<compile_context>
chip_gen: v7x
topology: tpu7x:2x2x1
jax: 0.10.0
libtpu: 0.0.40
codegen_flags: <defaults>
</compile_context>

<pallas_src>
import jax
import jax.numpy as jnp
from jax import lax
from jax.experimental import pallas as pl
from jax.experimental.pallas import tpu as pltpu


def _make_rdb_kernel(H, W, nf, gc, slope=0.2):
    """Fused ResidualDenseBlock_5C kernel body for one batch element."""
    cins = [nf, nf + gc, nf + 2 * gc, nf + 3 * gc, nf + 4 * gc]

    def pad_hw(v):
        # Zero halo of 1 around both spatial dims of an (h, w, c) value (stays in VMEM).
        h, w, c = v.shape
        zrow = jnp.zeros((1, w, c), v.dtype)
        v = jnp.concatenate([zrow, v, zrow], axis=0)            # (h+2, w, c)
        zcol = jnp.zeros((h + 2, 1, c), v.dtype)
        return jnp.concatenate([zcol, v, zcol], axis=1)         # (h+2, w+2, c)

    def im2col(feat_pad, cin):
        # (H+2, W+2, cin) zero-padded features -> (H*W, 9*cin) im2col slab.
        # Column order = (kh*3 + kw)*cin + c, matching the (9*cin, cout) weight layout.
        pieces = []
        for kh in range(3):
            for kw in range(3):
                pieces.append(
                    feat_pad[kh:kh + H, kw:kw + W, :].reshape(H * W, cin))
        return jnp.concatenate(pieces, axis=-1)

    def kernel(x_ref, w1, b1, w2, b2, w3, b3, w4, b4, w5, b5, o_ref):
        w_refs = (w1, w2, w3, w4, w5)
        b_refs = (b1, b2, b3, b4, b5)

        x = x_ref[...][0]                          # (H, W, nf) f32
        feat_pad = pad_hw(x)                       # running padded dense features

        acc = None
        for i in range(5):
            col = im2col(feat_pad, cins[i])        # (H*W, 9*cin_i)
            acc = jnp.dot(col, w_refs[i][...],     # single MXU matmul per conv
                          preferred_element_type=jnp.float32)
            acc = acc + b_refs[i][...]             # bias, (1, cout) broadcast
            if i < 4:
                a = jnp.where(acc >= 0, acc, slope * acc)       # LeakyReLU(0.2)
                # Dense "concat" stays on-chip: grow the padded feature value.
                feat_pad = jnp.concatenate(
                    [feat_pad, pad_hw(a.reshape(H, W, gc))], axis=-1)

        out = acc * 0.2 + x.reshape(H * W, nf)     # fused residual (conv5 has no lrelu)
        o_ref[...] = out.reshape(1, H, W, nf).astype(o_ref.dtype)

    return kernel


@jax.jit
def residual_dense_block_5c(x_nchw, params):
    """Forward pass matching ResidualDenseBlock_5C.forward (input/output NCHW)."""
    x = jnp.transpose(x_nchw, (0, 2, 3, 1))        # NCHW -> NHWC (channels on lanes)
    N, H, W, nf = x.shape
    gc = params[0][0].shape[-1]

    inputs = [x]
    in_specs = [pl.BlockSpec((1, H, W, nf), lambda n: (n, 0, 0, 0))]
    for (w, b) in params:
        cin, cout = w.shape[2], w.shape[3]
        # (3,3,cin,cout) HWIO -> (9*cin, cout): row = (kh*3+kw)*cin + c (matches im2col).
        inputs.append(w.reshape(9 * cin, cout))
        inputs.append(b.reshape(1, cout))
        in_specs.append(pl.BlockSpec((9 * cin, cout), lambda n: (0, 0)))
        in_specs.append(pl.BlockSpec((1, cout), lambda n: (0, 0)))

    kernel = _make_rdb_kernel(H, W, nf, gc)
    out = pl.pallas_call(
        kernel,
        out_shape=jax.ShapeDtypeStruct((N, H, W, nf), x.dtype),
        grid=(N,),
        in_specs=in_specs,
        out_specs=pl.BlockSpec((1, H, W, nf), lambda n: (n, 0, 0, 0)),
        compiler_params=pltpu.CompilerParams(
            dimension_semantics=("parallel",)),    # >=2 programs -> both v7x TCs busy
    )(*inputs)
    return jnp.transpose(out, (0, 3, 1, 2))        # NHWC -> NCHW


def init_rdb_params(key, nf=16, gc=8, scale=0.1):
    """Deterministic synthetic weights, shapes matching the PyTorch module (HWIO)."""
    in_chs = [nf, nf + gc, nf + 2 * gc, nf + 3 * gc, nf + 4 * gc]
    out_chs = [gc, gc, gc, gc, nf]
    params = []
    for i, (cin, cout) in enumerate(zip(in_chs, out_chs)):
        kw, kb = jax.random.split(jax.random.fold_in(key, i))
        fan_in = cin * 9
        w = jax.random.normal(kw, (3, 3, cin, cout), jnp.float32)
        w = w * (scale * (2.0 / fan_in) ** 0.5)    # ~kaiming * 0.1 like mutil.initialize_weights
        b = jax.random.normal(kb, (cout,), jnp.float32) * 0.01
        params.append((w, b))
    return params


# ---------------- pure-JAX reference (for correctness check only) --------------
def _conv3x3_ref(x_nhwc, w_hwio, b):
    y = lax.conv_general_dilated(
        x_nhwc, w_hwio, window_strides=(1, 1), padding=((1, 1), (1, 1)),
        dimension_numbers=("NHWC", "HWIO", "NHWC"))
    return y + b


def _rdb_ref(x_nchw, params):
    x = jnp.transpose(x_nchw, (0, 2, 3, 1))
    lrelu = lambda t: jnp.where(t >= 0, t, 0.2 * t)
    (w1, b1), (w2, b2), (w3, b3), (w4, b4), (w5, b5) = params
    x1 = lrelu(_conv3x3_ref(x, w1, b1))
    x2 = lrelu(_conv3x3_ref(jnp.concatenate([x, x1], -1), w2, b2))
    x3 = lrelu(_conv3x3_ref(jnp.concatenate([x, x1, x2], -1), w3, b3))
    x4 = lrelu(_conv3x3_ref(jnp.concatenate([x, x1, x2, x3], -1), w4, b4))
    x5 = _conv3x3_ref(jnp.concatenate([x, x1, x2, x3, x4], -1), w5, b5)
    return jnp.transpose(x5 * 0.2 + x, (0, 3, 1, 2))


if __name__ == "__main__":
    key = jax.random.PRNGKey(0)
    kx, kp = jax.random.split(key)

    N, NF, GC, H, W = 2, 16, 8, 16, 16
    x = jax.random.normal(kx, (N, NF, H, W), jnp.float32)       # NCHW like PyTorch
    params = init_rdb_params(kp, nf=NF, gc=GC)

    out = jax.block_until_ready(residual_dense_block_5c(x, params))
    ref = jax.block_until_ready(_rdb_ref(x, params))

    assert out.shape == (N, NF, H, W)
    err = float(jnp.max(jnp.abs(out - ref)))
    assert err < 2e-4, f"Pallas output mismatch vs reference: max abs err {err}"

    print("KERNEL_OK")
</pallas_src>

<mosaic_0001>
module attributes {stable_mosaic.version = 11 : i64} {
  func.func @kernel(%arg0: i32, %arg1: memref<1x16x16x16xf32, #tpu.memory_space<vmem>>, %arg2: memref<144x8xf32, #tpu.memory_space<vmem>>, %arg3: memref<1x8xf32, #tpu.memory_space<vmem>>, %arg4: memref<216x8xf32, #tpu.memory_space<vmem>>, %arg5: memref<1x8xf32, #tpu.memory_space<vmem>>, %arg6: memref<288x8xf32, #tpu.memory_space<vmem>>, %arg7: memref<1x8xf32, #tpu.memory_space<vmem>>, %arg8: memref<360x8xf32, #tpu.memory_space<vmem>>, %arg9: memref<1x8xf32, #tpu.memory_space<vmem>>, %arg10: memref<432x16xf32, #tpu.memory_space<vmem>>, %arg11: memref<1x16xf32, #tpu.memory_space<vmem>>, %arg12: memref<1x16x16x16xf32, #tpu.memory_space<vmem>>) attributes {dimension_semantics = [#tpu.dimension_semantics<parallel>], iteration_bounds = array<i64: 2>, scalar_prefetch = 0 : i64, scratch_operands = 0 : i64, tpu.core_type = #tpu.core_type<tc>, window_params = [{transform_indices = @transform_0, window_bounds = array<i64: 1, 16, 16, 16>}, {pipeline_mode = #tpu.pipeline_mode<synchronous>, transform_indices = @transform_1, window_bounds = array<i64: 144, 8>}, {pipeline_mode = #tpu.pipeline_mode<synchronous>, transform_indices = @transform_2, window_bounds = array<i64: 1, 8>}, {pipeline_mode = #tpu.pipeline_mode<synchronous>, transform_indices = @transform_3, window_bounds = array<i64: 216, 8>}, {pipeline_mode = #tpu.pipeline_mode<synchronous>, transform_indices = @transform_4, window_bounds = array<i64: 1, 8>}, {pipeline_mode = #tpu.pipeline_mode<synchronous>, transform_indices = @transform_5, window_bounds = array<i64: 288, 8>}, {pipeline_mode = #tpu.pipeline_mode<synchronous>, transform_indices = @transform_6, window_bounds = array<i64: 1, 8>}, {pipeline_mode = #tpu.pipeline_mode<synchronous>, transform_indices = @transform_7, window_bounds = array<i64: 360, 8>}, {pipeline_mode = #tpu.pipeline_mode<synchronous>, transform_indices = @transform_8, window_bounds = array<i64: 1, 8>}, {pipeline_mode = #tpu.pipeline_mode<synchronous>, transform_indices = @transform_9, window_bounds = array<i64: 432, 16>}, {pipeline_mode = #tpu.pipeline_mode<synchronous>, transform_indices = @transform_10, window_bounds = array<i64: 1, 16>}, {transform_indices = @transform_11, window_bounds = array<i64: 1, 16, 16, 16>}]} {
    %c0 = arith.constant 0 : index
    %c0_0 = arith.constant 0 : index
    %c0_1 = arith.constant 0 : index
    %c0_2 = arith.constant 0 : index
    %0 = vector.load %arg1[%c0, %c0_0, %c0_1, %c0_2] : memref<1x16x16x16xf32, #tpu.memory_space<vmem>>, vector<1x16x16x16xf32>
    %1 = vector.shape_cast %0 : vector<1x16x16x16xf32> to vector<16x16x16xf32>
    %cst = arith.constant 0.000000e+00 : f32
    %2 = vector.broadcast %cst : f32 to vector<1x16x16xf32>
    %3 = tpu.concatenate %2, %1, %2 in 0 : vector<1x16x16xf32>, vector<16x16x16xf32>, vector<1x16x16xf32> -> vector<18x16x16xf32>
    %cst_3 = arith.constant 0.000000e+00 : f32
    %4 = vector.broadcast %cst_3 : f32 to vector<18x1x16xf32>
    %5 = tpu.concatenate %4, %3, %4 in 1 : vector<18x1x16xf32>, vector<18x16x16xf32>, vector<18x1x16xf32> -> vector<18x18x16xf32>
    %6 = vector.extract_strided_slice %5 {offsets = [0, 0, 0], sizes = [16, 16, 16], strides = [1, 1, 1]} : vector<18x18x16xf32> to vector<16x16x16xf32>
    %7 = vector.shape_cast %6 : vector<16x16x16xf32> to vector<256x16xf32>
    %8 = vector.extract_strided_slice %5 {offsets = [0, 1, 0], sizes = [16, 16, 16], strides = [1, 1, 1]} : vector<18x18x16xf32> to vector<16x16x16xf32>
    %9 = vector.shape_cast %8 : vector<16x16x16xf32> to vector<256x16xf32>
    %10 = vector.extract_strided_slice %5 {offsets = [0, 2, 0], sizes = [16, 16, 16], strides = [1, 1, 1]} : vector<18x18x16xf32> to vector<16x16x16xf32>
    %11 = vector.shape_cast %10 : vector<16x16x16xf32> to vector<256x16xf32>
    %12 = vector.extract_strided_slice %5 {offsets = [1, 0, 0], sizes = [16, 16, 16], strides = [1, 1, 1]} : vector<18x18x16xf32> to vector<16x16x16xf32>
    %13 = vector.shape_cast %12 : vector<16x16x16xf32> to vector<256x16xf32>
    %14 = vector.extract_strided_slice %5 {offsets = [1, 1, 0], sizes = [16, 16, 16], strides = [1, 1, 1]} : vector<18x18x16xf32> to vector<16x16x16xf32>
    %15 = vector.shape_cast %14 : vector<16x16x16xf32> to vector<256x16xf32>
    %16 = vector.extract_strided_slice %5 {offsets = [1, 2, 0], sizes = [16, 16, 16], strides = [1, 1, 1]} : vector<18x18x16xf32> to vector<16x16x16xf32>
    %17 = vector.shape_cast %16 : vector<16x16x16xf32> to vector<256x16xf32>
    %18 = vector.extract_strided_slice %5 {offsets = [2, 0, 0], sizes = [16, 16, 16], strides = [1, 1, 1]} : vector<18x18x16xf32> to vector<16x16x16xf32>
    %19 = vector.shape_cast %18 : vector<16x16x16xf32> to vector<256x16xf32>
    %20 = vector.extract_strided_slice %5 {offsets = [2, 1, 0], sizes = [16, 16, 16], strides = [1, 1, 1]} : vector<18x18x16xf32> to vector<16x16x16xf32>
    %21 = vector.shape_cast %20 : vector<16x16x16xf32> to vector<256x16xf32>
    %22 = vector.extract_strided_slice %5 {offsets = [2, 2, 0], sizes = [16, 16, 16], strides = [1, 1, 1]} : vector<18x18x16xf32> to vector<16x16x16xf32>
    %23 = vector.shape_cast %22 : vector<16x16x16xf32> to vector<256x16xf32>
    %24 = tpu.concatenate %7, %9, %11, %13, %15, %17, %19, %21, %23 in 1 : vector<256x16xf32>, vector<256x16xf32>, vector<256x16xf32>, vector<256x16xf32>, vector<256x16xf32>, vector<256x16xf32>, vector<256x16xf32>, vector<256x16xf32>, vector<256x16xf32> -> vector<256x144xf32>
    %c0_4 = arith.constant 0 : index
    %c0_5 = arith.constant 0 : index
    %25 = vector.load %arg2[%c0_4, %c0_5] : memref<144x8xf32, #tpu.memory_space<vmem>>, vector<144x8xf32>
    %cst_6 = arith.constant dense<0.000000e+00> : vector<256x8xf32>
    %26 = tpu.matmul %24, %25, %cst_6 {dimension_numbers = #tpu.dot_dimension_numbers<[1], [0], [0], [1], [0, 0, 1, 1], [], []>} : vector<256x144xf32>, vector<144x8xf32>, vector<256x8xf32> -> vector<256x8xf32>
    %c0_7 = arith.constant 0 : index
    %c0_8 = arith.constant 0 : index
    %27 = vector.load %arg3[%c0_7, %c0_8] : memref<1x8xf32, #tpu.memory_space<vmem>>, vector<1x8xf32>
    %28 = vector.broadcast %27 : vector<1x8xf32> to vector<256x8xf32>
    %29 = arith.addf %26, %28 : vector<256x8xf32>
    %cst_9 = arith.constant 0.000000e+00 : f32
    %30 = vector.broadcast %cst_9 : f32 to vector<256x8xf32>
    %31 = arith.cmpf oge, %29, %30 : vector<256x8xf32>
    %cst_10 = arith.constant 2.000000e-01 : f32
    %32 = vector.broadcast %cst_10 : f32 to vector<256x8xf32>
    %33 = arith.mulf %32, %29 : vector<256x8xf32>
    %34 = arith.select %31, %29, %33 : vector<256x8xi1>, vector<256x8xf32>
    %35 = vector.shape_cast %34 : vector<256x8xf32> to vector<16x16x8xf32>
    %cst_11 = arith.constant 0.000000e+00 : f32
    %36 = vector.broadcast %cst_11 : f32 to vector<1x16x8xf32>
    %37 = tpu.concatenate %36, %35, %36 in 0 : vector<1x16x8xf32>, vector<16x16x8xf32>, vector<1x16x8xf32> -> vector<18x16x8xf32>
    %cst_12 = arith.constant 0.000000e+00 : f32
    %38 = vector.broadcast %cst_12 : f32 to vector<18x1x8xf32>
    %39 = tpu.concatenate %38, %37, %38 in 1 : vector<18x1x8xf32>, vector<18x16x8xf32>, vector<18x1x8xf32> -> vector<18x18x8xf32>
    %40 = tpu.concatenate %5, %39 in 2 : vector<18x18x16xf32>, vector<18x18x8xf32> -> vector<18x18x24xf32>
    %41 = vector.extract_strided_slice %40 {offsets = [0, 0, 0], sizes = [16, 16, 24], strides = [1, 1, 1]} : vector<18x18x24xf32> to vector<16x16x24xf32>
    %42 = vector.shape_cast %41 : vector<16x16x24xf32> to vector<256x24xf32>
    %43 = vector.extract_strided_slice %40 {offsets = [0, 1, 0], sizes = [16, 16, 24], strides = [1, 1, 1]} : vector<18x18x24xf32> to vector<16x16x24xf32>
    %44 = vector.shape_cast %43 : vector<16x16x24xf32> to vector<256x24xf32>
    %45 = vector.extract_strided_slice %40 {offsets = [0, 2, 0], sizes = [16, 16, 24], strides = [1, 1, 1]} : vector<18x18x24xf32> to vector<16x16x24xf32>
    %46 = vector.shape_cast %45 : vector<16x16x24xf32> to vector<256x24xf32>
    %47 = vector.extract_strided_slice %40 {offsets = [1, 0, 0], sizes = [16, 16, 24], strides = [1, 1, 1]} : vector<18x18x24xf32> to vector<16x16x24xf32>
    %48 = vector.shape_cast %47 : vector<16x16x24xf32> to vector<256x24xf32>
    %49 = vector.extract_strided_slice %40 {offsets = [1, 1, 0], sizes = [16, 16, 24], strides = [1, 1, 1]} : vector<18x18x24xf32> to vector<16x16x24xf32>
    %50 = vector.shape_cast %49 : vector<16x16x24xf32> to vector<256x24xf32>
    %51 = vector.extract_strided_slice %40 {offsets = [1, 2, 0], sizes = [16, 16, 24], strides = [1, 1, 1]} : vector<18x18x24xf32> to vector<16x16x24xf32>
    %52 = vector.shape_cast %51 : vector<16x16x24xf32> to vector<256x24xf32>
    %53 = vector.extract_strided_slice %40 {offsets = [2, 0, 0], sizes = [16, 16, 24], strides = [1, 1, 1]} : vector<18x18x24xf32> to vector<16x16x24xf32>
    %54 = vector.shape_cast %53 : vector<16x16x24xf32> to vector<256x24xf32>
    %55 = vector.extract_strided_slice %40 {offsets = [2, 1, 0], sizes = [16, 16, 24], strides = [1, 1, 1]} : vector<18x18x24xf32> to vector<16x16x24xf32>
    %56 = vector.shape_cast %55 : vector<16x16x24xf32> to vector<256x24xf32>
    %57 = vector.extract_strided_slice %40 {offsets = [2, 2, 0], sizes = [16, 16, 24], strides = [1, 1, 1]} : vector<18x18x24xf32> to vector<16x16x24xf32>
    %58 = vector.shape_cast %57 : vector<16x16x24xf32> to vector<256x24xf32>
    %59 = tpu.concatenate %42, %44, %46, %48, %50, %52, %54, %56, %58 in 1 : vector<256x24xf32>, vector<256x24xf32>, vector<256x24xf32>, vector<256x24xf32>, vector<256x24xf32>, vector<256x24xf32>, vector<256x24xf32>, vector<256x24xf32>, vector<256x24xf32> -> vector<256x216xf32>
    %c0_13 = arith.constant 0 : index
    %c0_14 = arith.constant 0 : index
    %60 = vector.load %arg4[%c0_13, %c0_14] : memref<216x8xf32, #tpu.memory_space<vmem>>, vector<216x8xf32>
    %cst_15 = arith.constant dense<0.000000e+00> : vector<256x8xf32>
    %61 = tpu.matmul %59, %60, %cst_15 {dimension_numbers = #tpu.dot_dimension_numbers<[1], [0], [0], [1], [0, 0, 1, 1], [], []>} : vector<256x216xf32>, vector<216x8xf32>, vector<256x8xf32> -> vector<256x8xf32>
    %c0_16 = arith.constant 0 : index
    %c0_17 = arith.constant 0 : index
    %62 = vector.load %arg5[%c0_16, %c0_17] : memref<1x8xf32, #tpu.memory_space<vmem>>, vector<1x8xf32>
    %63 = vector.broadcast %62 : vector<1x8xf32> to vector<256x8xf32>
    %64 = arith.addf %61, %63 : vector<256x8xf32>
    %cst_18 = arith.constant 0.000000e+00 : f32
    %65 = vector.broadcast %cst_18 : f32 to vector<256x8xf32>
    %66 = arith.cmpf oge, %64, %65 : vector<256x8xf32>
    %cst_19 = arith.constant 2.000000e-01 : f32
    %67 = vector.broadcast %cst_19 : f32 to vector<256x8xf32>
    %68 = arith.mulf %67, %64 : vector<256x8xf32>
    %69 = arith.select %66, %64, %68 : vector<256x8xi1>, vector<256x8xf32>
    %70 = vector.shape_cast %69 : vector<256x8xf32> to vector<16x16x8xf32>
    %cst_20 = arith.constant 0.000000e+00 : f32
    %71 = vector.broadcast %cst_20 : f32 to vector<1x16x8xf32>
    %72 = tpu.concatenate %71, %70, %71 in 0 : vector<1x16x8xf32>, vector<16x16x8xf32>, vector<1x16x8xf32> -> vector<18x16x8xf32>
    %cst_21 = arith.constant 0.000000e+00 : f32
    %73 = vector.broadcast %cst_21 : f32 to vector<18x1x8xf32>
    %74 = tpu.concatenate %73, %72, %73 in 1 : vector<18x1x8xf32>, vector<18x16x8xf32>, vector<18x1x8xf32> -> vector<18x18x8xf32>
    %75 = tpu.concatenate %40, %74 in 2 : vector<18x18x24xf32>, vector<18x18x8xf32> -> vector<18x18x32xf32>
    %76 = vector.extract_strided_slice %75 {offsets = [0, 0, 0], sizes = [16, 16, 32], strides = [1, 1, 1]} : vector<18x18x32xf32> to vector<16x16x32xf32>
    %77 = vector.shape_cast %76 : vector<16x16x32xf32> to vector<256x32xf32>
    %78 = vector.extract_strided_slice %75 {offsets = [0, 1, 0], sizes = [16, 16, 32], strides = [1, 1, 1]} : vector<18x18x32xf32> to vector<16x16x32xf32>
    %79 = vector.shape_cast %78 : vector<16x16x32xf32> to vector<256x32xf32>
    %80 = vector.extract_strided_slice %75 {offsets = [0, 2, 0], sizes = [16, 16, 32], strides = [1, 1, 1]} : vector<18x18x32xf32> to vector<16x16x32xf32>
    %81 = vector.shape_cast %80 : vector<16x16x32xf32> to vector<256x32xf32>
    %82 = vector.extract_strided_slice %75 {offsets = [1, 0, 0], sizes = [16, 16, 32], strides = [1, 1, 1]} : vector<18x18x32xf32> to vector<16x16x32xf32>
    %83 = vector.shape_cast %82 : vector<16x16x32xf32> to vector<256x32xf32>
    %84 = vector.extract_strided_slice %75 {offsets = [1, 1, 0], sizes = [16, 16, 32], strides = [1, 1, 1]} : vector<18x18x32xf32> to vector<16x16x32xf32>
    %85 = vector.shape_cast %84 : vector<16x16x32xf32> to vector<256x32xf32>
    %86 = vector.extract_strided_slice %75 {offsets = [1, 2, 0], sizes = [16, 16, 32], strides = [1, 1, 1]} : vector<18x18x32xf32> to vector<16x16x32xf32>
    %87 = vector.shape_cast %86 : vector<16x16x32xf32> to vector<256x32xf32>
    %88 = vector.extract_strided_slice %75 {offsets = [2, 0, 0], sizes = [16, 16, 32], strides = [1, 1, 1]} : vector<18x18x32xf32> to vector<16x16x32xf32>
    %89 = vector.shape_cast %88 : vector<16x16x32xf32> to vector<256x32xf32>
    %90 = vector.extract_strided_slice %75 {offsets = [2, 1, 0], sizes = [16, 16, 32], strides = [1, 1, 1]} : vector<18x18x32xf32> to vector<16x16x32xf32>
    %91 = vector.shape_cast %90 : vector<16x16x32xf32> to vector<256x32xf32>
    %92 = vector.extract_strided_slice %75 {offsets = [2, 2, 0], sizes = [16, 16, 32], strides = [1, 1, 1]} : vector<18x18x32xf32> to vector<16x16x32xf32>
    %93 = vector.shape_cast %92 : vector<16x16x32xf32> to vector<256x32xf32>
    %94 = tpu.concatenate %77, %79, %81, %83, %85, %87, %89, %91, %93 in 1 : vector<256x32xf32>, vector<256x32xf32>, vector<256x32xf32>, vector<256x32xf32>, vector<256x32xf32>, vector<256x32xf32>, vector<256x32xf32>, vector<256x32xf32>, vector<256x32xf32> -> vector<256x288xf32>
    %c0_22 = arith.constant 0 : index
    %c0_23 = arith.constant 0 : index
    %95 = vector.load %arg6[%c0_22, %c0_23] : memref<288x8xf32, #tpu.memory_space<vmem>>, vector<288x8xf32>
    %cst_24 = arith.constant dense<0.000000e+00> : vector<256x8xf32>
    %96 = tpu.matmul %94, %95, %cst_24 {dimension_numbers = #tpu.dot_dimension_numbers<[1], [0], [0], [1], [0, 0, 1, 1], [], []>} : vector<256x288xf32>, vector<288x8xf32>, vector<256x8xf32> -> vector<256x8xf32>
    %c0_25 = arith.constant 0 : index
    %c0_26 = arith.constant 0 : index
    %97 = vector.load %arg7[%c0_25, %c0_26] : memref<1x8xf32, #tpu.memory_space<vmem>>, vector<1x8xf32>
    %98 = vector.broadcast %97 : vector<1x8xf32> to vector<256x8xf32>
    %99 = arith.addf %96, %98 : vector<256x8xf32>
    %cst_27 = arith.constant 0.000000e+00 : f32
    %100 = vector.broadcast %cst_27 : f32 to vector<256x8xf32>
    %101 = arith.cmpf oge, %99, %100 : vector<256x8xf32>
    %cst_28 = arith.constant 2.000000e-01 : f32
    %102 = vector.broadcast %cst_28 : f32 to vector<256x8xf32>
    %103 = arith.mulf %102, %99 : vector<256x8xf32>
    %104 = arith.select %101, %99, %103 : vector<256x8xi1>, vector<256x8xf32>
    %105 = vector.shape_cast %104 : vector<256x8xf32> to vector<16x16x8xf32>
    %cst_29 = arith.constant 0.000000e+00 : f32
    %106 = vector.broadcast %cst_29 : f32 to vector<1x16x8xf32>
    %107 = tpu.concatenate %106, %105, %106 in 0 : vector<1x16x8xf32>, vector<16x16x8xf32>, vector<1x16x8xf32> -> vector<18x16x8xf32>
    %cst_30 = arith.constant 0.000000e+00 : f32
    %108 = vector.broadcast %cst_30 : f32 to vector<18x1x8xf32>
    %109 = tpu.concatenate %108, %107, %108 in 1 : vector<18x1x8xf32>, vector<18x16x8xf32>, vector<18x1x8xf32> -> vector<18x18x8xf32>
    %110 = tpu.concatenate %75, %109 in 2 : vector<18x18x32xf32>, vector<18x18x8xf32> -> vector<18x18x40xf32>
    %111 = vector.extract_strided_slice %110 {offsets = [0, 0, 0], sizes = [16, 16, 40], strides = [1, 1, 1]} : vector<18x18x40xf32> to vector<16x16x40xf32>
    %112 = vector.shape_cast %111 : vector<16x16x40xf32> to vector<256x40xf32>
    %113 = vector.extract_strided_slice %110 {offsets = [0, 1, 0], sizes = [16, 16, 40], strides = [1, 1, 1]} : vector<18x18x40xf32> to vector<16x16x40xf32>
    %114 = vector.shape_cast %113 : vector<16x16x40xf32> to vector<256x40xf32>
    %115 = vector.extract_strided_slice %110 {offsets = [0, 2, 0], sizes = [16, 16, 40], strides = [1, 1, 1]} : vector<18x18x40xf32> to vector<16x16x40xf32>
    %116 = vector.shape_cast %115 : vector<16x16x40xf32> to vector<256x40xf32>
    %117 = vector.extract_strided_slice %110 {offsets = [1, 0, 0], sizes = [16, 16, 40], strides = [1, 1, 1]} : vector<18x18x40xf32> to vector<16x16x40xf32>
    %118 = vector.shape_cast %117 : vector<16x16x40xf32> to vector<256x40xf32>
    %119 = vector.extract_strided_slice %110 {offsets = [1, 1, 0], sizes = [16, 16, 40], strides = [1, 1, 1]} : vector<18x18x40xf32> to vector<16x16x40xf32>
    %120 = vector.shape_cast %119 : vector<16x16x40xf32> to vector<256x40xf32>
    %121 = vector.extract_strided_slice %110 {offsets = [1, 2, 0], sizes = [16, 16, 40], strides = [1, 1, 1]} : vector<18x18x40xf32> to vector<16x16x40xf32>
    %122 = vector.shape_cast %121 : vector<16x16x40xf32> to vector<256x40xf32>
    %123 = vector.extract_strided_slice %110 {offsets = [2, 0, 0], sizes = [16, 16, 40], strides = [1, 1, 1]} : vector<18x18x40xf32> to vector<16x16x40xf32>
    %124 = vector.shape_cast %123 : vector<16x16x40xf32> to vector<256x40xf32>
    %125 = vector.extract_strided_slice %110 {offsets = [2, 1, 0], sizes = [16, 16, 40], strides = [1, 1, 1]} : vector<18x18x40xf32> to vector<16x16x40xf32>
    %126 = vector.shape_cast %125 : vector<16x16x40xf32> to vector<256x40xf32>
    %127 = vector.extract_strided_slice %110 {offsets = [2, 2, 0], sizes = [16, 16, 40], strides = [1, 1, 1]} : vector<18x18x40xf32> to vector<16x16x40xf32>
    %128 = vector.shape_cast %127 : vector<16x16x40xf32> to vector<256x40xf32>
    %129 = tpu.concatenate %112, %114, %116, %118, %120, %122, %124, %126, %128 in 1 : vector<256x40xf32>, vector<256x40xf32>, vector<256x40xf32>, vector<256x40xf32>, vector<256x40xf32>, vector<256x40xf32>, vector<256x40xf32>, vector<256x40xf32>, vector<256x40xf32> -> vector<256x360xf32>
    %c0_31 = arith.constant 0 : index
    %c0_32 = arith.constant 0 : index
    %130 = vector.load %arg8[%c0_31, %c0_32] : memref<360x8xf32, #tpu.memory_space<vmem>>, vector<360x8xf32>
    %cst_33 = arith.constant dense<0.000000e+00> : vector<256x8xf32>
    %131 = tpu.matmul %129, %130, %cst_33 {dimension_numbers = #tpu.dot_dimension_numbers<[1], [0], [0], [1], [0, 0, 1, 1], [], []>} : vector<256x360xf32>, vector<360x8xf32>, vector<256x8xf32> -> vector<256x8xf32>
    %c0_34 = arith.constant 0 : index
    %c0_35 = arith.constant 0 : index
    %132 = vector.load %arg9[%c0_34, %c0_35] : memref<1x8xf32, #tpu.memory_space<vmem>>, vector<1x8xf32>
    %133 = vector.broadcast %132 : vector<1x8xf32> to vector<256x8xf32>
    %134 = arith.addf %131, %133 : vector<256x8xf32>
    %cst_36 = arith.constant 0.000000e+00 : f32
    %135 = vector.broadcast %cst_36 : f32 to vector<256x8xf32>
    %136 = arith.cmpf oge, %134, %135 : vector<256x8xf32>
    %cst_37 = arith.constant 2.000000e-01 : f32
    %137 = vector.broadcast %cst_37 : f32 to vector<256x8xf32>
    %138 = arith.mulf %137, %134 : vector<256x8xf32>
    %139 = arith.select %136, %134, %138 : vector<256x8xi1>, vector<256x8xf32>
    %140 = vector.shape_cast %139 : vector<256x8xf32> to vector<16x16x8xf32>
    %cst_38 = arith.constant 0.000000e+00 : f32
    %141 = vector.broadcast %cst_38 : f32 to vector<1x16x8xf32>
    %142 = tpu.concatenate %141, %140, %141 in 0 : vector<1x16x8xf32>, vector<16x16x8xf32>, vector<1x16x8xf32> -> vector<18x16x8xf32>
    %cst_39 = arith.constant 0.000000e+00 : f32
    %143 = vector.broadcast %cst_39 : f32 to vector<18x1x8xf32>
    %144 = tpu.concatenate %143, %142, %143 in 1 : vector<18x1x8xf32>, vector<18x16x8xf32>, vector<18x1x8xf32> -> vector<18x18x8xf32>
    %145 = tpu.concatenate %110, %144 in 2 : vector<18x18x40xf32>, vector<18x18x8xf32> -> vector<18x18x48xf32>
    %146 = vector.extract_strided_slice %145 {offsets = [0, 0, 0], sizes = [16, 16, 48], strides = [1, 1, 1]} : vector<18x18x48xf32> to vector<16x16x48xf32>
    %147 = vector.shape_cast %146 : vector<16x16x48xf32> to vector<256x48xf32>
    %148 = vector.extract_strided_slice %145 {offsets = [0, 1, 0], sizes = [16, 16, 48], strides = [1, 1, 1]} : vector<18x18x48xf32> to vector<16x16x48xf32>
    %149 = vector.shape_cast %148 : vector<16x16x48xf32> to vector<256x48xf32>
    %150 = vector.extract_strided_slice %145 {offsets = [0, 2, 0], sizes = [16, 16, 48], strides = [1, 1, 1]} : vector<18x18x48xf32> to vector<16x16x48xf32>
    %151 = vector.shape_cast %150 : vector<16x16x48xf32> to vector<256x48xf32>
    %152 = vector.extract_strided_slice %145 {offsets = [1, 0, 0], sizes = [16, 16, 48], strides = [1, 1, 1]} : vector<18x18x48xf32> to vector<16x16x48xf32>
    %153 = vector.shape_cast %152 : vector<16x16x48xf32> to vector<256x48xf32>
    %154 = vector.extract_strided_slice %145 {offsets = [1, 1, 0], sizes = [16, 16, 48], strides = [1, 1, 1]} : vector<18x18x48xf32> to vector<16x16x48xf32>
    %155 = vector.shape_cast %154 : vector<16x16x48xf32> to vector<256x48xf32>
    %156 = vector.extract_strided_slice %145 {offsets = [1, 2, 0], sizes = [16, 16, 48], strides = [1, 1, 1]} : vector<18x18x48xf32> to vector<16x16x48xf32>
    %157 = vector.shape_cast %156 : vector<16x16x48xf32> to vector<256x48xf32>
    %158 = vector.extract_strided_slice %145 {offsets = [2, 0, 0], sizes = [16, 16, 48], strides = [1, 1, 1]} : vector<18x18x48xf32> to vector<16x16x48xf32>
    %159 = vector.shape_cast %158 : vector<16x16x48xf32> to vector<256x48xf32>
    %160 = vector.extract_strided_slice %145 {offsets = [2, 1, 0], sizes = [16, 16, 48], strides = [1, 1, 1]} : vector<18x18x48xf32> to vector<16x16x48xf32>
    %161 = vector.shape_cast %160 : vector<16x16x48xf32> to vector<256x48xf32>
    %162 = vector.extract_strided_slice %145 {offsets = [2, 2, 0], sizes = [16, 16, 48], strides = [1, 1, 1]} : vector<18x18x48xf32> to vector<16x16x48xf32>
    %163 = vector.shape_cast %162 : vector<16x16x48xf32> to vector<256x48xf32>
    %164 = tpu.concatenate %147, %149, %151, %153, %155, %157, %159, %161, %163 in 1 : vector<256x48xf32>, vector<256x48xf32>, vector<256x48xf32>, vector<256x48xf32>, vector<256x48xf32>, vector<256x48xf32>, vector<256x48xf32>, vector<256x48xf32>, vector<256x48xf32> -> vector<256x432xf32>
    %c0_40 = arith.constant 0 : index
    %c0_41 = arith.constant 0 : index
    %165 = vector.load %arg10[%c0_40, %c0_41] : memref<432x16xf32, #tpu.memory_space<vmem>>, vector<432x16xf32>
    %cst_42 = arith.constant dense<0.000000e+00> : vector<256x16xf32>
    %166 = tpu.matmul %164, %165, %cst_42 {dimension_numbers = #tpu.dot_dimension_numbers<[1], [0], [0], [1], [0, 0, 1, 1], [], []>} : vector<256x432xf32>, vector<432x16xf32>, vector<256x16xf32> -> vector<256x16xf32>
    %c0_43 = arith.constant 0 : index
    %c0_44 = arith.constant 0 : index
    %167 = vector.load %arg11[%c0_43, %c0_44] : memref<1x16xf32, #tpu.memory_space<vmem>>, vector<1x16xf32>
    %168 = vector.broadcast %167 : vector<1x16xf32> to vector<256x16xf32>
    %169 = arith.addf %166, %168 : vector<256x16xf32>
    %cst_45 = arith.constant 2.000000e-01 : f32
    %170 = vector.broadcast %cst_45 : f32 to vector<256x16xf32>
    %171 = arith.mulf %169, %170 : vector<256x16xf32>
    %172 = vector.shape_cast %1 : vector<16x16x16xf32> to vector<256x16xf32>
    %173 = arith.addf %171, %172 : vector<256x16xf32>
    %174 = vector.shape_cast %173 : vector<256x16xf32> to vector<1x16x16x16xf32>
    %c0_46 = arith.constant 0 : index
    %c0_47 = arith.constant 0 : index
    %c0_48 = arith.constant 0 : index
    %c0_49 = arith.constant 0 : index
    %175 = vector.load %arg12[%c0_46, %c0_47, %c0_48, %c0_49] : memref<1x16x16x16xf32, #tpu.memory_space<vmem>>, vector<1x16x16x16xf32>
    tpu.vector_store %arg12[%c0_46, %c0_47, %c0_48, %c0_49], %174 {strides = array<i32>} : memref<1x16x16x16xf32, #tpu.memory_space<vmem>>, vector<1x16x16x16xf32>,
    return
  }
  func.func @transform_0(%arg0: i32) -> (i32, i32, i32, i32) {
    %c0_i32 = arith.constant 0 : i32
    %c0_i32_0 = arith.constant 0 : i32
    %c0_i32_1 = arith.constant 0 : i32
    %c0_i32_2 = arith.constant 0 : i32
    return %arg0, %c0_i32, %c0_i32_0, %c0_i32_1 : i32, i32, i32, i32
  }
  func.func @transform_1(%arg0: i32) -> (i32, i32) {
    %c0_i32 = arith.constant 0 : i32
    %c0_i32_0 = arith.constant 0 : i32
    %c0_i32_1 = arith.constant 0 : i32
    return %c0_i32, %c0_i32_0 : i32, i32
  }
  func.func @transform_2(%arg0: i32) -> (i32, i32) {
    %c0_i32 = arith.constant 0 : i32
    %c0_i32_0 = arith.constant 0 : i32
    %c0_i32_1 = arith.constant 0 : i32
    return %c0_i32, %c0_i32_0 : i32, i32
  }
  func.func @transform_3(%arg0: i32) -> (i32, i32) {
    %c0_i32 = arith.constant 0 : i32
    %c0_i32_0 = arith.constant 0 : i32
    %c0_i32_1 = arith.constant 0 : i32
    return %c0_i32, %c0_i32_0 : i32, i32
  }
  func.func @transform_4(%arg0: i32) -> (i32, i32) {
    %c0_i32 = arith.constant 0 : i32
    %c0_i32_0 = arith.constant 0 : i32
    %c0_i32_1 = arith.constant 0 : i32
    return %c0_i32, %c0_i32_0 : i32, i32
  }
  func.func @transform_5(%arg0: i32) -> (i32, i32) {
    %c0_i32 = arith.constant 0 : i32
    %c0_i32_0 = arith.constant 0 : i32
    %c0_i32_1 = arith.constant 0 : i32
    return %c0_i32, %c0_i32_0 : i32, i32
  }
  func.func @transform_6(%arg0: i32) -> (i32, i32) {
    %c0_i32 = arith.constant 0 : i32
    %c0_i32_0 = arith.constant 0 : i32
    %c0_i32_1 = arith.constant 0 : i32
    return %c0_i32, %c0_i32_0 : i32, i32
  }
  func.func @transform_7(%arg0: i32) -> (i32, i32) {
    %c0_i32 = arith.constant 0 : i32
    %c0_i32_0 = arith.constant 0 : i32
    %c0_i32_1 = arith.constant 0 : i32
    return %c0_i32, %c0_i32_0 : i32, i32
  }
  func.func @transform_8(%arg0: i32) -> (i32, i32) {
    %c0_i32 = arith.constant 0 : i32
    %c0_i32_0 = arith.constant 0 : i32
    %c0_i32_1 = arith.constant 0 : i32
    return %c0_i32, %c0_i32_0 : i32, i32
  }
  func.func @transform_9(%arg0: i32) -> (i32, i32) {
    %c0_i32 = arith.constant 0 : i32
    %c0_i32_0 = arith.constant 0 : i32
    %c0_i32_1 = arith.constant 0 : i32
    return %c0_i32, %c0_i32_0 : i32, i32
  }
  func.func @transform_10(%arg0: i32) -> (i32, i32) {
    %c0_i32 = arith.constant 0 : i32
    %c0_i32_0 = arith.constant 0 : i32
    %c0_i32_1 = arith.constant 0 : i32
    return %c0_i32, %c0_i32_0 : i32, i32
  }
  func.func @transform_11(%arg0: i32) -> (i32, i32, i32, i32) {
    %c0_i32 = arith.constant 0 : i32
    %c0_i32_0 = arith.constant 0 : i32
    %c0_i32_1 = arith.constant 0 : i32
    %c0_i32_2 = arith.constant 0 : i32
    return %arg0, %c0_i32, %c0_i32_0, %c0_i32_1 : i32, i32, i32, i32
  }
}

</mosaic_0001>

<llo_original>
// kernel: residual_dense_block_5c.1
$region0: #{residual_dense_block_5c.1}
  #allocation0 [shape = 'u32[]', space=smem, size = 0x4, offset = 0x4, fixed_abs, tag = 'smem constant byte address 0x4 - core index']
  #allocation1 [shape = 'u32[144,128]{1,0:T(1,128)}', space=vmem, size = 0x12000, scoped, tag = 'internal scratch']
  %s0 = inlined_call_operand.vmem [shape: f32[2,16,16,16], index: 0, kind: input, shape index: {}]
  %s1 = inlined_call_operand.vmem [shape: f32[144,8], index: 1, kind: input, shape index: {}]
  %s2 = inlined_call_operand.vmem [shape: f32[1,8], index: 2, kind: input, shape index: {}]
  %s3 = inlined_call_operand.vmem [shape: f32[216,8], index: 3, kind: input, shape index: {}]
  %s4 = inlined_call_operand.vmem [shape: f32[1,8], index: 4, kind: input, shape index: {}]
  %s5 = inlined_call_operand.vmem [shape: f32[288,8], index: 5, kind: input, shape index: {}]
  %s6 = inlined_call_operand.vmem [shape: f32[1,8], index: 6, kind: input, shape index: {}]
  %s7 = inlined_call_operand.vmem [shape: f32[360,8], index: 7, kind: input, shape index: {}]
  %s8 = inlined_call_operand.vmem [shape: f32[1,8], index: 8, kind: input, shape index: {}]
  %s9 = inlined_call_operand.vmem [shape: f32[432,16], index: 9, kind: input, shape index: {}]
  %s10 = inlined_call_operand.vmem [shape: f32[1,16], index: 10, kind: input, shape index: {}]
  %s11 = inlined_call_operand.vmem [shape: f32[2,16,16,16], index: 11, kind: output, shape index: {}]
  %s12 = sld [smem:[#allocation0]]
  $region77: #{residual_dense_block_5c.1} parent=0
    _
  %s14 = ssub.s32 1, %s12
  %s15 = scalar_select 0, %s14, %s12
  loop: start=0, step=1, limit=4
  $region2: #{residual_dense_block_5c.1} parent=0 // loop_pre_header
    _
  $region3: #{residual_dense_block_5c.1} parent=0 // loop_header
    %s17 = sphi 0, %s21
    %p18 = scmp.ge.s32.totalorder %s17, 4
    %s27 = sphi 0, %s29
    %s30 = sphi 0, %s27
    %s31 = sphi 0, %s30
    %s47 = sphi 0, %s31
    %s51 = sphi 0, %s51
    %s53 = sphi 0, %s51
    %s54 = sphi 0, %s53
    %s68 = sphi 0, %s54
    %s72 = sphi 0, %s72
    %s74 = sphi 0, %s72
    %s75 = sphi 0, %s74
    %s89 = sphi 0, %s75
    %s93 = sphi 0, %s93
    %s95 = sphi 0, %s93
    %s96 = sphi 0, %s95
    %s110 = sphi 0, %s96
    %s114 = sphi 0, %s114
    %s116 = sphi 0, %s114
    %s117 = sphi 0, %s116
    %s131 = sphi 0, %s117
    %s135 = sphi 0, %s135
    %s137 = sphi 0, %s135
    %s138 = sphi 0, %s137
    %s152 = sphi 0, %s138
    %s156 = sphi 0, %s156
    %s158 = sphi 0, %s156
    %s159 = sphi 0, %s158
    %s173 = sphi 0, %s159
    %s177 = sphi 0, %s177
    %s179 = sphi 0, %s177
    %s180 = sphi 0, %s179
    %s194 = sphi 0, %s180
    %s198 = sphi 0, %s198
    %s200 = sphi 0, %s198
    %s201 = sphi 0, %s200
    %s215 = sphi 0, %s201
    %s219 = sphi 0, %s219
    %s221 = sphi 0, %s219
    %s222 = sphi 0, %s221
    %s236 = sphi 0, %s222
    %s240 = sphi 0, %s240
    %s242 = sphi 0, %s240
    %s243 = sphi 0, %s242
    %s257 = sphi 0, %s243
    %s263 = sphi 0, %s265
    %s266 = sphi 0, %s263
    %s267 = sphi 0, %s266
    %s283 = sphi 0, %s267
  $region4: #{residual_dense_block_5c.1} parent=0 // loop_header_branch
    %20 = sbr.rel (%p18) target = $region8
  $region5: #{residual_dense_block_5c.1} parent=0 // loop_body
    %s22 = ssub.s32 %s17, 1
    %s23 = ssub.s32 %s17, 2
    %s24 = sadd.s32 %s17, 1
    %s25 = ssub.s32 %s17, %s24
    %p26 = scmp.eq.s32.totalorder %s25, 0
    %s28 = sadd.s32 %s27, 1
    %s29 = scalar_select %p26, %s27, %s28
    %p32 = pneg %p26
    %p33 = scmp.eq.s32.totalorder %s17, 1
    %p34 = por %p32, %p33
    %p35 = scmp.ne.s32.totalorder %s27, %s30
    %p36 = scmp.eq.s32.totalorder %s17, 0
    %p37 = por %p35, %p36
    %p38 = scmp.ne.s32.totalorder %s27, %s30
    %p39 = scmp.eq.s32.totalorder %s22, 1
    %p40 = por %p38, %p39
    %p41 = scmp.ne.s32.totalorder %s30, %s31
    %p42 = scmp.eq.s32.totalorder %s22, 0
    %p43 = por %p41, %p42
    %p44 = scmp.ne.s32.totalorder %s30, %s31
    %p45 = scmp.eq.s32.totalorder %s23, 1
    %p46 = por %p44, %p45
    %p48 = scmp.ne.s32.totalorder %s31, %s47
    %p49 = scmp.eq.s32.totalorder %s23, 0
    %p50 = por %p48, %p49
    %s52 = sadd.s32 %s51, 1
    %p55 = scmp.eq.s32.totalorder %s17, 1
    %p56 = scmp.ne.s32.totalorder %s51, %s53
    %p57 = scmp.eq.s32.totalorder %s17, 0
    %p58 = por %p56, %p57
    %p59 = scmp.ne.s32.totalorder %s51, %s53
    %p60 = scmp.eq.s32.totalorder %s22, 1
    %p61 = por %p59, %p60
    %p62 = scmp.ne.s32.totalorder %s53, %s54
    %p63 = scmp.eq.s32.totalorder %s22, 0
    %p64 = por %p62, %p63
    %p65 = scmp.ne.s32.totalorder %s53, %s54
    %p66 = scmp.eq.s32.totalorder %s23, 1
    %p67 = por %p65, %p66
    %p69 = scmp.ne.s32.totalorder %s54, %s68
    %p70 = scmp.eq.s32.totalorder %s23, 0
    %p71 = por %p69, %p70
    %s73 = sadd.s32 %s72, 1
    %p76 = scmp.eq.s32.totalorder %s17, 1
    %p77 = scmp.ne.s32.totalorder %s72, %s74
    %p78 = scmp.eq.s32.totalorder %s17, 0
    %p79 = por %p77, %p78
    %p80 = scmp.ne.s32.totalorder %s72, %s74
    %p81 = scmp.eq.s32.totalorder %s22, 1
    %p82 = por %p80, %p81
    %p83 = scmp.ne.s32.totalorder %s74, %s75
    %p84 = scmp.eq.s32.totalorder %s22, 0
    %p85 = por %p83, %p84
    %p86 = scmp.ne.s32.totalorder %s74, %s75
    %p87 = scmp.eq.s32.totalorder %s23, 1
    %p88 = por %p86, %p87
    %p90 = scmp.ne.s32.totalorder %s75, %s89
    %p91 = scmp.eq.s32.totalorder %s23, 0
    %p92 = por %p90, %p91
    %s94 = sadd.s32 %s93, 1
    %p97 = scmp.eq.s32.totalorder %s17, 1
    %p98 = scmp.ne.s32.totalorder %s93, %s95
    %p99 = scmp.eq.s32.totalorder %s17, 0
    %p100 = por %p98, %p99
    %p101 = scmp.ne.s32.totalorder %s93, %s95
    %p102 = scmp.eq.s32.totalorder %s22, 1
    %p103 = por %p101, %p102
    %p104 = scmp.ne.s32.totalorder %s95, %s96
    %p105 = scmp.eq.s32.totalorder %s22, 0
    %p106 = por %p104, %p105
    %p107 = scmp.ne.s32.totalorder %s95, %s96
    %p108 = scmp.eq.s32.totalorder %s23, 1
    %p109 = por %p107, %p108
    %p111 = scmp.ne.s32.totalorder %s96, %s110
    %p112 = scmp.eq.s32.totalorder %s23, 0
    %p113 = por %p111, %p112
    %s115 = sadd.s32 %s114, 1
    %p118 = scmp.eq.s32.totalorder %s17, 1
    %p119 = scmp.ne.s32.totalorder %s114, %s116
    %p120 = scmp.eq.s32.totalorder %s17, 0
    %p121 = por %p119, %p120
    %p122 = scmp.ne.s32.totalorder %s114, %s116
    %p123 = scmp.eq.s32.totalorder %s22, 1
    %p124 = por %p122, %p123
    %p125 = scmp.ne.s32.totalorder %s116, %s117
    %p126 = scmp.eq.s32.totalorder %s22, 0
    %p127 = por %p125, %p126
    %p128 = scmp.ne.s32.totalorder %s116, %s117
    %p129 = scmp.eq.s32.totalorder %s23, 1
    %p130 = por %p128, %p129
    %p132 = scmp.ne.s32.totalorder %s117, %s131
    %p133 = scmp.eq.s32.totalorder %s23, 0
    %p134 = por %p132, %p133
    %s136 = sadd.s32 %s135, 1
    %p139 = scmp.eq.s32.totalorder %s17, 1
    %p140 = scmp.ne.s32.totalorder %s135, %s137
    %p141 = scmp.eq.s32.totalorder %s17, 0
    %p142 = por %p140, %p141
    %p143 = scmp.ne.s32.totalorder %s135, %s137
    %p144 = scmp.eq.s32.totalorder %s22, 1
    %p145 = por %p143, %p144
    %p146 = scmp.ne.s32.totalorder %s137, %s138
    %p147 = scmp.eq.s32.totalorder %s22, 0
    %p148 = por %p146, %p147
    %p149 = scmp.ne.s32.totalorder %s137, %s138
    %p150 = scmp.eq.s32.totalorder %s23, 1
    %p151 = por %p149, %p150
    %p153 = scmp.ne.s32.totalorder %s138, %s152
    %p154 = scmp.eq.s32.totalorder %s23, 0
    %p155 = por %p153, %p154
    %s157 = sadd.s32 %s156, 1
    %p160 = scmp.eq.s32.totalorder %s17, 1
    %p161 = scmp.ne.s32.totalorder %s156, %s158
    %p162 = scmp.eq.s32.totalorder %s17, 0
    %p163 = por %p161, %p162
    %p164 = scmp.ne.s32.totalorder %s156, %s158
    %p165 = scmp.eq.s32.totalorder %s22, 1
    %p166 = por %p164, %p165
    %p167 = scmp.ne.s32.totalorder %s158, %s159
    %p168 = scmp.eq.s32.totalorder %s22, 0
    %p169 = por %p167, %p168
    %p170 = scmp.ne.s32.totalorder %s158, %s159
    %p171 = scmp.eq.s32.totalorder %s23, 1
    %p172 = por %p170, %p171
    %p174 = scmp.ne.s32.totalorder %s159, %s173
    %p175 = scmp.eq.s32.totalorder %s23, 0
    %p176 = por %p174, %p175
    %s178 = sadd.s32 %s177, 1
    %p181 = scmp.eq.s32.totalorder %s17, 1
    %p182 = scmp.ne.s32.totalorder %s177, %s179
    %p183 = scmp.eq.s32.totalorder %s17, 0
    %p184 = por %p182, %p183
    %p185 = scmp.ne.s32.totalorder %s177, %s179
    %p186 = scmp.eq.s32.totalorder %s22, 1
    %p187 = por %p185, %p186
    %p188 = scmp.ne.s32.totalorder %s179, %s180
    %p189 = scmp.eq.s32.totalorder %s22, 0
    %p190 = por %p188, %p189
    %p191 = scmp.ne.s32.totalorder %s179, %s180
    %p192 = scmp.eq.s32.totalorder %s23, 1
    %p193 = por %p191, %p192
    %p195 = scmp.ne.s32.totalorder %s180, %s194
    %p196 = scmp.eq.s32.totalorder %s23, 0
    %p197 = por %p195, %p196
    %s199 = sadd.s32 %s198, 1
    %p202 = scmp.eq.s32.totalorder %s17, 1
    %p203 = scmp.ne.s32.totalorder %s198, %s200
    %p204 = scmp.eq.s32.totalorder %s17, 0
    %p205 = por %p203, %p204
    %p206 = scmp.ne.s32.totalorder %s198, %s200
    %p207 = scmp.eq.s32.totalorder %s22, 1
    %p208 = por %p206, %p207
    %p209 = scmp.ne.s32.totalorder %s200, %s201
    %p210 = scmp.eq.s32.totalorder %s22, 0
    %p211 = por %p209, %p210
    %p212 = scmp.ne.s32.totalorder %s200, %s201
    %p213 = scmp.eq.s32.totalorder %s23, 1
    %p214 = por %p212, %p213
    %p216 = scmp.ne.s32.totalorder %s201, %s215
    %p217 = scmp.eq.s32.totalorder %s23, 0
    %p218 = por %p216, %p217
    %s220 = sadd.s32 %s219, 1
    %p223 = scmp.eq.s32.totalorder %s17, 1
    %p224 = scmp.ne.s32.totalorder %s219, %s221
    %p225 = scmp.eq.s32.totalorder %s17, 0
    %p226 = por %p224, %p225
    %p227 = scmp.ne.s32.totalorder %s219, %s221
    %p228 = scmp.eq.s32.totalorder %s22, 1
    %p229 = por %p227, %p228
    %p230 = scmp.ne.s32.totalorder %s221, %s222
    %p231 = scmp.eq.s32.totalorder %s22, 0
    %p232 = por %p230, %p231
    %p233 = scmp.ne.s32.totalorder %s221, %s222
    %p234 = scmp.eq.s32.totalorder %s23, 1
    %p235 = por %p233, %p234
    %p237 = scmp.ne.s32.totalorder %s222, %s236
    %p238 = scmp.eq.s32.totalorder %s23, 0
    %p239 = por %p237, %p238
    %s241 = sadd.s32 %s240, 1
    %p244 = scmp.eq.s32.totalorder %s17, 1
    %p245 = scmp.ne.s32.totalorder %s240, %s242
    %p246 = scmp.eq.s32.totalorder %s17, 0
    %p247 = por %p245, %p246
    %p248 = scmp.ne.s32.totalorder %s240, %s242
    %p249 = scmp.eq.s32.totalorder %s22, 1
    %p250 = por %p248, %p249
    %p251 = scmp.ne.s32.totalorder %s242, %s243
    %p252 = scmp.eq.s32.totalorder %s22, 0
    %p253 = por %p251, %p252
    %p254 = scmp.ne.s32.totalorder %s242, %s243
    %p255 = scmp.eq.s32.totalorder %s23, 1
    %p256 = por %p254, %p255
    %p258 = scmp.ne.s32.totalorder %s243, %s257
    %p259 = scmp.eq.s32.totalorder %s23, 0
    %p260 = por %p258, %p259
    %s261 = ssub.s32 %s17, %s24
    %p262 = scmp.eq.s32.totalorder %s261, 0
    %s264 = sadd.s32 %s263, 1
    %s265 = scalar_select %p262, %s263, %s264
    %p268 = pneg %p262
    %p269 = scmp.eq.s32.totalorder %s17, 1
    %p270 = por %p268, %p269
    %p271 = scmp.ne.s32.totalorder %s263, %s266
    %p272 = scmp.eq.s32.totalorder %s17, 0
    %p273 = por %p271, %p272
    %p274 = scmp.ne.s32.totalorder %s263, %s266
    %p275 = scmp.eq.s32.totalorder %s22, 1
    %p276 = por %p274, %p275
    %p277 = scmp.ne.s32.totalorder %s266, %s267
    %p278 = scmp.eq.s32.totalorder %s22, 0
    %p279 = por %p277, %p278
    %p280 = scmp.ne.s32.totalorder %s266, %s267
    %p281 = scmp.eq.s32.totalorder %s23, 1
    %p282 = por %p280, %p281
    %p284 = scmp.ne.s32.totalorder %s267, %s283
    %p285 = scmp.eq.s32.totalorder %s23, 0
    %p286 = por %p284, %p285
    %p287 = scmp.le.s32.totalorder 1, %s17
    %p288 = scmp.lt.s32.totalorder %s17, 3
    %p289 = pnand %p287, %p288
    %p290 = pneg %p289
    // Predicated region
    $region9: #{residual_dense_block_5c.1} parent=5 // pred_check
      _
    $region10: #{residual_dense_block_5c.1} parent=5 // pred_check_branch
      %292 = sbr.rel (%p289) target = $region12
    $region11: #{residual_dense_block_5c.1} parent=5 // pred_region
      %s293 = ssub.s32 %s17, 1
      // Predicated region
      $region13: #{residual_dense_block_5c.1} parent=11 // pred_check
        %p294 = pneg %p64
      $region14: #{residual_dense_block_5c.1} parent=11 // pred_check_branch
        %296 = sbr.rel (%p294) target = $region16
      $region15: #{residual_dense_block_5c.1} parent=11 // pred_region
        _
      $region16: #{residual_dense_block_5c.1} parent=11 // pred_fallthru
        _
      // Predicated region
      $region17: #{residual_dense_block_5c.1} parent=11 // pred_check
        %p297 = pneg %p85
      $region18: #{residual_dense_block_5c.1} parent=11 // pred_check_branch
        %299 = sbr.rel (%p297) target = $region20
      $region19: #{residual_dense_block_5c.1} parent=11 // pred_region
        _
      $region20: #{residual_dense_block_5c.1} parent=11 // pred_fallthru
        _
      // Predicated region
      $region21: #{residual_dense_block_5c.1} parent=11 // pred_check
        %p300 = pneg %p106
      $region22: #{residual_dense_block_5c.1} parent=11 // pred_check_branch
        %302 = sbr.rel (%p300) target = $region24
      $region23: #{residual_dense_block_5c.1} parent=11 // pred_region
        _
      $region24: #{residual_dense_block_5c.1} parent=11 // pred_fallthru
        _
      // Predicated region
      $region25: #{residual_dense_block_5c.1} parent=11 // pred_check
        %p303 = pneg %p127
      $region26: #{residual_dense_block_5c.1} parent=11 // pred_check_branch
        %305 = sbr.rel (%p303) target = $region28
      $region27: #{residual_dense_block_5c.1} parent=11 // pred_region
        _
      $region28: #{residual_dense_block_5c.1} parent=11 // pred_fallthru
        _
      // Predicated region
      $region29: #{residual_dense_block_5c.1} parent=11 // pred_check
        %p306 = pneg %p148
      $region30: #{residual_dense_block_5c.1} parent=11 // pred_check_branch
        %308 = sbr.rel (%p306) target = $region32
      $region31: #{residual_dense_block_5c.1} parent=11 // pred_region
        _
      $region32: #{residual_dense_block_5c.1} parent=11 // pred_fallthru
        _
      // Predicated region
      $region33: #{residual_dense_block_5c.1} parent=11 // pred_check
        %p309 = pneg %p169
      $region34: #{residual_dense_block_5c.1} parent=11 // pred_check_branch
        %311 = sbr.rel (%p309) target = $region36
      $region35: #{residual_dense_block_5c.1} parent=11 // pred_region
        _
      $region36: #{residual_dense_block_5c.1} parent=11 // pred_fallthru
        _
      // Predicated region
      $region37: #{residual_dense_block_5c.1} parent=11 // pred_check
        %p312 = pneg %p190
      $region38: #{residual_dense_block_5c.1} parent=11 // pred_check_branch
        %314 = sbr.rel (%p312) target = $region40
      $region39: #{residual_dense_block_5c.1} parent=11 // pred_region
        _
      $region40: #{residual_dense_block_5c.1} parent=11 // pred_fallthru
        _
      // Predicated region
      $region41: #{residual_dense_block_5c.1} parent=11 // pred_check
        %p315 = pneg %p211
      $region42: #{residual_dense_block_5c.1} parent=11 // pred_check_branch
        %317 = sbr.rel (%p315) target = $region44
      $region43: #{residual_dense_block_5c.1} parent=11 // pred_region
        _
      $region44: #{residual_dense_block_5c.1} parent=11 // pred_fallthru
        _
      // Predicated region
      $region45: #{residual_dense_block_5c.1} parent=11 // pred_check
        %p318 = pneg %p232
      $region46: #{residual_dense_block_5c.1} parent=11 // pred_check_branch
        %320 = sbr.rel (%p318) target = $region48
      $region47: #{residual_dense_block_5c.1} parent=11 // pred_region
        _
      $region48: #{residual_dense_block_5c.1} parent=11 // pred_fallthru
        _
      // Predicated region
      $region49: #{residual_dense_block_5c.1} parent=11 // pred_check
        %p321 = pneg %p253
      $region50: #{residual_dense_block_5c.1} parent=11 // pred_check_branch
        %323 = sbr.rel (%p321) target = $region52
      $region51: #{residual_dense_block_5c.1} parent=11 // pred_region
        _
      $region52: #{residual_dense_block_5c.1} parent=11 // pred_fallthru
        _
    $region12: #{residual_dense_block_5c.1} parent=5 // pred_fallthru
      _
    %p324 = scmp.lt.s32.totalorder %s17, 2
    // Predicated region
    $region53: #{residual_dense_block_5c.1} parent=5 // pred_check
      %p325 = pneg %p324
    $region54: #{residual_dense_block_5c.1} parent=5 // pred_check_branch
      %327 = sbr.rel (%p325) target = $region56
    $region55: #{residual_dense_block_5c.1} parent=5 // pred_region
      // Predicated region
      $region57: #{residual_dense_block_5c.1} parent=55 // pred_check
        %p328 = pneg %p37
      $region58: #{residual_dense_block_5c.1} parent=55 // pred_check_branch
        %330 = sbr.rel (%p328) target = $region60
      $region59: #{residual_dense_block_5c.1} parent=55 // pred_region
        %p331 = scmp.lt.s32.totalorder %s17, 1
        %s332 = scalar_select %p331, %s17, 1
        %s333 = smul.addr %s332, 32
        %s334 = smul.addr %s333, 8
        %s335 = scalar_lea.vmem %s0, %s334
      $region60: #{residual_dense_block_5c.1} parent=55 // pred_fallthru
        _
    $region56: #{residual_dense_block_5c.1} parent=5 // pred_fallthru
      _
    %p336 = scmp.le.s32.totalorder 1, %s17
    %p337 = scmp.lt.s32.totalorder %s17, 3
    %p338 = pnand %p336, %p337
    %p339 = pneg %p338
    // Predicated region
    $region61: #{residual_dense_block_5c.1} parent=5 // pred_check
      _
    $region62: #{residual_dense_block_5c.1} parent=5 // pred_check_branch
      %341 = sbr.rel (%p338) target = $region64
    $region63: #{residual_dense_block_5c.1} parent=5 // pred_region
      %s342 = ssub.s32 %s17, 1
      %p343 = scmp.lt.s32.totalorder %s22, 1
      %s344 = scalar_select %p343, %s22, 1
      %s345 = smul.addr %s344, 32
      %s346 = smul.addr %s345, 8
      %s347 = scalar_lea.vmem %s0, %s346
      %p348 = pneg %p43
      %p349 = pneg %p40
      %p350 = pneg %p64
      %p351 = pneg %p61
      %p352 = pneg %p85
      %p353 = pneg %p82
      %p354 = pneg %p106
      %p355 = pneg %p103
      %p356 = pneg %p127
      %p357 = pneg %p124
      %p358 = pneg %p148
      %p359 = pneg %p145
      %p360 = pneg %p169
      %p361 = pneg %p166
      %p362 = pneg %p190
      %p363 = pneg %p187
      %p364 = pneg %p211
      %p365 = pneg %p208
      %p366 = pneg %p232
      %p367 = pneg %p229
      %p368 = pneg %p253
      %p369 = pneg %p250
      %p370 = pneg %p279
      %p371 = pneg %p276
      %p372 = scmp.lt.s32.totalorder %s22, 1
      %s373 = scalar_select %p372, %s22, 1
      %s374 = smul.addr %s373, 32
      %s375 = smul.addr %s374, 8
      %s376 = scalar_lea.vmem %s11, %s375
      %p377 = scmp.lt.s32.totalorder %s22, 1
      %s378 = scalar_select %p377, %s22, 1
      %s379 = smul.addr %s378, 32
      %s380 = smul.addr %s379, 8
      %s381 = scalar_lea.vmem %s0, %s380
      %p382 = scmp.lt.s32.totalorder %s22, 1
      %s383 = scalar_select %p382, %s22, 1
      %s384 = smul.addr %s383, 32
      %s385 = smul.addr %s384, 8
      %s386 = scalar_lea.vmem %s11, %s385
      %v387 = vld [vmem:[%s381] sm:$0xff]
      %v388 = vld [vmem:[%s381 + $0x8] sm:$0xff]
      %v389 = vld [vmem:[%s381 + $0x10] sm:$0xff]
      %v390 = vld [vmem:[%s381 + $0x18] sm:$0xff]
      %v391 = vld [vmem:[%s381 + $0x20] sm:$0xff]
      %v392 = vld [vmem:[%s381 + $0x28] sm:$0xff]
      %v393 = vld [vmem:[%s381 + $0x30] sm:$0xff]
      %v394 = vld [vmem:[%s381 + $0x38] sm:$0xff]
      %v395 = vld [vmem:[%s381 + $0x40] sm:$0xff]
      %v396 = vld [vmem:[%s381 + $0x48] sm:$0xff]
      %v397 = vld [vmem:[%s381 + $0x50] sm:$0xff]
      %v398 = vld [vmem:[%s381 + $0x58] sm:$0xff]
      %v399 = vld [vmem:[%s381 + $0x60] sm:$0xff]
      %v400 = vld [vmem:[%s381 + $0x68] sm:$0xff]
      %v401 = vld [vmem:[%s381 + $0x70] sm:$0xff]
      %v402 = vld [vmem:[%s381 + $0x78] sm:$0xff]
      %v403 = vld [vmem:[%s381 + $0x80] sm:$0xff]
      %v404 = vld [vmem:[%s381 + $0x88] sm:$0xff]
      %v405 = vld [vmem:[%s381 + $0x90] sm:$0xff]
      %v406 = vld [vmem:[%s381 + $0x98] sm:$0xff]
      %v407 = vld [vmem:[%s381 + $0xa0] sm:$0xff]
      %v408 = vld [vmem:[%s381 + $0xa8] sm:$0xff]
      %v409 = vld [vmem:[%s381 + $0xb0] sm:$0xff]
      %v410 = vld [vmem:[%s381 + $0xb8] sm:$0xff]
      %v411 = vld [vmem:[%s381 + $0xc0] sm:$0xff]
      %v412 = vld [vmem:[%s381 + $0xc8] sm:$0xff]
      %v413 = vld [vmem:[%s381 + $0xd0] sm:$0xff]
      %v414 = vld [vmem:[%s381 + $0xd8] sm:$0xff]
      %v415 = vld [vmem:[%s381 + $0xe0] sm:$0xff]
      %v416 = vld [vmem:[%s381 + $0xe8] sm:$0xff]
      %v417 = vld [vmem:[%s381 + $0xf0] sm:$0xff]
      %v418 = vld [vmem:[%s381 + $0xf8] sm:$0xff]
      %vm452 = vcmask 1040384
      %v453 = vrot.slane 0.0, 7
      %v454 = vsel %vm452, %v453, %v453
      %v455 = vrot.slane %v387, 7
      %v456 = vrot.slane %v388, 7
      %v457 = vsel %vm452, %v455, %v456
      %v458 = vrot.slane %v389, 7
      %v459 = vrot.slane %v390, 7
      %v460 = vsel %vm452, %v458, %v459
      %v461 = vrot.slane %v391, 7
      %v462 = vrot.slane %v392, 7
      %v463 = vsel %vm452, %v461, %v462
      %v464 = vrot.slane %v393, 7
      %v465 = vrot.slane %v394, 7
      %v466 = vsel %vm452, %v464, %v465
      %v467 = vrot.slane %v395, 7
      %v468 = vrot.slane %v396, 7
      %v469 = vsel %vm452, %v467, %v468
      %v470 = vrot.slane %v397, 7
      %v471 = vrot.slane %v398, 7
      %v472 = vsel %vm452, %v470, %v471
      %v473 = vrot.slane %v399, 7
      %v474 = vrot.slane %v400, 7
      %v475 = vsel %vm452, %v473, %v474
      %v476 = vrot.slane %v401, 7
      %v477 = vrot.slane %v402, 7
      %v478 = vsel %vm452, %v476, %v477
      %v479 = vrot.slane %v403, 7
      %v480 = vrot.slane %v404, 7
      %v481 = vsel %vm452, %v479, %v480
      %v482 = vrot.slane %v405, 7
      %v483 = vrot.slane %v406, 7
      %v484 = vsel %vm452, %v482, %v483
      %v485 = vrot.slane %v407, 7
      %v486 = vrot.slane %v408, 7
      %v487 = vsel %vm452, %v485, %v486
      %v488 = vrot.slane %v409, 7
      %v489 = vrot.slane %v410, 7
      %v490 = vsel %vm452, %v488, %v489
      %v491 = vrot.slane %v411, 7
      %v492 = vrot.slane %v412, 7
      %v493 = vsel %vm452, %v491, %v492
      %v494 = vrot.slane %v413, 7
      %v495 = vrot.slane %v414, 7
      %v496 = vsel %vm452, %v494, %v495
      %v497 = vrot.slane %v415, 7
      %v498 = vrot.slane %v416, 7
      %v499 = vsel %vm452, %v497, %v498
      %v500 = vrot.slane %v417, 7
      %v501 = vrot.slane %v418, 7
      %v502 = vsel %vm452, %v500, %v501
      %v553 = vsel %vm452, 0.0, %v453
      %v554 = vsel %vm452, 0.0, %v455
      %v555 = vsel %vm452, 0.0, %v458
      %v556 = vsel %vm452, 0.0, %v461
      %v557 = vsel %vm452, 0.0, %v464
      %v558 = vsel %vm452, 0.0, %v467
      %v559 = vsel %vm452, 0.0, %v470
      %v560 = vsel %vm452, 0.0, %v473
      %v561 = vsel %vm452, 0.0, %v476
      %v562 = vsel %vm452, 0.0, %v479
      %v563 = vsel %vm452, 0.0, %v482
      %v564 = vsel %vm452, 0.0, %v485
      %v565 = vsel %vm452, 0.0, %v488
      %v566 = vsel %vm452, 0.0, %v491
      %v567 = vsel %vm452, 0.0, %v494
      %v568 = vsel %vm452, 0.0, %v497
      %v569 = vsel %vm452, 0.0, %v500
      %v570 = vsel %vm452, %v453, 0.0
      %v571 = vsel %vm452, %v456, 0.0
      %v572 = vsel %vm452, %v459, 0.0
      %v573 = vsel %vm452, %v462, 0.0
      %v574 = vsel %vm452, %v465, 0.0
      %v575 = vsel %vm452, %v468, 0.0
      %v576 = vsel %vm452, %v471, 0.0
      %v577 = vsel %vm452, %v474, 0.0
      %v578 = vsel %vm452, %v477, 0.0
      %v579 = vsel %vm452, %v480, 0.0
      %v580 = vsel %vm452, %v483, 0.0
      %v581 = vsel %vm452, %v486, 0.0
      %v582 = vsel %vm452, %v489, 0.0
      %v583 = vsel %vm452, %v492, 0.0
      %v584 = vsel %vm452, %v495, 0.0
      %v585 = vsel %vm452, %v498, 0.0
      %v586 = vsel %vm452, %v501, 0.0
      %vm619 = vcmask 1046528
      %v620 = vrot.slane %v553, 1
      %v621 = vrot.slane %v454, 1
      %v622 = vsel %vm619, %v620, %v621
      %v623 = vrot.slane %v570, 1
      %v624 = vsel %vm619, %v621, %v623
      %v625 = vrot.slane %v554, 1
      %v626 = vrot.slane %v457, 1
      %v627 = vsel %vm619, %v625, %v626
      %v628 = vrot.slane %v571, 1
      %v629 = vsel %vm619, %v626, %v628
      %v630 = vrot.slane %v555, 1
      %v631 = vrot.slane %v460, 1
      %v632 = vsel %vm619, %v630, %v631
      %v633 = vrot.slane %v572, 1
      %v634 = vsel %vm619, %v631, %v633
      %v635 = vrot.slane %v556, 1
      %v636 = vrot.slane %v463, 1
      %v637 = vsel %vm619, %v635, %v636
      %v638 = vrot.slane %v573, 1
      %v639 = vsel %vm619, %v636, %v638
      %v640 = vrot.slane %v557, 1
      %v641 = vrot.slane %v466, 1
      %v642 = vsel %vm619, %v640, %v641
      %v643 = vrot.slane %v574, 1
      %v644 = vsel %vm619, %v641, %v643
      %v645 = vrot.slane %v558, 1
      %v646 = vrot.slane %v469, 1
      %v647 = vsel %vm619, %v645, %v646
      %v648 = vrot.slane %v575, 1
      %v649 = vsel %vm619, %v646, %v648
      %v650 = vrot.slane %v559, 1
      %v651 = vrot.slane %v472, 1
      %v652 = vsel %vm619, %v650, %v651
      %v653 = vrot.slane %v576, 1
      %v654 = vsel %vm619, %v651, %v653
      %v655 = vrot.slane %v560, 1
      %v656 = vrot.slane %v475, 1
      %v657 = vsel %vm619, %v655, %v656
      %v658 = vrot.slane %v577, 1
      %v659 = vsel %vm619, %v656, %v658
      %v660 = vrot.slane %v561, 1
      %v661 = vrot.slane %v478, 1
      %v662 = vsel %vm619, %v660, %v661
      %v663 = vrot.slane %v578, 1
      %v664 = vsel %vm619, %v661, %v663
      %v665 = vrot.slane %v562, 1
      %v666 = vrot.slane %v481, 1
      %v667 = vsel %vm619, %v665, %v666
      %v668 = vrot.slane %v579, 1
      %v669 = vsel %vm619, %v666, %v668
      %v670 = vrot.slane %v563, 1
      %v671 = vrot.slane %v484, 1
      %v672 = vsel %vm619, %v670, %v671
      %v673 = vrot.slane %v580, 1
      %v674 = vsel %vm619, %v671, %v673
      %v675 = vrot.slane %v564, 1
      %v676 = vrot.slane %v487, 1
      %v677 = vsel %vm619, %v675, %v676
      %v678 = vrot.slane %v581, 1
      %v679 = vsel %vm619, %v676, %v678
      %v680 = vrot.slane %v565, 1
      %v681 = vrot.slane %v490, 1
      %v682 = vsel %vm619, %v680, %v681
      %v683 = vrot.slane %v582, 1
      %v684 = vsel %vm619, %v681, %v683
      %v685 = vrot.slane %v566, 1
      %v686 = vrot.slane %v493, 1
      %v687 = vsel %vm619, %v685, %v686
      %v688 = vrot.slane %v583, 1
      %v689 = vsel %vm619, %v686, %v688
      %v690 = vrot.slane %v567, 1
      %v691 = vrot.slane %v496, 1
      %v692 = vsel %vm619, %v690, %v691
      %v693 = vrot.slane %v584, 1
      %v694 = vsel %vm619, %v691, %v693
      %v695 = vrot.slane %v568, 1
      %v696 = vrot.slane %v499, 1
      %v697 = vsel %vm619, %v695, %v696
      %v698 = vrot.slane %v585, 1
      %v699 = vsel %vm619, %v696, %v698
      %vm700 = vcmask 1045504
      %v701 = vrot.slane %v553, 2
      %v702 = vrot.slane %v454, 2
      %v703 = vsel %vm700, %v701, %v702
      %v704 = vrot.slane %v570, 2
      %v705 = vsel %vm700, %v702, %v704
      %v706 = vrot.slane %v554, 2
      %v707 = vrot.slane %v457, 2
      %v708 = vsel %vm700, %v706, %v707
      %v709 = vrot.slane %v571, 2
      %v710 = vsel %vm700, %v707, %v709
      %v711 = vrot.slane %v555, 2
      %v712 = vrot.slane %v460, 2
      %v713 = vsel %vm700, %v711, %v712
      %v714 = vrot.slane %v572, 2
      %v715 = vsel %vm700, %v712, %v714
      %v716 = vrot.slane %v556, 2
      %v717 = vrot.slane %v463, 2
      %v718 = vsel %vm700, %v716, %v717
      %v719 = vrot.slane %v573, 2
      %v720 = vsel %vm700, %v717, %v719
      %v721 = vrot.slane %v557, 2
      %v722 = vrot.slane %v466, 2
      %v723 = vsel %vm700, %v721, %v722
      %v724 = vrot.slane %v574, 2
      %v725 = vsel %vm700, %v722, %v724
      %v726 = vrot.slane %v558, 2
      %v727 = vrot.slane %v469, 2
      %v728 = vsel %vm700, %v726, %v727
      %v729 = vrot.slane %v575, 2
      %v730 = vsel %vm700, %v727, %v729
      %v731 = vrot.slane %v559, 2
      %v732 = vrot.slane %v472, 2
      %v733 = vsel %vm700, %v731, %v732
      %v734 = vrot.slane %v576, 2
      %v735 = vsel %vm700, %v732, %v734
      %v736 = vrot.slane %v560, 2
      %v737 = vrot.slane %v475, 2
      %v738 = vsel %vm700, %v736, %v737
      %v739 = vrot.slane %v577, 2
      %v740 = vsel %vm700, %v737, %v739
      %v741 = vrot.slane %v561, 2
      %v742 = vrot.slane %v478, 2
      %v743 = vsel %vm700, %v741, %v742
      %v744 = vrot.slane %v578, 2
      %v745 = vsel %vm700, %v742, %v744
      %v746 = vrot.slane %v562, 2
      %v747 = vrot.slane %v481, 2
      %v748 = vsel %vm700, %v746, %v747
      %v749 = vrot.slane %v579, 2
      %v750 = vsel %vm700, %v747, %v749
      %v751 = vrot.slane %v563, 2
      %v752 = vrot.slane %v484, 2
      %v753 = vsel %vm700, %v751, %v752
      %v754 = vrot.slane %v580, 2
      %v755 = vsel %vm700, %v752, %v754
      %v756 = vrot.slane %v564, 2
      %v757 = vrot.slane %v487, 2
      %v758 = vsel %vm700, %v756, %v757
      %v759 = vrot.slane %v581, 2
      %v760 = vsel %vm700, %v757, %v759
      %v761 = vrot.slane %v565, 2
      %v762 = vrot.slane %v490, 2
      %v763 = vsel %vm700, %v761, %v762
      %v764 = vrot.slane %v582, 2
      %v765 = vsel %vm700, %v762, %v764
      %v766 = vrot.slane %v566, 2
      %v767 = vrot.slane %v493, 2
      %v768 = vsel %vm700, %v766, %v767
      %v769 = vrot.slane %v583, 2
      %v770 = vsel %vm700, %v767, %v769
      %v771 = vrot.slane %v567, 2
      %v772 = vrot.slane %v496, 2
      %v773 = vsel %vm700, %v771, %v772
      %v774 = vrot.slane %v584, 2
      %v775 = vsel %vm700, %v772, %v774
      %v776 = vrot.slane %v568, 2
      %v777 = vrot.slane %v499, 2
      %v778 = vsel %vm700, %v776, %v777
      %v779 = vrot.slane %v585, 2
      %v780 = vsel %vm700, %v777, %v779
      %v783 = vrot.slane %v569, 1
      %v784 = vrot.slane %v502, 1
      %v785 = vsel %vm619, %v783, %v784
      %v786 = vrot.slane %v586, 1
      %v787 = vsel %vm619, %v784, %v786
      %v788 = vrot.slane %v569, 2
      %v789 = vrot.slane %v502, 2
      %v790 = vsel %vm700, %v788, %v789
      %v791 = vrot.slane %v586, 2
      %v792 = vsel %vm700, %v789, %v791
      %793 = vrot.lane.b32.xlu0 %v622, 16
      %v794 = vpop.permute.xlu0 %793
      %795 = vrot.lane.b32.xlu0 %v624, 16
      %v796 = vpop.permute.xlu0 %795
      %797 = vrot.lane.b32.xlu0 %v627, 16
      %v798 = vpop.permute.xlu0 %797
      %799 = vrot.lane.b32.xlu0 %v629, 16
      %v800 = vpop.permute.xlu0 %799
      %801 = vrot.lane.b32.xlu0 %v632, 16
      %v802 = vpop.permute.xlu0 %801
      %803 = vrot.lane.b32.xlu0 %v634, 16
      %v804 = vpop.permute.xlu0 %803
      %805 = vrot.lane.b32.xlu0 %v637, 16
      %v806 = vpop.permute.xlu0 %805
      %807 = vrot.lane.b32.xlu0 %v639, 16
      %v808 = vpop.permute.xlu0 %807
      %809 = vrot.lane.b32.xlu0 %v642, 16
      %v810 = vpop.permute.xlu0 %809
      %811 = vrot.lane.b32.xlu0 %v644, 16
      %v812 = vpop.permute.xlu0 %811
      %813 = vrot.lane.b32.xlu0 %v647, 16
      %v814 = vpop.permute.xlu0 %813
      %815 = vrot.lane.b32.xlu0 %v649, 16
      %v816 = vpop.permute.xlu0 %815
      %817 = vrot.lane.b32.xlu0 %v652, 16
      %v818 = vpop.permute.xlu0 %817
      %819 = vrot.lane.b32.xlu0 %v654, 16
      %v820 = vpop.permute.xlu0 %819
      %821 = vrot.lane.b32.xlu0 %v657, 16
      %v822 = vpop.permute.xlu0 %821
      %823 = vrot.lane.b32.xlu0 %v659, 16
      %v824 = vpop.permute.xlu0 %823
      %825 = vrot.lane.b32.xlu0 %v662, 16
      %v826 = vpop.permute.xlu0 %825
      %827 = vrot.lane.b32.xlu0 %v664, 16
      %v828 = vpop.permute.xlu0 %827
      %829 = vrot.lane.b32.xlu0 %v667, 16
      %v830 = vpop.permute.xlu0 %829
      %831 = vrot.lane.b32.xlu0 %v669, 16
      %v832 = vpop.permute.xlu0 %831
      %833 = vrot.lane.b32.xlu0 %v672, 16
      %v834 = vpop.permute.xlu0 %833
      %835 = vrot.lane.b32.xlu0 %v674, 16
      %v836 = vpop.permute.xlu0 %835
      %837 = vrot.lane.b32.xlu0 %v677, 16
      %v838 = vpop.permute.xlu0 %837
      %839 = vrot.lane.b32.xlu0 %v679, 16
      %v840 = vpop.permute.xlu0 %839
      %841 = vrot.lane.b32.xlu0 %v682, 16
      %v842 = vpop.permute.xlu0 %841
      %843 = vrot.lane.b32.xlu0 %v684, 16
      %v844 = vpop.permute.xlu0 %843
      %845 = vrot.lane.b32.xlu0 %v687, 16
      %v846 = vpop.permute.xlu0 %845
      %847 = vrot.lane.b32.xlu0 %v689, 16
      %v848 = vpop.permute.xlu0 %847
      %849 = vrot.lane.b32.xlu0 %v692, 16
      %v850 = vpop.permute.xlu0 %849
      %851 = vrot.lane.b32.xlu0 %v694, 16
      %v852 = vpop.permute.xlu0 %851
      %853 = vrot.lane.b32.xlu0 %v697, 16
      %v854 = vpop.permute.xlu0 %853
      %855 = vrot.lane.b32.xlu0 %v699, 16
      %v856 = vpop.permute.xlu0 %855
      %889 = vrot.lane.b32.xlu0 %v703, 32
      %v890 = vpop.permute.xlu0 %889
      %891 = vrot.lane.b32.xlu0 %v705, 32
      %v892 = vpop.permute.xlu0 %891
      %893 = vrot.lane.b32.xlu0 %v708, 32
      %v894 = vpop.permute.xlu0 %893
      %895 = vrot.lane.b32.xlu0 %v710, 32
      %v896 = vpop.permute.xlu0 %895
      %897 = vrot.lane.b32.xlu0 %v713, 32
      %v898 = vpop.permute.xlu0 %897
      %899 = vrot.lane.b32.xlu0 %v715, 32
      %v900 = vpop.permute.xlu0 %899
      %901 = vrot.lane.b32.xlu0 %v718, 32
      %v902 = vpop.permute.xlu0 %901
      %903 = vrot.lane.b32.xlu0 %v720, 32
      %v904 = vpop.permute.xlu0 %903
      %905 = vrot.lane.b32.xlu0 %v723, 32
      %v906 = vpop.permute.xlu0 %905
      %907 = vrot.lane.b32.xlu0 %v725, 32
      %v908 = vpop.permute.xlu0 %907
      %909 = vrot.lane.b32.xlu0 %v728, 32
      %v910 = vpop.permute.xlu0 %909
      %911 = vrot.lane.b32.xlu0 %v730, 32
      %v912 = vpop.permute.xlu0 %911
      %913 = vrot.lane.b32.xlu0 %v733, 32
      %v914 = vpop.permute.xlu0 %913
      %915 = vrot.lane.b32.xlu0 %v735, 32
      %v916 = vpop.permute.xlu0 %915
      %917 = vrot.lane.b32.xlu0 %v738, 32
      %v918 = vpop.permute.xlu0 %917
      %919 = vrot.lane.b32.xlu0 %v740, 32
      %v920 = vpop.permute.xlu0 %919
      %921 = vrot.lane.b32.xlu0 %v743, 32
      %v922 = vpop.permute.xlu0 %921
      %923 = vrot.lane.b32.xlu0 %v745, 32
      %v924 = vpop.permute.xlu0 %923
      %925 = vrot.lane.b32.xlu0 %v748, 32
      %v926 = vpop.permute.xlu0 %925
      %927 = vrot.lane.b32.xlu0 %v750, 32
      %v928 = vpop.permute.xlu0 %927
      %929 = vrot.lane.b32.xlu0 %v753, 32
      %v930 = vpop.permute.xlu0 %929
      %931 = vrot.lane.b32.xlu0 %v755, 32
      %v932 = vpop.permute.xlu0 %931
      %933 = vrot.lane.b32.xlu0 %v758, 32
      %v934 = vpop.permute.xlu0 %933
      %935 = vrot.lane.b32.xlu0 %v760, 32
      %v936 = vpop.permute.xlu0 %935
      %937 = vrot.lane.b32.xlu0 %v763, 32
      %v938 = vpop.permute.xlu0 %937
      %939 = vrot.lane.b32.xlu0 %v765, 32
      %v940 = vpop.permute.xlu0 %939
      %941 = vrot.lane.b32.xlu0 %v768, 32
      %v942 = vpop.permute.xlu0 %941
      %943 = vrot.lane.b32.xlu0 %v770, 32
      %v944 = vpop.permute.xlu0 %943
      %945 = vrot.lane.b32.xlu0 %v773, 32
      %v946 = vpop.permute.xlu0 %945
      %947 = vrot.lane.b32.xlu0 %v775, 32
      %v948 = vpop.permute.xlu0 %947
      %949 = vrot.lane.b32.xlu0 %v778, 32
      %v950 = vpop.permute.xlu0 %949
      %951 = vrot.lane.b32.xlu0 %v780, 32
      %v952 = vpop.permute.xlu0 %951
      %985 = vrot.lane.b32.xlu0 %v554, 48
      %v986 = vpop.permute.xlu0 %985
      %987 = vrot.lane.b32.xlu0 %v457, 48
      %v988 = vpop.permute.xlu0 %987
      %989 = vrot.lane.b32.xlu0 %v555, 48
      %v990 = vpop.permute.xlu0 %989
      %991 = vrot.lane.b32.xlu0 %v460, 48
      %v992 = vpop.permute.xlu0 %991
      %993 = vrot.lane.b32.xlu0 %v556, 48
      %v994 = vpop.permute.xlu0 %993
      %995 = vrot.lane.b32.xlu0 %v463, 48
      %v996 = vpop.permute.xlu0 %995
      %997 = vrot.lane.b32.xlu0 %v557, 48
      %v998 = vpop.permute.xlu0 %997
      %999 = vrot.lane.b32.xlu0 %v466, 48
      %v1000 = vpop.permute.xlu0 %999
      %1001 = vrot.lane.b32.xlu0 %v558, 48
      %v1002 = vpop.permute.xlu0 %1001
      %1003 = vrot.lane.b32.xlu0 %v469, 48
      %v1004 = vpop.permute.xlu0 %1003
      %1005 = vrot.lane.b32.xlu0 %v559, 48
      %v1006 = vpop.permute.xlu0 %1005
      %1007 = vrot.lane.b32.xlu0 %v472, 48
      %v1008 = vpop.permute.xlu0 %1007
      %1009 = vrot.lane.b32.xlu0 %v560, 48
      %v1010 = vpop.permute.xlu0 %1009
      %1011 = vrot.lane.b32.xlu0 %v475, 48
      %v1012 = vpop.permute.xlu0 %1011
      %1013 = vrot.lane.b32.xlu0 %v561, 48
      %v1014 = vpop.permute.xlu0 %1013
      %1015 = vrot.lane.b32.xlu0 %v478, 48
      %v1016 = vpop.permute.xlu0 %1015
      %1017 = vrot.lane.b32.xlu0 %v562, 48
      %v1018 = vpop.permute.xlu0 %1017
      %1019 = vrot.lane.b32.xlu0 %v481, 48
      %v1020 = vpop.permute.xlu0 %1019
      %1021 = vrot.lane.b32.xlu0 %v563, 48
      %v1022 = vpop.permute.xlu0 %1021
      %1023 = vrot.lane.b32.xlu0 %v484, 48
      %v1024 = vpop.permute.xlu0 %1023
      %1025 = vrot.lane.b32.xlu0 %v564, 48
      %v1026 = vpop.permute.xlu0 %1025
      %1027 = vrot.lane.b32.xlu0 %v487, 48
      %v1028 = vpop.permute.xlu0 %1027
      %1029 = vrot.lane.b32.xlu0 %v565, 48
      %v1030 = vpop.permute.xlu0 %1029
      %1031 = vrot.lane.b32.xlu0 %v490, 48
      %v1032 = vpop.permute.xlu0 %1031
      %1033 = vrot.lane.b32.xlu0 %v566, 48
      %v1034 = vpop.permute.xlu0 %1033
      %1035 = vrot.lane.b32.xlu0 %v493, 48
      %v1036 = vpop.permute.xlu0 %1035
      %1037 = vrot.lane.b32.xlu0 %v567, 48
      %v1038 = vpop.permute.xlu0 %1037
      %1039 = vrot.lane.b32.xlu0 %v496, 48
      %v1040 = vpop.permute.xlu0 %1039
      %1041 = vrot.lane.b32.xlu0 %v568, 48
      %v1042 = vpop.permute.xlu0 %1041
      %1043 = vrot.lane.b32.xlu0 %v499, 48
      %v1044 = vpop.permute.xlu0 %1043
      %1045 = vrot.lane.b32.xlu0 %v569, 48
      %v1046 = vpop.permute.xlu0 %1045
      %1047 = vrot.lane.b32.xlu0 %v502, 48
      %v1048 = vpop.permute.xlu0 %1047
      %1081 = vrot.lane.b32.xlu0 %v627, 64
      %v1082 = vpop.permute.xlu0 %1081
      %1083 = vrot.lane.b32.xlu0 %v629, 64
      %v1084 = vpop.permute.xlu0 %1083
      %1085 = vrot.lane.b32.xlu0 %v632, 64
      %v1086 = vpop.permute.xlu0 %1085
      %1087 = vrot.lane.b32.xlu0 %v634, 64
      %v1088 = vpop.permute.xlu0 %1087
      %1089 = vrot.lane.b32.xlu0 %v637, 64
      %v1090 = vpop.permute.xlu0 %1089
      %1091 = vrot.lane.b32.xlu0 %v639, 64
      %v1092 = vpop.permute.xlu0 %1091
      %1093 = vrot.lane.b32.xlu0 %v642, 64
      %v1094 = vpop.permute.xlu0 %1093
      %1095 = vrot.lane.b32.xlu0 %v644, 64
      %v1096 = vpop.permute.xlu0 %1095
      %1097 = vrot.lane.b32.xlu0 %v647, 64
      %v1098 = vpop.permute.xlu0 %1097
      %1099 = vrot.lane.b32.xlu0 %v649, 64
      %v1100 = vpop.permute.xlu0 %1099
      %1101 = vrot.lane.b32.xlu0 %v652, 64
      %v1102 = vpop.permute.xlu0 %1101
      %1103 = vrot.lane.b32.xlu0 %v654, 64
      %v1104 = vpop.permute.xlu0 %1103
      %1105 = vrot.lane.b32.xlu0 %v657, 64
      %v1106 = vpop.permute.xlu0 %1105
      %1107 = vrot.lane.b32.xlu0 %v659, 64
      %v1108 = vpop.permute.xlu0 %1107
      %1109 = vrot.lane.b32.xlu0 %v662, 64
      %v1110 = vpop.permute.xlu0 %1109
      %1111 = vrot.lane.b32.xlu0 %v664, 64
      %v1112 = vpop.permute.xlu0 %1111
      %1113 = vrot.lane.b32.xlu0 %v667, 64
      %v1114 = vpop.permute.xlu0 %1113
      %1115 = vrot.lane.b32.xlu0 %v669, 64
      %v1116 = vpop.permute.xlu0 %1115
      %1117 = vrot.lane.b32.xlu0 %v672, 64
      %v1118 = vpop.permute.xlu0 %1117
      %1119 = vrot.lane.b32.xlu0 %v674, 64
      %v1120 = vpop.permute.xlu0 %1119
      %1121 = vrot.lane.b32.xlu0 %v677, 64
      %v1122 = vpop.permute.xlu0 %1121
      %1123 = vrot.lane.b32.xlu0 %v679, 64
      %v1124 = vpop.permute.xlu0 %1123
      %1125 = vrot.lane.b32.xlu0 %v682, 64
      %v1126 = vpop.permute.xlu0 %1125
      %1127 = vrot.lane.b32.xlu0 %v684, 64
      %v1128 = vpop.permute.xlu0 %1127
      %1129 = vrot.lane.b32.xlu0 %v687, 64
      %v1130 = vpop.permute.xlu0 %1129
      %1131 = vrot.lane.b32.xlu0 %v689, 64
      %v1132 = vpop.permute.xlu0 %1131
      %1133 = vrot.lane.b32.xlu0 %v692, 64
      %v1134 = vpop.permute.xlu0 %1133
      %1135 = vrot.lane.b32.xlu0 %v694, 64
      %v1136 = vpop.permute.xlu0 %1135
      %1137 = vrot.lane.b32.xlu0 %v697, 64
      %v1138 = vpop.permute.xlu0 %1137
      %1139 = vrot.lane.b32.xlu0 %v699, 64
      %v1140 = vpop.permute.xlu0 %1139
      %1141 = vrot.lane.b32.xlu0 %v785, 64
      %v1142 = vpop.permute.xlu0 %1141
      %1143 = vrot.lane.b32.xlu0 %v787, 64
      %v1144 = vpop.permute.xlu0 %1143
      %1177 = vrot.lane.b32.xlu0 %v708, 80
      %v1178 = vpop.permute.xlu0 %1177
      %1179 = vrot.lane.b32.xlu0 %v710, 80
      %v1180 = vpop.permute.xlu0 %1179
      %1181 = vrot.lane.b32.xlu0 %v713, 80
      %v1182 = vpop.permute.xlu0 %1181
      %1183 = vrot.lane.b32.xlu0 %v715, 80
      %v1184 = vpop.permute.xlu0 %1183
      %1185 = vrot.lane.b32.xlu0 %v718, 80
      %v1186 = vpop.permute.xlu0 %1185
      %1187 = vrot.lane.b32.xlu0 %v720, 80
      %v1188 = vpop.permute.xlu0 %1187
      %1189 = vrot.lane.b32.xlu0 %v723, 80
      %v1190 = vpop.permute.xlu0 %1189
      %1191 = vrot.lane.b32.xlu0 %v725, 80
      %v1192 = vpop.permute.xlu0 %1191
      %1193 = vrot.lane.b32.xlu0 %v728, 80
      %v1194 = vpop.permute.xlu0 %1193
      %1195 = vrot.lane.b32.xlu0 %v730, 80
      %v1196 = vpop.permute.xlu0 %1195
      %1197 = vrot.lane.b32.xlu0 %v733, 80
      %v1198 = vpop.permute.xlu0 %1197
      %1199 = vrot.lane.b32.xlu0 %v735, 80
      %v1200 = vpop.permute.xlu0 %1199
      %1201 = vrot.lane.b32.xlu0 %v738, 80
      %v1202 = vpop.permute.xlu0 %1201
      %1203 = vrot.lane.b32.xlu0 %v740, 80
      %v1204 = vpop.permute.xlu0 %1203
      %1205 = vrot.lane.b32.xlu0 %v743, 80
      %v1206 = vpop.permute.xlu0 %1205
      %1207 = vrot.lane.b32.xlu0 %v745, 80
      %v1208 = vpop.permute.xlu0 %1207
      %1209 = vrot.lane.b32.xlu0 %v748, 80
      %v1210 = vpop.permute.xlu0 %1209
      %1211 = vrot.lane.b32.xlu0 %v750, 80
      %v1212 = vpop.permute.xlu0 %1211
      %1213 = vrot.lane.b32.xlu0 %v753, 80
      %v1214 = vpop.permute.xlu0 %1213
      %1215 = vrot.lane.b32.xlu0 %v755, 80
      %v1216 = vpop.permute.xlu0 %1215
      %1217 = vrot.lane.b32.xlu0 %v758, 80
      %v1218 = vpop.permute.xlu0 %1217
      %1219 = vrot.lane.b32.xlu0 %v760, 80
      %v1220 = vpop.permute.xlu0 %1219
      %1221 = vrot.lane.b32.xlu0 %v763, 80
      %v1222 = vpop.permute.xlu0 %1221
      %1223 = vrot.lane.b32.xlu0 %v765, 80
      %v1224 = vpop.permute.xlu0 %1223
      %1225 = vrot.lane.b32.xlu0 %v768, 80
      %v1226 = vpop.permute.xlu0 %1225
      %1227 = vrot.lane.b32.xlu0 %v770, 80
      %v1228 = vpop.permute.xlu0 %1227
      %1229 = vrot.lane.b32.xlu0 %v773, 80
      %v1230 = vpop.permute.xlu0 %1229
      %1231 = vrot.lane.b32.xlu0 %v775, 80
      %v1232 = vpop.permute.xlu0 %1231
      %1233 = vrot.lane.b32.xlu0 %v778, 80
      %v1234 = vpop.permute.xlu0 %1233
      %1235 = vrot.lane.b32.xlu0 %v780, 80
      %v1236 = vpop.permute.xlu0 %1235
      %1237 = vrot.lane.b32.xlu0 %v790, 80
      %v1238 = vpop.permute.xlu0 %1237
      %1239 = vrot.lane.b32.xlu0 %v792, 80
      %v1240 = vpop.permute.xlu0 %1239
      %1273 = vrot.lane.b32.xlu0 %v555, 96
      %v1274 = vpop.permute.xlu0 %1273
      %1275 = vrot.lane.b32.xlu0 %v460, 96
      %v1276 = vpop.permute.xlu0 %1275
      %1277 = vrot.lane.b32.xlu0 %v556, 96
      %v1278 = vpop.permute.xlu0 %1277
      %1279 = vrot.lane.b32.xlu0 %v463, 96
      %v1280 = vpop.permute.xlu0 %1279
      %1281 = vrot.lane.b32.xlu0 %v557, 96
      %v1282 = vpop.permute.xlu0 %1281
      %1283 = vrot.lane.b32.xlu0 %v466, 96
      %v1284 = vpop.permute.xlu0 %1283
      %1285 = vrot.lane.b32.xlu0 %v558, 96
      %v1286 = vpop.permute.xlu0 %1285
      %1287 = vrot.lane.b32.xlu0 %v469, 96
      %v1288 = vpop.permute.xlu0 %1287
      %1289 = vrot.lane.b32.xlu0 %v559, 96
      %v1290 = vpop.permute.xlu0 %1289
      %1291 = vrot.lane.b32.xlu0 %v472, 96
      %v1292 = vpop.permute.xlu0 %1291
      %1293 = vrot.lane.b32.xlu0 %v560, 96
      %v1294 = vpop.permute.xlu0 %1293
      %1295 = vrot.lane.b32.xlu0 %v475, 96
      %v1296 = vpop.permute.xlu0 %1295
      %1297 = vrot.lane.b32.xlu0 %v561, 96
      %v1298 = vpop.permute.xlu0 %1297
      %1299 = vrot.lane.b32.xlu0 %v478, 96
      %v1300 = vpop.permute.xlu0 %1299
      %1301 = vrot.lane.b32.xlu0 %v562, 96
      %v1302 = vpop.permute.xlu0 %1301
      %1303 = vrot.lane.b32.xlu0 %v481, 96
      %v1304 = vpop.permute.xlu0 %1303
      %1305 = vrot.lane.b32.xlu0 %v563, 96
      %v1306 = vpop.permute.xlu0 %1305
      %1307 = vrot.lane.b32.xlu0 %v484, 96
      %v1308 = vpop.permute.xlu0 %1307
      %1309 = vrot.lane.b32.xlu0 %v564, 96
      %v1310 = vpop.permute.xlu0 %1309
      %1311 = vrot.lane.b32.xlu0 %v487, 96
      %v1312 = vpop.permute.xlu0 %1311
      %1313 = vrot.lane.b32.xlu0 %v565, 96
      %v1314 = vpop.permute.xlu0 %1313
      %1315 = vrot.lane.b32.xlu0 %v490, 96
      %v1316 = vpop.permute.xlu0 %1315
      %1317 = vrot.lane.b32.xlu0 %v566, 96
      %v1318 = vpop.permute.xlu0 %1317
      %1319 = vrot.lane.b32.xlu0 %v493, 96
      %v1320 = vpop.permute.xlu0 %1319
      %1321 = vrot.lane.b32.xlu0 %v567, 96
      %v1322 = vpop.permute.xlu0 %1321
      %1323 = vrot.lane.b32.xlu0 %v496, 96
      %v1324 = vpop.permute.xlu0 %1323
      %1325 = vrot.lane.b32.xlu0 %v568, 96
      %v1326 = vpop.permute.xlu0 %1325
      %1327 = vrot.lane.b32.xlu0 %v499, 96
      %v1328 = vpop.permute.xlu0 %1327
      %1329 = vrot.lane.b32.xlu0 %v569, 96
      %v1330 = vpop.permute.xlu0 %1329
      %1331 = vrot.lane.b32.xlu0 %v502, 96
      %v1332 = vpop.permute.xlu0 %1331
      %1333 = vrot.lane.b32.xlu0 %v553, 96
      %v1334 = vpop.permute.xlu0 %1333
      %1335 = vrot.lane.b32.xlu0 %v454, 96
      %v1336 = vpop.permute.xlu0 %1335
      %1369 = vrot.lane.b32.xlu0 %v632, 112
      %v1370 = vpop.permute.xlu0 %1369
      %1371 = vrot.lane.b32.xlu0 %v634, 112
      %v1372 = vpop.permute.xlu0 %1371
      %1373 = vrot.lane.b32.xlu0 %v637, 112
      %v1374 = vpop.permute.xlu0 %1373
      %1375 = vrot.lane.b32.xlu0 %v639, 112
      %v1376 = vpop.permute.xlu0 %1375
      %1377 = vrot.lane.b32.xlu0 %v642, 112
      %v1378 = vpop.permute.xlu0 %1377
      %1379 = vrot.lane.b32.xlu0 %v644, 112
      %v1380 = vpop.permute.xlu0 %1379
      %1381 = vrot.lane.b32.xlu0 %v647, 112
      %v1382 = vpop.permute.xlu0 %1381
      %1383 = vrot.lane.b32.xlu0 %v649, 112
      %v1384 = vpop.permute.xlu0 %1383
      %1385 = vrot.lane.b32.xlu0 %v652, 112
      %v1386 = vpop.permute.xlu0 %1385
      %1387 = vrot.lane.b32.xlu0 %v654, 112
      %v1388 = vpop.permute.xlu0 %1387
      %1389 = vrot.lane.b32.xlu0 %v657, 112
      %v1390 = vpop.permute.xlu0 %1389
      %1391 = vrot.lane.b32.xlu0 %v659, 112
      %v1392 = vpop.permute.xlu0 %1391
      %1393 = vrot.lane.b32.xlu0 %v662, 112
      %v1394 = vpop.permute.xlu0 %1393
      %1395 = vrot.lane.b32.xlu0 %v664, 112
      %v1396 = vpop.permute.xlu0 %1395
      %1397 = vrot.lane.b32.xlu0 %v667, 112
      %v1398 = vpop.permute.xlu0 %1397
      %1399 = vrot.lane.b32.xlu0 %v669, 112
      %v1400 = vpop.permute.xlu0 %1399
      %1401 = vrot.lane.b32.xlu0 %v672, 112
      %v1402 = vpop.permute.xlu0 %1401
      %1403 = vrot.lane.b32.xlu0 %v674, 112
      %v1404 = vpop.permute.xlu0 %1403
      %1405 = vrot.lane.b32.xlu0 %v677, 112
      %v1406 = vpop.permute.xlu0 %1405
      %1407 = vrot.lane.b32.xlu0 %v679, 112
      %v1408 = vpop.permute.xlu0 %1407
      %1409 = vrot.lane.b32.xlu0 %v682, 112
      %v1410 = vpop.permute.xlu0 %1409
      %1411 = vrot.lane.b32.xlu0 %v684, 112
      %v1412 = vpop.permute.xlu0 %1411
      %1413 = vrot.lane.b32.xlu0 %v687, 112
      %v1414 = vpop.permute.xlu0 %1413
      %1415 = vrot.lane.b32.xlu0 %v689, 112
      %v1416 = vpop.permute.xlu0 %1415
      %1417 = vrot.lane.b32.xlu0 %v692, 112
      %v1418 = vpop.permute.xlu0 %1417
      %1419 = vrot.lane.b32.xlu0 %v694, 112
      %v1420 = vpop.permute.xlu0 %1419
      %1421 = vrot.lane.b32.xlu0 %v697, 112
      %v1422 = vpop.permute.xlu0 %1421
      %1423 = vrot.lane.b32.xlu0 %v699, 112
      %v1424 = vpop.permute.xlu0 %1423
      %1425 = vrot.lane.b32.xlu0 %v785, 112
      %v1426 = vpop.permute.xlu0 %1425
      %1427 = vrot.lane.b32.xlu0 %v787, 112
      %v1428 = vpop.permute.xlu0 %1427
      %1429 = vrot.lane.b32.xlu0 %v622, 112
      %v1430 = vpop.permute.xlu0 %1429
      %1431 = vrot.lane.b32.xlu0 %v624, 112
      %v1432 = vpop.permute.xlu0 %1431
      %vm1465 = vcmask 130048
      %v1466 = vsel %vm1465, %v553, %v794
      %v1467 = vsel %vm1465, %v454, %v796
      %v1468 = vsel %vm1465, %v554, %v798
      %v1469 = vsel %vm1465, %v457, %v800
      %v1470 = vsel %vm1465, %v555, %v802
      %v1471 = vsel %vm1465, %v460, %v804
      %v1472 = vsel %vm1465, %v556, %v806
      %v1473 = vsel %vm1465, %v463, %v808
      %v1474 = vsel %vm1465, %v557, %v810
      %v1475 = vsel %vm1465, %v466, %v812
      %v1476 = vsel %vm1465, %v558, %v814
      %v1477 = vsel %vm1465, %v469, %v816
      %v1478 = vsel %vm1465, %v559, %v818
      %v1479 = vsel %vm1465, %v472, %v820
      %v1480 = vsel %vm1465, %v560, %v822
      %v1481 = vsel %vm1465, %v475, %v824
      %v1482 = vsel %vm1465, %v561, %v826
      %v1483 = vsel %vm1465, %v478, %v828
      %v1484 = vsel %vm1465, %v562, %v830
      %v1485 = vsel %vm1465, %v481, %v832
      %v1486 = vsel %vm1465, %v563, %v834
      %v1487 = vsel %vm1465, %v484, %v836
      %v1488 = vsel %vm1465, %v564, %v838
      %v1489 = vsel %vm1465, %v487, %v840
      %v1490 = vsel %vm1465, %v565, %v842
      %v1491 = vsel %vm1465, %v490, %v844
      %v1492 = vsel %vm1465, %v566, %v846
      %v1493 = vsel %vm1465, %v493, %v848
      %v1494 = vsel %vm1465, %v567, %v850
      %v1495 = vsel %vm1465, %v496, %v852
      %v1496 = vsel %vm1465, %v568, %v854
      %v1497 = vsel %vm1465, %v499, %v856
      %vm1498 = vcmask 261120
      %v1499 = vsel %vm1498, %v1466, %v890
      %v1500 = vsel %vm1498, %v1467, %v892
      %v1501 = vsel %vm1498, %v1468, %v894
      %v1502 = vsel %vm1498, %v1469, %v896
      %v1503 = vsel %vm1498, %v1470, %v898
      %v1504 = vsel %vm1498, %v1471, %v900
      %v1505 = vsel %vm1498, %v1472, %v902
      %v1506 = vsel %vm1498, %v1473, %v904
      %v1507 = vsel %vm1498, %v1474, %v906
      %v1508 = vsel %vm1498, %v1475, %v908
      %v1509 = vsel %vm1498, %v1476, %v910
      %v1510 = vsel %vm1498, %v1477, %v912
      %v1511 = vsel %vm1498, %v1478, %v914
      %v1512 = vsel %vm1498, %v1479, %v916
      %v1513 = vsel %vm1498, %v1480, %v918
      %v1514 = vsel %vm1498, %v1481, %v920
      %v1515 = vsel %vm1498, %v1482, %v922
      %v1516 = vsel %vm1498, %v1483, %v924
      %v1517 = vsel %vm1498, %v1484, %v926
      %v1518 = vsel %vm1498, %v1485, %v928
      %v1519 = vsel %vm1498, %v1486, %v930
      %v1520 = vsel %vm1498, %v1487, %v932
      %v1521 = vsel %vm1498, %v1488, %v934
      %v1522 = vsel %vm1498, %v1489, %v936
      %v1523 = vsel %vm1498, %v1490, %v938
      %v1524 = vsel %vm1498, %v1491, %v940
      %v1525 = vsel %vm1498, %v1492, %v942
      %v1526 = vsel %vm1498, %v1493, %v944
      %v1527 = vsel %vm1498, %v1494, %v946
      %v1528 = vsel %vm1498, %v1495, %v948
      %v1529 = vsel %vm1498, %v1496, %v950
      %v1530 = vsel %vm1498, %v1497, %v952
      %vm1531 = vcmask 392192
      %v1532 = vsel %vm1531, %v1499, %v986
      %v1533 = vsel %vm1531, %v1500, %v988
      %v1534 = vsel %vm1531, %v1501, %v990
      %v1535 = vsel %vm1531, %v1502, %v992
      %v1536 = vsel %vm1531, %v1503, %v994
      %v1537 = vsel %vm1531, %v1504, %v996
      %v1538 = vsel %vm1531, %v1505, %v998
      %v1539 = vsel %vm1531, %v1506, %v1000
      %v1540 = vsel %vm1531, %v1507, %v1002
      %v1541 = vsel %vm1531, %v1508, %v1004
      %v1542 = vsel %vm1531, %v1509, %v1006
      %v1543 = vsel %vm1531, %v1510, %v1008
      %v1544 = vsel %vm1531, %v1511, %v1010
      %v1545 = vsel %vm1531, %v1512, %v1012
      %v1546 = vsel %vm1531, %v1513, %v1014
      %v1547 = vsel %vm1531, %v1514, %v1016
      %v1548 = vsel %vm1531, %v1515, %v1018
      %v1549 = vsel %vm1531, %v1516, %v1020
      %v1550 = vsel %vm1531, %v1517, %v1022
      %v1551 = vsel %vm1531, %v1518, %v1024
      %v1552 = vsel %vm1531, %v1519, %v1026
      %v1553 = vsel %vm1531, %v1520, %v1028
      %v1554 = vsel %vm1531, %v1521, %v1030
      %v1555 = vsel %vm1531, %v1522, %v1032
      %v1556 = vsel %vm1531, %v1523, %v1034
      %v1557 = vsel %vm1531, %v1524, %v1036
      %v1558 = vsel %vm1531, %v1525, %v1038
      %v1559 = vsel %vm1531, %v1526, %v1040
      %v1560 = vsel %vm1531, %v1527, %v1042
      %v1561 = vsel %vm1531, %v1528, %v1044
      %v1562 = vsel %vm1531, %v1529, %v1046
      %v1563 = vsel %vm1531, %v1530, %v1048
      %vm1564 = vcmask 523264
      %v1565 = vsel %vm1564, %v1532, %v1082
      %v1566 = vsel %vm1564, %v1533, %v1084
      %v1567 = vsel %vm1564, %v1534, %v1086
      %v1568 = vsel %vm1564, %v1535, %v1088
      %v1569 = vsel %vm1564, %v1536, %v1090
      %v1570 = vsel %vm1564, %v1537, %v1092
      %v1571 = vsel %vm1564, %v1538, %v1094
      %v1572 = vsel %vm1564, %v1539, %v1096
      %v1573 = vsel %vm1564, %v1540, %v1098
      %v1574 = vsel %vm1564, %v1541, %v1100
      %v1575 = vsel %vm1564, %v1542, %v1102
      %v1576 = vsel %vm1564, %v1543, %v1104
      %v1577 = vsel %vm1564, %v1544, %v1106
      %v1578 = vsel %vm1564, %v1545, %v1108
      %v1579 = vsel %vm1564, %v1546, %v1110
      %v1580 = vsel %vm1564, %v1547, %v1112
      %v1581 = vsel %vm1564, %v1548, %v1114
      %v1582 = vsel %vm1564, %v1549, %v1116
      %v1583 = vsel %vm1564, %v1550, %v1118
      %v1584 = vsel %vm1564, %v1551, %v1120
      %v1585 = vsel %vm1564, %v1552, %v1122
      %v1586 = vsel %vm1564, %v1553, %v1124
      %v1587 = vsel %vm1564, %v1554, %v1126
      %v1588 = vsel %vm1564, %v1555, %v1128
      %v1589 = vsel %vm1564, %v1556, %v1130
      %v1590 = vsel %vm1564, %v1557, %v1132
      %v1591 = vsel %vm1564, %v1558, %v1134
      %v1592 = vsel %vm1564, %v1559, %v1136
      %v1593 = vsel %vm1564, %v1560, %v1138
      %v1594 = vsel %vm1564, %v1561, %v1140
      %v1595 = vsel %vm1564, %v1562, %v1142
      %v1596 = vsel %vm1564, %v1563, %v1144
      %vm1597 = vcmask 654336
      %v1598 = vsel %vm1597, %v1565, %v1178
      %v1599 = vsel %vm1597, %v1566, %v1180
      %v1600 = vsel %vm1597, %v1567, %v1182
      %v1601 = vsel %vm1597, %v1568, %v1184
      %v1602 = vsel %vm1597, %v1569, %v1186
      %v1603 = vsel %vm1597, %v1570, %v1188
      %v1604 = vsel %vm1597, %v1571, %v1190
      %v1605 = vsel %vm1597, %v1572, %v1192
      %v1606 = vsel %vm1597, %v1573, %v1194
      %v1607 = vsel %vm1597, %v1574, %v1196
      %v1608 = vsel %vm1597, %v1575, %v1198
      %v1609 = vsel %vm1597, %v1576, %v1200
      %v1610 = vsel %vm1597, %v1577, %v1202
      %v1611 = vsel %vm1597, %v1578, %v1204
      %v1612 = vsel %vm1597, %v1579, %v1206
      %v1613 = vsel %vm1597, %v1580, %v1208
      %v1614 = vsel %vm1597, %v1581, %v1210
      %v1615 = vsel %vm1597, %v1582, %v1212
      %v1616 = vsel %vm1597, %v1583, %v1214
      %v1617 = vsel %vm1597, %v1584, %v1216
      %v1618 = vsel %vm1597, %v1585, %v1218
      %v1619 = vsel %vm1597, %v1586, %v1220
      %v1620 = vsel %vm1597, %v1587, %v1222
      %v1621 = vsel %vm1597, %v1588, %v1224
      %v1622 = vsel %vm1597, %v1589, %v1226
      %v1623 = vsel %vm1597, %v1590, %v1228
      %v1624 = vsel %vm1597, %v1591, %v1230
      %v1625 = vsel %vm1597, %v1592, %v1232
      %v1626 = vsel %vm1597, %v1593, %v1234
      %v1627 = vsel %vm1597, %v1594, %v1236
      %v1628 = vsel %vm1597, %v1595, %v1238
      %v1629 = vsel %vm1597, %v1596, %v1240
      %vm1630 = vcmask 785408
      %v1631 = vsel %vm1630, %v1598, %v1274
      %v1632 = vsel %vm1630, %v1599, %v1276
      %v1633 = vsel %vm1630, %v1600, %v1278
      %v1634 = vsel %vm1630, %v1601, %v1280
      %v1635 = vsel %vm1630, %v1602, %v1282
      %v1636 = vsel %vm1630, %v1603, %v1284
      %v1637 = vsel %vm1630, %v1604, %v1286
      %v1638 = vsel %vm1630, %v1605, %v1288
      %v1639 = vsel %vm1630, %v1606, %v1290
      %v1640 = vsel %vm1630, %v1607, %v1292
      %v1641 = vsel %vm1630, %v1608, %v1294
      %v1642 = vsel %vm1630, %v1609, %v1296
      %v1643 = vsel %vm1630, %v1610, %v1298
      %v1644 = vsel %vm1630, %v1611, %v1300
      %v1645 = vsel %vm1630, %v1612, %v1302
      %v1646 = vsel %vm1630, %v1613, %v1304
      %v1647 = vsel %vm1630, %v1614, %v1306
      %v1648 = vsel %vm1630, %v1615, %v1308
      %v1649 = vsel %vm1630, %v1616, %v1310
      %v1650 = vsel %vm1630, %v1617, %v1312
      %v1651 = vsel %vm1630, %v1618, %v1314
      %v1652 = vsel %vm1630, %v1619, %v1316
      %v1653 = vsel %vm1630, %v1620, %v1318
      %v1654 = vsel %vm1630, %v1621, %v1320
      %v1655 = vsel %vm1630, %v1622, %v1322
      %v1656 = vsel %vm1630, %v1623, %v1324
      %v1657 = vsel %vm1630, %v1624, %v1326
      %v1658 = vsel %vm1630, %v1625, %v1328
      %v1659 = vsel %vm1630, %v1626, %v1330
      %v1660 = vsel %vm1630, %v1627, %v1332
      %v1661 = vsel %vm1630, %v1628, %v1334
      %v1662 = vsel %vm1630, %v1629, %v1336
      %vm1663 = vcmask 916480
      %v1664 = vsel %vm1663, %v1631, %v1370
      %v1665 = vsel %vm1663, %v1632, %v1372
      %v1666 = vsel %vm1663, %v1633, %v1374
      %v1667 = vsel %vm1663, %v1634, %v1376
      %v1668 = vsel %vm1663, %v1635, %v1378
      %v1669 = vsel %vm1663, %v1636, %v1380
      %v1670 = vsel %vm1663, %v1637, %v1382
      %v1671 = vsel %vm1663, %v1638, %v1384
      %v1672 = vsel %vm1663, %v1639, %v1386
      %v1673 = vsel %vm1663, %v1640, %v1388
      %v1674 = vsel %vm1663, %v1641, %v1390
      %v1675 = vsel %vm1663, %v1642, %v1392
      %v1676 = vsel %vm1663, %v1643, %v1394
      %v1677 = vsel %vm1663, %v1644, %v1396
      %v1678 = vsel %vm1663, %v1645, %v1398
      %v1679 = vsel %vm1663, %v1646, %v1400
      %v1680 = vsel %vm1663, %v1647, %v1402
      %v1681 = vsel %vm1663, %v1648, %v1404
      %v1682 = vsel %vm1663, %v1649, %v1406
      %v1683 = vsel %vm1663, %v1650, %v1408
      %v1684 = vsel %vm1663, %v1651, %v1410
      %v1685 = vsel %vm1663, %v1652, %v1412
      %v1686 = vsel %vm1663, %v1653, %v1414
      %v1687 = vsel %vm1663, %v1654, %v1416
      %v1688 = vsel %vm1663, %v1655, %v1418
      %v1689 = vsel %vm1663, %v1656, %v1420
      %v1690 = vsel %vm1663, %v1657, %v1422
      %v1691 = vsel %vm1663, %v1658, %v1424
      %v1692 = vsel %vm1663, %v1659, %v1426
      %v1693 = vsel %vm1663, %v1660, %v1428
      %v1694 = vsel %vm1663, %v1661, %v1430
      %v1695 = vsel %vm1663, %v1662, %v1432
      %v1696 = vld [vmem:[%s1] sm:$0xff]
      %v1697 = vld [vmem:[%s1 + $0x8] sm:$0xff]
      %v1698 = vld [vmem:[%s1 + $0x10] sm:$0xff]
      %v1699 = vld [vmem:[%s1 + $0x18] sm:$0xff]
      %v1700 = vld [vmem:[%s1 + $0x20] sm:$0xff]
      %v1701 = vld [vmem:[%s1 + $0x28] sm:$0xff]
      %v1702 = vld [vmem:[%s1 + $0x30] sm:$0xff]
      %v1703 = vld [vmem:[%s1 + $0x38] sm:$0xff]
      %v1704 = vld [vmem:[%s1 + $0x40] sm:$0xff]
      %v1705 = vld [vmem:[%s1 + $0x48] sm:$0xff]
      %v1706 = vld [vmem:[%s1 + $0x50] sm:$0xff]
      %v1707 = vld [vmem:[%s1 + $0x58] sm:$0xff]
      %v1708 = vld [vmem:[%s1 + $0x60] sm:$0xff]
      %v1709 = vld [vmem:[%s1 + $0x68] sm:$0xff]
      %v1710 = vld [vmem:[%s1 + $0x70] sm:$0xff]
      %v1711 = vld [vmem:[%s1 + $0x78] sm:$0xff]
      %v1712 = vld [vmem:[%s1 + $0x80] sm:$0xff]
      %v1713 = vld [vmem:[%s1 + $0x88] sm:$0xff]
      %v1714 = vld [vmem:[%s2] sm:$0x1]
      %v1716 = vlaneseq
      %v1717 = vshrl.u32 %v1716, 7
      %v1718 = vsub.s32 0, %v1717
      %v1719 = vrot.slane %v1714, %v1718
      %v1721 = vsel %vm1465, %v713, 0
      %v1723 = vsel %vm1465, %v715, 0
      %v1725 = vsel %vm1465, %v718, 0
      %v1727 = vsel %vm1465, %v720, 0
      %v1729 = vsel %vm1465, %v723, 0
      %v1731 = vsel %vm1465, %v725, 0
      %v1733 = vsel %vm1465, %v728, 0
      %v1735 = vsel %vm1465, %v730, 0
      %v1737 = vsel %vm1465, %v733, 0
      %v1739 = vsel %vm1465, %v735, 0
      %v1741 = vsel %vm1465, %v738, 0
      %v1743 = vsel %vm1465, %v740, 0
      %v1745 = vsel %vm1465, %v743, 0
      %v1747 = vsel %vm1465, %v745, 0
      %v1749 = vsel %vm1465, %v748, 0
      %v1751 = vsel %vm1465, %v750, 0
      %v1753 = vsel %vm1465, %v753, 0
      %v1755 = vsel %vm1465, %v755, 0
      %v1757 = vsel %vm1465, %v758, 0
      %v1759 = vsel %vm1465, %v760, 0
      %v1761 = vsel %vm1465, %v763, 0
      %v1763 = vsel %vm1465, %v765, 0
      %v1765 = vsel %vm1465, %v768, 0
      %v1767 = vsel %vm1465, %v770, 0
      %v1769 = vsel %vm1465, %v773, 0
      %v1771 = vsel %vm1465, %v775, 0
      %v1773 = vsel %vm1465, %v778, 0
      %v1775 = vsel %vm1465, %v780, 0
      %v1777 = vsel %vm1465, %v790, 0
      %v1779 = vsel %vm1465, %v792, 0
      %v1781 = vsel %vm1465, %v703, 0
      %v1783 = vsel %vm1465, %v705, 0
      %1785 = vmatprep.subr.mxu0 0.0
      %1786 = vmatpush1.msra.mxu0 %v1696
      %1787 = vmatprep.subr.mxu0 0.0
      %1788 = vmatpush1.msra.mxu0 %v1697
      %1789 = vmatprep.subr.mxu0 0.0
      %1790 = vmatpush1.msra.mxu0 %v1698
      %1791 = vmatprep.subr.mxu0 0.0
      %1792 = vmatpush1.msra.mxu0 %v1699
      %1793 = vmatprep.subr.mxu0 0.0
      %1794 = vmatpush1.msra.mxu0 %v1700
      %1795 = vmatprep.subr.mxu0 0.0
      %1796 = vmatpush1.msra.mxu0 %v1701
      %1797 = vmatprep.subr.mxu0 0.0
      %1798 = vmatpush1.msra.mxu0 %v1702
      %1799 = vmatprep.subr.mxu0 0.0
      %1800 = vmatpush1.msra.mxu0 %v1703
      %1801 = vmatprep.subr.mxu0 0.0
      %1802 = vmatpush1.msra.mxu0 %v1704
      %1803 = vmatprep.subr.mxu0 0.0
      %1804 = vmatpush1.msra.mxu0 %v1705
      %1805 = vmatprep.subr.mxu0 0.0
      %1806 = vmatpush1.msra.mxu0 %v1706
      %1807 = vmatprep.subr.mxu0 0.0
      %1808 = vmatpush1.msra.mxu0 %v1707
      %1809 = vmatprep.subr.mxu0 0.0
      %1810 = vmatpush1.msra.mxu0 %v1708
      %1811 = vmatprep.subr.mxu0 0.0
      %1812 = vmatpush1.msra.mxu0 %v1709
      %1813 = vmatprep.subr.mxu0 0.0
      %1814 = vmatpush1.msra.mxu0 %v1710
      %1815 = vmatprep.subr.mxu0 0.0
      %1816 = vmatpush1.msra.mxu0 %v1711
      %1817 = vmatprep.subr.mxu0 0.0
      %1818 = vmatpush1.msra.mxu0 %v1712
      %1819 = vmatprep.subr.mxu0 0.0
      %1820 = vmatpush1.msra.mxu0 %v1713
      %1821 = vmatprep.subr.mxu0 0.0
      %1822 = vmatpush1.msra.mxu0 0.0
      %1823 = vmatprep.subr.mxu0 0.0
      %1824 = vmatpush1.msra.mxu0 0.0
      %1825 = vmatprep.subr.mxu0 0.0
      %1826 = vmatpush1.msra.mxu0 0.0
      %1827 = vmatprep.subr.mxu0 0.0
      %1828 = vmatpush1.msra.mxu0 0.0
      %1829 = vmatprep.subr.mxu0 0.0
      %1830 = vmatpush1.msra.mxu0 0.0
      %1831 = vmatprep.subr.mxu0 0.0
      %1832 = vmatpush1.msra.mxu0 0.0
      %1833 = vmatprep.subr.mxu0 0.0
      %1834 = vmatpush1.msra.mxu0 0.0
      %1835 = vmatprep.subr.mxu0 0.0
      %1836 = vmatpush1.msra.mxu0 0.0
      %1837 = vmatprep.subr.mxu0 0.0
      %1838 = vmatpush1.msra.mxu0 0.0
      %1839 = vmatprep.subr.mxu0 0.0
      %1840 = vmatpush1.msra.mxu0 0.0
      %1841 = vmatprep.subr.mxu0 0.0
      %1842 = vmatpush1.msra.mxu0 0.0
      %1843 = vmatprep.subr.mxu0 0.0
      %1844 = vmatpush1.msra.mxu0 0.0
      %1845 = vmatprep.subr.mxu0 0.0
      %1846 = vmatpush1.msra.mxu0 0.0
      %1847 = vmatprep.subr.mxu0 0.0
      %1848 = vmatpush1.msra.mxu0 0.0
      %1849 = vmatprep.mubr.f32.mxu0 %v1721
      %1850 = vmatmul.mubr.f32.gmra.mrb[0].mxu0 %v1664
      %v1851 = vpop.f32.mrb[0].mxu0
      %v1852 = vadd.f32 %v1719, %v1851
      %v1853 = vpop.f32.mrb[0].mxu0
      %1854 = vmatprep.mubr.f32.mxu0 %v1723
      %1855 = vmatmul.mubr.f32.gmra.mrb[0].mxu0 %v1665
      %v1856 = vpop.f32.mrb[0].mxu0
      %v1857 = vadd.f32 %v1719, %v1856
      %v1858 = vpop.f32.mrb[0].mxu0
      %1859 = vmatprep.mubr.f32.mxu0 %v1725
      %1860 = vmatmul.mubr.f32.gmra.mrb[0].mxu0 %v1666
      %v1861 = vpop.f32.mrb[0].mxu0
      %v1862 = vadd.f32 %v1719, %v1861
      %v1863 = vpop.f32.mrb[0].mxu0
      %1864 = vmatprep.mubr.f32.mxu0 %v1727
      %1865 = vmatmul.mubr.f32.gmra.mrb[0].mxu0 %v1667
      %v1866 = vpop.f32.mrb[0].mxu0
      %v1867 = vadd.f32 %v1719, %v1866
      %v1868 = vpop.f32.mrb[0].mxu0
      %1869 = vmatprep.mubr.f32.mxu0 %v1729
      %1870 = vmatmul.mubr.f32.gmra.mrb[0].mxu0 %v1668
      %v1871 = vpop.f32.mrb[0].mxu0
      %v1872 = vadd.f32 %v1719, %v1871
      %v1873 = vpop.f32.mrb[0].mxu0
      %1874 = vmatprep.mubr.f32.mxu0 %v1731
      %1875 = vmatmul.mubr.f32.gmra.mrb[0].mxu0 %v1669
      %v1876 = vpop.f32.mrb[0].mxu0
      %v1877 = vadd.f32 %v1719, %v1876
      %v1878 = vpop.f32.mrb[0].mxu0
      %1879 = vmatprep.mubr.f32.mxu0 %v1733
      %1880 = vmatmul.mubr.f32.gmra.mrb[0].mxu0 %v1670
      %v1881 = vpop.f32.mrb[0].mxu0
      %v1882 = vadd.f32 %v1719, %v1881
      %v1883 = vpop.f32.mrb[0].mxu0
      %1884 = vmatprep.mubr.f32.mxu0 %v1735
      %1885 = vmatmul.mubr.f32.gmra.mrb[0].mxu0 %v1671
      %v1886 = vpop.f32.mrb[0].mxu0
      %v1887 = vadd.f32 %v1719, %v1886
      %v1888 = vpop.f32.mrb[0].mxu0
      %1889 = vmatprep.mubr.f32.mxu0 %v1737
      %1890 = vmatmul.mubr.f32.gmra.mrb[0].mxu0 %v1672
      %v1891 = vpop.f32.mrb[0].mxu0
      %v1892 = vadd.f32 %v1719, %v1891
      %v1893 = vpop.f32.mrb[0].mxu0
      %1894 = vmatprep.mubr.f32.mxu0 %v1739
      %1895 = vmatmul.mubr.f32.gmra.mrb[0].mxu0 %v1673
      %v1896 = vpop.f32.mrb[0].mxu0
      %v1897 = vadd.f32 %v1719, %v1896
      %v1898 = vpop.f32.mrb[0].mxu0
      %1899 = vmatprep.mubr.f32.mxu0 %v1741
      %1900 = vmatmul.mubr.f32.gmra.mrb[0].mxu0 %v1674
      %v1901 = vpop.f32.mrb[0].mxu0
      %v1902 = vadd.f32 %v1719, %v1901
      %v1903 = vpop.f32.mrb[0].mxu0
      %1904 = vmatprep.mubr.f32.mxu0 %v1743
      %1905 = vmatmul.mubr.f32.gmra.mrb[0].mxu0 %v1675
      %v1906 = vpop.f32.mrb[0].mxu0
      %v1907 = vadd.f32 %v1719, %v1906
      %v1908 = vpop.f32.mrb[0].mxu0
      %1909 = vmatprep.mubr.f32.mxu0 %v1745
      %1910 = vmatmul.mubr.f32.gmra.mrb[0].mxu0 %v1676
      %v1911 = vpop.f32.mrb[0].mxu0
      %v1912 = vadd.f32 %v1719, %v1911
      %v1913 = vpop.f32.mrb[0].mxu0
      %1914 = vmatprep.mubr.f32.mxu0 %v1747
      %1915 = vmatmul.mubr.f32.gmra.mrb[0].mxu0 %v1677
      %v1916 = vpop.f32.mrb[0].mxu0
      %v1917 = vadd.f32 %v1719, %v1916
      %v1918 = vpop.f32.mrb[0].mxu0
      %1919 = vmatprep.mubr.f32.mxu0 %v1749
      %1920 = vmatmul.mubr.f32.gmra.mrb[0].mxu0 %v1678
      %v1921 = vpop.f32.mrb[0].mxu0
      %v1922 = vadd.f32 %v1719, %v1921
      %v1923 = vpop.f32.mrb[0].mxu0
      %1924 = vmatprep.mubr.f32.mxu0 %v1751
      %1925 = vmatmul.mubr.f32.gmra.mrb[0].mxu0 %v1679
      %v1926 = vpop.f32.mrb[0].mxu0
      %v1927 = vadd.f32 %v1719, %v1926
      %v1928 = vpop.f32.mrb[0].mxu0
      %1929 = vmatprep.mubr.f32.mxu0 %v1753
      %1930 = vmatmul.mubr.f32.gmra.mrb[0].mxu0 %v1680
      %v1931 = vpop.f32.mrb[0].mxu0
      %v1932 = vadd.f32 %v1719, %v1931
      %v1933 = vpop.f32.mrb[0].mxu0
      %1934 = vmatprep.mubr.f32.mxu0 %v1755
      %1935 = vmatmul.mubr.f32.gmra.mrb[0].mxu0 %v1681
      %v1936 = vpop.f32.mrb[0].mxu0
      %v1937 = vadd.f32 %v1719, %v1936
      %v1938 = vpop.f32.mrb[0].mxu0
      %1939 = vmatprep.mubr.f32.mxu0 %v1757
      %1940 = vmatmul.mubr.f32.gmra.mrb[0].mxu0 %v1682
      %v1941 = vpop.f32.mrb[0].mxu0
      %v1942 = vadd.f32 %v1719, %v1941
      %v1943 = vpop.f32.mrb[0].mxu0
      %1944 = vmatprep.mubr.f32.mxu0 %v1759
      %1945 = vmatmul.mubr.f32.gmra.mrb[0].mxu0 %v1683
      %v1946 = vpop.f32.mrb[0].mxu0
      %v1947 = vadd.f32 %v1719, %v1946
      %v1948 = vpop.f32.mrb[0].mxu0
      %1949 = vmatprep.mubr.f32.mxu0 %v1761
      %1950 = vmatmul.mubr.f32.gmra.mrb[0].mxu0 %v1684
      %v1951 = vpop.f32.mrb[0].mxu0
      %v1952 = vadd.f32 %v1719, %v1951
      %v1953 = vpop.f32.mrb[0].mxu0
      %1954 = vmatprep.mubr.f32.mxu0 %v1763
      %1955 = vmatmul.mubr.f32.gmra.mrb[0].mxu0 %v1685
      %v1956 = vpop.f32.mrb[0].mxu0
      %v1957 = vadd.f32 %v1719, %v1956
      %v1958 = vpop.f32.mrb[0].mxu0
      %1959 = vmatprep.mubr.f32.mxu0 %v1765
      %1960 = vmatmul.mubr.f32.gmra.mrb[0].mxu0 %v1686
      %v1961 = vpop.f32.mrb[0].mxu0
      %v1962 = vadd.f32 %v1719, %v1961
      %v1963 = vpop.f32.mrb[0].mxu0
      %1964 = vmatprep.mubr.f32.mxu0 %v1767
      %1965 = vmatmul.mubr.f32.gmra.mrb[0].mxu0 %v1687
      %v1966 = vpop.f32.mrb[0].mxu0
      %v1967 = vadd.f32 %v1719, %v1966
      %v1968 = vpop.f32.mrb[0].mxu0
      %1969 = vmatprep.mubr.f32.mxu0 %v1769
      %1970 = vmatmul.mubr.f32.gmra.mrb[0].mxu0 %v1688
      %v1971 = vpop.f32.mrb[0].mxu0
      %v1972 = vadd.f32 %v1719, %v1971
      %v1973 = vpop.f32.mrb[0].mxu0
      %1974 = vmatprep.mubr.f32.mxu0 %v1771
      %1975 = vmatmul.mubr.f32.gmra.mrb[0].mxu0 %v1689
      %v1976 = vpop.f32.mrb[0].mxu0
      %v1977 = vadd.f32 %v1719, %v1976
      %v1978 = vpop.f32.mrb[0].mxu0
      %1979 = vmatprep.mubr.f32.mxu0 %v1773
      %1980 = vmatmul.mubr.f32.gmra.mrb[0].mxu0 %v1690
      %v1981 = vpop.f32.mrb[0].mxu0
      %v1982 = vadd.f32 %v1719, %v1981
      %v1983 = vpop.f32.mrb[0].mxu0
      %1984 = vmatprep.mubr.f32.mxu0 %v1775
      %1985 = vmatmul.mubr.f32.gmra.mrb[0].mxu0 %v1691
      %v1986 = vpop.f32.mrb[0].mxu0
      %v1987 = vadd.f32 %v1719, %v1986
      %v1988 = vpop.f32.mrb[0].mxu0
      %1989 = vmatprep.mubr.f32.mxu0 %v1777
      %1990 = vmatmul.mubr.f32.gmra.mrb[0].mxu0 %v1692
      %v1991 = vpop.f32.mrb[0].mxu0
      %v1992 = vadd.f32 %v1719, %v1991
      %v1993 = vpop.f32.mrb[0].mxu0
      %1994 = vmatprep.mubr.f32.mxu0 %v1779
      %1995 = vmatmul.mubr.f32.gmra.mrb[0].mxu0 %v1693
      %v1996 = vpop.f32.mrb[0].mxu0
      %v1997 = vadd.f32 %v1719, %v1996
      %v1998 = vpop.f32.mrb[0].mxu0
      %1999 = vmatprep.mubr.f32.mxu0 %v1781
      %2000 = vmatmul.mubr.f32.gmra.mrb[0].mxu0 %v1694
      %v2001 = vpop.f32.mrb[0].mxu0
      %v2002 = vadd.f32 %v1719, %v2001
      %v2003 = vpop.f32.mrb[0].mxu0
      %2004 = vmatprep.mubr.f32.mxu0 %v1783
      %2005 = vmatmul.mubr.f32.gmra.mrb[0].mxu0 %v1695
      %v2006 = vpop.f32.mrb[0].mxu0
      %v2007 = vadd.f32 %v1719, %v2006
      %v2008 = vpop.f32.mrb[0].mxu0
      %2009 = vdwg.mxu0
      %vm2010 = vcmp.ge.f32.partialorder %v1852, 0.0
      %vm2011 = vcmp.ge.f32.partialorder %v1857, 0.0
      %vm2012 = vcmp.ge.f32.partialorder %v1862, 0.0
      %vm2013 = vcmp.ge.f32.partialorder %v1867, 0.0
      %vm2014 = vcmp.ge.f32.partialorder %v1872, 0.0
      %vm2015 = vcmp.ge.f32.partialorder %v1877, 0.0
      %vm2016 = vcmp.ge.f32.partialorder %v1882, 0.0
      %vm2017 = vcmp.ge.f32.partialorder %v1887, 0.0
      %vm2018 = vcmp.ge.f32.partialorder %v1892, 0.0
      %vm2019 = vcmp.ge.f32.partialorder %v1897, 0.0
      %vm2020 = vcmp.ge.f32.partialorder %v1902, 0.0
      %vm2021 = vcmp.ge.f32.partialorder %v1907, 0.0
      %vm2022 = vcmp.ge.f32.partialorder %v1912, 0.0
      %vm2023 = vcmp.ge.f32.partialorder %v1917, 0.0
      %vm2024 = vcmp.ge.f32.partialorder %v1922, 0.0
      %vm2025 = vcmp.ge.f32.partialorder %v1927, 0.0
      %vm2026 = vcmp.ge.f32.partialorder %v1932, 0.0
      %vm2027 = vcmp.ge.f32.partialorder %v1937, 0.0
      %vm2028 = vcmp.ge.f32.partialorder %v1942, 0.0
      %vm2029 = vcmp.ge.f32.partialorder %v1947, 0.0
      %vm2030 = vcmp.ge.f32.partialorder %v1952, 0.0
      %vm2031 = vcmp.ge.f32.partialorder %v1957, 0.0
      %vm2032 = vcmp.ge.f32.partialorder %v1962, 0.0
      %vm2033 = vcmp.ge.f32.partialorder %v1967, 0.0
      %vm2034 = vcmp.ge.f32.partialorder %v1972, 0.0
      %vm2035 = vcmp.ge.f32.partialorder %v1977, 0.0
      %vm2036 = vcmp.ge.f32.partialorder %v1982, 0.0
      %vm2037 = vcmp.ge.f32.partialorder %v1987, 0.0
      %vm2038 = vcmp.ge.f32.partialorder %v1992, 0.0
      %vm2039 = vcmp.ge.f32.partialorder %v1997, 0.0
      %vm2040 = vcmp.ge.f32.partialorder %v2002, 0.0
      %vm2041 = vcmp.ge.f32.partialorder %v2007, 0.0
      %v2042 = vmul.f32 %v1852, 0.2
      %v2043 = vmul.f32 %v1857, 0.2
      %v2044 = vmul.f32 %v1862, 0.2
      %v2045 = vmul.f32 %v1867, 0.2
      %v2046 = vmul.f32 %v1872, 0.2
      %v2047 = vmul.f32 %v1877, 0.2
      %v2048 = vmul.f32 %v1882, 0.2
      %v2049 = vmul.f32 %v1887, 0.2
      %v2050 = vmul.f32 %v1892, 0.2
      %v2051 = vmul.f32 %v1897, 0.2
      %v2052 = vmul.f32 %v1902, 0.2
      %v2053 = vmul.f32 %v1907, 0.2
      %v2054 = vmul.f32 %v1912, 0.2
      %v2055 = vmul.f32 %v1917, 0.2
      %v2056 = vmul.f32 %v1922, 0.2
      %v2057 = vmul.f32 %v1927, 0.2
      %v2058 = vmul.f32 %v1932, 0.2
      %v2059 = vmul.f32 %v1937, 0.2
      %v2060 = vmul.f32 %v1942, 0.2
      %v2061 = vmul.f32 %v1947, 0.2
      %v2062 = vmul.f32 %v1952, 0.2
      %v2063 = vmul.f32 %v1957, 0.2
      %v2064 = vmul.f32 %v1962, 0.2
      %v2065 = vmul.f32 %v1967, 0.2
      %v2066 = vmul.f32 %v1972, 0.2
      %v2067 = vmul.f32 %v1977, 0.2
      %v2068 = vmul.f32 %v1982, 0.2
      %v2069 = vmul.f32 %v1987, 0.2
      %v2070 = vmul.f32 %v1992, 0.2
      %v2071 = vmul.f32 %v1997, 0.2
      %v2072 = vmul.f32 %v2002, 0.2
      %v2073 = vmul.f32 %v2007, 0.2
      %v2074 = vsel %vm2010, %v1852, %v2042
      %v2075 = vsel %vm2011, %v1857, %v2043
      %v2076 = vsel %vm2012, %v1862, %v2044
      %v2077 = vsel %vm2013, %v1867, %v2045
      %v2078 = vsel %vm2014, %v1872, %v2046
      %v2079 = vsel %vm2015, %v1877, %v2047
      %v2080 = vsel %vm2016, %v1882, %v2048
      %v2081 = vsel %vm2017, %v1887, %v2049
      %v2082 = vsel %vm2018, %v1892, %v2050
      %v2083 = vsel %vm2019, %v1897, %v2051
      %v2084 = vsel %vm2020, %v1902, %v2052
      %v2085 = vsel %vm2021, %v1907, %v2053
      %v2086 = vsel %vm2022, %v1912, %v2054
      %v2087 = vsel %vm2023, %v1917, %v2055
      %v2088 = vsel %vm2024, %v1922, %v2056
      %v2089 = vsel %vm2025, %v1927, %v2057
      %v2090 = vsel %vm2026, %v1932, %v2058
      %v2091 = vsel %vm2027, %v1937, %v2059
      %v2092 = vsel %vm2028, %v1942, %v2060
      %v2093 = vsel %vm2029, %v1947, %v2061
      %v2094 = vsel %vm2030, %v1952, %v2062
      %v2095 = vsel %vm2031, %v1957, %v2063
      %v2096 = vsel %vm2032, %v1962, %v2064
      %v2097 = vsel %vm2033, %v1967, %v2065
      %v2098 = vsel %vm2034, %v1972, %v2066
      %v2099 = vsel %vm2035, %v1977, %v2067
      %v2100 = vsel %vm2036, %v1982, %v2068
      %v2101 = vsel %vm2037, %v1987, %v2069
      %v2102 = vsel %vm2038, %v1992, %v2070
      %v2103 = vsel %vm2039, %v1997, %v2071
      %v2104 = vsel %vm2040, %v2002, %v2072
      %v2105 = vsel %vm2041, %v2007, %v2073
      %v2138 = vrot.slane %v2074, 7
      %v2139 = vrot.slane %v2075, 7
      %v2140 = vsel %vm452, %v2138, %v2139
      %v2141 = vrot.slane %v2076, 7
      %v2142 = vrot.slane %v2077, 7
      %v2143 = vsel %vm452, %v2141, %v2142
      %v2144 = vrot.slane %v2078, 7
      %v2145 = vrot.slane %v2079, 7
      %v2146 = vsel %vm452, %v2144, %v2145
      %v2147 = vrot.slane %v2080, 7
      %v2148 = vrot.slane %v2081, 7
      %v2149 = vsel %vm452, %v2147, %v2148
      %v2150 = vrot.slane %v2082, 7
      %v2151 = vrot.slane %v2083, 7
      %v2152 = vsel %vm452, %v2150, %v2151
      %v2153 = vrot.slane %v2084, 7
      %v2154 = vrot.slane %v2085, 7
      %v2155 = vsel %vm452, %v2153, %v2154
      %v2156 = vrot.slane %v2086, 7
      %v2157 = vrot.slane %v2087, 7
      %v2158 = vsel %vm452, %v2156, %v2157
      %v2159 = vrot.slane %v2088, 7
      %v2160 = vrot.slane %v2089, 7
      %v2161 = vsel %vm452, %v2159, %v2160
      %v2162 = vrot.slane %v2090, 7
      %v2163 = vrot.slane %v2091, 7
      %v2164 = vsel %vm452, %v2162, %v2163
      %v2165 = vrot.slane %v2092, 7
      %v2166 = vrot.slane %v2093, 7
      %v2167 = vsel %vm452, %v2165, %v2166
      %v2168 = vrot.slane %v2094, 7
      %v2169 = vrot.slane %v2095, 7
      %v2170 = vsel %vm452, %v2168, %v2169
      %v2171 = vrot.slane %v2096, 7
      %v2172 = vrot.slane %v2097, 7
      %v2173 = vsel %vm452, %v2171, %v2172
      %v2174 = vrot.slane %v2098, 7
      %v2175 = vrot.slane %v2099, 7
      %v2176 = vsel %vm452, %v2174, %v2175
      %v2177 = vrot.slane %v2100, 7
      %v2178 = vrot.slane %v2101, 7
      %v2179 = vsel %vm452, %v2177, %v2178
      %v2180 = vrot.slane %v2102, 7
      %v2181 = vrot.slane %v2103, 7
      %v2182 = vsel %vm452, %v2180, %v2181
      %v2183 = vrot.slane %v2104, 7
      %v2184 = vrot.slane %v2105, 7
      %v2185 = vsel %vm452, %v2183, %v2184
      %v2218 = vsel %vm452, 0.0, %v2138
      %v2219 = vsel %vm452, 0.0, %v2141
      %v2220 = vsel %vm452, 0.0, %v2144
      %v2221 = vsel %vm452, 0.0, %v2147
      %v2222 = vsel %vm452, 0.0, %v2150
      %v2223 = vsel %vm452, 0.0, %v2153
      %v2224 = vsel %vm452, 0.0, %v2156
      %v2225 = vsel %vm452, 0.0, %v2159
      %v2226 = vsel %vm452, 0.0, %v2162
      %v2227 = vsel %vm452, 0.0, %v2165
      %v2228 = vsel %vm452, 0.0, %v2168
      %v2229 = vsel %vm452, 0.0, %v2171
      %v2230 = vsel %vm452, 0.0, %v2174
      %v2231 = vsel %vm452, 0.0, %v2177
      %v2232 = vsel %vm452, 0.0, %v2180
      %v2233 = vsel %vm452, 0.0, %v2183
      %v2234 = vsel %vm452, %v2139, 0.0
      %v2235 = vsel %vm452, %v2142, 0.0
      %v2236 = vsel %vm452, %v2145, 0.0
      %v2237 = vsel %vm452, %v2148, 0.0
      %v2238 = vsel %vm452, %v2151, 0.0
      %v2239 = vsel %vm452, %v2154, 0.0
      %v2240 = vsel %vm452, %v2157, 0.0
      %v2241 = vsel %vm452, %v2160, 0.0
      %v2242 = vsel %vm452, %v2163, 0.0
      %v2243 = vsel %vm452, %v2166, 0.0
      %v2244 = vsel %vm452, %v2169, 0.0
      %v2245 = vsel %vm452, %v2172, 0.0
      %v2246 = vsel %vm452, %v2175, 0.0
      %v2247 = vsel %vm452, %v2178, 0.0
      %v2248 = vsel %vm452, %v2181, 0.0
      %v2249 = vsel %vm452, %v2184, 0.0
      %2282 = vrot.lane.b32.xlu0 %v553, 16
      %v2283 = vpop.permute.xlu0 %2282
      %2284 = vrot.lane.b32.xlu0 %v454, 16
      %v2285 = vpop.permute.xlu0 %2284
      %2286 = vrot.lane.b32.xlu0 %v570, 16
      %v2287 = vpop.permute.xlu0 %2286
      %2288 = vrot.lane.b32.xlu0 %v2218, 16
      %v2289 = vpop.permute.xlu0 %2288
      %2290 = vrot.lane.b32.xlu0 %v2140, 16
      %v2291 = vpop.permute.xlu0 %2290
      %2292 = vrot.lane.b32.xlu0 %v2234, 16
      %v2293 = vpop.permute.xlu0 %2292
      %2294 = vrot.lane.b32.xlu0 %v2219, 16
      %v2295 = vpop.permute.xlu0 %2294
      %2296 = vrot.lane.b32.xlu0 %v2143, 16
      %v2297 = vpop.permute.xlu0 %2296
      %2298 = vrot.lane.b32.xlu0 %v2235, 16
      %v2299 = vpop.permute.xlu0 %2298
      %2300 = vrot.lane.b32.xlu0 %v2220, 16
      %v2301 = vpop.permute.xlu0 %2300
      %2302 = vrot.lane.b32.xlu0 %v2146, 16
      %v2303 = vpop.permute.xlu0 %2302
      %2304 = vrot.lane.b32.xlu0 %v2236, 16
      %v2305 = vpop.permute.xlu0 %2304
      %2306 = vrot.lane.b32.xlu0 %v2221, 16
      %v2307 = vpop.permute.xlu0 %2306
      %2308 = vrot.lane.b32.xlu0 %v2149, 16
      %v2309 = vpop.permute.xlu0 %2308
      %2310 = vrot.lane.b32.xlu0 %v2237, 16
      %v2311 = vpop.permute.xlu0 %2310
      %2312 = vrot.lane.b32.xlu0 %v2222, 16
      %v2313 = vpop.permute.xlu0 %2312
      %2314 = vrot.lane.b32.xlu0 %v2152, 16
      %v2315 = vpop.permute.xlu0 %2314
      %2316 = vrot.lane.b32.xlu0 %v2238, 16
      %v2317 = vpop.permute.xlu0 %2316
      %2318 = vrot.lane.b32.xlu0 %v2223, 16
      %v2319 = vpop.permute.xlu0 %2318
      %2320 = vrot.lane.b32.xlu0 %v2155, 16
      %v2321 = vpop.permute.xlu0 %2320
      %2322 = vrot.lane.b32.xlu0 %v2239, 16
      %v2323 = vpop.permute.xlu0 %2322
      %2324 = vrot.lane.b32.xlu0 %v2224, 16
      %v2325 = vpop.permute.xlu0 %2324
      %2326 = vrot.lane.b32.xlu0 %v2158, 16
      %v2327 = vpop.permute.xlu0 %2326
      %2328 = vrot.lane.b32.xlu0 %v2240, 16
      %v2329 = vpop.permute.xlu0 %2328
      %2330 = vrot.lane.b32.xlu0 %v2225, 16
      %v2331 = vpop.permute.xlu0 %2330
      %2332 = vrot.lane.b32.xlu0 %v2161, 16
      %v2333 = vpop.permute.xlu0 %2332
      %2334 = vrot.lane.b32.xlu0 %v2241, 16
      %v2335 = vpop.permute.xlu0 %2334
      %2336 = vrot.lane.b32.xlu0 %v2226, 16
      %v2337 = vpop.permute.xlu0 %2336
      %2338 = vrot.lane.b32.xlu0 %v2164, 16
      %v2339 = vpop.permute.xlu0 %2338
      %2340 = vrot.lane.b32.xlu0 %v2242, 16
      %v2341 = vpop.permute.xlu0 %2340
      %2342 = vrot.lane.b32.xlu0 %v2227, 16
      %v2343 = vpop.permute.xlu0 %2342
      %2344 = vrot.lane.b32.xlu0 %v2167, 16
      %v2345 = vpop.permute.xlu0 %2344
      %2346 = vrot.lane.b32.xlu0 %v2243, 16
      %v2347 = vpop.permute.xlu0 %2346
      %2348 = vrot.lane.b32.xlu0 %v2228, 16
      %v2349 = vpop.permute.xlu0 %2348
      %2350 = vrot.lane.b32.xlu0 %v2170, 16
      %v2351 = vpop.permute.xlu0 %2350
      %2352 = vrot.lane.b32.xlu0 %v2244, 16
      %v2353 = vpop.permute.xlu0 %2352
      %2354 = vrot.lane.b32.xlu0 %v2229, 16
      %v2355 = vpop.permute.xlu0 %2354
      %2356 = vrot.lane.b32.xlu0 %v2173, 16
      %v2357 = vpop.permute.xlu0 %2356
      %2358 = vrot.lane.b32.xlu0 %v2245, 16
      %v2359 = vpop.permute.xlu0 %2358
      %2360 = vrot.lane.b32.xlu0 %v2230, 16
      %v2361 = vpop.permute.xlu0 %2360
      %2362 = vrot.lane.b32.xlu0 %v2176, 16
      %v2363 = vpop.permute.xlu0 %2362
      %2364 = vrot.lane.b32.xlu0 %v2246, 16
      %v2365 = vpop.permute.xlu0 %2364
      %2366 = vrot.lane.b32.xlu0 %v2231, 16
      %v2367 = vpop.permute.xlu0 %2366
      %2368 = vrot.lane.b32.xlu0 %v2179, 16
      %v2369 = vpop.permute.xlu0 %2368
      %2370 = vrot.lane.b32.xlu0 %v2247, 16
      %v2371 = vpop.permute.xlu0 %2370
      %2372 = vrot.lane.b32.xlu0 %v2232, 16
      %v2373 = vpop.permute.xlu0 %2372
      %2374 = vrot.lane.b32.xlu0 %v2182, 16
      %v2375 = vpop.permute.xlu0 %2374
      %2376 = vrot.lane.b32.xlu0 %v2248, 16
      %v2377 = vpop.permute.xlu0 %2376
      %2378 = vrot.lane.b32.xlu0 %v2233, 16
      %v2379 = vpop.permute.xlu0 %2378
      %2380 = vrot.lane.b32.xlu0 %v2185, 16
      %v2381 = vpop.permute.xlu0 %2380
      %2382 = vrot.lane.b32.xlu0 %v2249, 16
      %v2383 = vpop.permute.xlu0 %2382
      %v2435 = vsel %vm1465, %v553, %v2283
      %v2436 = vsel %vm1465, %v454, %v2285
      %v2437 = vsel %vm1465, %v570, %v2287
      %v2438 = vsel %vm1465, %v554, %v2289
      %v2439 = vsel %vm1465, %v457, %v2291
      %v2440 = vsel %vm1465, %v571, %v2293
      %v2441 = vsel %vm1465, %v555, %v2295
      %v2442 = vsel %vm1465, %v460, %v2297
      %v2443 = vsel %vm1465, %v572, %v2299
      %v2444 = vsel %vm1465, %v556, %v2301
      %v2445 = vsel %vm1465, %v463, %v2303
      %v2446 = vsel %vm1465, %v573, %v2305
      %v2447 = vsel %vm1465, %v557, %v2307
      %v2448 = vsel %vm1465, %v466, %v2309
      %v2449 = vsel %vm1465, %v574, %v2311
      %v2450 = vsel %vm1465, %v558, %v2313
      %v2451 = vsel %vm1465, %v469, %v2315
      %v2452 = vsel %vm1465, %v575, %v2317
      %v2453 = vsel %vm1465, %v559, %v2319
      %v2454 = vsel %vm1465, %v472, %v2321
      %v2455 = vsel %vm1465, %v576, %v2323
      %v2456 = vsel %vm1465, %v560, %v2325
      %v2457 = vsel %vm1465, %v475, %v2327
      %v2458 = vsel %vm1465, %v577, %v2329
      %v2459 = vsel %vm1465, %v561, %v2331
      %v2460 = vsel %vm1465, %v478, %v2333
      %v2461 = vsel %vm1465, %v578, %v2335
      %v2462 = vsel %vm1465, %v562, %v2337
      %v2463 = vsel %vm1465, %v481, %v2339
      %v2464 = vsel %vm1465, %v579, %v2341
      %v2465 = vsel %vm1465, %v563, %v2343
      %v2466 = vsel %vm1465, %v484, %v2345
      %v2467 = vsel %vm1465, %v580, %v2347
      %v2468 = vsel %vm1465, %v564, %v2349
      %v2469 = vsel %vm1465, %v487, %v2351
      %v2470 = vsel %vm1465, %v581, %v2353
      %v2471 = vsel %vm1465, %v565, %v2355
      %v2472 = vsel %vm1465, %v490, %v2357
      %v2473 = vsel %vm1465, %v582, %v2359
      %v2474 = vsel %vm1465, %v566, %v2361
      %v2475 = vsel %vm1465, %v493, %v2363
      %v2476 = vsel %vm1465, %v583, %v2365
      %v2477 = vsel %vm1465, %v567, %v2367
      %v2478 = vsel %vm1465, %v496, %v2369
      %v2479 = vsel %vm1465, %v584, %v2371
      %v2480 = vsel %vm1465, %v568, %v2373
      %v2481 = vsel %vm1465, %v499, %v2375
      %v2482 = vsel %vm1465, %v585, %v2377
      %v2483 = vsel %vm1465, %v569, %v2379
      %v2484 = vsel %vm1465, %v502, %v2381
      %v2485 = vsel %vm1465, %v586, %v2383
      %v2534 = vrot.slane %v2435, 1
      %v2535 = vrot.slane %v2436, 1
      %v2536 = vsel %vm619, %v2534, %v2535
      %v2537 = vrot.slane %v2437, 1
      %v2538 = vsel %vm619, %v2535, %v2537
      %v2539 = vrot.slane %v2438, 1
      %v2540 = vrot.slane %v2439, 1
      %v2541 = vsel %vm619, %v2539, %v2540
      %v2542 = vrot.slane %v2440, 1
      %v2543 = vsel %vm619, %v2540, %v2542
      %v2544 = vrot.slane %v2441, 1
      %v2545 = vrot.slane %v2442, 1
      %v2546 = vsel %vm619, %v2544, %v2545
      %v2547 = vrot.slane %v2443, 1
      %v2548 = vsel %vm619, %v2545, %v2547
      %v2549 = vrot.slane %v2444, 1
      %v2550 = vrot.slane %v2445, 1
      %v2551 = vsel %vm619, %v2549, %v2550
      %v2552 = vrot.slane %v2446, 1
      %v2553 = vsel %vm619, %v2550, %v2552
      %v2554 = vrot.slane %v2447, 1
      %v2555 = vrot.slane %v2448, 1
      %v2556 = vsel %vm619, %v2554, %v2555
      %v2557 = vrot.slane %v2449, 1
      %v2558 = vsel %vm619, %v2555, %v2557
      %v2559 = vrot.slane %v2450, 1
      %v2560 = vrot.slane %v2451, 1
      %v2561 = vsel %vm619, %v2559, %v2560
      %v2562 = vrot.slane %v2452, 1
      %v2563 = vsel %vm619, %v2560, %v2562
      %v2564 = vrot.slane %v2453, 1
      %v2565 = vrot.slane %v2454, 1
      %v2566 = vsel %vm619, %v2564, %v2565
      %v2567 = vrot.slane %v2455, 1
      %v2568 = vsel %vm619, %v2565, %v2567
      %v2569 = vrot.slane %v2456, 1
      %v2570 = vrot.slane %v2457, 1
      %v2571 = vsel %vm619, %v2569, %v2570
      %v2572 = vrot.slane %v2458, 1
      %v2573 = vsel %vm619, %v2570, %v2572
      %v2574 = vrot.slane %v2459, 1
      %v2575 = vrot.slane %v2460, 1
      %v2576 = vsel %vm619, %v2574, %v2575
      %v2577 = vrot.slane %v2461, 1
      %v2578 = vsel %vm619, %v2575, %v2577
      %v2579 = vrot.slane %v2462, 1
      %v2580 = vrot.slane %v2463, 1
      %v2581 = vsel %vm619, %v2579, %v2580
      %v2582 = vrot.slane %v2464, 1
      %v2583 = vsel %vm619, %v2580, %v2582
      %v2584 = vrot.slane %v2465, 1
      %v2585 = vrot.slane %v2466, 1
      %v2586 = vsel %vm619, %v2584, %v2585
      %v2587 = vrot.slane %v2467, 1
      %v2588 = vsel %vm619, %v2585, %v2587
      %v2589 = vrot.slane %v2468, 1
      %v2590 = vrot.slane %v2469, 1
      %v2591 = vsel %vm619, %v2589, %v2590
      %v2592 = vrot.slane %v2470, 1
      %v2593 = vsel %vm619, %v2590, %v2592
      %v2594 = vrot.slane %v2471, 1
      %v2595 = vrot.slane %v2472, 1
      %v2596 = vsel %vm619, %v2594, %v2595
      %v2597 = vrot.slane %v2473, 1
      %v2598 = vsel %vm619, %v2595, %v2597
      %v2599 = vrot.slane %v2474, 1
      %v2600 = vrot.slane %v2475, 1
      %v2601 = vsel %vm619, %v2599, %v2600
      %v2602 = vrot.slane %v2476, 1
      %v2603 = vsel %vm619, %v2600, %v2602
      %v2604 = vrot.slane %v2477, 1
      %v2605 = vrot.slane %v2478, 1
      %v2606 = vsel %vm619, %v2604, %v2605
      %v2607 = vrot.slane %v2479, 1
      %v2608 = vsel %vm619, %v2605, %v2607
      %v2609 = vrot.slane %v2480, 1
      %v2610 = vrot.slane %v2481, 1
      %v2611 = vsel %vm619, %v2609, %v2610
      %v2612 = vrot.slane %v2482, 1
      %v2613 = vsel %vm619, %v2610, %v2612
      %v2614 = vrot.slane %v2435, 2
      %v2615 = vrot.slane %v2436, 2
      %v2616 = vsel %vm700, %v2614, %v2615
      %v2617 = vrot.slane %v2437, 2
      %v2618 = vsel %vm700, %v2615, %v2617
      %v2619 = vrot.slane %v2438, 2
      %v2620 = vrot.slane %v2439, 2
      %v2621 = vsel %vm700, %v2619, %v2620
      %v2622 = vrot.slane %v2440, 2
      %v2623 = vsel %vm700, %v2620, %v2622
      %v2624 = vrot.slane %v2441, 2
      %v2625 = vrot.slane %v2442, 2
      %v2626 = vsel %vm700, %v2624, %v2625
      %v2627 = vrot.slane %v2443, 2
      %v2628 = vsel %vm700, %v2625, %v2627
      %v2629 = vrot.slane %v2444, 2
      %v2630 = vrot.slane %v2445, 2
      %v2631 = vsel %vm700, %v2629, %v2630
      %v2632 = vrot.slane %v2446, 2
      %v2633 = vsel %vm700, %v2630, %v2632
      %v2634 = vrot.slane %v2447, 2
      %v2635 = vrot.slane %v2448, 2
      %v2636 = vsel %vm700, %v2634, %v2635
      %v2637 = vrot.slane %v2449, 2
      %v2638 = vsel %vm700, %v2635, %v2637
      %v2639 = vrot.slane %v2450, 2
      %v2640 = vrot.slane %v2451, 2
      %v2641 = vsel %vm700, %v2639, %v2640
      %v2642 = vrot.slane %v2452, 2
      %v2643 = vsel %vm700, %v2640, %v2642
      %v2644 = vrot.slane %v2453, 2
      %v2645 = vrot.slane %v2454, 2
      %v2646 = vsel %vm700, %v2644, %v2645
      %v2647 = vrot.slane %v2455, 2
      %v2648 = vsel %vm700, %v2645, %v2647
      %v2649 = vrot.slane %v2456, 2
      %v2650 = vrot.slane %v2457, 2
      %v2651 = vsel %vm700, %v2649, %v2650
      %v2652 = vrot.slane %v2458, 2
      %v2653 = vsel %vm700, %v2650, %v2652
      %v2654 = vrot.slane %v2459, 2
      %v2655 = vrot.slane %v2460, 2
      %v2656 = vsel %vm700, %v2654, %v2655
      %v2657 = vrot.slane %v2461, 2
      %v2658 = vsel %vm700, %v2655, %v2657
      %v2659 = vrot.slane %v2462, 2
      %v2660 = vrot.slane %v2463, 2
      %v2661 = vsel %vm700, %v2659, %v2660
      %v2662 = vrot.slane %v2464, 2
      %v2663 = vsel %vm700, %v2660, %v2662
      %v2664 = vrot.slane %v2465, 2
      %v2665 = vrot.slane %v2466, 2
      %v2666 = vsel %vm700, %v2664, %v2665
      %v2667 = vrot.slane %v2467, 2
      %v2668 = vsel %vm700, %v2665, %v2667
      %v2669 = vrot.slane %v2468, 2
      %v2670 = vrot.slane %v2469, 2
      %v2671 = vsel %vm700, %v2669, %v2670
      %v2672 = vrot.slane %v2470, 2
      %v2673 = vsel %vm700, %v2670, %v2672
      %v2674 = vrot.slane %v2471, 2
      %v2675 = vrot.slane %v2472, 2
      %v2676 = vsel %vm700, %v2674, %v2675
      %v2677 = vrot.slane %v2473, 2
      %v2678 = vsel %vm700, %v2675, %v2677
      %v2679 = vrot.slane %v2474, 2
      %v2680 = vrot.slane %v2475, 2
      %v2681 = vsel %vm700, %v2679, %v2680
      %v2682 = vrot.slane %v2476, 2
      %v2683 = vsel %vm700, %v2680, %v2682
      %v2684 = vrot.slane %v2477, 2
      %v2685 = vrot.slane %v2478, 2
      %v2686 = vsel %vm700, %v2684, %v2685
      %v2687 = vrot.slane %v2479, 2
      %v2688 = vsel %vm700, %v2685, %v2687
      %v2689 = vrot.slane %v2480, 2
      %v2690 = vrot.slane %v2481, 2
      %v2691 = vsel %vm700, %v2689, %v2690
      %v2692 = vrot.slane %v2482, 2
      %v2693 = vsel %vm700, %v2690, %v2692
      %v2697 = vrot.slane %v2483, 1
      %v2698 = vrot.slane %v2484, 1
      %v2699 = vsel %vm619, %v2697, %v2698
      %v2700 = vrot.slane %v2485, 1
      %v2701 = vsel %vm619, %v2698, %v2700
      %v2702 = vrot.slane %v2483, 2
      %v2703 = vrot.slane %v2484, 2
      %v2704 = vsel %vm700, %v2702, %v2703
      %v2705 = vrot.slane %v2485, 2
      %v2706 = vsel %vm700, %v2703, %v2705
      %2707 = vrot.lane.b32.xlu0 %v2536, 24
      %v2708 = vpop.permute.xlu0 %2707
      %2709 = vrot.lane.b32.xlu0 %v2538, 24
      %v2710 = vpop.permute.xlu0 %2709
      %2711 = vrot.lane.b32.xlu0 %v2541, 24
      %v2712 = vpop.permute.xlu0 %2711
      %2713 = vrot.lane.b32.xlu0 %v2543, 24
      %v2714 = vpop.permute.xlu0 %2713
      %2715 = vrot.lane.b32.xlu0 %v2546, 24
      %v2716 = vpop.permute.xlu0 %2715
      %2717 = vrot.lane.b32.xlu0 %v2548, 24
      %v2718 = vpop.permute.xlu0 %2717
      %2719 = vrot.lane.b32.xlu0 %v2551, 24
      %v2720 = vpop.permute.xlu0 %2719
      %2721 = vrot.lane.b32.xlu0 %v2553, 24
      %v2722 = vpop.permute.xlu0 %2721
      %2723 = vrot.lane.b32.xlu0 %v2556, 24
      %v2724 = vpop.permute.xlu0 %2723
      %2725 = vrot.lane.b32.xlu0 %v2558, 24
      %v2726 = vpop.permute.xlu0 %2725
      %2727 = vrot.lane.b32.xlu0 %v2561, 24
      %v2728 = vpop.permute.xlu0 %2727
      %2729 = vrot.lane.b32.xlu0 %v2563, 24
      %v2730 = vpop.permute.xlu0 %2729
      %2731 = vrot.lane.b32.xlu0 %v2566, 24
      %v2732 = vpop.permute.xlu0 %2731
      %2733 = vrot.lane.b32.xlu0 %v2568, 24
      %v2734 = vpop.permute.xlu0 %2733
      %2735 = vrot.lane.b32.xlu0 %v2571, 24
      %v2736 = vpop.permute.xlu0 %2735
      %2737 = vrot.lane.b32.xlu0 %v2573, 24
      %v2738 = vpop.permute.xlu0 %2737
      %2739 = vrot.lane.b32.xlu0 %v2576, 24
      %v2740 = vpop.permute.xlu0 %2739
      %2741 = vrot.lane.b32.xlu0 %v2578, 24
      %v2742 = vpop.permute.xlu0 %2741
      %2743 = vrot.lane.b32.xlu0 %v2581, 24
      %v2744 = vpop.permute.xlu0 %2743
      %2745 = vrot.lane.b32.xlu0 %v2583, 24
      %v2746 = vpop.permute.xlu0 %2745
      %2747 = vrot.lane.b32.xlu0 %v2586, 24
      %v2748 = vpop.permute.xlu0 %2747
      %2749 = vrot.lane.b32.xlu0 %v2588, 24
      %v2750 = vpop.permute.xlu0 %2749
      %2751 = vrot.lane.b32.xlu0 %v2591, 24
      %v2752 = vpop.permute.xlu0 %2751
      %2753 = vrot.lane.b32.xlu0 %v2593, 24
      %v2754 = vpop.permute.xlu0 %2753
      %2755 = vrot.lane.b32.xlu0 %v2596, 24
      %v2756 = vpop.permute.xlu0 %2755
      %2757 = vrot.lane.b32.xlu0 %v2598, 24
      %v2758 = vpop.permute.xlu0 %2757
      %2759 = vrot.lane.b32.xlu0 %v2601, 24
      %v2760 = vpop.permute.xlu0 %2759
      %2761 = vrot.lane.b32.xlu0 %v2603, 24
      %v2762 = vpop.permute.xlu0 %2761
      %2763 = vrot.lane.b32.xlu0 %v2606, 24
      %v2764 = vpop.permute.xlu0 %2763
      %2765 = vrot.lane.b32.xlu0 %v2608, 24
      %v2766 = vpop.permute.xlu0 %2765
      %2767 = vrot.lane.b32.xlu0 %v2611, 24
      %v2768 = vpop.permute.xlu0 %2767
      %2769 = vrot.lane.b32.xlu0 %v2613, 24
      %v2770 = vpop.permute.xlu0 %2769
      %2803 = vrot.lane.b32.xlu0 %v2616, 48
      %v2804 = vpop.permute.xlu0 %2803
      %2805 = vrot.lane.b32.xlu0 %v2618, 48
      %v2806 = vpop.permute.xlu0 %2805
      %2807 = vrot.lane.b32.xlu0 %v2621, 48
      %v2808 = vpop.permute.xlu0 %2807
      %2809 = vrot.lane.b32.xlu0 %v2623, 48
      %v2810 = vpop.permute.xlu0 %2809
      %2811 = vrot.lane.b32.xlu0 %v2626, 48
      %v2812 = vpop.permute.xlu0 %2811
      %2813 = vrot.lane.b32.xlu0 %v2628, 48
      %v2814 = vpop.permute.xlu0 %2813
      %2815 = vrot.lane.b32.xlu0 %v2631, 48
      %v2816 = vpop.permute.xlu0 %2815
      %2817 = vrot.lane.b32.xlu0 %v2633, 48
      %v2818 = vpop.permute.xlu0 %2817
      %2819 = vrot.lane.b32.xlu0 %v2636, 48
      %v2820 = vpop.permute.xlu0 %2819
      %2821 = vrot.lane.b32.xlu0 %v2638, 48
      %v2822 = vpop.permute.xlu0 %2821
      %2823 = vrot.lane.b32.xlu0 %v2641, 48
      %v2824 = vpop.permute.xlu0 %2823
      %2825 = vrot.lane.b32.xlu0 %v2643, 48
      %v2826 = vpop.permute.xlu0 %2825
      %2827 = vrot.lane.b32.xlu0 %v2646, 48
      %v2828 = vpop.permute.xlu0 %2827
      %2829 = vrot.lane.b32.xlu0 %v2648, 48
      %v2830 = vpop.permute.xlu0 %2829
      %2831 = vrot.lane.b32.xlu0 %v2651, 48
      %v2832 = vpop.permute.xlu0 %2831
      %2833 = vrot.lane.b32.xlu0 %v2653, 48
      %v2834 = vpop.permute.xlu0 %2833
      %2835 = vrot.lane.b32.xlu0 %v2656, 48
      %v2836 = vpop.permute.xlu0 %2835
      %2837 = vrot.lane.b32.xlu0 %v2658, 48
      %v2838 = vpop.permute.xlu0 %2837
      %2839 = vrot.lane.b32.xlu0 %v2661, 48
      %v2840 = vpop.permute.xlu0 %2839
      %2841 = vrot.lane.b32.xlu0 %v2663, 48
      %v2842 = vpop.permute.xlu0 %2841
      %2843 = vrot.lane.b32.xlu0 %v2666, 48
      %v2844 = vpop.permute.xlu0 %2843
      %2845 = vrot.lane.b32.xlu0 %v2668, 48
      %v2846 = vpop.permute.xlu0 %2845
      %2847 = vrot.lane.b32.xlu0 %v2671, 48
      %v2848 = vpop.permute.xlu0 %2847
      %2849 = vrot.lane.b32.xlu0 %v2673, 48
      %v2850 = vpop.permute.xlu0 %2849
      %2851 = vrot.lane.b32.xlu0 %v2676, 48
      %v2852 = vpop.permute.xlu0 %2851
      %2853 = vrot.lane.b32.xlu0 %v2678, 48
      %v2854 = vpop.permute.xlu0 %2853
      %2855 = vrot.lane.b32.xlu0 %v2681, 48
      %v2856 = vpop.permute.xlu0 %2855
      %2857 = vrot.lane.b32.xlu0 %v2683, 48
      %v2858 = vpop.permute.xlu0 %2857
      %2859 = vrot.lane.b32.xlu0 %v2686, 48
      %v2860 = vpop.permute.xlu0 %2859
      %2861 = vrot.lane.b32.xlu0 %v2688, 48
      %v2862 = vpop.permute.xlu0 %2861
      %2863 = vrot.lane.b32.xlu0 %v2691, 48
      %v2864 = vpop.permute.xlu0 %2863
      %2865 = vrot.lane.b32.xlu0 %v2693, 48
      %v2866 = vpop.permute.xlu0 %2865
      %2899 = vrot.lane.b32.xlu0 %v2438, 72
      %v2900 = vpop.permute.xlu0 %2899
      %2901 = vrot.lane.b32.xlu0 %v2439, 72
      %v2902 = vpop.permute.xlu0 %2901
      %2903 = vrot.lane.b32.xlu0 %v2441, 72
      %v2904 = vpop.permute.xlu0 %2903
      %2905 = vrot.lane.b32.xlu0 %v2442, 72
      %v2906 = vpop.permute.xlu0 %2905
      %2907 = vrot.lane.b32.xlu0 %v2444, 72
      %v2908 = vpop.permute.xlu0 %2907
      %2909 = vrot.lane.b32.xlu0 %v2445, 72
      %v2910 = vpop.permute.xlu0 %2909
      %2911 = vrot.lane.b32.xlu0 %v2447, 72
      %v2912 = vpop.permute.xlu0 %2911
      %2913 = vrot.lane.b32.xlu0 %v2448, 72
      %v2914 = vpop.permute.xlu0 %2913
      %2915 = vrot.lane.b32.xlu0 %v2450, 72
      %v2916 = vpop.permute.xlu0 %2915
      %2917 = vrot.lane.b32.xlu0 %v2451, 72
      %v2918 = vpop.permute.xlu0 %2917
      %2919 = vrot.lane.b32.xlu0 %v2453, 72
      %v2920 = vpop.permute.xlu0 %2919
      %2921 = vrot.lane.b32.xlu0 %v2454, 72
      %v2922 = vpop.permute.xlu0 %2921
      %2923 = vrot.lane.b32.xlu0 %v2456, 72
      %v2924 = vpop.permute.xlu0 %2923
      %2925 = vrot.lane.b32.xlu0 %v2457, 72
      %v2926 = vpop.permute.xlu0 %2925
      %2927 = vrot.lane.b32.xlu0 %v2459, 72
      %v2928 = vpop.permute.xlu0 %2927
      %2929 = vrot.lane.b32.xlu0 %v2460, 72
      %v2930 = vpop.permute.xlu0 %2929
      %2931 = vrot.lane.b32.xlu0 %v2462, 72
      %v2932 = vpop.permute.xlu0 %2931
      %2933 = vrot.lane.b32.xlu0 %v2463, 72
      %v2934 = vpop.permute.xlu0 %2933
      %2935 = vrot.lane.b32.xlu0 %v2465, 72
      %v2936 = vpop.permute.xlu0 %2935
      %2937 = vrot.lane.b32.xlu0 %v2466, 72
      %v2938 = vpop.permute.xlu0 %2937
      %2939 = vrot.lane.b32.xlu0 %v2468, 72
      %v2940 = vpop.permute.xlu0 %2939
      %2941 = vrot.lane.b32.xlu0 %v2469, 72
      %v2942 = vpop.permute.xlu0 %2941
      %2943 = vrot.lane.b32.xlu0 %v2471, 72
      %v2944 = vpop.permute.xlu0 %2943
      %2945 = vrot.lane.b32.xlu0 %v2472, 72
      %v2946 = vpop.permute.xlu0 %2945
      %2947 = vrot.lane.b32.xlu0 %v2474, 72
      %v2948 = vpop.permute.xlu0 %2947
      %2949 = vrot.lane.b32.xlu0 %v2475, 72
      %v2950 = vpop.permute.xlu0 %2949
      %2951 = vrot.lane.b32.xlu0 %v2477, 72
      %v2952 = vpop.permute.xlu0 %2951
      %2953 = vrot.lane.b32.xlu0 %v2478, 72
      %v2954 = vpop.permute.xlu0 %2953
      %2955 = vrot.lane.b32.xlu0 %v2480, 72
      %v2956 = vpop.permute.xlu0 %2955
      %2957 = vrot.lane.b32.xlu0 %v2481, 72
      %v2958 = vpop.permute.xlu0 %2957
      %2959 = vrot.lane.b32.xlu0 %v2483, 72
      %v2960 = vpop.permute.xlu0 %2959
      %2961 = vrot.lane.b32.xlu0 %v2484, 72
      %v2962 = vpop.permute.xlu0 %2961
      %2995 = vrot.lane.b32.xlu0 %v2541, 96
      %v2996 = vpop.permute.xlu0 %2995
      %2997 = vrot.lane.b32.xlu0 %v2543, 96
      %v2998 = vpop.permute.xlu0 %2997
      %2999 = vrot.lane.b32.xlu0 %v2546, 96
      %v3000 = vpop.permute.xlu0 %2999
      %3001 = vrot.lane.b32.xlu0 %v2548, 96
      %v3002 = vpop.permute.xlu0 %3001
      %3003 = vrot.lane.b32.xlu0 %v2551, 96
      %v3004 = vpop.permute.xlu0 %3003
      %3005 = vrot.lane.b32.xlu0 %v2553, 96
      %v3006 = vpop.permute.xlu0 %3005
      %3007 = vrot.lane.b32.xlu0 %v2556, 96
      %v3008 = vpop.permute.xlu0 %3007
      %3009 = vrot.lane.b32.xlu0 %v2558, 96
      %v3010 = vpop.permute.xlu0 %3009
      %3011 = vrot.lane.b32.xlu0 %v2561, 96
      %v3012 = vpop.permute.xlu0 %3011
      %3013 = vrot.lane.b32.xlu0 %v2563, 96
      %v3014 = vpop.permute.xlu0 %3013
      %3015 = vrot.lane.b32.xlu0 %v2566, 96
      %v3016 = vpop.permute.xlu0 %3015
      %3017 = vrot.lane.b32.xlu0 %v2568, 96
      %v3018 = vpop.permute.xlu0 %3017
      %3019 = vrot.lane.b32.xlu0 %v2571, 96
      %v3020 = vpop.permute.xlu0 %3019
      %3021 = vrot.lane.b32.xlu0 %v2573, 96
      %v3022 = vpop.permute.xlu0 %3021
      %3023 = vrot.lane.b32.xlu0 %v2576, 96
      %v3024 = vpop.permute.xlu0 %3023
      %3025 = vrot.lane.b32.xlu0 %v2578, 96
      %v3026 = vpop.permute.xlu0 %3025
      %3027 = vrot.lane.b32.xlu0 %v2581, 96
      %v3028 = vpop.permute.xlu0 %3027
      %3029 = vrot.lane.b32.xlu0 %v2583, 96
      %v3030 = vpop.permute.xlu0 %3029
      %3031 = vrot.lane.b32.xlu0 %v2586, 96
      %v3032 = vpop.permute.xlu0 %3031
      %3033 = vrot.lane.b32.xlu0 %v2588, 96
      %v3034 = vpop.permute.xlu0 %3033
      %3035 = vrot.lane.b32.xlu0 %v2591, 96
      %v3036 = vpop.permute.xlu0 %3035
      %3037 = vrot.lane.b32.xlu0 %v2593, 96
      %v3038 = vpop.permute.xlu0 %3037
      %3039 = vrot.lane.b32.xlu0 %v2596, 96
      %v3040 = vpop.permute.xlu0 %3039
      %3041 = vrot.lane.b32.xlu0 %v2598, 96
      %v3042 = vpop.permute.xlu0 %3041
      %3043 = vrot.lane.b32.xlu0 %v2601, 96
      %v3044 = vpop.permute.xlu0 %3043
      %3045 = vrot.lane.b32.xlu0 %v2603, 96
      %v3046 = vpop.permute.xlu0 %3045
      %3047 = vrot.lane.b32.xlu0 %v2606, 96
      %v3048 = vpop.permute.xlu0 %3047
      %3049 = vrot.lane.b32.xlu0 %v2608, 96
      %v3050 = vpop.permute.xlu0 %3049
      %3051 = vrot.lane.b32.xlu0 %v2611, 96
      %v3052 = vpop.permute.xlu0 %3051
      %3053 = vrot.lane.b32.xlu0 %v2613, 96
      %v3054 = vpop.permute.xlu0 %3053
      %3055 = vrot.lane.b32.xlu0 %v2699, 96
      %v3056 = vpop.permute.xlu0 %3055
      %3057 = vrot.lane.b32.xlu0 %v2701, 96
      %v3058 = vpop.permute.xlu0 %3057
      %3091 = vrot.lane.b32.xlu0 %v2621, 120
      %v3092 = vpop.permute.xlu0 %3091
      %3093 = vrot.lane.b32.xlu0 %v2623, 120
      %v3094 = vpop.permute.xlu0 %3093
      %3095 = vrot.lane.b32.xlu0 %v2626, 120
      %v3096 = vpop.permute.xlu0 %3095
      %3097 = vrot.lane.b32.xlu0 %v2628, 120
      %v3098 = vpop.permute.xlu0 %3097
      %3099 = vrot.lane.b32.xlu0 %v2631, 120
      %v3100 = vpop.permute.xlu0 %3099
      %3101 = vrot.lane.b32.xlu0 %v2633, 120
      %v3102 = vpop.permute.xlu0 %3101
      %3103 = vrot.lane.b32.xlu0 %v2636, 120
      %v3104 = vpop.permute.xlu0 %3103
      %3105 = vrot.lane.b32.xlu0 %v2638, 120
      %v3106 = vpop.permute.xlu0 %3105
      %3107 = vrot.lane.b32.xlu0 %v2641, 120
      %v3108 = vpop.permute.xlu0 %3107
      %3109 = vrot.lane.b32.xlu0 %v2643, 120
      %v3110 = vpop.permute.xlu0 %3109
      %3111 = vrot.lane.b32.xlu0 %v2646, 120
      %v3112 = vpop.permute.xlu0 %3111
      %3113 = vrot.lane.b32.xlu0 %v2648, 120
      %v3114 = vpop.permute.xlu0 %3113
      %3115 = vrot.lane.b32.xlu0 %v2651, 120
      %v3116 = vpop.permute.xlu0 %3115
      %3117 = vrot.lane.b32.xlu0 %v2653, 120
      %v3118 = vpop.permute.xlu0 %3117
      %3119 = vrot.lane.b32.xlu0 %v2656, 120
      %v3120 = vpop.permute.xlu0 %3119
      %3121 = vrot.lane.b32.xlu0 %v2658, 120
      %v3122 = vpop.permute.xlu0 %3121
      %3123 = vrot.lane.b32.xlu0 %v2661, 120
      %v3124 = vpop.permute.xlu0 %3123
      %3125 = vrot.lane.b32.xlu0 %v2663, 120
      %v3126 = vpop.permute.xlu0 %3125
      %3127 = vrot.lane.b32.xlu0 %v2666, 120
      %v3128 = vpop.permute.xlu0 %3127
      %3129 = vrot.lane.b32.xlu0 %v2668, 120
      %v3130 = vpop.permute.xlu0 %3129
      %3131 = vrot.lane.b32.xlu0 %v2671, 120
      %v3132 = vpop.permute.xlu0 %3131
      %3133 = vrot.lane.b32.xlu0 %v2673, 120
      %v3134 = vpop.permute.xlu0 %3133
      %3135 = vrot.lane.b32.xlu0 %v2676, 120
      %v3136 = vpop.permute.xlu0 %3135
      %3137 = vrot.lane.b32.xlu0 %v2678, 120
      %v3138 = vpop.permute.xlu0 %3137
      %3139 = vrot.lane.b32.xlu0 %v2681, 120
      %v3140 = vpop.permute.xlu0 %3139
      %3141 = vrot.lane.b32.xlu0 %v2683, 120
      %v3142 = vpop.permute.xlu0 %3141
      %3143 = vrot.lane.b32.xlu0 %v2686, 120
      %v3144 = vpop.permute.xlu0 %3143
      %3145 = vrot.lane.b32.xlu0 %v2688, 120
      %v3146 = vpop.permute.xlu0 %3145
      %3147 = vrot.lane.b32.xlu0 %v2691, 120
      %v3148 = vpop.permute.xlu0 %3147
      %3149 = vrot.lane.b32.xlu0 %v2693, 120
      %v3150 = vpop.permute.xlu0 %3149
      %3151 = vrot.lane.b32.xlu0 %v2704, 120
      %v3152 = vpop.permute.xlu0 %3151
      %3153 = vrot.lane.b32.xlu0 %v2706, 120
      %v3154 = vpop.permute.xlu0 %3153
      %3187 = vrot.lane.b32.xlu0 %v2441, 16
      %v3188 = vpop.permute.xlu0 %3187
      %3189 = vrot.lane.b32.xlu0 %v2442, 16
      %v3190 = vpop.permute.xlu0 %3189
      %3191 = vrot.lane.b32.xlu0 %v2444, 16
      %v3192 = vpop.permute.xlu0 %3191
      %3193 = vrot.lane.b32.xlu0 %v2445, 16
      %v3194 = vpop.permute.xlu0 %3193
      %3195 = vrot.lane.b32.xlu0 %v2447, 16
      %v3196 = vpop.permute.xlu0 %3195
      %3197 = vrot.lane.b32.xlu0 %v2448, 16
      %v3198 = vpop.permute.xlu0 %3197
      %3199 = vrot.lane.b32.xlu0 %v2450, 16
      %v3200 = vpop.permute.xlu0 %3199
      %3201 = vrot.lane.b32.xlu0 %v2451, 16
      %v3202 = vpop.permute.xlu0 %3201
      %3203 = vrot.lane.b32.xlu0 %v2453, 16
      %v3204 = vpop.permute.xlu0 %3203
      %3205 = vrot.lane.b32.xlu0 %v2454, 16
      %v3206 = vpop.permute.xlu0 %3205
      %3207 = vrot.lane.b32.xlu0 %v2456, 16
      %v3208 = vpop.permute.xlu0 %3207
      %3209 = vrot.lane.b32.xlu0 %v2457, 16
      %v3210 = vpop.permute.xlu0 %3209
      %3211 = vrot.lane.b32.xlu0 %v2459, 16
      %v3212 = vpop.permute.xlu0 %3211
      %3213 = vrot.lane.b32.xlu0 %v2460, 16
      %v3214 = vpop.permute.xlu0 %3213
      %3215 = vrot.lane.b32.xlu0 %v2462, 16
      %v3216 = vpop.permute.xlu0 %3215
      %3217 = vrot.lane.b32.xlu0 %v2463, 16
      %v3218 = vpop.permute.xlu0 %3217
      %3219 = vrot.lane.b32.xlu0 %v2465, 16
      %v3220 = vpop.permute.xlu0 %3219
      %3221 = vrot.lane.b32.xlu0 %v2466, 16
      %v3222 = vpop.permute.xlu0 %3221
      %3223 = vrot.lane.b32.xlu0 %v2468, 16
      %v3224 = vpop.permute.xlu0 %3223
      %3225 = vrot.lane.b32.xlu0 %v2469, 16
      %v3226 = vpop.permute.xlu0 %3225
      %3227 = vrot.lane.b32.xlu0 %v2471, 16
      %v3228 = vpop.permute.xlu0 %3227
      %3229 = vrot.lane.b32.xlu0 %v2472, 16
      %v3230 = vpop.permute.xlu0 %3229
      %3231 = vrot.lane.b32.xlu0 %v2474, 16
      %v3232 = vpop.permute.xlu0 %3231
      %3233 = vrot.lane.b32.xlu0 %v2475, 16
      %v3234 = vpop.permute.xlu0 %3233
      %3235 = vrot.lane.b32.xlu0 %v2477, 16
      %v3236 = vpop.permute.xlu0 %3235
      %3237 = vrot.lane.b32.xlu0 %v2478, 16
      %v3238 = vpop.permute.xlu0 %3237
      %3239 = vrot.lane.b32.xlu0 %v2480, 16
      %v3240 = vpop.permute.xlu0 %3239
      %3241 = vrot.lane.b32.xlu0 %v2481, 16
      %v3242 = vpop.permute.xlu0 %3241
      %3243 = vrot.lane.b32.xlu0 %v2483, 16
      %v3244 = vpop.permute.xlu0 %3243
      %3245 = vrot.lane.b32.xlu0 %v2484, 16
      %v3246 = vpop.permute.xlu0 %3245
      %3247 = vrot.lane.b32.xlu0 %v2435, 16
      %v3248 = vpop.permute.xlu0 %3247
      %3249 = vrot.lane.b32.xlu0 %v2436, 16
      %v3250 = vpop.permute.xlu0 %3249
      %3283 = vrot.lane.b32.xlu0 %v2546, 40
      %v3284 = vpop.permute.xlu0 %3283
      %3285 = vrot.lane.b32.xlu0 %v2548, 40
      %v3286 = vpop.permute.xlu0 %3285
      %3287 = vrot.lane.b32.xlu0 %v2551, 40
      %v3288 = vpop.permute.xlu0 %3287
      %3289 = vrot.lane.b32.xlu0 %v2553, 40
      %v3290 = vpop.permute.xlu0 %3289
      %3291 = vrot.lane.b32.xlu0 %v2556, 40
      %v3292 = vpop.permute.xlu0 %3291
      %3293 = vrot.lane.b32.xlu0 %v2558, 40
      %v3294 = vpop.permute.xlu0 %3293
      %3295 = vrot.lane.b32.xlu0 %v2561, 40
      %v3296 = vpop.permute.xlu0 %3295
      %3297 = vrot.lane.b32.xlu0 %v2563, 40
      %v3298 = vpop.permute.xlu0 %3297
      %3299 = vrot.lane.b32.xlu0 %v2566, 40
      %v3300 = vpop.permute.xlu0 %3299
      %3301 = vrot.lane.b32.xlu0 %v2568, 40
      %v3302 = vpop.permute.xlu0 %3301
      %3303 = vrot.lane.b32.xlu0 %v2571, 40
      %v3304 = vpop.permute.xlu0 %3303
      %3305 = vrot.lane.b32.xlu0 %v2573, 40
      %v3306 = vpop.permute.xlu0 %3305
      %3307 = vrot.lane.b32.xlu0 %v2576, 40
      %v3308 = vpop.permute.xlu0 %3307
      %3309 = vrot.lane.b32.xlu0 %v2578, 40
      %v3310 = vpop.permute.xlu0 %3309
      %3311 = vrot.lane.b32.xlu0 %v2581, 40
      %v3312 = vpop.permute.xlu0 %3311
      %3313 = vrot.lane.b32.xlu0 %v2583, 40
      %v3314 = vpop.permute.xlu0 %3313
      %3315 = vrot.lane.b32.xlu0 %v2586, 40
      %v3316 = vpop.permute.xlu0 %3315
      %3317 = vrot.lane.b32.xlu0 %v2588, 40
      %v3318 = vpop.permute.xlu0 %3317
      %3319 = vrot.lane.b32.xlu0 %v2591, 40
      %v3320 = vpop.permute.xlu0 %3319
      %3321 = vrot.lane.b32.xlu0 %v2593, 40
      %v3322 = vpop.permute.xlu0 %3321
      %3323 = vrot.lane.b32.xlu0 %v2596, 40
      %v3324 = vpop.permute.xlu0 %3323
      %3325 = vrot.lane.b32.xlu0 %v2598, 40
      %v3326 = vpop.permute.xlu0 %3325
      %3327 = vrot.lane.b32.xlu0 %v2601, 40
      %v3328 = vpop.permute.xlu0 %3327
      %3329 = vrot.lane.b32.xlu0 %v2603, 40
      %v3330 = vpop.permute.xlu0 %3329
      %3331 = vrot.lane.b32.xlu0 %v2606, 40
      %v3332 = vpop.permute.xlu0 %3331
      %3333 = vrot.lane.b32.xlu0 %v2608, 40
      %v3334 = vpop.permute.xlu0 %3333
      %3335 = vrot.lane.b32.xlu0 %v2611, 40
      %v3336 = vpop.permute.xlu0 %3335
      %3337 = vrot.lane.b32.xlu0 %v2613, 40
      %v3338 = vpop.permute.xlu0 %3337
      %3339 = vrot.lane.b32.xlu0 %v2699, 40
      %v3340 = vpop.permute.xlu0 %3339
      %3341 = vrot.lane.b32.xlu0 %v2701, 40
      %v3342 = vpop.permute.xlu0 %3341
      %3343 = vrot.lane.b32.xlu0 %v2536, 40
      %v3344 = vpop.permute.xlu0 %3343
      %3345 = vrot.lane.b32.xlu0 %v2538, 40
      %v3346 = vpop.permute.xlu0 %3345
      %3379 = vrot.lane.b32.xlu0 %v2626, 64
      %v3380 = vpop.permute.xlu0 %3379
      %3381 = vrot.lane.b32.xlu0 %v2628, 64
      %v3382 = vpop.permute.xlu0 %3381
      %3383 = vrot.lane.b32.xlu0 %v2631, 64
      %v3384 = vpop.permute.xlu0 %3383
      %3385 = vrot.lane.b32.xlu0 %v2633, 64
      %v3386 = vpop.permute.xlu0 %3385
      %3387 = vrot.lane.b32.xlu0 %v2636, 64
      %v3388 = vpop.permute.xlu0 %3387
      %3389 = vrot.lane.b32.xlu0 %v2638, 64
      %v3390 = vpop.permute.xlu0 %3389
      %3391 = vrot.lane.b32.xlu0 %v2641, 64
      %v3392 = vpop.permute.xlu0 %3391
      %3393 = vrot.lane.b32.xlu0 %v2643, 64
      %v3394 = vpop.permute.xlu0 %3393
      %3395 = vrot.lane.b32.xlu0 %v2646, 64
      %v3396 = vpop.permute.xlu0 %3395
      %3397 = vrot.lane.b32.xlu0 %v2648, 64
      %v3398 = vpop.permute.xlu0 %3397
      %3399 = vrot.lane.b32.xlu0 %v2651, 64
      %v3400 = vpop.permute.xlu0 %3399
      %3401 = vrot.lane.b32.xlu0 %v2653, 64
      %v3402 = vpop.permute.xlu0 %3401
      %3403 = vrot.lane.b32.xlu0 %v2656, 64
      %v3404 = vpop.permute.xlu0 %3403
      %3405 = vrot.lane.b32.xlu0 %v2658, 64
      %v3406 = vpop.permute.xlu0 %3405
      %3407 = vrot.lane.b32.xlu0 %v2661, 64
      %v3408 = vpop.permute.xlu0 %3407
      %3409 = vrot.lane.b32.xlu0 %v2663, 64
      %v3410 = vpop.permute.xlu0 %3409
      %3411 = vrot.lane.b32.xlu0 %v2666, 64
      %v3412 = vpop.permute.xlu0 %3411
      %3413 = vrot.lane.b32.xlu0 %v2668, 64
      %v3414 = vpop.permute.xlu0 %3413
      %3415 = vrot.lane.b32.xlu0 %v2671, 64
      %v3416 = vpop.permute.xlu0 %3415
      %3417 = vrot.lane.b32.xlu0 %v2673, 64
      %v3418 = vpop.permute.xlu0 %3417
      %3419 = vrot.lane.b32.xlu0 %v2676, 64
      %v3420 = vpop.permute.xlu0 %3419
      %3421 = vrot.lane.b32.xlu0 %v2678, 64
      %v3422 = vpop.permute.xlu0 %3421
      %3423 = vrot.lane.b32.xlu0 %v2681, 64
      %v3424 = vpop.permute.xlu0 %3423
      %3425 = vrot.lane.b32.xlu0 %v2683, 64
      %v3426 = vpop.permute.xlu0 %3425
      %3427 = vrot.lane.b32.xlu0 %v2686, 64
      %v3428 = vpop.permute.xlu0 %3427
      %3429 = vrot.lane.b32.xlu0 %v2688, 64
      %v3430 = vpop.permute.xlu0 %3429
      %3431 = vrot.lane.b32.xlu0 %v2691, 64
      %v3432 = vpop.permute.xlu0 %3431
      %3433 = vrot.lane.b32.xlu0 %v2693, 64
      %v3434 = vpop.permute.xlu0 %3433
      %3435 = vrot.lane.b32.xlu0 %v2704, 64
      %v3436 = vpop.permute.xlu0 %3435
      %3437 = vrot.lane.b32.xlu0 %v2706, 64
      %v3438 = vpop.permute.xlu0 %3437
      %3439 = vrot.lane.b32.xlu0 %v2616, 64
      %v3440 = vpop.permute.xlu0 %3439
      %3441 = vrot.lane.b32.xlu0 %v2618, 64
      %v3442 = vpop.permute.xlu0 %3441
      %vm3475 = vcmask 195584
      %v3476 = vsel %vm3475, %v2435, %v2708
      %v3477 = vsel %vm3475, %v2436, %v2710
      %v3478 = vsel %vm3475, %v2438, %v2712
      %v3479 = vsel %vm3475, %v2439, %v2714
      %v3480 = vsel %vm3475, %v2441, %v2716
      %v3481 = vsel %vm3475, %v2442, %v2718
      %v3482 = vsel %vm3475, %v2444, %v2720
      %v3483 = vsel %vm3475, %v2445, %v2722
      %v3484 = vsel %vm3475, %v2447, %v2724
      %v3485 = vsel %vm3475, %v2448, %v2726
      %v3486 = vsel %vm3475, %v2450, %v2728
      %v3487 = vsel %vm3475, %v2451, %v2730
      %v3488 = vsel %vm3475, %v2453, %v2732
      %v3489 = vsel %vm3475, %v2454, %v2734
      %v3490 = vsel %vm3475, %v2456, %v2736
      %v3491 = vsel %vm3475, %v2457, %v2738
      %v3492 = vsel %vm3475, %v2459, %v2740
      %v3493 = vsel %vm3475, %v2460, %v2742
      %v3494 = vsel %vm3475, %v2462, %v2744
      %v3495 = vsel %vm3475, %v2463, %v2746
      %v3496 = vsel %vm3475, %v2465, %v2748
      %v3497 = vsel %vm3475, %v2466, %v2750
      %v3498 = vsel %vm3475, %v2468, %v2752
      %v3499 = vsel %vm3475, %v2469, %v2754
      %v3500 = vsel %vm3475, %v2471, %v2756
      %v3501 = vsel %vm3475, %v2472, %v2758
      %v3502 = vsel %vm3475, %v2474, %v2760
      %v3503 = vsel %vm3475, %v2475, %v2762
      %v3504 = vsel %vm3475, %v2477, %v2764
      %v3505 = vsel %vm3475, %v2478, %v2766
      %v3506 = vsel %vm3475, %v2480, %v2768
      %v3507 = vsel %vm3475, %v2481, %v2770
      %v3508 = vsel %vm1531, %v3476, %v2804
      %v3509 = vsel %vm1531, %v3477, %v2806
      %v3510 = vsel %vm1531, %v3478, %v2808
      %v3511 = vsel %vm1531, %v3479, %v2810
      %v3512 = vsel %vm1531, %v3480, %v2812
      %v3513 = vsel %vm1531, %v3481, %v2814
      %v3514 = vsel %vm1531, %v3482, %v2816
      %v3515 = vsel %vm1531, %v3483, %v2818
      %v3516 = vsel %vm1531, %v3484, %v2820
      %v3517 = vsel %vm1531, %v3485, %v2822
      %v3518 = vsel %vm1531, %v3486, %v2824
      %v3519 = vsel %vm1531, %v3487, %v2826
      %v3520 = vsel %vm1531, %v3488, %v2828
      %v3521 = vsel %vm1531, %v3489, %v2830
      %v3522 = vsel %vm1531, %v3490, %v2832
      %v3523 = vsel %vm1531, %v3491, %v2834
      %v3524 = vsel %vm1531, %v3492, %v2836
      %v3525 = vsel %vm1531, %v3493, %v2838
      %v3526 = vsel %vm1531, %v3494, %v2840
      %v3527 = vsel %vm1531, %v3495, %v2842
      %v3528 = vsel %vm1531, %v3496, %v2844
      %v3529 = vsel %vm1531, %v3497, %v2846
      %v3530 = vsel %vm1531, %v3498, %v2848
      %v3531 = vsel %vm1531, %v3499, %v2850
      %v3532 = vsel %vm1531, %v3500, %v2852
      %v3533 = vsel %vm1531, %v3501, %v2854
      %v3534 = vsel %vm1531, %v3502, %v2856
      %v3535 = vsel %vm1531, %v3503, %v2858
      %v3536 = vsel %vm1531, %v3504, %v2860
      %v3537 = vsel %vm1531, %v3505, %v2862
      %v3538 = vsel %vm1531, %v3506, %v2864
      %v3539 = vsel %vm1531, %v3507, %v2866
      %vm3540 = vcmask 588800
      %v3541 = vsel %vm3540, %v3508, %v2900
      %v3542 = vsel %vm3540, %v3509, %v2902
      %v3543 = vsel %vm3540, %v3510, %v2904
      %v3544 = vsel %vm3540, %v3511, %v2906
      %v3545 = vsel %vm3540, %v3512, %v2908
      %v3546 = vsel %vm3540, %v3513, %v2910
      %v3547 = vsel %vm3540, %v3514, %v2912
      %v3548 = vsel %vm3540, %v3515, %v2914
      %v3549 = vsel %vm3540, %v3516, %v2916
      %v3550 = vsel %vm3540, %v3517, %v2918
      %v3551 = vsel %vm3540, %v3518, %v2920
      %v3552 = vsel %vm3540, %v3519, %v2922
      %v3553 = vsel %vm3540, %v3520, %v2924
      %v3554 = vsel %vm3540, %v3521, %v2926
      %v3555 = vsel %vm3540, %v3522, %v2928
      %v3556 = vsel %vm3540, %v3523, %v2930
      %v3557 = vsel %vm3540, %v3524, %v2932
      %v3558 = vsel %vm3540, %v3525, %v2934
      %v3559 = vsel %vm3540, %v3526, %v2936
      %v3560 = vsel %vm3540, %v3527, %v2938
      %v3561 = vsel %vm3540, %v3528, %v2940
      %v3562 = vsel %vm3540, %v3529, %v2942
      %v3563 = vsel %vm3540, %v3530, %v2944
      %v3564 = vsel %vm3540, %v3531, %v2946
      %v3565 = vsel %vm3540, %v3532, %v2948
      %v3566 = vsel %vm3540, %v3533, %v2950
      %v3567 = vsel %vm3540, %v3534, %v2952
      %v3568 = vsel %vm3540, %v3535, %v2954
      %v3569 = vsel %vm3540, %v3536, %v2956
      %v3570 = vsel %vm3540, %v3537, %v2958
      %v3571 = vsel %vm3540, %v3538, %v2960
      %v3572 = vsel %vm3540, %v3539, %v2962
      %v3573 = vsel %vm1630, %v3541, %v2996
      %v3574 = vsel %vm1630, %v3542, %v2998
      %v3575 = vsel %vm1630, %v3543, %v3000
      %v3576 = vsel %vm1630, %v3544, %v3002
      %v3577 = vsel %vm1630, %v3545, %v3004
      %v3578 = vsel %vm1630, %v3546, %v3006
      %v3579 = vsel %vm1630, %v3547, %v3008
      %v3580 = vsel %vm1630, %v3548, %v3010
      %v3581 = vsel %vm1630, %v3549, %v3012
      %v3582 = vsel %vm1630, %v3550, %v3014
      %v3583 = vsel %vm1630, %v3551, %v3016
      %v3584 = vsel %vm1630, %v3552, %v3018
      %v3585 = vsel %vm1630, %v3553, %v3020
      %v3586 = vsel %vm1630, %v3554, %v3022
      %v3587 = vsel %vm1630, %v3555, %v3024
      %v3588 = vsel %vm1630, %v3556, %v3026
      %v3589 = vsel %vm1630, %v3557, %v3028
      %v3590 = vsel %vm1630, %v3558, %v3030
      %v3591 = vsel %vm1630, %v3559, %v3032
      %v3592 = vsel %vm1630, %v3560, %v3034
      %v3593 = vsel %vm1630, %v3561, %v3036
      %v3594 = vsel %vm1630, %v3562, %v3038
      %v3595 = vsel %vm1630, %v3563, %v3040
      %v3596 = vsel %vm1630, %v3564, %v3042
      %v3597 = vsel %vm1630, %v3565, %v3044
      %v3598 = vsel %vm1630, %v3566, %v3046
      %v3599 = vsel %vm1630, %v3567, %v3048
      %v3600 = vsel %vm1630, %v3568, %v3050
      %v3601 = vsel %vm1630, %v3569, %v3052
      %v3602 = vsel %vm1630, %v3570, %v3054
      %v3603 = vsel %vm1630, %v3571, %v3056
      %v3604 = vsel %vm1630, %v3572, %v3058
      %vm3605 = vcmask 982016
      %v3606 = vsel %vm3605, %v3573, %v3092
      %v3607 = vsel %vm3605, %v3574, %v3094
      %v3608 = vsel %vm3605, %v3575, %v3096
      %v3609 = vsel %vm3605, %v3576, %v3098
      %v3610 = vsel %vm3605, %v3577, %v3100
      %v3611 = vsel %vm3605, %v3578, %v3102
      %v3612 = vsel %vm3605, %v3579, %v3104
      %v3613 = vsel %vm3605, %v3580, %v3106
      %v3614 = vsel %vm3605, %v3581, %v3108
      %v3615 = vsel %vm3605, %v3582, %v3110
      %v3616 = vsel %vm3605, %v3583, %v3112
      %v3617 = vsel %vm3605, %v3584, %v3114
      %v3618 = vsel %vm3605, %v3585, %v3116
      %v3619 = vsel %vm3605, %v3586, %v3118
      %v3620 = vsel %vm3605, %v3587, %v3120
      %v3621 = vsel %vm3605, %v3588, %v3122
      %v3622 = vsel %vm3605, %v3589, %v3124
      %v3623 = vsel %vm3605, %v3590, %v3126
      %v3624 = vsel %vm3605, %v3591, %v3128
      %v3625 = vsel %vm3605, %v3592, %v3130
      %v3626 = vsel %vm3605, %v3593, %v3132
      %v3627 = vsel %vm3605, %v3594, %v3134
      %v3628 = vsel %vm3605, %v3595, %v3136
      %v3629 = vsel %vm3605, %v3596, %v3138
      %v3630 = vsel %vm3605, %v3597, %v3140
      %v3631 = vsel %vm3605, %v3598, %v3142
      %v3632 = vsel %vm3605, %v3599, %v3144
      %v3633 = vsel %vm3605, %v3600, %v3146
      %v3634 = vsel %vm3605, %v3601, %v3148
      %v3635 = vsel %vm3605, %v3602, %v3150
      %v3636 = vsel %vm3605, %v3603, %v3152
      %v3637 = vsel %vm3605, %v3604, %v3154
      %v3638 = vsel %vm1465, %v3092, %v3188
      %v3639 = vsel %vm1465, %v3094, %v3190
      %v3640 = vsel %vm1465, %v3096, %v3192
      %v3641 = vsel %vm1465, %v3098, %v3194
      %v3642 = vsel %vm1465, %v3100, %v3196
      %v3643 = vsel %vm1465, %v3102, %v3198
      %v3644 = vsel %vm1465, %v3104, %v3200
      %v3645 = vsel %vm1465, %v3106, %v3202
      %v3646 = vsel %vm1465, %v3108, %v3204
      %v3647 = vsel %vm1465, %v3110, %v3206
      %v3648 = vsel %vm1465, %v3112, %v3208
      %v3649 = vsel %vm1465, %v3114, %v3210
      %v3650 = vsel %vm1465, %v3116, %v3212
      %v3651 = vsel %vm1465, %v3118, %v3214
      %v3652 = vsel %vm1465, %v3120, %v3216
      %v3653 = vsel %vm1465, %v3122, %v3218
      %v3654 = vsel %vm1465, %v3124, %v3220
      %v3655 = vsel %vm1465, %v3126, %v3222
      %v3656 = vsel %vm1465, %v3128, %v3224
      %v3657 = vsel %vm1465, %v3130, %v3226
      %v3658 = vsel %vm1465, %v3132, %v3228
      %v3659 = vsel %vm1465, %v3134, %v3230
      %v3660 = vsel %vm1465, %v3136, %v3232
      %v3661 = vsel %vm1465, %v3138, %v3234
      %v3662 = vsel %vm1465, %v3140, %v3236
      %v3663 = vsel %vm1465, %v3142, %v3238
      %v3664 = vsel %vm1465, %v3144, %v3240
      %v3665 = vsel %vm1465, %v3146, %v3242
      %v3666 = vsel %vm1465, %v3148, %v3244
      %v3667 = vsel %vm1465, %v3150, %v3246
      %v3668 = vsel %vm1465, %v3152, %v3248
      %v3669 = vsel %vm1465, %v3154, %v3250
      %vm3670 = vcmask 326656
      %v3671 = vsel %vm3670, %v3638, %v3284
      %v3672 = vsel %vm3670, %v3639, %v3286
      %v3673 = vsel %vm3670, %v3640, %v3288
      %v3674 = vsel %vm3670, %v3641, %v3290
      %v3675 = vsel %vm3670, %v3642, %v3292
      %v3676 = vsel %vm3670, %v3643, %v3294
      %v3677 = vsel %vm3670, %v3644, %v3296
      %v3678 = vsel %vm3670, %v3645, %v3298
      %v3679 = vsel %vm3670, %v3646, %v3300
      %v3680 = vsel %vm3670, %v3647, %v3302
      %v3681 = vsel %vm3670, %v3648, %v3304
      %v3682 = vsel %vm3670, %v3649, %v3306
      %v3683 = vsel %vm3670, %v3650, %v3308
      %v3684 = vsel %vm3670, %v3651, %v3310
      %v3685 = vsel %vm3670, %v3652, %v3312
      %v3686 = vsel %vm3670, %v3653, %v3314
      %v3687 = vsel %vm3670, %v3654, %v3316
      %v3688 = vsel %vm3670, %v3655, %v3318
      %v3689 = vsel %vm3670, %v3656, %v3320
      %v3690 = vsel %vm3670, %v3657, %v3322
      %v3691 = vsel %vm3670, %v3658, %v3324
      %v3692 = vsel %vm3670, %v3659, %v3326
      %v3693 = vsel %vm3670, %v3660, %v3328
      %v3694 = vsel %vm3670, %v3661, %v3330
      %v3695 = vsel %vm3670, %v3662, %v3332
      %v3696 = vsel %vm3670, %v3663, %v3334
      %v3697 = vsel %vm3670, %v3664, %v3336
      %v3698 = vsel %vm3670, %v3665, %v3338
      %v3699 = vsel %vm3670, %v3666, %v3340
      %v3700 = vsel %vm3670, %v3667, %v3342
      %v3701 = vsel %vm3670, %v3668, %v3344
      %v3702 = vsel %vm3670, %v3669, %v3346
      %v3703 = vsel %vm1564, %v3671, %v3380
      %v3704 = vsel %vm1564, %v3672, %v3382
      %v3705 = vsel %vm1564, %v3673, %v3384
      %v3706 = vsel %vm1564, %v3674, %v3386
      %v3707 = vsel %vm1564, %v3675, %v3388
      %v3708 = vsel %vm1564, %v3676, %v3390
      %v3709 = vsel %vm1564, %v3677, %v3392
      %v3710 = vsel %vm1564, %v3678, %v3394
      %v3711 = vsel %vm1564, %v3679, %v3396
      %v3712 = vsel %vm1564, %v3680, %v3398
      %v3713 = vsel %vm1564, %v3681, %v3400
      %v3714 = vsel %vm1564, %v3682, %v3402
      %v3715 = vsel %vm1564, %v3683, %v3404
      %v3716 = vsel %vm1564, %v3684, %v3406
      %v3717 = vsel %vm1564, %v3685, %v3408
      %v3718 = vsel %vm1564, %v3686, %v3410
      %v3719 = vsel %vm1564, %v3687, %v3412
      %v3720 = vsel %vm1564, %v3688, %v3414
      %v3721 = vsel %vm1564, %v3689, %v3416
      %v3722 = vsel %vm1564, %v3690, %v3418
      %v3723 = vsel %vm1564, %v3691, %v3420
      %v3724 = vsel %vm1564, %v3692, %v3422
      %v3725 = vsel %vm1564, %v3693, %v3424
      %v3726 = vsel %vm1564, %v3694, %v3426
      %v3727 = vsel %vm1564, %v3695, %v3428
      %v3728 = vsel %vm1564, %v3696, %v3430
      %v3729 = vsel %vm1564, %v3697, %v3432
      %v3730 = vsel %vm1564, %v3698, %v3434
      %v3731 = vsel %vm1564, %v3699, %v3436
      %v3732 = vsel %vm1564, %v3700, %v3438
      %v3733 = vsel %vm1564, %v3701, %v3440
      %v3734 = vsel %vm1564, %v3702, %v3442
      %v3735 = vld [vmem:[%s3] sm:$0xff]
      %v3736 = vld [vmem:[%s3 + $0x8] sm:$0xff]
      %v3737 = vld [vmem:[%s3 + $0x10] sm:$0xff]
      %v3738 = vld [vmem:[%s3 + $0x18] sm:$0xff]
      %v3739 = vld [vmem:[%s3 + $0x20] sm:$0xff]
      %v3740 = vld [vmem:[%s3 + $0x28] sm:$0xff]
      %v3741 = vld [vmem:[%s3 + $0x30] sm:$0xff]
      %v3742 = vld [vmem:[%s3 + $0x38] sm:$0xff]
      %v3743 = vld [vmem:[%s3 + $0x40] sm:$0xff]
      %v3744 = vld [vmem:[%s3 + $0x48] sm:$0xff]
      %v3745 = vld [vmem:[%s3 + $0x50] sm:$0xff]
      %v3746 = vld [vmem:[%s3 + $0x58] sm:$0xff]
      %v3747 = vld [vmem:[%s3 + $0x60] sm:$0xff]
      %v3748 = vld [vmem:[%s3 + $0x68] sm:$0xff]
      %v3749 = vld [vmem:[%s3 + $0x70] sm:$0xff]
      %v3750 = vld [vmem:[%s3 + $0x78] sm:$0xff]
      %v3751 = vld [vmem:[%s3 + $0x80] sm:$0xff]
      %v3752 = vld [vmem:[%s3 + $0x88] sm:$0xff]
      %v3753 = vld [vmem:[%s3 + $0x90] sm:$0xff]
      %v3754 = vld [vmem:[%s3 + $0x98] sm:$0xff]
      %v3755 = vld [vmem:[%s3 + $0xa0] sm:$0xff]
      %v3756 = vld [vmem:[%s3 + $0xa8] sm:$0xff]
      %v3757 = vld [vmem:[%s3 + $0xb0] sm:$0xff]
      %v3758 = vld [vmem:[%s3 + $0xb8] sm:$0xff]
      %v3759 = vld [vmem:[%s3 + $0xc0] sm:$0xff]
      %v3760 = vld [vmem:[%s3 + $0xc8] sm:$0xff]
      %v3761 = vld [vmem:[%s3 + $0xd0] sm:$0xff]
      %v3762 = vld [vmem:[%s4] sm:$0x1]
      %v3764 = vlaneseq
      %v3765 = vshrl.u32 %v3764, 7
      %v3766 = vsub.s32 0, %v3765
      %v3767 = vrot.slane %v3762, %v3766
      %vm3769 = vcmask 719872
      %v3771 = vsel %vm3769, %v3703, 0
      %v3774 = vsel %vm3769, %v3704, 0
      %v3777 = vsel %vm3769, %v3705, 0
      %v3780 = vsel %vm3769, %v3706, 0
      %v3783 = vsel %vm3769, %v3707, 0
      %v3786 = vsel %vm3769, %v3708, 0
      %v3789 = vsel %vm3769, %v3709, 0
      %v3792 = vsel %vm3769, %v3710, 0
      %v3795 = vsel %vm3769, %v3711, 0
      %v3798 = vsel %vm3769, %v3712, 0
      %v3801 = vsel %vm3769, %v3713, 0
      %v3804 = vsel %vm3769, %v3714, 0
      %v3807 = vsel %vm3769, %v3715, 0
      %v3810 = vsel %vm3769, %v3716, 0
      %v3813 = vsel %vm3769, %v3717, 0
      %v3816 = vsel %vm3769, %v3718, 0
      %v3819 = vsel %vm3769, %v3719, 0
      %v3822 = vsel %vm3769, %v3720, 0
      %v3825 = vsel %vm3769, %v3721, 0
      %v3828 = vsel %vm3769, %v3722, 0
      %v3831 = vsel %vm3769, %v3723, 0
      %v3834 = vsel %vm3769, %v3724, 0
      %v3837 = vsel %vm3769, %v3725, 0
      %v3840 = vsel %vm3769, %v3726, 0
      %v3843 = vsel %vm3769, %v3727, 0
      %v3846 = vsel %vm3769, %v3728, 0
      %v3849 = vsel %vm3769, %v3729, 0
      %v3852 = vsel %vm3769, %v3730, 0
      %v3855 = vsel %vm3769, %v3731, 0
      %v3858 = vsel %vm3769, %v3732, 0
      %v3861 = vsel %vm3769, %v3733, 0
      %v3864 = vsel %vm3769, %v3734, 0
      %3866 = vmatprep.subr.mxu0 0.0
      %3867 = vmatpush1.msra.mxu0 %v3735
      %3868 = vmatprep.subr.mxu0 0.0
      %3869 = vmatpush1.msra.mxu0 %v3736
      %3870 = vmatprep.subr.mxu0 0.0
      %3871 = vmatpush1.msra.mxu0 %v3737
      %3872 = vmatprep.subr.mxu0 0.0
      %3873 = vmatpush1.msra.mxu0 %v3738
      %3874 = vmatprep.subr.mxu0 0.0
      %3875 = vmatpush1.msra.mxu0 %v3739
      %3876 = vmatprep.subr.mxu0 0.0
      %3877 = vmatpush1.msra.mxu0 %v3740
      %3878 = vmatprep.subr.mxu0 0.0
      %3879 = vmatpush1.msra.mxu0 %v3741
      %3880 = vmatprep.subr.mxu0 0.0
      %3881 = vmatpush1.msra.mxu0 %v3742
      %3882 = vmatprep.subr.mxu0 0.0
      %3883 = vmatpush1.msra.mxu0 %v3743
      %3884 = vmatprep.subr.mxu0 0.0
      %3885 = vmatpush1.msra.mxu0 %v3744
      %3886 = vmatprep.subr.mxu0 0.0
      %3887 = vmatpush1.msra.mxu0 %v3745
      %3888 = vmatprep.subr.mxu0 0.0
      %3889 = vmatpush1.msra.mxu0 %v3746
      %3890 = vmatprep.subr.mxu0 0.0
      %3891 = vmatpush1.msra.mxu0 %v3747
      %3892 = vmatprep.subr.mxu0 0.0
      %3893 = vmatpush1.msra.mxu0 %v3748
      %3894 = vmatprep.subr.mxu0 0.0
      %3895 = vmatpush1.msra.mxu0 %v3749
      %3896 = vmatprep.subr.mxu0 0.0
      %3897 = vmatpush1.msra.mxu0 %v3750
      %3898 = vmatprep.subr.mxu0 0.0
      %3899 = vmatpush1.msra.mxu0 %v3751
      %3900 = vmatprep.subr.mxu0 0.0
      %3901 = vmatpush1.msra.mxu0 %v3752
      %3902 = vmatprep.subr.mxu0 0.0
      %3903 = vmatpush1.msra.mxu0 %v3753
      %3904 = vmatprep.subr.mxu0 0.0
      %3905 = vmatpush1.msra.mxu0 %v3754
      %3906 = vmatprep.subr.mxu0 0.0
      %3907 = vmatpush1.msra.mxu0 %v3755
      %3908 = vmatprep.subr.mxu0 0.0
      %3909 = vmatpush1.msra.mxu0 %v3756
      %3910 = vmatprep.subr.mxu0 0.0
      %3911 = vmatpush1.msra.mxu0 %v3757
      %3912 = vmatprep.subr.mxu0 0.0
      %3913 = vmatpush1.msra.mxu0 %v3758
      %3914 = vmatprep.subr.mxu0 0.0
      %3915 = vmatpush1.msra.mxu0 %v3759
      %3916 = vmatprep.subr.mxu0 0.0
      %3917 = vmatpush1.msra.mxu0 %v3760
      %3918 = vmatprep.subr.mxu0 0.0
      %3919 = vmatpush1.msra.mxu0 %v3761
      %3920 = vmatprep.subr.mxu0 0.0
      %3921 = vmatpush1.msra.mxu0 0.0
      %3922 = vmatprep.subr.mxu0 0.0
      %3923 = vmatpush1.msra.mxu0 0.0
      %3924 = vmatprep.subr.mxu0 0.0
      %3925 = vmatpush1.msra.mxu0 0.0
      %3926 = vmatprep.subr.mxu0 0.0
      %3927 = vmatpush1.msra.mxu0 0.0
      %3928 = vmatprep.subr.mxu0 0.0
      %3929 = vmatpush1.msra.mxu0 0.0
      %3930 = vmatprep.mubr.f32.mxu0 %v3771
      %3931 = vmatmul.mubr.f32.gmra.mrb[0].mxu0 %v3606
      %v3932 = vpop.f32.mrb[0].mxu0
      %v3933 = vadd.f32 %v3767, %v3932
      %v3934 = vpop.f32.mrb[0].mxu0
      %3935 = vmatprep.mubr.f32.mxu0 %v3774
      %3936 = vmatmul.mubr.f32.gmra.mrb[0].mxu0 %v3607
      %v3937 = vpop.f32.mrb[0].mxu0
      %v3938 = vadd.f32 %v3767, %v3937
      %v3939 = vpop.f32.mrb[0].mxu0
      %3940 = vmatprep.mubr.f32.mxu0 %v3777
      %3941 = vmatmul.mubr.f32.gmra.mrb[0].mxu0 %v3608
      %v3942 = vpop.f32.mrb[0].mxu0
      %v3943 = vadd.f32 %v3767, %v3942
      %v3944 = vpop.f32.mrb[0].mxu0
      %3945 = vmatprep.mubr.f32.mxu0 %v3780
      %3946 = vmatmul.mubr.f32.gmra.mrb[0].mxu0 %v3609
      %v3947 = vpop.f32.mrb[0].mxu0
      %v3948 = vadd.f32 %v3767, %v3947
      %v3949 = vpop.f32.mrb[0].mxu0
      %3950 = vmatprep.mubr.f32.mxu0 %v3783
      %3951 = vmatmul.mubr.f32.gmra.mrb[0].mxu0 %v3610
      %v3952 = vpop.f32.mrb[0].mxu0
      %v3953 = vadd.f32 %v3767, %v3952
      %v3954 = vpop.f32.mrb[0].mxu0
      %3955 = vmatprep.mubr.f32.mxu0 %v3786
      %3956 = vmatmul.mubr.f32.gmra.mrb[0].mxu0 %v3611
      %v3957 = vpop.f32.mrb[0].mxu0
      %v3958 = vadd.f32 %v3767, %v3957
      %v3959 = vpop.f32.mrb[0].mxu0
      %3960 = vmatprep.mubr.f32.mxu0 %v3789
      %3961 = vmatmul.mubr.f32.gmra.mrb[0].mxu0 %v3612
      %v3962 = vpop.f32.mrb[0].mxu0
      %v3963 = vadd.f32 %v3767, %v3962
      %v3964 = vpop.f32.mrb[0].mxu0
      %3965 = vmatprep.mubr.f32.mxu0 %v3792
      %3966 = vmatmul.mubr.f32.gmra.mrb[0].mxu0 %v3613
      %v3967 = vpop.f32.mrb[0].mxu0
      %v3968 = vadd.f32 %v3767, %v3967
      %v3969 = vpop.f32.mrb[0].mxu0
      %3970 = vmatprep.mubr.f32.mxu0 %v3795
      %3971 = vmatmul.mubr.f32.gmra.mrb[0].mxu0 %v3614
      %v3972 = vpop.f32.mrb[0].mxu0
      %v3973 = vadd.f32 %v3767, %v3972
      %v3974 = vpop.f32.mrb[0].mxu0
      %3975 = vmatprep.mubr.f32.mxu0 %v3798
      %3976 = vmatmul.mubr.f32.gmra.mrb[0].mxu0 %v3615
      %v3977 = vpop.f32.mrb[0].mxu0
      %v3978 = vadd.f32 %v3767, %v3977
      %v3979 = vpop.f32.mrb[0].mxu0
      %3980 = vmatprep.mubr.f32.mxu0 %v3801
      %3981 = vmatmul.mubr.f32.gmra.mrb[0].mxu0 %v3616
      %v3982 = vpop.f32.mrb[0].mxu0
      %v3983 = vadd.f32 %v3767, %v3982
      %v3984 = vpop.f32.mrb[0].mxu0
      %3985 = vmatprep.mubr.f32.mxu0 %v3804
      %3986 = vmatmul.mubr.f32.gmra.mrb[0].mxu0 %v3617
      %v3987 = vpop.f32.mrb[0].mxu0
      %v3988 = vadd.f32 %v3767, %v3987
      %v3989 = vpop.f32.mrb[0].mxu0
      %3990 = vmatprep.mubr.f32.mxu0 %v3807
      %3991 = vmatmul.mubr.f32.gmra.mrb[0].mxu0 %v3618
      %v3992 = vpop.f32.mrb[0].mxu0
      %v3993 = vadd.f32 %v3767, %v3992
      %v3994 = vpop.f32.mrb[0].mxu0
      %3995 = vmatprep.mubr.f32.mxu0 %v3810
      %3996 = vmatmul.mubr.f32.gmra.mrb[0].mxu0 %v3619
      %v3997 = vpop.f32.mrb[0].mxu0
      %v3998 = vadd.f32 %v3767, %v3997
      %v3999 = vpop.f32.mrb[0].mxu0
      %4000 = vmatprep.mubr.f32.mxu0 %v3813
      %4001 = vmatmul.mubr.f32.gmra.mrb[0].mxu0 %v3620
      %v4002 = vpop.f32.mrb[0].mxu0
      %v4003 = vadd.f32 %v3767, %v4002
      %v4004 = vpop.f32.mrb[0].mxu0
      %4005 = vmatprep.mubr.f32.mxu0 %v3816
      %4006 = vmatmul.mubr.f32.gmra.mrb[0].mxu0 %v3621
      %v4007 = vpop.f32.mrb[0].mxu0
      %v4008 = vadd.f32 %v3767, %v4007
      %v4009 = vpop.f32.mrb[0].mxu0
      %4010 = vmatprep.mubr.f32.mxu0 %v3819
      %4011 = vmatmul.mubr.f32.gmra.mrb[0].mxu0 %v3622
      %v4012 = vpop.f32.mrb[0].mxu0
      %v4013 = vadd.f32 %v3767, %v4012
      %v4014 = vpop.f32.mrb[0].mxu0
      %4015 = vmatprep.mubr.f32.mxu0 %v3822
      %4016 = vmatmul.mubr.f32.gmra.mrb[0].mxu0 %v3623
      %v4017 = vpop.f32.mrb[0].mxu0
      %v4018 = vadd.f32 %v3767, %v4017
      %v4019 = vpop.f32.mrb[0].mxu0
      %4020 = vmatprep.mubr.f32.mxu0 %v3825
      %4021 = vmatmul.mubr.f32.gmra.mrb[0].mxu0 %v3624
      %v4022 = vpop.f32.mrb[0].mxu0
      %v4023 = vadd.f32 %v3767, %v4022
      %v4024 = vpop.f32.mrb[0].mxu0
      %4025 = vmatprep.mubr.f32.mxu0 %v3828
      %4026 = vmatmul.mubr.f32.gmra.mrb[0].mxu0 %v3625
      %v4027 = vpop.f32.mrb[0].mxu0
      %v4028 = vadd.f32 %v3767, %v4027
      %v4029 = vpop.f32.mrb[0].mxu0
      %4030 = vmatprep.mubr.f32.mxu0 %v3831
      %4031 = vmatmul.mubr.f32.gmra.mrb[0].mxu0 %v3626
      %v4032 = vpop.f32.mrb[0].mxu0
      %v4033 = vadd.f32 %v3767, %v4032
      %v4034 = vpop.f32.mrb[0].mxu0
      %4035 = vmatprep.mubr.f32.mxu0 %v3834
      %4036 = vmatmul.mubr.f32.gmra.mrb[0].mxu0 %v3627
      %v4037 = vpop.f32.mrb[0].mxu0
      %v4038 = vadd.f32 %v3767, %v4037
      %v4039 = vpop.f32.mrb[0].mxu0
      %4040 = vmatprep.mubr.f32.mxu0 %v3837
      %4041 = vmatmul.mubr.f32.gmra.mrb[0].mxu0 %v3628
      %v4042 = vpop.f32.mrb[0].mxu0
      %v4043 = vadd.f32 %v3767, %v4042
      %v4044 = vpop.f32.mrb[0].mxu0
      %4045 = vmatprep.mubr.f32.mxu0 %v3840
      %4046 = vmatmul.mubr.f32.gmra.mrb[0].mxu0 %v3629
      %v4047 = vpop.f32.mrb[0].mxu0
      %v4048 = vadd.f32 %v3767, %v4047
      %v4049 = vpop.f32.mrb[0].mxu0
      %4050 = vmatprep.mubr.f32.mxu0 %v3843
      %4051 = vmatmul.mubr.f32.gmra.mrb[0].mxu0 %v3630
      %v4052 = vpop.f32.mrb[0].mxu0
      %v4053 = vadd.f32 %v3767, %v4052
      %v4054 = vpop.f32.mrb[0].mxu0
      %4055 = vmatprep.mubr.f32.mxu0 %v3846
      %4056 = vmatmul.mubr.f32.gmra.mrb[0].mxu0 %v3631
      %v4057 = vpop.f32.mrb[0].mxu0
      %v4058 = vadd.f32 %v3767, %v4057
      %v4059 = vpop.f32.mrb[0].mxu0
      %4060 = vmatprep.mubr.f32.mxu0 %v3849
      %4061 = vmatmul.mubr.f32.gmra.mrb[0].mxu0 %v3632
      %v4062 = vpop.f32.mrb[0].mxu0
      %v4063 = vadd.f32 %v3767, %v4062
      %v4064 = vpop.f32.mrb[0].mxu0
      %4065 = vmatprep.mubr.f32.mxu0 %v3852
      %4066 = vmatmul.mubr.f32.gmra.mrb[0].mxu0 %v3633
      %v4067 = vpop.f32.mrb[0].mxu0
      %v4068 = vadd.f32 %v3767, %v4067
      %v4069 = vpop.f32.mrb[0].mxu0
      %4070 = vmatprep.mubr.f32.mxu0 %v3855
      %4071 = vmatmul.mubr.f32.gmra.mrb[0].mxu0 %v3634
      %v4072 = vpop.f32.mrb[0].mxu0
      %v4073 = vadd.f32 %v3767, %v4072
      %v4074 = vpop.f32.mrb[0].mxu0
      %4075 = vmatprep.mubr.f32.mxu0 %v3858
      %4076 = vmatmul.mubr.f32.gmra.mrb[0].mxu0 %v3635
      %v4077 = vpop.f32.mrb[0].mxu0
      %v4078 = vadd.f32 %v3767, %v4077
      %v4079 = vpop.f32.mrb[0].mxu0
      %4080 = vmatprep.mubr.f32.mxu0 %v3861
      %4081 = vmatmul.mubr.f32.gmra.mrb[0].mxu0 %v3636
      %v4082 = vpop.f32.mrb[0].mxu0
      %v4083 = vadd.f32 %v3767, %v4082
      %v4084 = vpop.f32.mrb[0].mxu0
      %4085 = vmatprep.mubr.f32.mxu0 %v3864
      %4086 = vmatmul.mubr.f32.gmra.mrb[0].mxu0 %v3637
      %v4087 = vpop.f32.mrb[0].mxu0
      %v4088 = vadd.f32 %v3767, %v4087
      %v4089 = vpop.f32.mrb[0].mxu0
      %4090 = vdwg.mxu0
      %vm4091 = vcmp.ge.f32.partialorder %v3933, 0.0
      %vm4092 = vcmp.ge.f32.partialorder %v3938, 0.0
      %vm4093 = vcmp.ge.f32.partialorder %v3943, 0.0
      %vm4094 = vcmp.ge.f32.partialorder %v3948, 0.0
      %vm4095 = vcmp.ge.f32.partialorder %v3953, 0.0
      %vm4096 = vcmp.ge.f32.partialorder %v3958, 0.0
      %vm4097 = vcmp.ge.f32.partialorder %v3963, 0.0
      %vm4098 = vcmp.ge.f32.partialorder %v3968, 0.0
      %vm4099 = vcmp.ge.f32.partialorder %v3973, 0.0
      %vm4100 = vcmp.ge.f32.partialorder %v3978, 0.0
      %vm4101 = vcmp.ge.f32.partialorder %v3983, 0.0
      %vm4102 = vcmp.ge.f32.partialorder %v3988, 0.0
      %vm4103 = vcmp.ge.f32.partialorder %v3993, 0.0
      %vm4104 = vcmp.ge.f32.partialorder %v3998, 0.0
      %vm4105 = vcmp.ge.f32.partialorder %v4003, 0.0
      %vm4106 = vcmp.ge.f32.partialorder %v4008, 0.0
      %vm4107 = vcmp.ge.f32.partialorder %v4013, 0.0
      %vm4108 = vcmp.ge.f32.partialorder %v4018, 0.0
      %vm4109 = vcmp.ge.f32.partialorder %v4023, 0.0
      %vm4110 = vcmp.ge.f32.partialorder %v4028, 0.0
      %vm4111 = vcmp.ge.f32.partialorder %v4033, 0.0
      %vm4112 = vcmp.ge.f32.partialorder %v4038, 0.0
      %vm4113 = vcmp.ge.f32.partialorder %v4043, 0.0
      %vm4114 = vcmp.ge.f32.partialorder %v4048, 0.0
      %vm4115 = vcmp.ge.f32.partialorder %v4053, 0.0
      %vm4116 = vcmp.ge.f32.partialorder %v4058, 0.0
      %vm4117 = vcmp.ge.f32.partialorder %v4063, 0.0
      %vm4118 = vcmp.ge.f32.partialorder %v4068, 0.0
      %vm4119 = vcmp.ge.f32.partialorder %v4073, 0.0
      %vm4120 = vcmp.ge.f32.partialorder %v4078, 0.0
      %vm4121 = vcmp.ge.f32.partialorder %v4083, 0.0
      %vm4122 = vcmp.ge.f32.partialorder %v4088, 0.0
      %v4123 = vmul.f32 %v3933, 0.2
      %v4124 = vmul.f32 %v3938, 0.2
      %v4125 = vmul.f32 %v3943, 0.2
      %v4126 = vmul.f32 %v3948, 0.2
      %v4127 = vmul.f32 %v3953, 0.2
      %v4128 = vmul.f32 %v3958, 0.2
      %v4129 = vmul.f32 %v3963, 0.2
      %v4130 = vmul.f32 %v3968, 0.2
      %v4131 = vmul.f32 %v3973, 0.2
      %v4132 = vmul.f32 %v3978, 0.2
      %v4133 = vmul.f32 %v3983, 0.2
      %v4134 = vmul.f32 %v3988, 0.2
      %v4135 = vmul.f32 %v3993, 0.2
      %v4136 = vmul.f32 %v3998, 0.2
      %v4137 = vmul.f32 %v4003, 0.2
      %v4138 = vmul.f32 %v4008, 0.2
      %v4139 = vmul.f32 %v4013, 0.2
      %v4140 = vmul.f32 %v4018, 0.2
      %v4141 = vmul.f32 %v4023, 0.2
      %v4142 = vmul.f32 %v4028, 0.2
      %v4143 = vmul.f32 %v4033, 0.2
      %v4144 = vmul.f32 %v4038, 0.2
      %v4145 = vmul.f32 %v4043, 0.2
      %v4146 = vmul.f32 %v4048, 0.2
      %v4147 = vmul.f32 %v4053, 0.2
      %v4148 = vmul.f32 %v4058, 0.2
      %v4149 = vmul.f32 %v4063, 0.2
      %v4150 = vmul.f32 %v4068, 0.2
      %v4151 = vmul.f32 %v4073, 0.2
      %v4152 = vmul.f32 %v4078, 0.2
      %v4153 = vmul.f32 %v4083, 0.2
      %v4154 = vmul.f32 %v4088, 0.2
      %v4155 = vsel %vm4091, %v3933, %v4123
      %v4156 = vsel %vm4092, %v3938, %v4124
      %v4157 = vsel %vm4093, %v3943, %v4125
      %v4158 = vsel %vm4094, %v3948, %v4126
      %v4159 = vsel %vm4095, %v3953, %v4127
      %v4160 = vsel %vm4096, %v3958, %v4128
      %v4161 = vsel %vm4097, %v3963, %v4129
      %v4162 = vsel %vm4098, %v3968, %v4130
      %v4163 = vsel %vm4099, %v3973, %v4131
      %v4164 = vsel %vm4100, %v3978, %v4132
      %v4165 = vsel %vm4101, %v3983, %v4133
      %v4166 = vsel %vm4102, %v3988, %v4134
      %v4167 = vsel %vm4103, %v3993, %v4135
      %v4168 = vsel %vm4104, %v3998, %v4136
      %v4169 = vsel %vm4105, %v4003, %v4137
      %v4170 = vsel %vm4106, %v4008, %v4138
      %v4171 = vsel %vm4107, %v4013, %v4139
      %v4172 = vsel %vm4108, %v4018, %v4140
      %v4173 = vsel %vm4109, %v4023, %v4141
      %v4174 = vsel %vm4110, %v4028, %v4142
      %v4175 = vsel %vm4111, %v4033, %v4143
      %v4176 = vsel %vm4112, %v4038, %v4144
      %v4177 = vsel %vm4113, %v4043, %v4145
      %v4178 = vsel %vm4114, %v4048, %v4146
      %v4179 = vsel %vm4115, %v4053, %v4147
      %v4180 = vsel %vm4116, %v4058, %v4148
      %v4181 = vsel %vm4117, %v4063, %v4149
      %v4182 = vsel %vm4118, %v4068, %v4150
      %v4183 = vsel %vm4119, %v4073, %v4151
      %v4184 = vsel %vm4120, %v4078, %v4152
      %v4185 = vsel %vm4121, %v4083, %v4153
      %v4186 = vsel %vm4122, %v4088, %v4154
      %v4219 = vrot.slane %v4155, 7
      %v4220 = vrot.slane %v4156, 7
      %v4221 = vsel %vm452, %v4219, %v4220
      %v4222 = vrot.slane %v4157, 7
      %v4223 = vrot.slane %v4158, 7
      %v4224 = vsel %vm452, %v4222, %v4223
      %v4225 = vrot.slane %v4159, 7
      %v4226 = vrot.slane %v4160, 7
      %v4227 = vsel %vm452, %v4225, %v4226
      %v4228 = vrot.slane %v4161, 7
      %v4229 = vrot.slane %v4162, 7
      %v4230 = vsel %vm452, %v4228, %v4229
      %v4231 = vrot.slane %v4163, 7
      %v4232 = vrot.slane %v4164, 7
      %v4233 = vsel %vm452, %v4231, %v4232
      %v4234 = vrot.slane %v4165, 7
      %v4235 = vrot.slane %v4166, 7
      %v4236 = vsel %vm452, %v4234, %v4235
      %v4237 = vrot.slane %v4167, 7
      %v4238 = vrot.slane %v4168, 7
      %v4239 = vsel %vm452, %v4237, %v4238
      %v4240 = vrot.slane %v4169, 7
      %v4241 = vrot.slane %v4170, 7
      %v4242 = vsel %vm452, %v4240, %v4241
      %v4243 = vrot.slane %v4171, 7
      %v4244 = vrot.slane %v4172, 7
      %v4245 = vsel %vm452, %v4243, %v4244
      %v4246 = vrot.slane %v4173, 7
      %v4247 = vrot.slane %v4174, 7
      %v4248 = vsel %vm452, %v4246, %v4247
      %v4249 = vrot.slane %v4175, 7
      %v4250 = vrot.slane %v4176, 7
      %v4251 = vsel %vm452, %v4249, %v4250
      %v4252 = vrot.slane %v4177, 7
      %v4253 = vrot.slane %v4178, 7
      %v4254 = vsel %vm452, %v4252, %v4253
      %v4255 = vrot.slane %v4179, 7
      %v4256 = vrot.slane %v4180, 7
      %v4257 = vsel %vm452, %v4255, %v4256
      %v4258 = vrot.slane %v4181, 7
      %v4259 = vrot.slane %v4182, 7
      %v4260 = vsel %vm452, %v4258, %v4259
      %v4261 = vrot.slane %v4183, 7
      %v4262 = vrot.slane %v4184, 7
      %v4263 = vsel %vm452, %v4261, %v4262
      %v4264 = vrot.slane %v4185, 7
      %v4265 = vrot.slane %v4186, 7
      %v4266 = vsel %vm452, %v4264, %v4265
      %v4299 = vsel %vm452, 0.0, %v4219
      %v4300 = vsel %vm452, 0.0, %v4222
      %v4301 = vsel %vm452, 0.0, %v4225
      %v4302 = vsel %vm452, 0.0, %v4228
      %v4303 = vsel %vm452, 0.0, %v4231
      %v4304 = vsel %vm452, 0.0, %v4234
      %v4305 = vsel %vm452, 0.0, %v4237
      %v4306 = vsel %vm452, 0.0, %v4240
      %v4307 = vsel %vm452, 0.0, %v4243
      %v4308 = vsel %vm452, 0.0, %v4246
      %v4309 = vsel %vm452, 0.0, %v4249
      %v4310 = vsel %vm452, 0.0, %v4252
      %v4311 = vsel %vm452, 0.0, %v4255
      %v4312 = vsel %vm452, 0.0, %v4258
      %v4313 = vsel %vm452, 0.0, %v4261
      %v4314 = vsel %vm452, 0.0, %v4264
      %v4315 = vsel %vm452, %v4220, 0.0
      %v4316 = vsel %vm452, %v4223, 0.0
      %v4317 = vsel %vm452, %v4226, 0.0
      %v4318 = vsel %vm452, %v4229, 0.0
      %v4319 = vsel %vm452, %v4232, 0.0
      %v4320 = vsel %vm452, %v4235, 0.0
      %v4321 = vsel %vm452, %v4238, 0.0
      %v4322 = vsel %vm452, %v4241, 0.0
      %v4323 = vsel %vm452, %v4244, 0.0
      %v4324 = vsel %vm452, %v4247, 0.0
      %v4325 = vsel %vm452, %v4250, 0.0
      %v4326 = vsel %vm452, %v4253, 0.0
      %v4327 = vsel %vm452, %v4256, 0.0
      %v4328 = vsel %vm452, %v4259, 0.0
      %v4329 = vsel %vm452, %v4262, 0.0
      %v4330 = vsel %vm452, %v4265, 0.0
      %4363 = vrot.lane.b32.xlu0 %v553, 24
      %v4364 = vpop.permute.xlu0 %4363
      %4365 = vrot.lane.b32.xlu0 %v454, 24
      %v4366 = vpop.permute.xlu0 %4365
      %4367 = vrot.lane.b32.xlu0 %v570, 24
      %v4368 = vpop.permute.xlu0 %4367
      %4369 = vrot.lane.b32.xlu0 %v4299, 24
      %v4370 = vpop.permute.xlu0 %4369
      %4371 = vrot.lane.b32.xlu0 %v4221, 24
      %v4372 = vpop.permute.xlu0 %4371
      %4373 = vrot.lane.b32.xlu0 %v4315, 24
      %v4374 = vpop.permute.xlu0 %4373
      %4375 = vrot.lane.b32.xlu0 %v4300, 24
      %v4376 = vpop.permute.xlu0 %4375
      %4377 = vrot.lane.b32.xlu0 %v4224, 24
      %v4378 = vpop.permute.xlu0 %4377
      %4379 = vrot.lane.b32.xlu0 %v4316, 24
      %v4380 = vpop.permute.xlu0 %4379
      %4381 = vrot.lane.b32.xlu0 %v4301, 24
      %v4382 = vpop.permute.xlu0 %4381
      %4383 = vrot.lane.b32.xlu0 %v4227, 24
      %v4384 = vpop.permute.xlu0 %4383
      %4385 = vrot.lane.b32.xlu0 %v4317, 24
      %v4386 = vpop.permute.xlu0 %4385
      %4387 = vrot.lane.b32.xlu0 %v4302, 24
      %v4388 = vpop.permute.xlu0 %4387
      %4389 = vrot.lane.b32.xlu0 %v4230, 24
      %v4390 = vpop.permute.xlu0 %4389
      %4391 = vrot.lane.b32.xlu0 %v4318, 24
      %v4392 = vpop.permute.xlu0 %4391
      %4393 = vrot.lane.b32.xlu0 %v4303, 24
      %v4394 = vpop.permute.xlu0 %4393
      %4395 = vrot.lane.b32.xlu0 %v4233, 24
      %v4396 = vpop.permute.xlu0 %4395
      %4397 = vrot.lane.b32.xlu0 %v4319, 24
      %v4398 = vpop.permute.xlu0 %4397
      %4399 = vrot.lane.b32.xlu0 %v4304, 24
      %v4400 = vpop.permute.xlu0 %4399
      %4401 = vrot.lane.b32.xlu0 %v4236, 24
      %v4402 = vpop.permute.xlu0 %4401
      %4403 = vrot.lane.b32.xlu0 %v4320, 24
      %v4404 = vpop.permute.xlu0 %4403
      %4405 = vrot.lane.b32.xlu0 %v4305, 24
      %v4406 = vpop.permute.xlu0 %4405
      %4407 = vrot.lane.b32.xlu0 %v4239, 24
      %v4408 = vpop.permute.xlu0 %4407
      %4409 = vrot.lane.b32.xlu0 %v4321, 24
      %v4410 = vpop.permute.xlu0 %4409
      %4411 = vrot.lane.b32.xlu0 %v4306, 24
      %v4412 = vpop.permute.xlu0 %4411
      %4413 = vrot.lane.b32.xlu0 %v4242, 24
      %v4414 = vpop.permute.xlu0 %4413
      %4415 = vrot.lane.b32.xlu0 %v4322, 24
      %v4416 = vpop.permute.xlu0 %4415
      %4417 = vrot.lane.b32.xlu0 %v4307, 24
      %v4418 = vpop.permute.xlu0 %4417
      %4419 = vrot.lane.b32.xlu0 %v4245, 24
      %v4420 = vpop.permute.xlu0 %4419
      %4421 = vrot.lane.b32.xlu0 %v4323, 24
      %v4422 = vpop.permute.xlu0 %4421
      %4423 = vrot.lane.b32.xlu0 %v4308, 24
      %v4424 = vpop.permute.xlu0 %4423
      %4425 = vrot.lane.b32.xlu0 %v4248, 24
      %v4426 = vpop.permute.xlu0 %4425
      %4427 = vrot.lane.b32.xlu0 %v4324, 24
      %v4428 = vpop.permute.xlu0 %4427
      %4429 = vrot.lane.b32.xlu0 %v4309, 24
      %v4430 = vpop.permute.xlu0 %4429
      %4431 = vrot.lane.b32.xlu0 %v4251, 24
      %v4432 = vpop.permute.xlu0 %4431
      %4433 = vrot.lane.b32.xlu0 %v4325, 24
      %v4434 = vpop.permute.xlu0 %4433
      %4435 = vrot.lane.b32.xlu0 %v4310, 24
      %v4436 = vpop.permute.xlu0 %4435
      %4437 = vrot.lane.b32.xlu0 %v4254, 24
      %v4438 = vpop.permute.xlu0 %4437
      %4439 = vrot.lane.b32.xlu0 %v4326, 24
      %v4440 = vpop.permute.xlu0 %4439
      %4441 = vrot.lane.b32.xlu0 %v4311, 24
      %v4442 = vpop.permute.xlu0 %4441
      %4443 = vrot.lane.b32.xlu0 %v4257, 24
      %v4444 = vpop.permute.xlu0 %4443
      %4445 = vrot.lane.b32.xlu0 %v4327, 24
      %v4446 = vpop.permute.xlu0 %4445
      %4447 = vrot.lane.b32.xlu0 %v4312, 24
      %v4448 = vpop.permute.xlu0 %4447
      %4449 = vrot.lane.b32.xlu0 %v4260, 24
      %v4450 = vpop.permute.xlu0 %4449
      %4451 = vrot.lane.b32.xlu0 %v4328, 24
      %v4452 = vpop.permute.xlu0 %4451
      %4453 = vrot.lane.b32.xlu0 %v4313, 24
      %v4454 = vpop.permute.xlu0 %4453
      %4455 = vrot.lane.b32.xlu0 %v4263, 24
      %v4456 = vpop.permute.xlu0 %4455
      %4457 = vrot.lane.b32.xlu0 %v4329, 24
      %v4458 = vpop.permute.xlu0 %4457
      %4459 = vrot.lane.b32.xlu0 %v4314, 24
      %v4460 = vpop.permute.xlu0 %4459
      %4461 = vrot.lane.b32.xlu0 %v4266, 24
      %v4462 = vpop.permute.xlu0 %4461
      %4463 = vrot.lane.b32.xlu0 %v4330, 24
      %v4464 = vpop.permute.xlu0 %4463
      %v4516 = vsel %vm3475, %v2435, %v4364
      %v4517 = vsel %vm3475, %v2436, %v4366
      %v4518 = vsel %vm3475, %v2437, %v4368
      %v4519 = vsel %vm3475, %v2438, %v4370
      %v4520 = vsel %vm3475, %v2439, %v4372
      %v4521 = vsel %vm3475, %v2440, %v4374
      %v4522 = vsel %vm3475, %v2441, %v4376
      %v4523 = vsel %vm3475, %v2442, %v4378
      %v4524 = vsel %vm3475, %v2443, %v4380
      %v4525 = vsel %vm3475, %v2444, %v4382
      %v4526 = vsel %vm3475, %v2445, %v4384
      %v4527 = vsel %vm3475, %v2446, %v4386
      %v4528 = vsel %vm3475, %v2447, %v4388
      %v4529 = vsel %vm3475, %v2448, %v4390
      %v4530 = vsel %vm3475, %v2449, %v4392
      %v4531 = vsel %vm3475, %v2450, %v4394
      %v4532 = vsel %vm3475, %v2451, %v4396
      %v4533 = vsel %vm3475, %v2452, %v4398
      %v4534 = vsel %vm3475, %v2453, %v4400
      %v4535 = vsel %vm3475, %v2454, %v4402
      %v4536 = vsel %vm3475, %v2455, %v4404
      %v4537 = vsel %vm3475, %v2456, %v4406
      %v4538 = vsel %vm3475, %v2457, %v4408
      %v4539 = vsel %vm3475, %v2458, %v4410
      %v4540 = vsel %vm3475, %v2459, %v4412
      %v4541 = vsel %vm3475, %v2460, %v4414
      %v4542 = vsel %vm3475, %v2461, %v4416
      %v4543 = vsel %vm3475, %v2462, %v4418
      %v4544 = vsel %vm3475, %v2463, %v4420
      %v4545 = vsel %vm3475, %v2464, %v4422
      %v4546 = vsel %vm3475, %v2465, %v4424
      %v4547 = vsel %vm3475, %v2466, %v4426
      %v4548 = vsel %vm3475, %v2467, %v4428
      %v4549 = vsel %vm3475, %v2468, %v4430
      %v4550 = vsel %vm3475, %v2469, %v4432
      %v4551 = vsel %vm3475, %v2470, %v4434
      %v4552 = vsel %vm3475, %v2471, %v4436
      %v4553 = vsel %vm3475, %v2472, %v4438
      %v4554 = vsel %vm3475, %v2473, %v4440
      %v4555 = vsel %vm3475, %v2474, %v4442
      %v4556 = vsel %vm3475, %v2475, %v4444
      %v4557 = vsel %vm3475, %v2476, %v4446
      %v4558 = vsel %vm3475, %v2477, %v4448
      %v4559 = vsel %vm3475, %v2478, %v4450
      %v4560 = vsel %vm3475, %v2479, %v4452
      %v4561 = vsel %vm3475, %v2480, %v4454
      %v4562 = vsel %vm3475, %v2481, %v4456
      %v4563 = vsel %vm3475, %v2482, %v4458
      %v4564 = vsel %vm3475, %v2483, %v4460
      %v4565 = vsel %vm3475, %v2484, %v4462
      %v4566 = vsel %vm3475, %v2485, %v4464
      %v4615 = vrot.slane %v4516, 1
      %v4616 = vrot.slane %v4517, 1
      %v4617 = vsel %vm619, %v4615, %v4616
      %v4618 = vrot.slane %v4518, 1
      %v4619 = vsel %vm619, %v4616, %v4618
      %v4620 = vrot.slane %v4519, 1
      %v4621 = vrot.slane %v4520, 1
      %v4622 = vsel %vm619, %v4620, %v4621
      %v4623 = vrot.slane %v4521, 1
      %v4624 = vsel %vm619, %v4621, %v4623
      %v4625 = vrot.slane %v4522, 1
      %v4626 = vrot.slane %v4523, 1
      %v4627 = vsel %vm619, %v4625, %v4626
      %v4628 = vrot.slane %v4524, 1
      %v4629 = vsel %vm619, %v4626, %v4628
      %v4630 = vrot.slane %v4525, 1
      %v4631 = vrot.slane %v4526, 1
      %v4632 = vsel %vm619, %v4630, %v4631
      %v4633 = vrot.slane %v4527, 1
      %v4634 = vsel %vm619, %v4631, %v4633
      %v4635 = vrot.slane %v4528, 1
      %v4636 = vrot.slane %v4529, 1
      %v4637 = vsel %vm619, %v4635, %v4636
      %v4638 = vrot.slane %v4530, 1
      %v4639 = vsel %vm619, %v4636, %v4638
      %v4640 = vrot.slane %v4531, 1
      %v4641 = vrot.slane %v4532, 1
      %v4642 = vsel %vm619, %v4640, %v4641
      %v4643 = vrot.slane %v4533, 1
      %v4644 = vsel %vm619, %v4641, %v4643
      %v4645 = vrot.slane %v4534, 1
      %v4646 = vrot.slane %v4535, 1
      %v4647 = vsel %vm619, %v4645, %v4646
      %v4648 = vrot.slane %v4536, 1
      %v4649 = vsel %vm619, %v4646, %v4648
      %v4650 = vrot.slane %v4537, 1
      %v4651 = vrot.slane %v4538, 1
      %v4652 = vsel %vm619, %v4650, %v4651
      %v4653 = vrot.slane %v4539, 1
      %v4654 = vsel %vm619, %v4651, %v4653
      %v4655 = vrot.slane %v4540, 1
      %v4656 = vrot.slane %v4541, 1
      %v4657 = vsel %vm619, %v4655, %v4656
      %v4658 = vrot.slane %v4542, 1
      %v4659 = vsel %vm619, %v4656, %v4658
      %v4660 = vrot.slane %v4543, 1
      %v4661 = vrot.slane %v4544, 1
      %v4662 = vsel %vm619, %v4660, %v4661
      %v4663 = vrot.slane %v4545, 1
      %v4664 = vsel %vm619, %v4661, %v4663
      %v4665 = vrot.slane %v4546, 1
      %v4666 = vrot.slane %v4547, 1
      %v4667 = vsel %vm619, %v4665, %v4666
      %v4668 = vrot.slane %v4548, 1
      %v4669 = vsel %vm619, %v4666, %v4668
      %v4670 = vrot.slane %v4549, 1
      %v4671 = vrot.slane %v4550, 1
      %v4672 = vsel %vm619, %v4670, %v4671
      %v4673 = vrot.slane %v4551, 1
      %v4674 = vsel %vm619, %v4671, %v4673
      %v4675 = vrot.slane %v4552, 1
      %v4676 = vrot.slane %v4553, 1
      %v4677 = vsel %vm619, %v4675, %v4676
      %v4678 = vrot.slane %v4554, 1
      %v4679 = vsel %vm619, %v4676, %v4678
      %v4680 = vrot.slane %v4555, 1
      %v4681 = vrot.slane %v4556, 1
      %v4682 = vsel %vm619, %v4680, %v4681
      %v4683 = vrot.slane %v4557, 1
      %v4684 = vsel %vm619, %v4681, %v4683
      %v4685 = vrot.slane %v4558, 1
      %v4686 = vrot.slane %v4559, 1
      %v4687 = vsel %vm619, %v4685, %v4686
      %v4688 = vrot.slane %v4560, 1
      %v4689 = vsel %vm619, %v4686, %v4688
      %v4690 = vrot.slane %v4561, 1
      %v4691 = vrot.slane %v4562, 1
      %v4692 = vsel %vm619, %v4690, %v4691
      %v4693 = vrot.slane %v4563, 1
      %v4694 = vsel %vm619, %v4691, %v4693
      %v4695 = vrot.slane %v4516, 2
      %v4696 = vrot.slane %v4517, 2
      %v4697 = vsel %vm700, %v4695, %v4696
      %v4698 = vrot.slane %v4518, 2
      %v4699 = vsel %vm700, %v4696, %v4698
      %v4700 = vrot.slane %v4519, 2
      %v4701 = vrot.slane %v4520, 2
      %v4702 = vsel %vm700, %v4700, %v4701
      %v4703 = vrot.slane %v4521, 2
      %v4704 = vsel %vm700, %v4701, %v4703
      %v4705 = vrot.slane %v4522, 2
      %v4706 = vrot.slane %v4523, 2
      %v4707 = vsel %vm700, %v4705, %v4706
      %v4708 = vrot.slane %v4524, 2
      %v4709 = vsel %vm700, %v4706, %v4708
      %v4710 = vrot.slane %v4525, 2
      %v4711 = vrot.slane %v4526, 2
      %v4712 = vsel %vm700, %v4710, %v4711
      %v4713 = vrot.slane %v4527, 2
      %v4714 = vsel %vm700, %v4711, %v4713
      %v4715 = vrot.slane %v4528, 2
      %v4716 = vrot.slane %v4529, 2
      %v4717 = vsel %vm700, %v4715, %v4716
      %v4718 = vrot.slane %v4530, 2
      %v4719 = vsel %vm700, %v4716, %v4718
      %v4720 = vrot.slane %v4531, 2
      %v4721 = vrot.slane %v4532, 2
      %v4722 = vsel %vm700, %v4720, %v4721
      %v4723 = vrot.slane %v4533, 2
      %v4724 = vsel %vm700, %v4721, %v4723
      %v4725 = vrot.slane %v4534, 2
      %v4726 = vrot.slane %v4535, 2
      %v4727 = vsel %vm700, %v4725, %v4726
      %v4728 = vrot.slane %v4536, 2
      %v4729 = vsel %vm700, %v4726, %v4728
      %v4730 = vrot.slane %v4537, 2
      %v4731 = vrot.slane %v4538, 2
      %v4732 = vsel %vm700, %v4730, %v4731
      %v4733 = vrot.slane %v4539, 2
      %v4734 = vsel %vm700, %v4731, %v4733
      %v4735 = vrot.slane %v4540, 2
      %v4736 = vrot.slane %v4541, 2
      %v4737 = vsel %vm700, %v4735, %v4736
      %v4738 = vrot.slane %v4542, 2
      %v4739 = vsel %vm700, %v4736, %v4738
      %v4740 = vrot.slane %v4543, 2
      %v4741 = vrot.slane %v4544, 2
      %v4742 = vsel %vm700, %v4740, %v4741
      %v4743 = vrot.slane %v4545, 2
      %v4744 = vsel %vm700, %v4741, %v4743
      %v4745 = vrot.slane %v4546, 2
      %v4746 = vrot.slane %v4547, 2
      %v4747 = vsel %vm700, %v4745, %v4746
      %v4748 = vrot.slane %v4548, 2
      %v4749 = vsel %vm700, %v4746, %v4748
      %v4750 = vrot.slane %v4549, 2
      %v4751 = vrot.slane %v4550, 2
      %v4752 = vsel %vm700, %v4750, %v4751
      %v4753 = vrot.slane %v4551, 2
      %v4754 = vsel %vm700, %v4751, %v4753
      %v4755 = vrot.slane %v4552, 2
      %v4756 = vrot.slane %v4553, 2
      %v4757 = vsel %vm700, %v4755, %v4756
      %v4758 = vrot.slane %v4554, 2
      %v4759 = vsel %vm700, %v4756, %v4758
      %v4760 = vrot.slane %v4555, 2
      %v4761 = vrot.slane %v4556, 2
      %v4762 = vsel %vm700, %v4760, %v4761
      %v4763 = vrot.slane %v4557, 2
      %v4764 = vsel %vm700, %v4761, %v4763
      %v4765 = vrot.slane %v4558, 2
      %v4766 = vrot.slane %v4559, 2
      %v4767 = vsel %vm700, %v4765, %v4766
      %v4768 = vrot.slane %v4560, 2
      %v4769 = vsel %vm700, %v4766, %v4768
      %v4770 = vrot.slane %v4561, 2
      %v4771 = vrot.slane %v4562, 2
      %v4772 = vsel %vm700, %v4770, %v4771
      %v4773 = vrot.slane %v4563, 2
      %v4774 = vsel %vm700, %v4771, %v4773
      %v4778 = vrot.slane %v4564, 1
      %v4779 = vrot.slane %v4565, 1
      %v4780 = vsel %vm619, %v4778, %v4779
      %v4781 = vrot.slane %v4566, 1
      %v4782 = vsel %vm619, %v4779, %v4781
      %v4815 = vrot.slane %v4564, 2
      %v4816 = vrot.slane %v4565, 2
      %v4817 = vsel %vm700, %v4815, %v4816
      %v4818 = vrot.slane %v4566, 2
      %v4819 = vsel %vm700, %v4816, %v4818
      %4820 = vrot.lane.b32.xlu0 %v4617, 32
      %v4821 = vpop.permute.xlu0 %4820
      %4822 = vrot.lane.b32.xlu0 %v4619, 32
      %v4823 = vpop.permute.xlu0 %4822
      %4824 = vrot.lane.b32.xlu0 %v4622, 32
      %v4825 = vpop.permute.xlu0 %4824
      %4826 = vrot.lane.b32.xlu0 %v4624, 32
      %v4827 = vpop.permute.xlu0 %4826
      %4828 = vrot.lane.b32.xlu0 %v4627, 32
      %v4829 = vpop.permute.xlu0 %4828
      %4830 = vrot.lane.b32.xlu0 %v4629, 32
      %v4831 = vpop.permute.xlu0 %4830
      %4832 = vrot.lane.b32.xlu0 %v4632, 32
      %v4833 = vpop.permute.xlu0 %4832
      %4834 = vrot.lane.b32.xlu0 %v4634, 32
      %v4835 = vpop.permute.xlu0 %4834
      %4836 = vrot.lane.b32.xlu0 %v4637, 32
      %v4837 = vpop.permute.xlu0 %4836
      %4838 = vrot.lane.b32.xlu0 %v4639, 32
      %v4839 = vpop.permute.xlu0 %4838
      %4840 = vrot.lane.b32.xlu0 %v4642, 32
      %v4841 = vpop.permute.xlu0 %4840
      %4842 = vrot.lane.b32.xlu0 %v4644, 32
      %v4843 = vpop.permute.xlu0 %4842
      %4844 = vrot.lane.b32.xlu0 %v4647, 32
      %v4845 = vpop.permute.xlu0 %4844
      %4846 = vrot.lane.b32.xlu0 %v4649, 32
      %v4847 = vpop.permute.xlu0 %4846
      %4848 = vrot.lane.b32.xlu0 %v4652, 32
      %v4849 = vpop.permute.xlu0 %4848
      %4850 = vrot.lane.b32.xlu0 %v4654, 32
      %v4851 = vpop.permute.xlu0 %4850
      %4852 = vrot.lane.b32.xlu0 %v4657, 32
      %v4853 = vpop.permute.xlu0 %4852
      %4854 = vrot.lane.b32.xlu0 %v4659, 32
      %v4855 = vpop.permute.xlu0 %4854
      %4856 = vrot.lane.b32.xlu0 %v4662, 32
      %v4857 = vpop.permute.xlu0 %4856
      %4858 = vrot.lane.b32.xlu0 %v4664, 32
      %v4859 = vpop.permute.xlu0 %4858
      %4860 = vrot.lane.b32.xlu0 %v4667, 32
      %v4861 = vpop.permute.xlu0 %4860
      %4862 = vrot.lane.b32.xlu0 %v4669, 32
      %v4863 = vpop.permute.xlu0 %4862
      %4864 = vrot.lane.b32.xlu0 %v4672, 32
      %v4865 = vpop.permute.xlu0 %4864
      %4866 = vrot.lane.b32.xlu0 %v4674, 32
      %v4867 = vpop.permute.xlu0 %4866
      %4868 = vrot.lane.b32.xlu0 %v4677, 32
      %v4869 = vpop.permute.xlu0 %4868
      %4870 = vrot.lane.b32.xlu0 %v4679, 32
      %v4871 = vpop.permute.xlu0 %4870
      %4872 = vrot.lane.b32.xlu0 %v4682, 32
      %v4873 = vpop.permute.xlu0 %4872
      %4874 = vrot.lane.b32.xlu0 %v4684, 32
      %v4875 = vpop.permute.xlu0 %4874
      %4876 = vrot.lane.b32.xlu0 %v4687, 32
      %v4877 = vpop.permute.xlu0 %4876
      %4878 = vrot.lane.b32.xlu0 %v4689, 32
      %v4879 = vpop.permute.xlu0 %4878
      %4880 = vrot.lane.b32.xlu0 %v4692, 32
      %v4881 = vpop.permute.xlu0 %4880
      %4882 = vrot.lane.b32.xlu0 %v4694, 32
      %v4883 = vpop.permute.xlu0 %4882
      %4916 = vrot.lane.b32.xlu0 %v4697, 64
      %v4917 = vpop.permute.xlu0 %4916
      %4918 = vrot.lane.b32.xlu0 %v4699, 64
      %v4919 = vpop.permute.xlu0 %4918
      %4920 = vrot.lane.b32.xlu0 %v4702, 64
      %v4921 = vpop.permute.xlu0 %4920
      %4922 = vrot.lane.b32.xlu0 %v4704, 64
      %v4923 = vpop.permute.xlu0 %4922
      %4924 = vrot.lane.b32.xlu0 %v4707, 64
      %v4925 = vpop.permute.xlu0 %4924
      %4926 = vrot.lane.b32.xlu0 %v4709, 64
      %v4927 = vpop.permute.xlu0 %4926
      %4928 = vrot.lane.b32.xlu0 %v4712, 64
      %v4929 = vpop.permute.xlu0 %4928
      %4930 = vrot.lane.b32.xlu0 %v4714, 64
      %v4931 = vpop.permute.xlu0 %4930
      %4932 = vrot.lane.b32.xlu0 %v4717, 64
      %v4933 = vpop.permute.xlu0 %4932
      %4934 = vrot.lane.b32.xlu0 %v4719, 64
      %v4935 = vpop.permute.xlu0 %4934
      %4936 = vrot.lane.b32.xlu0 %v4722, 64
      %v4937 = vpop.permute.xlu0 %4936
      %4938 = vrot.lane.b32.xlu0 %v4724, 64
      %v4939 = vpop.permute.xlu0 %4938
      %4940 = vrot.lane.b32.xlu0 %v4727, 64
      %v4941 = vpop.permute.xlu0 %4940
      %4942 = vrot.lane.b32.xlu0 %v4729, 64
      %v4943 = vpop.permute.xlu0 %4942
      %4944 = vrot.lane.b32.xlu0 %v4732, 64
      %v4945 = vpop.permute.xlu0 %4944
      %4946 = vrot.lane.b32.xlu0 %v4734, 64
      %v4947 = vpop.permute.xlu0 %4946
      %4948 = vrot.lane.b32.xlu0 %v4737, 64
      %v4949 = vpop.permute.xlu0 %4948
      %4950 = vrot.lane.b32.xlu0 %v4739, 64
      %v4951 = vpop.permute.xlu0 %4950
      %4952 = vrot.lane.b32.xlu0 %v4742, 64
      %v4953 = vpop.permute.xlu0 %4952
      %4954 = vrot.lane.b32.xlu0 %v4744, 64
      %v4955 = vpop.permute.xlu0 %4954
      %4956 = vrot.lane.b32.xlu0 %v4747, 64
      %v4957 = vpop.permute.xlu0 %4956
      %4958 = vrot.lane.b32.xlu0 %v4749, 64
      %v4959 = vpop.permute.xlu0 %4958
      %4960 = vrot.lane.b32.xlu0 %v4752, 64
      %v4961 = vpop.permute.xlu0 %4960
      %4962 = vrot.lane.b32.xlu0 %v4754, 64
      %v4963 = vpop.permute.xlu0 %4962
      %4964 = vrot.lane.b32.xlu0 %v4757, 64
      %v4965 = vpop.permute.xlu0 %4964
      %4966 = vrot.lane.b32.xlu0 %v4759, 64
      %v4967 = vpop.permute.xlu0 %4966
      %4968 = vrot.lane.b32.xlu0 %v4762, 64
      %v4969 = vpop.permute.xlu0 %4968
      %4970 = vrot.lane.b32.xlu0 %v4764, 64
      %v4971 = vpop.permute.xlu0 %4970
      %4972 = vrot.lane.b32.xlu0 %v4767, 64
      %v4973 = vpop.permute.xlu0 %4972
      %4974 = vrot.lane.b32.xlu0 %v4769, 64
      %v4975 = vpop.permute.xlu0 %4974
      %4976 = vrot.lane.b32.xlu0 %v4772, 64
      %v4977 = vpop.permute.xlu0 %4976
      %4978 = vrot.lane.b32.xlu0 %v4774, 64
      %v4979 = vpop.permute.xlu0 %4978
      %5012 = vrot.lane.b32.xlu0 %v4519, 96
      %v5013 = vpop.permute.xlu0 %5012
      %5014 = vrot.lane.b32.xlu0 %v4520, 96
      %v5015 = vpop.permute.xlu0 %5014
      %5016 = vrot.lane.b32.xlu0 %v4522, 96
      %v5017 = vpop.permute.xlu0 %5016
      %5018 = vrot.lane.b32.xlu0 %v4523, 96
      %v5019 = vpop.permute.xlu0 %5018
      %5020 = vrot.lane.b32.xlu0 %v4525, 96
      %v5021 = vpop.permute.xlu0 %5020
      %5022 = vrot.lane.b32.xlu0 %v4526, 96
      %v5023 = vpop.permute.xlu0 %5022
      %5024 = vrot.lane.b32.xlu0 %v4528, 96
      %v5025 = vpop.permute.xlu0 %5024
      %5026 = vrot.lane.b32.xlu0 %v4529, 96
      %v5027 = vpop.permute.xlu0 %5026
      %5028 = vrot.lane.b32.xlu0 %v4531, 96
      %v5029 = vpop.permute.xlu0 %5028
      %5030 = vrot.lane.b32.xlu0 %v4532, 96
      %v5031 = vpop.permute.xlu0 %5030
      %5032 = vrot.lane.b32.xlu0 %v4534, 96
      %v5033 = vpop.permute.xlu0 %5032
      %5034 = vrot.lane.b32.xlu0 %v4535, 96
      %v5035 = vpop.permute.xlu0 %5034
      %5036 = vrot.lane.b32.xlu0 %v4537, 96
      %v5037 = vpop.permute.xlu0 %5036
      %5038 = vrot.lane.b32.xlu0 %v4538, 96
      %v5039 = vpop.permute.xlu0 %5038
      %5040 = vrot.lane.b32.xlu0 %v4540, 96
      %v5041 = vpop.permute.xlu0 %5040
      %5042 = vrot.lane.b32.xlu0 %v4541, 96
      %v5043 = vpop.permute.xlu0 %5042
      %5044 = vrot.lane.b32.xlu0 %v4543, 96
      %v5045 = vpop.permute.xlu0 %5044
      %5046 = vrot.lane.b32.xlu0 %v4544, 96
      %v5047 = vpop.permute.xlu0 %5046
      %5048 = vrot.lane.b32.xlu0 %v4546, 96
      %v5049 = vpop.permute.xlu0 %5048
      %5050 = vrot.lane.b32.xlu0 %v4547, 96
      %v5051 = vpop.permute.xlu0 %5050
      %5052 = vrot.lane.b32.xlu0 %v4549, 96
      %v5053 = vpop.permute.xlu0 %5052
      %5054 = vrot.lane.b32.xlu0 %v4550, 96
      %v5055 = vpop.permute.xlu0 %5054
      %5056 = vrot.lane.b32.xlu0 %v4552, 96
      %v5057 = vpop.permute.xlu0 %5056
      %5058 = vrot.lane.b32.xlu0 %v4553, 96
      %v5059 = vpop.permute.xlu0 %5058
      %5060 = vrot.lane.b32.xlu0 %v4555, 96
      %v5061 = vpop.permute.xlu0 %5060
      %5062 = vrot.lane.b32.xlu0 %v4556, 96
      %v5063 = vpop.permute.xlu0 %5062
      %5064 = vrot.lane.b32.xlu0 %v4558, 96
      %v5065 = vpop.permute.xlu0 %5064
      %5066 = vrot.lane.b32.xlu0 %v4559, 96
      %v5067 = vpop.permute.xlu0 %5066
      %5068 = vrot.lane.b32.xlu0 %v4561, 96
      %v5069 = vpop.permute.xlu0 %5068
      %5070 = vrot.lane.b32.xlu0 %v4562, 96
      %v5071 = vpop.permute.xlu0 %5070
      %5072 = vrot.lane.b32.xlu0 %v4564, 96
      %v5073 = vpop.permute.xlu0 %5072
      %5074 = vrot.lane.b32.xlu0 %v4565, 96
      %v5075 = vpop.permute.xlu0 %5074
      %5108 = vrot.lane.b32.xlu0 %v4702, 32
      %v5109 = vpop.permute.xlu0 %5108
      %5110 = vrot.lane.b32.xlu0 %v4704, 32
      %v5111 = vpop.permute.xlu0 %5110
      %5112 = vrot.lane.b32.xlu0 %v4707, 32
      %v5113 = vpop.permute.xlu0 %5112
      %5114 = vrot.lane.b32.xlu0 %v4709, 32
      %v5115 = vpop.permute.xlu0 %5114
      %5116 = vrot.lane.b32.xlu0 %v4712, 32
      %v5117 = vpop.permute.xlu0 %5116
      %5118 = vrot.lane.b32.xlu0 %v4714, 32
      %v5119 = vpop.permute.xlu0 %5118
      %5120 = vrot.lane.b32.xlu0 %v4717, 32
      %v5121 = vpop.permute.xlu0 %5120
      %5122 = vrot.lane.b32.xlu0 %v4719, 32
      %v5123 = vpop.permute.xlu0 %5122
      %5124 = vrot.lane.b32.xlu0 %v4722, 32
      %v5125 = vpop.permute.xlu0 %5124
      %5126 = vrot.lane.b32.xlu0 %v4724, 32
      %v5127 = vpop.permute.xlu0 %5126
      %5128 = vrot.lane.b32.xlu0 %v4727, 32
      %v5129 = vpop.permute.xlu0 %5128
      %5130 = vrot.lane.b32.xlu0 %v4729, 32
      %v5131 = vpop.permute.xlu0 %5130
      %5132 = vrot.lane.b32.xlu0 %v4732, 32
      %v5133 = vpop.permute.xlu0 %5132
      %5134 = vrot.lane.b32.xlu0 %v4734, 32
      %v5135 = vpop.permute.xlu0 %5134
      %5136 = vrot.lane.b32.xlu0 %v4737, 32
      %v5137 = vpop.permute.xlu0 %5136
      %5138 = vrot.lane.b32.xlu0 %v4739, 32
      %v5139 = vpop.permute.xlu0 %5138
      %5140 = vrot.lane.b32.xlu0 %v4742, 32
      %v5141 = vpop.permute.xlu0 %5140
      %5142 = vrot.lane.b32.xlu0 %v4744, 32
      %v5143 = vpop.permute.xlu0 %5142
      %5144 = vrot.lane.b32.xlu0 %v4747, 32
      %v5145 = vpop.permute.xlu0 %5144
      %5146 = vrot.lane.b32.xlu0 %v4749, 32
      %v5147 = vpop.permute.xlu0 %5146
      %5148 = vrot.lane.b32.xlu0 %v4752, 32
      %v5149 = vpop.permute.xlu0 %5148
      %5150 = vrot.lane.b32.xlu0 %v4754, 32
      %v5151 = vpop.permute.xlu0 %5150
      %5152 = vrot.lane.b32.xlu0 %v4757, 32
      %v5153 = vpop.permute.xlu0 %5152
      %5154 = vrot.lane.b32.xlu0 %v4759, 32
      %v5155 = vpop.permute.xlu0 %5154
      %5156 = vrot.lane.b32.xlu0 %v4762, 32
      %v5157 = vpop.permute.xlu0 %5156
      %5158 = vrot.lane.b32.xlu0 %v4764, 32
      %v5159 = vpop.permute.xlu0 %5158
      %5160 = vrot.lane.b32.xlu0 %v4767, 32
      %v5161 = vpop.permute.xlu0 %5160
      %5162 = vrot.lane.b32.xlu0 %v4769, 32
      %v5163 = vpop.permute.xlu0 %5162
      %5164 = vrot.lane.b32.xlu0 %v4772, 32
      %v5165 = vpop.permute.xlu0 %5164
      %5166 = vrot.lane.b32.xlu0 %v4774, 32
      %v5167 = vpop.permute.xlu0 %5166
      %5168 = vrot.lane.b32.xlu0 %v4817, 32
      %v5169 = vpop.permute.xlu0 %5168
      %5170 = vrot.lane.b32.xlu0 %v4819, 32
      %v5171 = vpop.permute.xlu0 %5170
      %5204 = vrot.lane.b32.xlu0 %v4522, 64
      %v5205 = vpop.permute.xlu0 %5204
      %5206 = vrot.lane.b32.xlu0 %v4523, 64
      %v5207 = vpop.permute.xlu0 %5206
      %5208 = vrot.lane.b32.xlu0 %v4525, 64
      %v5209 = vpop.permute.xlu0 %5208
      %5210 = vrot.lane.b32.xlu0 %v4526, 64
      %v5211 = vpop.permute.xlu0 %5210
      %5212 = vrot.lane.b32.xlu0 %v4528, 64
      %v5213 = vpop.permute.xlu0 %5212
      %5214 = vrot.lane.b32.xlu0 %v4529, 64
      %v5215 = vpop.permute.xlu0 %5214
      %5216 = vrot.lane.b32.xlu0 %v4531, 64
      %v5217 = vpop.permute.xlu0 %5216
      %5218 = vrot.lane.b32.xlu0 %v4532, 64
      %v5219 = vpop.permute.xlu0 %5218
      %5220 = vrot.lane.b32.xlu0 %v4534, 64
      %v5221 = vpop.permute.xlu0 %5220
      %5222 = vrot.lane.b32.xlu0 %v4535, 64
      %v5223 = vpop.permute.xlu0 %5222
      %5224 = vrot.lane.b32.xlu0 %v4537, 64
      %v5225 = vpop.permute.xlu0 %5224
      %5226 = vrot.lane.b32.xlu0 %v4538, 64
      %v5227 = vpop.permute.xlu0 %5226
      %5228 = vrot.lane.b32.xlu0 %v4540, 64
      %v5229 = vpop.permute.xlu0 %5228
      %5230 = vrot.lane.b32.xlu0 %v4541, 64
      %v5231 = vpop.permute.xlu0 %5230
      %5232 = vrot.lane.b32.xlu0 %v4543, 64
      %v5233 = vpop.permute.xlu0 %5232
      %5234 = vrot.lane.b32.xlu0 %v4544, 64
      %v5235 = vpop.permute.xlu0 %5234
      %5236 = vrot.lane.b32.xlu0 %v4546, 64
      %v5237 = vpop.permute.xlu0 %5236
      %5238 = vrot.lane.b32.xlu0 %v4547, 64
      %v5239 = vpop.permute.xlu0 %5238
      %5240 = vrot.lane.b32.xlu0 %v4549, 64
      %v5241 = vpop.permute.xlu0 %5240
      %5242 = vrot.lane.b32.xlu0 %v4550, 64
      %v5243 = vpop.permute.xlu0 %5242
      %5244 = vrot.lane.b32.xlu0 %v4552, 64
      %v5245 = vpop.permute.xlu0 %5244
      %5246 = vrot.lane.b32.xlu0 %v4553, 64
      %v5247 = vpop.permute.xlu0 %5246
      %5248 = vrot.lane.b32.xlu0 %v4555, 64
      %v5249 = vpop.permute.xlu0 %5248
      %5250 = vrot.lane.b32.xlu0 %v4556, 64
      %v5251 = vpop.permute.xlu0 %5250
      %5252 = vrot.lane.b32.xlu0 %v4558, 64
      %v5253 = vpop.permute.xlu0 %5252
      %5254 = vrot.lane.b32.xlu0 %v4559, 64
      %v5255 = vpop.permute.xlu0 %5254
      %5256 = vrot.lane.b32.xlu0 %v4561, 64
      %v5257 = vpop.permute.xlu0 %5256
      %5258 = vrot.lane.b32.xlu0 %v4562, 64
      %v5259 = vpop.permute.xlu0 %5258
      %5260 = vrot.lane.b32.xlu0 %v4564, 64
      %v5261 = vpop.permute.xlu0 %5260
      %5262 = vrot.lane.b32.xlu0 %v4565, 64
      %v5263 = vpop.permute.xlu0 %5262
      %5264 = vrot.lane.b32.xlu0 %v4516, 64
      %v5265 = vpop.permute.xlu0 %5264
      %5266 = vrot.lane.b32.xlu0 %v4517, 64
      %v5267 = vpop.permute.xlu0 %5266
      %5300 = vrot.lane.b32.xlu0 %v4627, 96
      %v5301 = vpop.permute.xlu0 %5300
      %5302 = vrot.lane.b32.xlu0 %v4629, 96
      %v5303 = vpop.permute.xlu0 %5302
      %5304 = vrot.lane.b32.xlu0 %v4632, 96
      %v5305 = vpop.permute.xlu0 %5304
      %5306 = vrot.lane.b32.xlu0 %v4634, 96
      %v5307 = vpop.permute.xlu0 %5306
      %5308 = vrot.lane.b32.xlu0 %v4637, 96
      %v5309 = vpop.permute.xlu0 %5308
      %5310 = vrot.lane.b32.xlu0 %v4639, 96
      %v5311 = vpop.permute.xlu0 %5310
      %5312 = vrot.lane.b32.xlu0 %v4642, 96
      %v5313 = vpop.permute.xlu0 %5312
      %5314 = vrot.lane.b32.xlu0 %v4644, 96
      %v5315 = vpop.permute.xlu0 %5314
      %5316 = vrot.lane.b32.xlu0 %v4647, 96
      %v5317 = vpop.permute.xlu0 %5316
      %5318 = vrot.lane.b32.xlu0 %v4649, 96
      %v5319 = vpop.permute.xlu0 %5318
      %5320 = vrot.lane.b32.xlu0 %v4652, 96
      %v5321 = vpop.permute.xlu0 %5320
      %5322 = vrot.lane.b32.xlu0 %v4654, 96
      %v5323 = vpop.permute.xlu0 %5322
      %5324 = vrot.lane.b32.xlu0 %v4657, 96
      %v5325 = vpop.permute.xlu0 %5324
      %5326 = vrot.lane.b32.xlu0 %v4659, 96
      %v5327 = vpop.permute.xlu0 %5326
      %5328 = vrot.lane.b32.xlu0 %v4662, 96
      %v5329 = vpop.permute.xlu0 %5328
      %5330 = vrot.lane.b32.xlu0 %v4664, 96
      %v5331 = vpop.permute.xlu0 %5330
      %5332 = vrot.lane.b32.xlu0 %v4667, 96
      %v5333 = vpop.permute.xlu0 %5332
      %5334 = vrot.lane.b32.xlu0 %v4669, 96
      %v5335 = vpop.permute.xlu0 %5334
      %5336 = vrot.lane.b32.xlu0 %v4672, 96
      %v5337 = vpop.permute.xlu0 %5336
      %5338 = vrot.lane.b32.xlu0 %v4674, 96
      %v5339 = vpop.permute.xlu0 %5338
      %5340 = vrot.lane.b32.xlu0 %v4677, 96
      %v5341 = vpop.permute.xlu0 %5340
      %5342 = vrot.lane.b32.xlu0 %v4679, 96
      %v5343 = vpop.permute.xlu0 %5342
      %5344 = vrot.lane.b32.xlu0 %v4682, 96
      %v5345 = vpop.permute.xlu0 %5344
      %5346 = vrot.lane.b32.xlu0 %v4684, 96
      %v5347 = vpop.permute.xlu0 %5346
      %5348 = vrot.lane.b32.xlu0 %v4687, 96
      %v5349 = vpop.permute.xlu0 %5348
      %5350 = vrot.lane.b32.xlu0 %v4689, 96
      %v5351 = vpop.permute.xlu0 %5350
      %5352 = vrot.lane.b32.xlu0 %v4692, 96
      %v5353 = vpop.permute.xlu0 %5352
      %5354 = vrot.lane.b32.xlu0 %v4694, 96
      %v5355 = vpop.permute.xlu0 %5354
      %5356 = vrot.lane.b32.xlu0 %v4780, 96
      %v5357 = vpop.permute.xlu0 %5356
      %5358 = vrot.lane.b32.xlu0 %v4782, 96
      %v5359 = vpop.permute.xlu0 %5358
      %5360 = vrot.lane.b32.xlu0 %v4617, 96
      %v5361 = vpop.permute.xlu0 %5360
      %5362 = vrot.lane.b32.xlu0 %v4619, 96
      %v5363 = vpop.permute.xlu0 %5362
      %v5396 = vsel %vm1498, %v4516, %v4821
      %v5397 = vsel %vm1498, %v4517, %v4823
      %v5398 = vsel %vm1498, %v4519, %v4825
      %v5399 = vsel %vm1498, %v4520, %v4827
      %v5400 = vsel %vm1498, %v4522, %v4829
      %v5401 = vsel %vm1498, %v4523, %v4831
      %v5402 = vsel %vm1498, %v4525, %v4833
      %v5403 = vsel %vm1498, %v4526, %v4835
      %v5404 = vsel %vm1498, %v4528, %v4837
      %v5405 = vsel %vm1498, %v4529, %v4839
      %v5406 = vsel %vm1498, %v4531, %v4841
      %v5407 = vsel %vm1498, %v4532, %v4843
      %v5408 = vsel %vm1498, %v4534, %v4845
      %v5409 = vsel %vm1498, %v4535, %v4847
      %v5410 = vsel %vm1498, %v4537, %v4849
      %v5411 = vsel %vm1498, %v4538, %v4851
      %v5412 = vsel %vm1498, %v4540, %v4853
      %v5413 = vsel %vm1498, %v4541, %v4855
      %v5414 = vsel %vm1498, %v4543, %v4857
      %v5415 = vsel %vm1498, %v4544, %v4859
      %v5416 = vsel %vm1498, %v4546, %v4861
      %v5417 = vsel %vm1498, %v4547, %v4863
      %v5418 = vsel %vm1498, %v4549, %v4865
      %v5419 = vsel %vm1498, %v4550, %v4867
      %v5420 = vsel %vm1498, %v4552, %v4869
      %v5421 = vsel %vm1498, %v4553, %v4871
      %v5422 = vsel %vm1498, %v4555, %v4873
      %v5423 = vsel %vm1498, %v4556, %v4875
      %v5424 = vsel %vm1498, %v4558, %v4877
      %v5425 = vsel %vm1498, %v4559, %v4879
      %v5426 = vsel %vm1498, %v4561, %v4881
      %v5427 = vsel %vm1498, %v4562, %v4883
      %v5428 = vsel %vm1564, %v5396, %v4917
      %v5429 = vsel %vm1564, %v5397, %v4919
      %v5430 = vsel %vm1564, %v5398, %v4921
      %v5431 = vsel %vm1564, %v5399, %v4923
      %v5432 = vsel %vm1564, %v5400, %v4925
      %v5433 = vsel %vm1564, %v5401, %v4927
      %v5434 = vsel %vm1564, %v5402, %v4929
      %v5435 = vsel %vm1564, %v5403, %v4931
      %v5436 = vsel %vm1564, %v5404, %v4933
      %v5437 = vsel %vm1564, %v5405, %v4935
      %v5438 = vsel %vm1564, %v5406, %v4937
      %v5439 = vsel %vm1564, %v5407, %v4939
      %v5440 = vsel %vm1564, %v5408, %v4941
      %v5441 = vsel %vm1564, %v5409, %v4943
      %v5442 = vsel %vm1564, %v5410, %v4945
      %v5443 = vsel %vm1564, %v5411, %v4947
      %v5444 = vsel %vm1564, %v5412, %v4949
      %v5445 = vsel %vm1564, %v5413, %v4951
      %v5446 = vsel %vm1564, %v5414, %v4953
      %v5447 = vsel %vm1564, %v5415, %v4955
      %v5448 = vsel %vm1564, %v5416, %v4957
      %v5449 = vsel %vm1564, %v5417, %v4959
      %v5450 = vsel %vm1564, %v5418, %v4961
      %v5451 = vsel %vm1564, %v5419, %v4963
      %v5452 = vsel %vm1564, %v5420, %v4965
      %v5453 = vsel %vm1564, %v5421, %v4967
      %v5454 = vsel %vm1564, %v5422, %v4969
      %v5455 = vsel %vm1564, %v5423, %v4971
      %v5456 = vsel %vm1564, %v5424, %v4973
      %v5457 = vsel %vm1564, %v5425, %v4975
      %v5458 = vsel %vm1564, %v5426, %v4977
      %v5459 = vsel %vm1564, %v5427, %v4979
      %v5460 = vsel %vm1630, %v5428, %v5013
      %v5461 = vsel %vm1630, %v5429, %v5015
      %v5462 = vsel %vm1630, %v5430, %v5017
      %v5463 = vsel %vm1630, %v5431, %v5019
      %v5464 = vsel %vm1630, %v5432, %v5021
      %v5465 = vsel %vm1630, %v5433, %v5023
      %v5466 = vsel %vm1630, %v5434, %v5025
      %v5467 = vsel %vm1630, %v5435, %v5027
      %v5468 = vsel %vm1630, %v5436, %v5029
      %v5469 = vsel %vm1630, %v5437, %v5031
      %v5470 = vsel %vm1630, %v5438, %v5033
      %v5471 = vsel %vm1630, %v5439, %v5035
      %v5472 = vsel %vm1630, %v5440, %v5037
      %v5473 = vsel %vm1630, %v5441, %v5039
      %v5474 = vsel %vm1630, %v5442, %v5041
      %v5475 = vsel %vm1630, %v5443, %v5043
      %v5476 = vsel %vm1630, %v5444, %v5045
      %v5477 = vsel %vm1630, %v5445, %v5047
      %v5478 = vsel %vm1630, %v5446, %v5049
      %v5479 = vsel %vm1630, %v5447, %v5051
      %v5480 = vsel %vm1630, %v5448, %v5053
      %v5481 = vsel %vm1630, %v5449, %v5055
      %v5482 = vsel %vm1630, %v5450, %v5057
      %v5483 = vsel %vm1630, %v5451, %v5059
      %v5484 = vsel %vm1630, %v5452, %v5061
      %v5485 = vsel %vm1630, %v5453, %v5063
      %v5486 = vsel %vm1630, %v5454, %v5065
      %v5487 = vsel %vm1630, %v5455, %v5067
      %v5488 = vsel %vm1630, %v5456, %v5069
      %v5489 = vsel %vm1630, %v5457, %v5071
      %v5490 = vsel %vm1630, %v5458, %v5073
      %v5491 = vsel %vm1630, %v5459, %v5075
      %v5492 = vsel %vm1498, %v4622, %v5109
      %v5493 = vsel %vm1498, %v4624, %v5111
      %v5494 = vsel %vm1498, %v4627, %v5113
      %v5495 = vsel %vm1498, %v4629, %v5115
      %v5496 = vsel %vm1498, %v4632, %v5117
      %v5497 = vsel %vm1498, %v4634, %v5119
      %v5498 = vsel %vm1498, %v4637, %v5121
      %v5499 = vsel %vm1498, %v4639, %v5123
      %v5500 = vsel %vm1498, %v4642, %v5125
      %v5501 = vsel %vm1498, %v4644, %v5127
      %v5502 = vsel %vm1498, %v4647, %v5129
      %v5503 = vsel %vm1498, %v4649, %v5131
      %v5504 = vsel %vm1498, %v4652, %v5133
      %v5505 = vsel %vm1498, %v4654, %v5135
      %v5506 = vsel %vm1498, %v4657, %v5137
      %v5507 = vsel %vm1498, %v4659, %v5139
      %v5508 = vsel %vm1498, %v4662, %v5141
      %v5509 = vsel %vm1498, %v4664, %v5143
      %v5510 = vsel %vm1498, %v4667, %v5145
      %v5511 = vsel %vm1498, %v4669, %v5147
      %v5512 = vsel %vm1498, %v4672, %v5149
      %v5513 = vsel %vm1498, %v4674, %v5151
      %v5514 = vsel %vm1498, %v4677, %v5153
      %v5515 = vsel %vm1498, %v4679, %v5155
      %v5516 = vsel %vm1498, %v4682, %v5157
      %v5517 = vsel %vm1498, %v4684, %v5159
      %v5518 = vsel %vm1498, %v4687, %v5161
      %v5519 = vsel %vm1498, %v4689, %v5163
      %v5520 = vsel %vm1498, %v4692, %v5165
      %v5521 = vsel %vm1498, %v4694, %v5167
      %v5522 = vsel %vm1498, %v4780, %v5169
      %v5523 = vsel %vm1498, %v4782, %v5171
      %v5524 = vsel %vm1564, %v5492, %v5205
      %v5525 = vsel %vm1564, %v5493, %v5207
      %v5526 = vsel %vm1564, %v5494, %v5209
      %v5527 = vsel %vm1564, %v5495, %v5211
      %v5528 = vsel %vm1564, %v5496, %v5213
      %v5529 = vsel %vm1564, %v5497, %v5215
      %v5530 = vsel %vm1564, %v5498, %v5217
      %v5531 = vsel %vm1564, %v5499, %v5219
      %v5532 = vsel %vm1564, %v5500, %v5221
      %v5533 = vsel %vm1564, %v5501, %v5223
      %v5534 = vsel %vm1564, %v5502, %v5225
      %v5535 = vsel %vm1564, %v5503, %v5227
      %v5536 = vsel %vm1564, %v5504, %v5229
      %v5537 = vsel %vm1564, %v5505, %v5231
      %v5538 = vsel %vm1564, %v5506, %v5233
      %v5539 = vsel %vm1564, %v5507, %v5235
      %v5540 = vsel %vm1564, %v5508, %v5237
      %v5541 = vsel %vm1564, %v5509, %v5239
      %v5542 = vsel %vm1564, %v5510, %v5241
      %v5543 = vsel %vm1564, %v5511, %v5243
      %v5544 = vsel %vm1564, %v5512, %v5245
      %v5545 = vsel %vm1564, %v5513, %v5247
      %v5546 = vsel %vm1564, %v5514, %v5249
      %v5547 = vsel %vm1564, %v5515, %v5251
      %v5548 = vsel %vm1564, %v5516, %v5253
      %v5549 = vsel %vm1564, %v5517, %v5255
      %v5550 = vsel %vm1564, %v5518, %v5257
      %v5551 = vsel %vm1564, %v5519, %v5259
      %v5552 = vsel %vm1564, %v5520, %v5261
      %v5553 = vsel %vm1564, %v5521, %v5263
      %v5554 = vsel %vm1564, %v5522, %v5265
      %v5555 = vsel %vm1564, %v5523, %v5267
      %v5556 = vsel %vm1630, %v5524, %v5301
      %v5557 = vsel %vm1630, %v5525, %v5303
      %v5558 = vsel %vm1630, %v5526, %v5305
      %v5559 = vsel %vm1630, %v5527, %v5307
      %v5560 = vsel %vm1630, %v5528, %v5309
      %v5561 = vsel %vm1630, %v5529, %v5311
      %v5562 = vsel %vm1630, %v5530, %v5313
      %v5563 = vsel %vm1630, %v5531, %v5315
      %v5564 = vsel %vm1630, %v5532, %v5317
      %v5565 = vsel %vm1630, %v5533, %v5319
      %v5566 = vsel %vm1630, %v5534, %v5321
      %v5567 = vsel %vm1630, %v5535, %v5323
      %v5568 = vsel %vm1630, %v5536, %v5325
      %v5569 = vsel %vm1630, %v5537, %v5327
      %v5570 = vsel %vm1630, %v5538, %v5329
      %v5571 = vsel %vm1630, %v5539, %v5331
      %v5572 = vsel %vm1630, %v5540, %v5333
      %v5573 = vsel %vm1630, %v5541, %v5335
      %v5574 = vsel %vm1630, %v5542, %v5337
      %v5575 = vsel %vm1630, %v5543, %v5339
      %v5576 = vsel %vm1630, %v5544, %v5341
      %v5577 = vsel %vm1630, %v5545, %v5343
      %v5578 = vsel %vm1630, %v5546, %v5345
      %v5579 = vsel %vm1630, %v5547, %v5347
      %v5580 = vsel %vm1630, %v5548, %v5349
      %v5581 = vsel %vm1630, %v5549, %v5351
      %v5582 = vsel %vm1630, %v5550, %v5353
      %v5583 = vsel %vm1630, %v5551, %v5355
      %v5584 = vsel %vm1630, %v5552, %v5357
      %v5585 = vsel %vm1630, %v5553, %v5359
      %v5586 = vsel %vm1630, %v5554, %v5361
      %v5587 = vsel %vm1630, %v5555, %v5363
      %v5588 = vld [vmem:[%s5] sm:$0xff]
      %v5589 = vld [vmem:[%s5 + $0x8] sm:$0xff]
      %v5590 = vld [vmem:[%s5 + $0x10] sm:$0xff]
      %v5591 = vld [vmem:[%s5 + $0x18] sm:$0xff]
      %v5592 = vld [vmem:[%s5 + $0x20] sm:$0xff]
      %v5593 = vld [vmem:[%s5 + $0x28] sm:$0xff]
      %v5594 = vld [vmem:[%s5 + $0x30] sm:$0xff]
      %v5595 = vld [vmem:[%s5 + $0x38] sm:$0xff]
      %v5596 = vld [vmem:[%s5 + $0x40] sm:$0xff]
      %v5597 = vld [vmem:[%s5 + $0x48] sm:$0xff]
      %v5598 = vld [vmem:[%s5 + $0x50] sm:$0xff]
      %v5599 = vld [vmem:[%s5 + $0x58] sm:$0xff]
      %v5600 = vld [vmem:[%s5 + $0x60] sm:$0xff]
      %v5601 = vld [vmem:[%s5 + $0x68] sm:$0xff]
      %v5602 = vld [vmem:[%s5 + $0x70] sm:$0xff]
      %v5603 = vld [vmem:[%s5 + $0x78] sm:$0xff]
      %v5604 = vld [vmem:[%s5 + $0x80] sm:$0xff]
      %v5605 = vld [vmem:[%s5 + $0x88] sm:$0xff]
      %v5606 = vld [vmem:[%s5 + $0x90] sm:$0xff]
      %v5607 = vld [vmem:[%s5 + $0x98] sm:$0xff]
      %v5608 = vld [vmem:[%s5 + $0xa0] sm:$0xff]
      %v5609 = vld [vmem:[%s5 + $0xa8] sm:$0xff]
      %v5610 = vld [vmem:[%s5 + $0xb0] sm:$0xff]
      %v5611 = vld [vmem:[%s5 + $0xb8] sm:$0xff]
      %v5612 = vld [vmem:[%s5 + $0xc0] sm:$0xff]
      %v5613 = vld [vmem:[%s5 + $0xc8] sm:$0xff]
      %v5614 = vld [vmem:[%s5 + $0xd0] sm:$0xff]
      %v5615 = vld [vmem:[%s5 + $0xd8] sm:$0xff]
      %v5616 = vld [vmem:[%s5 + $0xe0] sm:$0xff]
      %v5617 = vld [vmem:[%s5 + $0xe8] sm:$0xff]
      %v5618 = vld [vmem:[%s5 + $0xf0] sm:$0xff]
      %v5619 = vld [vmem:[%s5 + $0xf8] sm:$0xff]
      %v5620 = vld [vmem:[%s5 + $0x100] sm:$0xff]
      %v5621 = vld [vmem:[%s5 + $0x108] sm:$0xff]
      %v5622 = vld [vmem:[%s5 + $0x110] sm:$0xff]
      %v5623 = vld [vmem:[%s5 + $0x118] sm:$0xff]
      %v5624 = vld [vmem:[%s6] sm:$0x1]
      %v5626 = vlaneseq
      %v5627 = vshrl.u32 %v5626, 7
      %v5628 = vsub.s32 0, %v5627
      %v5629 = vrot.slane %v5624, %v5628
      %v5631 = vsel %vm1498, %v4707, 0
      %v5633 = vsel %vm1498, %v4709, 0
      %v5635 = vsel %vm1498, %v4712, 0
      %v5637 = vsel %vm1498, %v4714, 0
      %v5639 = vsel %vm1498, %v4717, 0
      %v5641 = vsel %vm1498, %v4719, 0
      %v5643 = vsel %vm1498, %v4722, 0
      %v5645 = vsel %vm1498, %v4724, 0
      %v5647 = vsel %vm1498, %v4727, 0
      %v5649 = vsel %vm1498, %v4729, 0
      %v5651 = vsel %vm1498, %v4732, 0
      %v5653 = vsel %vm1498, %v4734, 0
      %v5655 = vsel %vm1498, %v4737, 0
      %v5657 = vsel %vm1498, %v4739, 0
      %v5659 = vsel %vm1498, %v4742, 0
      %v5661 = vsel %vm1498, %v4744, 0
      %v5663 = vsel %vm1498, %v4747, 0
      %v5665 = vsel %vm1498, %v4749, 0
      %v5667 = vsel %vm1498, %v4752, 0
      %v5669 = vsel %vm1498, %v4754, 0
      %v5671 = vsel %vm1498, %v4757, 0
      %v5673 = vsel %vm1498, %v4759, 0
      %v5675 = vsel %vm1498, %v4762, 0
      %v5677 = vsel %vm1498, %v4764, 0
      %v5679 = vsel %vm1498, %v4767, 0
      %v5681 = vsel %vm1498, %v4769, 0
      %v5683 = vsel %vm1498, %v4772, 0
      %v5685 = vsel %vm1498, %v4774, 0
      %v5687 = vsel %vm1498, %v4817, 0
      %v5689 = vsel %vm1498, %v4819, 0
      %v5691 = vsel %vm1498, %v4697, 0
      %v5693 = vsel %vm1498, %v4699, 0
      %5695 = vmatprep.subr.mxu0 0.0
      %5696 = vmatpush1.msra.mxu0 %v5588
      %5697 = vmatprep.subr.mxu0 0.0
      %5698 = vmatpush1.msra.mxu0 %v5589
      %5699 = vmatprep.subr.mxu0 0.0
      %5700 = vmatpush1.msra.mxu0 %v5590
      %5701 = vmatprep.subr.mxu0 0.0
      %5702 = vmatpush1.msra.mxu0 %v5591
      %5703 = vmatprep.subr.mxu0 0.0
      %5704 = vmatpush1.msra.mxu0 %v5592
      %5705 = vmatprep.subr.mxu0 0.0
      %5706 = vmatpush1.msra.mxu0 %v5593
      %5707 = vmatprep.subr.mxu0 0.0
      %5708 = vmatpush1.msra.mxu0 %v5594
      %5709 = vmatprep.subr.mxu0 0.0
      %5710 = vmatpush1.msra.mxu0 %v5595
      %5711 = vmatprep.subr.mxu0 0.0
      %5712 = vmatpush1.msra.mxu0 %v5596
      %5713 = vmatprep.subr.mxu0 0.0
      %5714 = vmatpush1.msra.mxu0 %v5597
      %5715 = vmatprep.subr.mxu0 0.0
      %5716 = vmatpush1.msra.mxu0 %v5598
      %5717 = vmatprep.subr.mxu0 0.0
      %5718 = vmatpush1.msra.mxu0 %v5599
      %5719 = vmatprep.subr.mxu0 0.0
      %5720 = vmatpush1.msra.mxu0 %v5600
      %5721 = vmatprep.subr.mxu0 0.0
      %5722 = vmatpush1.msra.mxu0 %v5601
      %5723 = vmatprep.subr.mxu0 0.0
      %5724 = vmatpush1.msra.mxu0 %v5602
      %5725 = vmatprep.subr.mxu0 0.0
      %5726 = vmatpush1.msra.mxu0 %v5603
      %5727 = vmatprep.subr.mxu0 0.0
      %5728 = vmatpush1.msra.mxu0 %v5604
      %5729 = vmatprep.subr.mxu0 0.0
      %5730 = vmatpush1.msra.mxu0 %v5605
      %5731 = vmatprep.subr.mxu0 0.0
      %5732 = vmatpush1.msra.mxu0 %v5606
      %5733 = vmatprep.subr.mxu0 0.0
      %5734 = vmatpush1.msra.mxu0 %v5607
      %5735 = vmatprep.subr.mxu0 0.0
      %5736 = vmatpush1.msra.mxu0 %v5608
      %5737 = vmatprep.subr.mxu0 0.0
      %5738 = vmatpush1.msra.mxu0 %v5609
      %5739 = vmatprep.subr.mxu0 0.0
      %5740 = vmatpush1.msra.mxu0 %v5610
      %5741 = vmatprep.subr.mxu0 0.0
      %5742 = vmatpush1.msra.mxu0 %v5611
      %5743 = vmatprep.subr.mxu0 0.0
      %5744 = vmatpush1.msra.mxu0 %v5612
      %5745 = vmatprep.subr.mxu0 0.0
      %5746 = vmatpush1.msra.mxu0 %v5613
      %5747 = vmatprep.subr.mxu0 0.0
      %5748 = vmatpush1.msra.mxu0 %v5614
      %5749 = vmatprep.subr.mxu0 0.0
      %5750 = vmatpush1.msra.mxu0 %v5615
      %5751 = vmatprep.subr.mxu0 0.0
      %5752 = vmatpush1.msra.mxu0 %v5616
      %5753 = vmatprep.subr.mxu0 0.0
      %5754 = vmatpush1.msra.mxu0 %v5617
      %5755 = vmatprep.subr.mxu0 0.0
      %5756 = vmatpush1.msra.mxu0 %v5618
      %5757 = vmatprep.subr.mxu0 0.0
      %5758 = vmatpush1.msra.mxu0 %v5619
      %5759 = vmatprep.mubr.f32.mxu0 %v5556
      %5760 = vmatmul.mubr.f32.gmra.mrb[0].mxu0 %v5460
      %v5761 = vpop.f32.mrb[0].mxu0
      %v5762 = vadd.f32 %v5629, %v5761
      %v5763 = vpop.f32.mrb[0].mxu0
      %5764 = vmatprep.mubr.f32.mxu0 %v5557
      %5765 = vmatmul.mubr.f32.gmra.mrb[0].mxu0 %v5461
      %v5766 = vpop.f32.mrb[0].mxu0
      %v5767 = vadd.f32 %v5629, %v5766
      %v5768 = vpop.f32.mrb[0].mxu0
      %5769 = vmatprep.mubr.f32.mxu0 %v5558
      %5770 = vmatmul.mubr.f32.gmra.mrb[0].mxu0 %v5462
      %v5771 = vpop.f32.mrb[0].mxu0
      %v5772 = vadd.f32 %v5629, %v5771
      %v5773 = vpop.f32.mrb[0].mxu0
      %5774 = vmatprep.mubr.f32.mxu0 %v5559
      %5775 = vmatmul.mubr.f32.gmra.mrb[0].mxu0 %v5463
      %v5776 = vpop.f32.mrb[0].mxu0
      %v5777 = vadd.f32 %v5629, %v5776
      %v5778 = vpop.f32.mrb[0].mxu0
      %5779 = vmatprep.mubr.f32.mxu0 %v5560
      %5780 = vmatmul.mubr.f32.gmra.mrb[0].mxu0 %v5464
      %v5781 = vpop.f32.mrb[0].mxu0
      %v5782 = vadd.f32 %v5629, %v5781
      %v5783 = vpop.f32.mrb[0].mxu0
      %5784 = vmatprep.mubr.f32.mxu0 %v5561
      %5785 = vmatmul.mubr.f32.gmra.mrb[0].mxu0 %v5465
      %v5786 = vpop.f32.mrb[0].mxu0
      %v5787 = vadd.f32 %v5629, %v5786
      %v5788 = vpop.f32.mrb[0].mxu0
      %5789 = vmatprep.mubr.f32.mxu0 %v5562
      %5790 = vmatmul.mubr.f32.gmra.mrb[0].mxu0 %v5466
      %v5791 = vpop.f32.mrb[0].mxu0
      %v5792 = vadd.f32 %v5629, %v5791
      %v5793 = vpop.f32.mrb[0].mxu0
      %5794 = vmatprep.mubr.f32.mxu0 %v5563
      %5795 = vmatmul.mubr.f32.gmra.mrb[0].mxu0 %v5467
      %v5796 = vpop.f32.mrb[0].mxu0
      %v5797 = vadd.f32 %v5629, %v5796
      %v5798 = vpop.f32.mrb[0].mxu0
      %5799 = vmatprep.mubr.f32.mxu0 %v5564
      %5800 = vmatmul.mubr.f32.gmra.mrb[0].mxu0 %v5468
      %v5801 = vpop.f32.mrb[0].mxu0
      %v5802 = vadd.f32 %v5629, %v5801
      %v5803 = vpop.f32.mrb[0].mxu0
      %5804 = vmatprep.mubr.f32.mxu0 %v5565
      %5805 = vmatmul.mubr.f32.gmra.mrb[0].mxu0 %v5469
      %v5806 = vpop.f32.mrb[0].mxu0
      %v5807 = vadd.f32 %v5629, %v5806
      %v5808 = vpop.f32.mrb[0].mxu0
      %5809 = vmatprep.mubr.f32.mxu0 %v5566
      %5810 = vmatmul.mubr.f32.gmra.mrb[0].mxu0 %v5470
      %v5811 = vpop.f32.mrb[0].mxu0
      %v5812 = vadd.f32 %v5629, %v5811
      %v5813 = vpop.f32.mrb[0].mxu0
      %5814 = vmatprep.mubr.f32.mxu0 %v5567
      %5815 = vmatmul.mubr.f32.gmra.mrb[0].mxu0 %v5471
      %v5816 = vpop.f32.mrb[0].mxu0
      %v5817 = vadd.f32 %v5629, %v5816
      %v5818 = vpop.f32.mrb[0].mxu0
      %5819 = vmatprep.mubr.f32.mxu0 %v5568
      %5820 = vmatmul.mubr.f32.gmra.mrb[0].mxu0 %v5472
      %v5821 = vpop.f32.mrb[0].mxu0
      %v5822 = vadd.f32 %v5629, %v5821
      %v5823 = vpop.f32.mrb[0].mxu0
      %5824 = vmatprep.mubr.f32.mxu0 %v5569
      %5825 = vmatmul.mubr.f32.gmra.mrb[0].mxu0 %v5473
      %v5826 = vpop.f32.mrb[0].mxu0
      %v5827 = vadd.f32 %v5629, %v5826
      %v5828 = vpop.f32.mrb[0].mxu0
      %5829 = vmatprep.mubr.f32.mxu0 %v5570
      %5830 = vmatmul.mubr.f32.gmra.mrb[0].mxu0 %v5474
      %v5831 = vpop.f32.mrb[0].mxu0
      %v5832 = vadd.f32 %v5629, %v5831
      %v5833 = vpop.f32.mrb[0].mxu0
      %5834 = vmatprep.mubr.f32.mxu0 %v5571
      %5835 = vmatmul.mubr.f32.gmra.mrb[0].mxu0 %v5475
      %v5836 = vpop.f32.mrb[0].mxu0
      %v5837 = vadd.f32 %v5629, %v5836
      %v5838 = vpop.f32.mrb[0].mxu0
      %5839 = vmatprep.mubr.f32.mxu0 %v5572
      %5840 = vmatmul.mubr.f32.gmra.mrb[0].mxu0 %v5476
      %v5841 = vpop.f32.mrb[0].mxu0
      %v5842 = vadd.f32 %v5629, %v5841
      %v5843 = vpop.f32.mrb[0].mxu0
      %5844 = vmatprep.mubr.f32.mxu0 %v5573
      %5845 = vmatmul.mubr.f32.gmra.mrb[0].mxu0 %v5477
      %v5846 = vpop.f32.mrb[0].mxu0
      %v5847 = vadd.f32 %v5629, %v5846
      %v5848 = vpop.f32.mrb[0].mxu0
      %5849 = vmatprep.mubr.f32.mxu0 %v5574
      %5850 = vmatmul.mubr.f32.gmra.mrb[0].mxu0 %v5478
      %v5851 = vpop.f32.mrb[0].mxu0
      %v5852 = vadd.f32 %v5629, %v5851
      %v5853 = vpop.f32.mrb[0].mxu0
      %5854 = vmatprep.mubr.f32.mxu0 %v5575
      %5855 = vmatmul.mubr.f32.gmra.mrb[0].mxu0 %v5479
      %v5856 = vpop.f32.mrb[0].mxu0
      %v5857 = vadd.f32 %v5629, %v5856
      %v5858 = vpop.f32.mrb[0].mxu0
      %5859 = vmatprep.mubr.f32.mxu0 %v5576
      %5860 = vmatmul.mubr.f32.gmra.mrb[0].mxu0 %v5480
      %v5861 = vpop.f32.mrb[0].mxu0
      %v5862 = vadd.f32 %v5629, %v5861
      %v5863 = vpop.f32.mrb[0].mxu0
      %5864 = vmatprep.mubr.f32.mxu0 %v5577
      %5865 = vmatmul.mubr.f32.gmra.mrb[0].mxu0 %v5481
      %v5866 = vpop.f32.mrb[0].mxu0
      %v5867 = vadd.f32 %v5629, %v5866
      %v5868 = vpop.f32.mrb[0].mxu0
      %5869 = vmatprep.mubr.f32.mxu0 %v5578
      %5870 = vmatmul.mubr.f32.gmra.mrb[0].mxu0 %v5482
      %v5871 = vpop.f32.mrb[0].mxu0
      %v5872 = vadd.f32 %v5629, %v5871
      %v5873 = vpop.f32.mrb[0].mxu0
      %5874 = vmatprep.mubr.f32.mxu0 %v5579
      %5875 = vmatmul.mubr.f32.gmra.mrb[0].mxu0 %v5483
      %v5876 = vpop.f32.mrb[0].mxu0
      %v5877 = vadd.f32 %v5629, %v5876
      %v5878 = vpop.f32.mrb[0].mxu0
      %5879 = vmatprep.mubr.f32.mxu0 %v5580
      %5880 = vmatmul.mubr.f32.gmra.mrb[0].mxu0 %v5484
      %v5881 = vpop.f32.mrb[0].mxu0
      %v5882 = vadd.f32 %v5629, %v5881
      %v5883 = vpop.f32.mrb[0].mxu0
      %5884 = vmatprep.mubr.f32.mxu0 %v5581
      %5885 = vmatmul.mubr.f32.gmra.mrb[0].mxu0 %v5485
      %v5886 = vpop.f32.mrb[0].mxu0
      %v5887 = vadd.f32 %v5629, %v5886
      %v5888 = vpop.f32.mrb[0].mxu0
      %5889 = vmatprep.mubr.f32.mxu0 %v5582
      %5890 = vmatmul.mubr.f32.gmra.mrb[0].mxu0 %v5486
      %v5891 = vpop.f32.mrb[0].mxu0
      %v5892 = vadd.f32 %v5629, %v5891
      %v5893 = vpop.f32.mrb[0].mxu0
      %5894 = vmatprep.mubr.f32.mxu0 %v5583
      %5895 = vmatmul.mubr.f32.gmra.mrb[0].mxu0 %v5487
      %v5896 = vpop.f32.mrb[0].mxu0
      %v5897 = vadd.f32 %v5629, %v5896
      %v5898 = vpop.f32.mrb[0].mxu0
      %5899 = vmatprep.mubr.f32.mxu0 %v5584
      %5900 = vmatmul.mubr.f32.gmra.mrb[0].mxu0 %v5488
      %v5901 = vpop.f32.mrb[0].mxu0
      %v5902 = vadd.f32 %v5629, %v5901
      %v5903 = vpop.f32.mrb[0].mxu0
      %5904 = vmatprep.mubr.f32.mxu0 %v5585
      %5905 = vmatmul.mubr.f32.gmra.mrb[0].mxu0 %v5489
      %v5906 = vpop.f32.mrb[0].mxu0
      %v5907 = vadd.f32 %v5629, %v5906
      %v5908 = vpop.f32.mrb[0].mxu0
      %5909 = vmatprep.mubr.f32.mxu0 %v5586
      %5910 = vmatmul.mubr.f32.gmra.mrb[0].mxu0 %v5490
      %v5911 = vpop.f32.mrb[0].mxu0
      %v5912 = vadd.f32 %v5629, %v5911
      %v5913 = vpop.f32.mrb[0].mxu0
      %5914 = vmatprep.mubr.f32.mxu0 %v5587
      %5915 = vmatmul.mubr.f32.gmra.mrb[0].mxu0 %v5491
      %v5916 = vpop.f32.mrb[0].mxu0
      %v5917 = vadd.f32 %v5629, %v5916
      %v5918 = vpop.f32.mrb[0].mxu0
      %5919 = vdwg.mxu0
      %5920 = vmatprep.subr.mxu0 0.0
      %5921 = vmatpush1.msra.mxu0 %v5620
      %5922 = vmatprep.subr.mxu0 0.0
      %5923 = vmatpush1.msra.mxu0 %v5621
      %5924 = vmatprep.subr.mxu0 0.0
      %5925 = vmatpush1.msra.mxu0 %v5622
      %5926 = vmatprep.subr.mxu0 0.0
      %5927 = vmatpush1.msra.mxu0 %v5623
      %5928 = vmatprep.subr.mxu0 0.0
      %5929 = vmatpush1.msra.mxu0 0.0
      %5930 = vmatprep.subr.mxu0 0.0
      %5931 = vmatpush1.msra.mxu0 0.0
      %5932 = vmatprep.subr.mxu0 0.0
      %5933 = vmatpush1.msra.mxu0 0.0
      %5934 = vmatprep.subr.mxu0 0.0
      %5935 = vmatpush1.msra.mxu0 0.0
      %5936 = vmatprep.subr.mxu0 0.0
      %5937 = vmatpush1.msra.mxu0 0.0
      %5938 = vmatprep.subr.mxu0 0.0
      %5939 = vmatpush1.msra.mxu0 0.0
      %5940 = vmatprep.subr.mxu0 0.0
      %5941 = vmatpush1.msra.mxu0 0.0
      %5942 = vmatprep.subr.mxu0 0.0
      %5943 = vmatpush1.msra.mxu0 0.0
      %5944 = vmatprep.subr.mxu0 0.0
      %5945 = vmatpush1.msra.mxu0 0.0
      %5946 = vmatprep.subr.mxu0 0.0
      %5947 = vmatpush1.msra.mxu0 0.0
      %5948 = vmatprep.subr.mxu0 0.0
      %5949 = vmatpush1.msra.mxu0 0.0
      %5950 = vmatprep.subr.mxu0 0.0
      %5951 = vmatpush1.msra.mxu0 0.0
      %5952 = vmatprep.subr.mxu0 0.0
      %5953 = vmatpush1.msra.mxu0 0.0
      %5954 = vmatprep.subr.mxu0 0.0
      %5955 = vmatpush1.msra.mxu0 0.0
      %5956 = vmatprep.subr.mxu0 0.0
      %5957 = vmatpush1.msra.mxu0 0.0
      %5958 = vmatprep.subr.mxu0 0.0
      %5959 = vmatpush1.msra.mxu0 0.0
      %5960 = vmatprep.subr.mxu0 0.0
      %5961 = vmatpush1.msra.mxu0 0.0
      %5962 = vmatprep.subr.mxu0 0.0
      %5963 = vmatpush1.msra.mxu0 0.0
      %5964 = vmatprep.subr.mxu0 0.0
      %5965 = vmatpush1.msra.mxu0 0.0
      %5966 = vmatprep.subr.mxu0 0.0
      %5967 = vmatpush1.msra.mxu0 0.0
      %5968 = vmatprep.subr.mxu0 0.0
      %5969 = vmatpush1.msra.mxu0 0.0
      %5970 = vmatprep.subr.mxu0 0.0
      %5971 = vmatpush1.msra.mxu0 0.0
      %5972 = vmatprep.subr.mxu0 0.0
      %5973 = vmatpush1.msra.mxu0 0.0
      %5974 = vmatprep.subr.mxu0 0.0
      %5975 = vmatpush1.msra.mxu0 0.0
      %5976 = vmatprep.subr.mxu0 0.0
      %5977 = vmatpush1.msra.mxu0 0.0
      %5978 = vmatprep.subr.mxu0 0.0
      %5979 = vmatpush1.msra.mxu0 0.0
      %5980 = vmatprep.subr.mxu0 0.0
      %5981 = vmatpush1.msra.mxu0 0.0
      %5982 = vmatprep.subr.mxu0 0.0
      %5983 = vmatpush1.msra.mxu0 0.0
      %5984 = vmatprep.mubr.f32.mxu0 0.0
      %5985 = vmatmul.mubr.f32.gmra.mrb[0].mxu0 %v5631
      %v5986 = vpop.f32.mrb[0].mxu0
      %v5987 = vadd.f32 %v5762, %v5986
      %v5988 = vpop.f32.mrb[0].mxu0
      %5989 = vmatprep.mubr.f32.mxu0 0.0
      %5990 = vmatmul.mubr.f32.gmra.mrb[0].mxu0 %v5633
      %v5991 = vpop.f32.mrb[0].mxu0
      %v5992 = vadd.f32 %v5767, %v5991
      %v5993 = vpop.f32.mrb[0].mxu0
      %5994 = vmatprep.mubr.f32.mxu0 0.0
      %5995 = vmatmul.mubr.f32.gmra.mrb[0].mxu0 %v5635
      %v5996 = vpop.f32.mrb[0].mxu0
      %v5997 = vadd.f32 %v5772, %v5996
      %v5998 = vpop.f32.mrb[0].mxu0
      %5999 = vmatprep.mubr.f32.mxu0 0.0
      %6000 = vmatmul.mubr.f32.gmra.mrb[0].mxu0 %v5637
      %v6001 = vpop.f32.mrb[0].mxu0
      %v6002 = vadd.f32 %v5777, %v6001
      %v6003 = vpop.f32.mrb[0].mxu0
      %6004 = vmatprep.mubr.f32.mxu0 0.0
      %6005 = vmatmul.mubr.f32.gmra.mrb[0].mxu0 %v5639
      %v6006 = vpop.f32.mrb[0].mxu0
      %v6007 = vadd.f32 %v5782, %v6006
      %v6008 = vpop.f32.mrb[0].mxu0
      %6009 = vmatprep.mubr.f32.mxu0 0.0
      %6010 = vmatmul.mubr.f32.gmra.mrb[0].mxu0 %v5641
      %v6011 = vpop.f32.mrb[0].mxu0
      %v6012 = vadd.f32 %v5787, %v6011
      %v6013 = vpop.f32.mrb[0].mxu0
      %6014 = vmatprep.mubr.f32.mxu0 0.0
      %6015 = vmatmul.mubr.f32.gmra.mrb[0].mxu0 %v5643
      %v6016 = vpop.f32.mrb[0].mxu0
      %v6017 = vadd.f32 %v5792, %v6016
      %v6018 = vpop.f32.mrb[0].mxu0
      %6019 = vmatprep.mubr.f32.mxu0 0.0
      %6020 = vmatmul.mubr.f32.gmra.mrb[0].mxu0 %v5645
      %v6021 = vpop.f32.mrb[0].mxu0
      %v6022 = vadd.f32 %v5797, %v6021
      %v6023 = vpop.f32.mrb[0].mxu0
      %6024 = vmatprep.mubr.f32.mxu0 0.0
      %6025 = vmatmul.mubr.f32.gmra.mrb[0].mxu0 %v5647
      %v6026 = vpop.f32.mrb[0].mxu0
      %v6027 = vadd.f32 %v5802, %v6026
      %v6028 = vpop.f32.mrb[0].mxu0
      %6029 = vmatprep.mubr.f32.mxu0 0.0
      %6030 = vmatmul.mubr.f32.gmra.mrb[0].mxu0 %v5649
      %v6031 = vpop.f32.mrb[0].mxu0
      %v6032 = vadd.f32 %v5807, %v6031
      %v6033 = vpop.f32.mrb[0].mxu0
      %6034 = vmatprep.mubr.f32.mxu0 0.0
      %6035 = vmatmul.mubr.f32.gmra.mrb[0].mxu0 %v5651
      %v6036 = vpop.f32.mrb[0].mxu0
      %v6037 = vadd.f32 %v5812, %v6036
      %v6038 = vpop.f32.mrb[0].mxu0
      %6039 = vmatprep.mubr.f32.mxu0 0.0
      %6040 = vmatmul.mubr.f32.gmra.mrb[0].mxu0 %v5653
      %v6041 = vpop.f32.mrb[0].mxu0
      %v6042 = vadd.f32 %v5817, %v6041
      %v6043 = vpop.f32.mrb[0].mxu0
      %6044 = vmatprep.mubr.f32.mxu0 0.0
      %6045 = vmatmul.mubr.f32.gmra.mrb[0].mxu0 %v5655
      %v6046 = vpop.f32.mrb[0].mxu0
      %v6047 = vadd.f32 %v5822, %v6046
      %v6048 = vpop.f32.mrb[0].mxu0
      %6049 = vmatprep.mubr.f32.mxu0 0.0
      %6050 = vmatmul.mubr.f32.gmra.mrb[0].mxu0 %v5657
      %v6051 = vpop.f32.mrb[0].mxu0
      %v6052 = vadd.f32 %v5827, %v6051
      %v6053 = vpop.f32.mrb[0].mxu0
      %6054 = vmatprep.mubr.f32.mxu0 0.0
      %6055 = vmatmul.mubr.f32.gmra.mrb[0].mxu0 %v5659
      %v6056 = vpop.f32.mrb[0].mxu0
      %v6057 = vadd.f32 %v5832, %v6056
      %v6058 = vpop.f32.mrb[0].mxu0
      %6059 = vmatprep.mubr.f32.mxu0 0.0
      %6060 = vmatmul.mubr.f32.gmra.mrb[0].mxu0 %v5661
      %v6061 = vpop.f32.mrb[0].mxu0
      %v6062 = vadd.f32 %v5837, %v6061
      %v6063 = vpop.f32.mrb[0].mxu0
      %6064 = vmatprep.mubr.f32.mxu0 0.0
      %6065 = vmatmul.mubr.f32.gmra.mrb[0].mxu0 %v5663
      %v6066 = vpop.f32.mrb[0].mxu0
      %v6067 = vadd.f32 %v5842, %v6066
      %v6068 = vpop.f32.mrb[0].mxu0
      %6069 = vmatprep.mubr.f32.mxu0 0.0
      %6070 = vmatmul.mubr.f32.gmra.mrb[0].mxu0 %v5665
      %v6071 = vpop.f32.mrb[0].mxu0
      %v6072 = vadd.f32 %v5847, %v6071
      %v6073 = vpop.f32.mrb[0].mxu0
      %6074 = vmatprep.mubr.f32.mxu0 0.0
      %6075 = vmatmul.mubr.f32.gmra.mrb[0].mxu0 %v5667
      %v6076 = vpop.f32.mrb[0].mxu0
      %v6077 = vadd.f32 %v5852, %v6076
      %v6078 = vpop.f32.mrb[0].mxu0
      %6079 = vmatprep.mubr.f32.mxu0 0.0
      %6080 = vmatmul.mubr.f32.gmra.mrb[0].mxu0 %v5669
      %v6081 = vpop.f32.mrb[0].mxu0
      %v6082 = vadd.f32 %v5857, %v6081
      %v6083 = vpop.f32.mrb[0].mxu0
      %6084 = vmatprep.mubr.f32.mxu0 0.0
      %6085 = vmatmul.mubr.f32.gmra.mrb[0].mxu0 %v5671
      %v6086 = vpop.f32.mrb[0].mxu0
      %v6087 = vadd.f32 %v5862, %v6086
      %v6088 = vpop.f32.mrb[0].mxu0
      %6089 = vmatprep.mubr.f32.mxu0 0.0
      %6090 = vmatmul.mubr.f32.gmra.mrb[0].mxu0 %v5673
      %v6091 = vpop.f32.mrb[0].mxu0
      %v6092 = vadd.f32 %v5867, %v6091
      %v6093 = vpop.f32.mrb[0].mxu0
      %6094 = vmatprep.mubr.f32.mxu0 0.0
      %6095 = vmatmul.mubr.f32.gmra.mrb[0].mxu0 %v5675
      %v6096 = vpop.f32.mrb[0].mxu0
      %v6097 = vadd.f32 %v5872, %v6096
      %v6098 = vpop.f32.mrb[0].mxu0
      %6099 = vmatprep.mubr.f32.mxu0 0.0
      %6100 = vmatmul.mubr.f32.gmra.mrb[0].mxu0 %v5677
      %v6101 = vpop.f32.mrb[0].mxu0
      %v6102 = vadd.f32 %v5877, %v6101
      %v6103 = vpop.f32.mrb[0].mxu0
      %6104 = vmatprep.mubr.f32.mxu0 0.0
      %6105 = vmatmul.mubr.f32.gmra.mrb[0].mxu0 %v5679
      %v6106 = vpop.f32.mrb[0].mxu0
      %v6107 = vadd.f32 %v5882, %v6106
      %v6108 = vpop.f32.mrb[0].mxu0
      %6109 = vmatprep.mubr.f32.mxu0 0.0
      %6110 = vmatmul.mubr.f32.gmra.mrb[0].mxu0 %v5681
      %v6111 = vpop.f32.mrb[0].mxu0
      %v6112 = vadd.f32 %v5887, %v6111
      %v6113 = vpop.f32.mrb[0].mxu0
      %6114 = vmatprep.mubr.f32.mxu0 0.0
      %6115 = vmatmul.mubr.f32.gmra.mrb[0].mxu0 %v5683
      %v6116 = vpop.f32.mrb[0].mxu0
      %v6117 = vadd.f32 %v5892, %v6116
      %v6118 = vpop.f32.mrb[0].mxu0
      %6119 = vmatprep.mubr.f32.mxu0 0.0
      %6120 = vmatmul.mubr.f32.gmra.mrb[0].mxu0 %v5685
      %v6121 = vpop.f32.mrb[0].mxu0
      %v6122 = vadd.f32 %v5897, %v6121
      %v6123 = vpop.f32.mrb[0].mxu0
      %6124 = vmatprep.mubr.f32.mxu0 0.0
      %6125 = vmatmul.mubr.f32.gmra.mrb[0].mxu0 %v5687
      %v6126 = vpop.f32.mrb[0].mxu0
      %v6127 = vadd.f32 %v5902, %v6126
      %v6128 = vpop.f32.mrb[0].mxu0
      %6129 = vmatprep.mubr.f32.mxu0 0.0
      %6130 = vmatmul.mubr.f32.gmra.mrb[0].mxu0 %v5689
      %v6131 = vpop.f32.mrb[0].mxu0
      %v6132 = vadd.f32 %v5907, %v6131
      %v6133 = vpop.f32.mrb[0].mxu0
      %6134 = vmatprep.mubr.f32.mxu0 0.0
      %6135 = vmatmul.mubr.f32.gmra.mrb[0].mxu0 %v5691
      %v6136 = vpop.f32.mrb[0].mxu0
      %v6137 = vadd.f32 %v5912, %v6136
      %v6138 = vpop.f32.mrb[0].mxu0
      %6139 = vmatprep.mubr.f32.mxu0 0.0
      %6140 = vmatmul.mubr.f32.gmra.mrb[0].mxu0 %v5693
      %v6141 = vpop.f32.mrb[0].mxu0
      %v6142 = vadd.f32 %v5917, %v6141
      %v6143 = vpop.f32.mrb[0].mxu0
      %6144 = vdwg.mxu0
      %vm6145 = vcmp.ge.f32.partialorder %v5987, 0.0
      %vm6146 = vcmp.ge.f32.partialorder %v5992, 0.0
      %vm6147 = vcmp.ge.f32.partialorder %v5997, 0.0
      %vm6148 = vcmp.ge.f32.partialorder %v6002, 0.0
      %vm6149 = vcmp.ge.f32.partialorder %v6007, 0.0
      %vm6150 = vcmp.ge.f32.partialorder %v6012, 0.0
      %vm6151 = vcmp.ge.f32.partialorder %v6017, 0.0
      %vm6152 = vcmp.ge.f32.partialorder %v6022, 0.0
      %vm6153 = vcmp.ge.f32.partialorder %v6027, 0.0
      %vm6154 = vcmp.ge.f32.partialorder %v6032, 0.0
      %vm6155 = vcmp.ge.f32.partialorder %v6037, 0.0
      %vm6156 = vcmp.ge.f32.partialorder %v6042, 0.0
      %vm6157 = vcmp.ge.f32.partialorder %v6047, 0.0
      %vm6158 = vcmp.ge.f32.partialorder %v6052, 0.0
      %vm6159 = vcmp.ge.f32.partialorder %v6057, 0.0
      %vm6160 = vcmp.ge.f32.partialorder %v6062, 0.0
      %vm6161 = vcmp.ge.f32.partialorder %v6067, 0.0
      %vm6162 = vcmp.ge.f32.partialorder %v6072, 0.0
      %vm6163 = vcmp.ge.f32.partialorder %v6077, 0.0
      %vm6164 = vcmp.ge.f32.partialorder %v6082, 0.0
      %vm6165 = vcmp.ge.f32.partialorder %v6087, 0.0
      %vm6166 = vcmp.ge.f32.partialorder %v6092, 0.0
      %vm6167 = vcmp.ge.f32.partialorder %v6097, 0.0
      %vm6168 = vcmp.ge.f32.partialorder %v6102, 0.0
      %vm6169 = vcmp.ge.f32.partialorder %v6107, 0.0
      %vm6170 = vcmp.ge.f32.partialorder %v6112, 0.0
      %vm6171 = vcmp.ge.f32.partialorder %v6117, 0.0
      %vm6172 = vcmp.ge.f32.partialorder %v6122, 0.0
      %vm6173 = vcmp.ge.f32.partialorder %v6127, 0.0
      %vm6174 = vcmp.ge.f32.partialorder %v6132, 0.0
      %vm6175 = vcmp.ge.f32.partialorder %v6137, 0.0
      %vm6176 = vcmp.ge.f32.partialorder %v6142, 0.0
      %v6177 = vmul.f32 %v5987, 0.2
      %v6178 = vmul.f32 %v5992, 0.2
      %v6179 = vmul.f32 %v5997, 0.2
      %v6180 = vmul.f32 %v6002, 0.2
      %v6181 = vmul.f32 %v6007, 0.2
      %v6182 = vmul.f32 %v6012, 0.2
      %v6183 = vmul.f32 %v6017, 0.2
      %v6184 = vmul.f32 %v6022, 0.2
      %v6185 = vmul.f32 %v6027, 0.2
      %v6186 = vmul.f32 %v6032, 0.2
      %v6187 = vmul.f32 %v6037, 0.2
      %v6188 = vmul.f32 %v6042, 0.2
      %v6189 = vmul.f32 %v6047, 0.2
      %v6190 = vmul.f32 %v6052, 0.2
      %v6191 = vmul.f32 %v6057, 0.2
      %v6192 = vmul.f32 %v6062, 0.2
      %v6193 = vmul.f32 %v6067, 0.2
      %v6194 = vmul.f32 %v6072, 0.2
      %v6195 = vmul.f32 %v6077, 0.2
      %v6196 = vmul.f32 %v6082, 0.2
      %v6197 = vmul.f32 %v6087, 0.2
      %v6198 = vmul.f32 %v6092, 0.2
      %v6199 = vmul.f32 %v6097, 0.2
      %v6200 = vmul.f32 %v6102, 0.2
      %v6201 = vmul.f32 %v6107, 0.2
      %v6202 = vmul.f32 %v6112, 0.2
      %v6203 = vmul.f32 %v6117, 0.2
      %v6204 = vmul.f32 %v6122, 0.2
      %v6205 = vmul.f32 %v6127, 0.2
      %v6206 = vmul.f32 %v6132, 0.2
      %v6207 = vmul.f32 %v6137, 0.2
      %v6208 = vmul.f32 %v6142, 0.2
      %v6209 = vsel %vm6145, %v5987, %v6177
      %v6210 = vsel %vm6146, %v5992, %v6178
      %v6211 = vsel %vm6147, %v5997, %v6179
      %v6212 = vsel %vm6148, %v6002, %v6180
      %v6213 = vsel %vm6149, %v6007, %v6181
      %v6214 = vsel %vm6150, %v6012, %v6182
      %v6215 = vsel %vm6151, %v6017, %v6183
      %v6216 = vsel %vm6152, %v6022, %v6184
      %v6217 = vsel %vm6153, %v6027, %v6185
      %v6218 = vsel %vm6154, %v6032, %v6186
      %v6219 = vsel %vm6155, %v6037, %v6187
      %v6220 = vsel %vm6156, %v6042, %v6188
      %v6221 = vsel %vm6157, %v6047, %v6189
      %v6222 = vsel %vm6158, %v6052, %v6190
      %v6223 = vsel %vm6159, %v6057, %v6191
      %v6224 = vsel %vm6160, %v6062, %v6192
      %v6225 = vsel %vm6161, %v6067, %v6193
      %v6226 = vsel %vm6162, %v6072, %v6194
      %v6227 = vsel %vm6163, %v6077, %v6195
      %v6228 = vsel %vm6164, %v6082, %v6196
      %v6229 = vsel %vm6165, %v6087, %v6197
      %v6230 = vsel %vm6166, %v6092, %v6198
      %v6231 = vsel %vm6167, %v6097, %v6199
      %v6232 = vsel %vm6168, %v6102, %v6200
      %v6233 = vsel %vm6169, %v6107, %v6201
      %v6234 = vsel %vm6170, %v6112, %v6202
      %v6235 = vsel %vm6171, %v6117, %v6203
      %v6236 = vsel %vm6172, %v6122, %v6204
      %v6237 = vsel %vm6173, %v6127, %v6205
      %v6238 = vsel %vm6174, %v6132, %v6206
      %v6239 = vsel %vm6175, %v6137, %v6207
      %v6240 = vsel %vm6176, %v6142, %v6208
      %v6273 = vrot.slane %v6209, 7
      %v6274 = vrot.slane %v6210, 7
      %v6275 = vsel %vm452, %v6273, %v6274
      %v6276 = vrot.slane %v6211, 7
      %v6277 = vrot.slane %v6212, 7
      %v6278 = vsel %vm452, %v6276, %v6277
      %v6279 = vrot.slane %v6213, 7
      %v6280 = vrot.slane %v6214, 7
      %v6281 = vsel %vm452, %v6279, %v6280
      %v6282 = vrot.slane %v6215, 7
      %v6283 = vrot.slane %v6216, 7
      %v6284 = vsel %vm452, %v6282, %v6283
      %v6285 = vrot.slane %v6217, 7
      %v6286 = vrot.slane %v6218, 7
      %v6287 = vsel %vm452, %v6285, %v6286
      %v6288 = vrot.slane %v6219, 7
      %v6289 = vrot.slane %v6220, 7
      %v6290 = vsel %vm452, %v6288, %v6289
      %v6291 = vrot.slane %v6221, 7
      %v6292 = vrot.slane %v6222, 7
      %v6293 = vsel %vm452, %v6291, %v6292
      %v6294 = vrot.slane %v6223, 7
      %v6295 = vrot.slane %v6224, 7
      %v6296 = vsel %vm452, %v6294, %v6295
      %v6297 = vrot.slane %v6225, 7
      %v6298 = vrot.slane %v6226, 7
      %v6299 = vsel %vm452, %v6297, %v6298
      %v6300 = vrot.slane %v6227, 7
      %v6301 = vrot.slane %v6228, 7
      %v6302 = vsel %vm452, %v6300, %v6301
      %v6303 = vrot.slane %v6229, 7
      %v6304 = vrot.slane %v6230, 7
      %v6305 = vsel %vm452, %v6303, %v6304
      %v6306 = vrot.slane %v6231, 7
      %v6307 = vrot.slane %v6232, 7
      %v6308 = vsel %vm452, %v6306, %v6307
      %v6309 = vrot.slane %v6233, 7
      %v6310 = vrot.slane %v6234, 7
      %v6311 = vsel %vm452, %v6309, %v6310
      %v6312 = vrot.slane %v6235, 7
      %v6313 = vrot.slane %v6236, 7
      %v6314 = vsel %vm452, %v6312, %v6313
      %v6315 = vrot.slane %v6237, 7
      %v6316 = vrot.slane %v6238, 7
      %v6317 = vsel %vm452, %v6315, %v6316
      %v6318 = vrot.slane %v6239, 7
      %v6319 = vrot.slane %v6240, 7
      %v6320 = vsel %vm452, %v6318, %v6319
      %v6353 = vsel %vm452, 0.0, %v6273
      %v6354 = vsel %vm452, 0.0, %v6276
      %v6355 = vsel %vm452, 0.0, %v6279
      %v6356 = vsel %vm452, 0.0, %v6282
      %v6357 = vsel %vm452, 0.0, %v6285
      %v6358 = vsel %vm452, 0.0, %v6288
      %v6359 = vsel %vm452, 0.0, %v6291
      %v6360 = vsel %vm452, 0.0, %v6294
      %v6361 = vsel %vm452, 0.0, %v6297
      %v6362 = vsel %vm452, 0.0, %v6300
      %v6363 = vsel %vm452, 0.0, %v6303
      %v6364 = vsel %vm452, 0.0, %v6306
      %v6365 = vsel %vm452, 0.0, %v6309
      %v6366 = vsel %vm452, 0.0, %v6312
      %v6367 = vsel %vm452, 0.0, %v6315
      %v6368 = vsel %vm452, 0.0, %v6318
      %v6369 = vsel %vm452, %v6274, 0.0
      %v6370 = vsel %vm452, %v6277, 0.0
      %v6371 = vsel %vm452, %v6280, 0.0
      %v6372 = vsel %vm452, %v6283, 0.0
      %v6373 = vsel %vm452, %v6286, 0.0
      %v6374 = vsel %vm452, %v6289, 0.0
      %v6375 = vsel %vm452, %v6292, 0.0
      %v6376 = vsel %vm452, %v6295, 0.0
      %v6377 = vsel %vm452, %v6298, 0.0
      %v6378 = vsel %vm452, %v6301, 0.0
      %v6379 = vsel %vm452, %v6304, 0.0
      %v6380 = vsel %vm452, %v6307, 0.0
      %v6381 = vsel %vm452, %v6310, 0.0
      %v6382 = vsel %vm452, %v6313, 0.0
      %v6383 = vsel %vm452, %v6316, 0.0
      %v6384 = vsel %vm452, %v6319, 0.0
      %6417 = vrot.lane.b32.xlu0 %v553, 32
      %v6418 = vpop.permute.xlu0 %6417
      %6419 = vrot.lane.b32.xlu0 %v454, 32
      %v6420 = vpop.permute.xlu0 %6419
      %6421 = vrot.lane.b32.xlu0 %v570, 32
      %v6422 = vpop.permute.xlu0 %6421
      %6423 = vrot.lane.b32.xlu0 %v6353, 32
      %v6424 = vpop.permute.xlu0 %6423
      %6425 = vrot.lane.b32.xlu0 %v6275, 32
      %v6426 = vpop.permute.xlu0 %6425
      %6427 = vrot.lane.b32.xlu0 %v6369, 32
      %v6428 = vpop.permute.xlu0 %6427
      %6429 = vrot.lane.b32.xlu0 %v6354, 32
      %v6430 = vpop.permute.xlu0 %6429
      %6431 = vrot.lane.b32.xlu0 %v6278, 32
      %v6432 = vpop.permute.xlu0 %6431
      %6433 = vrot.lane.b32.xlu0 %v6370, 32
      %v6434 = vpop.permute.xlu0 %6433
      %6435 = vrot.lane.b32.xlu0 %v6355, 32
      %v6436 = vpop.permute.xlu0 %6435
      %6437 = vrot.lane.b32.xlu0 %v6281, 32
      %v6438 = vpop.permute.xlu0 %6437
      %6439 = vrot.lane.b32.xlu0 %v6371, 32
      %v6440 = vpop.permute.xlu0 %6439
      %6441 = vrot.lane.b32.xlu0 %v6356, 32
      %v6442 = vpop.permute.xlu0 %6441
      %6443 = vrot.lane.b32.xlu0 %v6284, 32
      %v6444 = vpop.permute.xlu0 %6443
      %6445 = vrot.lane.b32.xlu0 %v6372, 32
      %v6446 = vpop.permute.xlu0 %6445
      %6447 = vrot.lane.b32.xlu0 %v6357, 32
      %v6448 = vpop.permute.xlu0 %6447
      %6449 = vrot.lane.b32.xlu0 %v6287, 32
      %v6450 = vpop.permute.xlu0 %6449
      %6451 = vrot.lane.b32.xlu0 %v6373, 32
      %v6452 = vpop.permute.xlu0 %6451
      %6453 = vrot.lane.b32.xlu0 %v6358, 32
      %v6454 = vpop.permute.xlu0 %6453
      %6455 = vrot.lane.b32.xlu0 %v6290, 32
      %v6456 = vpop.permute.xlu0 %6455
      %6457 = vrot.lane.b32.xlu0 %v6374, 32
      %v6458 = vpop.permute.xlu0 %6457
      %6459 = vrot.lane.b32.xlu0 %v6359, 32
      %v6460 = vpop.permute.xlu0 %6459
      %6461 = vrot.lane.b32.xlu0 %v6293, 32
      %v6462 = vpop.permute.xlu0 %6461
      %6463 = vrot.lane.b32.xlu0 %v6375, 32
      %v6464 = vpop.permute.xlu0 %6463
      %6465 = vrot.lane.b32.xlu0 %v6360, 32
      %v6466 = vpop.permute.xlu0 %6465
      %6467 = vrot.lane.b32.xlu0 %v6296, 32
      %v6468 = vpop.permute.xlu0 %6467
      %6469 = vrot.lane.b32.xlu0 %v6376, 32
      %v6470 = vpop.permute.xlu0 %6469
      %6471 = vrot.lane.b32.xlu0 %v6361, 32
      %v6472 = vpop.permute.xlu0 %6471
      %6473 = vrot.lane.b32.xlu0 %v6299, 32
      %v6474 = vpop.permute.xlu0 %6473
      %6475 = vrot.lane.b32.xlu0 %v6377, 32
      %v6476 = vpop.permute.xlu0 %6475
      %6477 = vrot.lane.b32.xlu0 %v6362, 32
      %v6478 = vpop.permute.xlu0 %6477
      %6479 = vrot.lane.b32.xlu0 %v6302, 32
      %v6480 = vpop.permute.xlu0 %6479
      %6481 = vrot.lane.b32.xlu0 %v6378, 32
      %v6482 = vpop.permute.xlu0 %6481
      %6483 = vrot.lane.b32.xlu0 %v6363, 32
      %v6484 = vpop.permute.xlu0 %6483
      %6485 = vrot.lane.b32.xlu0 %v6305, 32
      %v6486 = vpop.permute.xlu0 %6485
      %6487 = vrot.lane.b32.xlu0 %v6379, 32
      %v6488 = vpop.permute.xlu0 %6487
      %6489 = vrot.lane.b32.xlu0 %v6364, 32
      %v6490 = vpop.permute.xlu0 %6489
      %6491 = vrot.lane.b32.xlu0 %v6308, 32
      %v6492 = vpop.permute.xlu0 %6491
      %6493 = vrot.lane.b32.xlu0 %v6380, 32
      %v6494 = vpop.permute.xlu0 %6493
      %6495 = vrot.lane.b32.xlu0 %v6365, 32
      %v6496 = vpop.permute.xlu0 %6495
      %6497 = vrot.lane.b32.xlu0 %v6311, 32
      %v6498 = vpop.permute.xlu0 %6497
      %6499 = vrot.lane.b32.xlu0 %v6381, 32
      %v6500 = vpop.permute.xlu0 %6499
      %6501 = vrot.lane.b32.xlu0 %v6366, 32
      %v6502 = vpop.permute.xlu0 %6501
      %6503 = vrot.lane.b32.xlu0 %v6314, 32
      %v6504 = vpop.permute.xlu0 %6503
      %6505 = vrot.lane.b32.xlu0 %v6382, 32
      %v6506 = vpop.permute.xlu0 %6505
      %6507 = vrot.lane.b32.xlu0 %v6367, 32
      %v6508 = vpop.permute.xlu0 %6507
      %6509 = vrot.lane.b32.xlu0 %v6317, 32
      %v6510 = vpop.permute.xlu0 %6509
      %6511 = vrot.lane.b32.xlu0 %v6383, 32
      %v6512 = vpop.permute.xlu0 %6511
      %6513 = vrot.lane.b32.xlu0 %v6368, 32
      %v6514 = vpop.permute.xlu0 %6513
      %6515 = vrot.lane.b32.xlu0 %v6320, 32
      %v6516 = vpop.permute.xlu0 %6515
      %6517 = vrot.lane.b32.xlu0 %v6384, 32
      %v6518 = vpop.permute.xlu0 %6517
      %v6570 = vsel %vm1498, %v4516, %v6418
      %v6571 = vsel %vm1498, %v4517, %v6420
      %v6572 = vsel %vm1498, %v4518, %v6422
      %v6573 = vsel %vm1498, %v4519, %v6424
      %v6574 = vsel %vm1498, %v4520, %v6426
      %v6575 = vsel %vm1498, %v4521, %v6428
      %v6576 = vsel %vm1498, %v4522, %v6430
      %v6577 = vsel %vm1498, %v4523, %v6432
      %v6578 = vsel %vm1498, %v4524, %v6434
      %v6579 = vsel %vm1498, %v4525, %v6436
      %v6580 = vsel %vm1498, %v4526, %v6438
      %v6581 = vsel %vm1498, %v4527, %v6440
      %v6582 = vsel %vm1498, %v4528, %v6442
      %v6583 = vsel %vm1498, %v4529, %v6444
      %v6584 = vsel %vm1498, %v4530, %v6446
      %v6585 = vsel %vm1498, %v4531, %v6448
      %v6586 = vsel %vm1498, %v4532, %v6450
      %v6587 = vsel %vm1498, %v4533, %v6452
      %v6588 = vsel %vm1498, %v4534, %v6454
      %v6589 = vsel %vm1498, %v4535, %v6456
      %v6590 = vsel %vm1498, %v4536, %v6458
      %v6591 = vsel %vm1498, %v4537, %v6460
      %v6592 = vsel %vm1498, %v4538, %v6462
      %v6593 = vsel %vm1498, %v4539, %v6464
      %v6594 = vsel %vm1498, %v4540, %v6466
      %v6595 = vsel %vm1498, %v4541, %v6468
      %v6596 = vsel %vm1498, %v4542, %v6470
      %v6597 = vsel %vm1498, %v4543, %v6472
      %v6598 = vsel %vm1498, %v4544, %v6474
      %v6599 = vsel %vm1498, %v4545, %v6476
      %v6600 = vsel %vm1498, %v4546, %v6478
      %v6601 = vsel %vm1498, %v4547, %v6480
      %v6602 = vsel %vm1498, %v4548, %v6482
      %v6603 = vsel %vm1498, %v4549, %v6484
      %v6604 = vsel %vm1498, %v4550, %v6486
      %v6605 = vsel %vm1498, %v4551, %v6488
      %v6606 = vsel %vm1498, %v4552, %v6490
      %v6607 = vsel %vm1498, %v4553, %v6492
      %v6608 = vsel %vm1498, %v4554, %v6494
      %v6609 = vsel %vm1498, %v4555, %v6496
      %v6610 = vsel %vm1498, %v4556, %v6498
      %v6611 = vsel %vm1498, %v4557, %v6500
      %v6612 = vsel %vm1498, %v4558, %v6502
      %v6613 = vsel %vm1498, %v4559, %v6504
      %v6614 = vsel %vm1498, %v4560, %v6506
      %v6615 = vsel %vm1498, %v4561, %v6508
      %v6616 = vsel %vm1498, %v4562, %v6510
      %v6617 = vsel %vm1498, %v4563, %v6512
      %v6618 = vsel %vm1498, %v4564, %v6514
      %v6619 = vsel %vm1498, %v4565, %v6516
      %v6620 = vsel %vm1498, %v4566, %v6518
      %v6669 = vrot.slane %v6570, 1
      %v6670 = vrot.slane %v6571, 1
      %v6671 = vsel %vm619, %v6669, %v6670
      %v6672 = vrot.slane %v6572, 1
      %v6673 = vsel %vm619, %v6670, %v6672
      %v6674 = vrot.slane %v6573, 1
      %v6675 = vrot.slane %v6574, 1
      %v6676 = vsel %vm619, %v6674, %v6675
      %v6677 = vrot.slane %v6575, 1
      %v6678 = vsel %vm619, %v6675, %v6677
      %v6679 = vrot.slane %v6576, 1
      %v6680 = vrot.slane %v6577, 1
      %v6681 = vsel %vm619, %v6679, %v6680
      %v6682 = vrot.slane %v6578, 1
      %v6683 = vsel %vm619, %v6680, %v6682
      %v6684 = vrot.slane %v6579, 1
      %v6685 = vrot.slane %v6580, 1
      %v6686 = vsel %vm619, %v6684, %v6685
      %v6687 = vrot.slane %v6581, 1
      %v6688 = vsel %vm619, %v6685, %v6687
      %v6689 = vrot.slane %v6582, 1
      %v6690 = vrot.slane %v6583, 1
      %v6691 = vsel %vm619, %v6689, %v6690
      %v6692 = vrot.slane %v6584, 1
      %v6693 = vsel %vm619, %v6690, %v6692
      %v6694 = vrot.slane %v6585, 1
      %v6695 = vrot.slane %v6586, 1
      %v6696 = vsel %vm619, %v6694, %v6695
      %v6697 = vrot.slane %v6587, 1
      %v6698 = vsel %vm619, %v6695, %v6697
      %v6699 = vrot.slane %v6588, 1
      %v6700 = vrot.slane %v6589, 1
      %v6701 = vsel %vm619, %v6699, %v6700
      %v6702 = vrot.slane %v6590, 1
      %v6703 = vsel %vm619, %v6700, %v6702
      %v6704 = vrot.slane %v6591, 1
      %v6705 = vrot.slane %v6592, 1
      %v6706 = vsel %vm619, %v6704, %v6705
      %v6707 = vrot.slane %v6593, 1
      %v6708 = vsel %vm619, %v6705, %v6707
      %v6709 = vrot.slane %v6594, 1
      %v6710 = vrot.slane %v6595, 1
      %v6711 = vsel %vm619, %v6709, %v6710
      %v6712 = vrot.slane %v6596, 1
      %v6713 = vsel %vm619, %v6710, %v6712
      %v6714 = vrot.slane %v6597, 1
      %v6715 = vrot.slane %v6598, 1
      %v6716 = vsel %vm619, %v6714, %v6715
      %v6717 = vrot.slane %v6599, 1
      %v6718 = vsel %vm619, %v6715, %v6717
      %v6719 = vrot.slane %v6600, 1
      %v6720 = vrot.slane %v6601, 1
      %v6721 = vsel %vm619, %v6719, %v6720
      %v6722 = vrot.slane %v6602, 1
      %v6723 = vsel %vm619, %v6720, %v6722
      %v6724 = vrot.slane %v6603, 1
      %v6725 = vrot.slane %v6604, 1
      %v6726 = vsel %vm619, %v6724, %v6725
      %v6727 = vrot.slane %v6605, 1
      %v6728 = vsel %vm619, %v6725, %v6727
      %v6729 = vrot.slane %v6606, 1
      %v6730 = vrot.slane %v6607, 1
      %v6731 = vsel %vm619, %v6729, %v6730
      %v6732 = vrot.slane %v6608, 1
      %v6733 = vsel %vm619, %v6730, %v6732
      %v6734 = vrot.slane %v6609, 1
      %v6735 = vrot.slane %v6610, 1
      %v6736 = vsel %vm619, %v6734, %v6735
      %v6737 = vrot.slane %v6611, 1
      %v6738 = vsel %vm619, %v6735, %v6737
      %v6739 = vrot.slane %v6612, 1
      %v6740 = vrot.slane %v6613, 1
      %v6741 = vsel %vm619, %v6739, %v6740
      %v6742 = vrot.slane %v6614, 1
      %v6743 = vsel %vm619, %v6740, %v6742
      %v6744 = vrot.slane %v6615, 1
      %v6745 = vrot.slane %v6616, 1
      %v6746 = vsel %vm619, %v6744, %v6745
      %v6747 = vrot.slane %v6617, 1
      %v6748 = vsel %vm619, %v6745, %v6747
      %v6749 = vrot.slane %v6570, 2
      %v6750 = vrot.slane %v6571, 2
      %v6751 = vsel %vm700, %v6749, %v6750
      %v6752 = vrot.slane %v6572, 2
      %v6753 = vsel %vm700, %v6750, %v6752
      %v6754 = vrot.slane %v6573, 2
      %v6755 = vrot.slane %v6574, 2
      %v6756 = vsel %vm700, %v6754, %v6755
      %v6757 = vrot.slane %v6575, 2
      %v6758 = vsel %vm700, %v6755, %v6757
      %v6759 = vrot.slane %v6576, 2
      %v6760 = vrot.slane %v6577, 2
      %v6761 = vsel %vm700, %v6759, %v6760
      %v6762 = vrot.slane %v6578, 2
      %v6763 = vsel %vm700, %v6760, %v6762
      %v6764 = vrot.slane %v6579, 2
      %v6765 = vrot.slane %v6580, 2
      %v6766 = vsel %vm700, %v6764, %v6765
      %v6767 = vrot.slane %v6581, 2
      %v6768 = vsel %vm700, %v6765, %v6767
      %v6769 = vrot.slane %v6582, 2
      %v6770 = vrot.slane %v6583, 2
      %v6771 = vsel %vm700, %v6769, %v6770
      %v6772 = vrot.slane %v6584, 2
      %v6773 = vsel %vm700, %v6770, %v6772
      %v6774 = vrot.slane %v6585, 2
      %v6775 = vrot.slane %v6586, 2
      %v6776 = vsel %vm700, %v6774, %v6775
      %v6777 = vrot.slane %v6587, 2
      %v6778 = vsel %vm700, %v6775, %v6777
      %v6779 = vrot.slane %v6588, 2
      %v6780 = vrot.slane %v6589, 2
      %v6781 = vsel %vm700, %v6779, %v6780
      %v6782 = vrot.slane %v6590, 2
      %v6783 = vsel %vm700, %v6780, %v6782
      %v6784 = vrot.slane %v6591, 2
      %v6785 = vrot.slane %v6592, 2
      %v6786 = vsel %vm700, %v6784, %v6785
      %v6787 = vrot.slane %v6593, 2
      %v6788 = vsel %vm700, %v6785, %v6787
      %v6789 = vrot.slane %v6594, 2
      %v6790 = vrot.slane %v6595, 2
      %v6791 = vsel %vm700, %v6789, %v6790
      %v6792 = vrot.slane %v6596, 2
      %v6793 = vsel %vm700, %v6790, %v6792
      %v6794 = vrot.slane %v6597, 2
      %v6795 = vrot.slane %v6598, 2
      %v6796 = vsel %vm700, %v6794, %v6795
      %v6797 = vrot.slane %v6599, 2
      %v6798 = vsel %vm700, %v6795, %v6797
      %v6799 = vrot.slane %v6600, 2
      %v6800 = vrot.slane %v6601, 2
      %v6801 = vsel %vm700, %v6799, %v6800
      %v6802 = vrot.slane %v6602, 2
      %v6803 = vsel %vm700, %v6800, %v6802
      %v6804 = vrot.slane %v6603, 2
      %v6805 = vrot.slane %v6604, 2
      %v6806 = vsel %vm700, %v6804, %v6805
      %v6807 = vrot.slane %v6605, 2
      %v6808 = vsel %vm700, %v6805, %v6807
      %v6809 = vrot.slane %v6606, 2
      %v6810 = vrot.slane %v6607, 2
      %v6811 = vsel %vm700, %v6809, %v6810
      %v6812 = vrot.slane %v6608, 2
      %v6813 = vsel %vm700, %v6810, %v6812
      %v6814 = vrot.slane %v6609, 2
      %v6815 = vrot.slane %v6610, 2
      %v6816 = vsel %vm700, %v6814, %v6815
      %v6817 = vrot.slane %v6611, 2
      %v6818 = vsel %vm700, %v6815, %v6817
      %v6819 = vrot.slane %v6612, 2
      %v6820 = vrot.slane %v6613, 2
      %v6821 = vsel %vm700, %v6819, %v6820
      %v6822 = vrot.slane %v6614, 2
      %v6823 = vsel %vm700, %v6820, %v6822
      %v6824 = vrot.slane %v6615, 2
      %v6825 = vrot.slane %v6616, 2
      %v6826 = vsel %vm700, %v6824, %v6825
      %v6827 = vrot.slane %v6617, 2
      %v6828 = vsel %vm700, %v6825, %v6827
      %v6832 = vrot.slane %v6618, 1
      %v6833 = vrot.slane %v6619, 1
      %v6834 = vsel %vm619, %v6832, %v6833
      %v6835 = vrot.slane %v6620, 1
      %v6836 = vsel %vm619, %v6833, %v6835
      %v6837 = vrot.slane %v6618, 2
      %v6838 = vrot.slane %v6619, 2
      %v6839 = vsel %vm700, %v6837, %v6838
      %v6840 = vrot.slane %v6620, 2
      %v6841 = vsel %vm700, %v6838, %v6840
      %6842 = vrot.lane.b32.xlu0 %v6671, 40
      %v6843 = vpop.permute.xlu0 %6842
      %6844 = vrot.lane.b32.xlu0 %v6673, 40
      %v6845 = vpop.permute.xlu0 %6844
      %6846 = vrot.lane.b32.xlu0 %v6676, 40
      %v6847 = vpop.permute.xlu0 %6846
      %6848 = vrot.lane.b32.xlu0 %v6678, 40
      %v6849 = vpop.permute.xlu0 %6848
      %6850 = vrot.lane.b32.xlu0 %v6681, 40
      %v6851 = vpop.permute.xlu0 %6850
      %6852 = vrot.lane.b32.xlu0 %v6683, 40
      %v6853 = vpop.permute.xlu0 %6852
      %6854 = vrot.lane.b32.xlu0 %v6686, 40
      %v6855 = vpop.permute.xlu0 %6854
      %6856 = vrot.lane.b32.xlu0 %v6688, 40
      %v6857 = vpop.permute.xlu0 %6856
      %6858 = vrot.lane.b32.xlu0 %v6691, 40
      %v6859 = vpop.permute.xlu0 %6858
      %6860 = vrot.lane.b32.xlu0 %v6693, 40
      %v6861 = vpop.permute.xlu0 %6860
      %6862 = vrot.lane.b32.xlu0 %v6696, 40
      %v6863 = vpop.permute.xlu0 %6862
      %6864 = vrot.lane.b32.xlu0 %v6698, 40
      %v6865 = vpop.permute.xlu0 %6864
      %6866 = vrot.lane.b32.xlu0 %v6701, 40
      %v6867 = vpop.permute.xlu0 %6866
      %6868 = vrot.lane.b32.xlu0 %v6703, 40
      %v6869 = vpop.permute.xlu0 %6868
      %6870 = vrot.lane.b32.xlu0 %v6706, 40
      %v6871 = vpop.permute.xlu0 %6870
      %6872 = vrot.lane.b32.xlu0 %v6708, 40
      %v6873 = vpop.permute.xlu0 %6872
      %6874 = vrot.lane.b32.xlu0 %v6711, 40
      %v6875 = vpop.permute.xlu0 %6874
      %6876 = vrot.lane.b32.xlu0 %v6713, 40
      %v6877 = vpop.permute.xlu0 %6876
      %6878 = vrot.lane.b32.xlu0 %v6716, 40
      %v6879 = vpop.permute.xlu0 %6878
      %6880 = vrot.lane.b32.xlu0 %v6718, 40
      %v6881 = vpop.permute.xlu0 %6880
      %6882 = vrot.lane.b32.xlu0 %v6721, 40
      %v6883 = vpop.permute.xlu0 %6882
      %6884 = vrot.lane.b32.xlu0 %v6723, 40
      %v6885 = vpop.permute.xlu0 %6884
      %6886 = vrot.lane.b32.xlu0 %v6726, 40
      %v6887 = vpop.permute.xlu0 %6886
      %6888 = vrot.lane.b32.xlu0 %v6728, 40
      %v6889 = vpop.permute.xlu0 %6888
      %6890 = vrot.lane.b32.xlu0 %v6731, 40
      %v6891 = vpop.permute.xlu0 %6890
      %6892 = vrot.lane.b32.xlu0 %v6733, 40
      %v6893 = vpop.permute.xlu0 %6892
      %6894 = vrot.lane.b32.xlu0 %v6736, 40
      %v6895 = vpop.permute.xlu0 %6894
      %6896 = vrot.lane.b32.xlu0 %v6738, 40
      %v6897 = vpop.permute.xlu0 %6896
      %6898 = vrot.lane.b32.xlu0 %v6741, 40
      %v6899 = vpop.permute.xlu0 %6898
      %6900 = vrot.lane.b32.xlu0 %v6743, 40
      %v6901 = vpop.permute.xlu0 %6900
      %6902 = vrot.lane.b32.xlu0 %v6746, 40
      %v6903 = vpop.permute.xlu0 %6902
      %6904 = vrot.lane.b32.xlu0 %v6748, 40
      %v6905 = vpop.permute.xlu0 %6904
      %6938 = vrot.lane.b32.xlu0 %v6751, 80
      %v6939 = vpop.permute.xlu0 %6938
      %6940 = vrot.lane.b32.xlu0 %v6753, 80
      %v6941 = vpop.permute.xlu0 %6940
      %6942 = vrot.lane.b32.xlu0 %v6756, 80
      %v6943 = vpop.permute.xlu0 %6942
      %6944 = vrot.lane.b32.xlu0 %v6758, 80
      %v6945 = vpop.permute.xlu0 %6944
      %6946 = vrot.lane.b32.xlu0 %v6761, 80
      %v6947 = vpop.permute.xlu0 %6946
      %6948 = vrot.lane.b32.xlu0 %v6763, 80
      %v6949 = vpop.permute.xlu0 %6948
      %6950 = vrot.lane.b32.xlu0 %v6766, 80
      %v6951 = vpop.permute.xlu0 %6950
      %6952 = vrot.lane.b32.xlu0 %v6768, 80
      %v6953 = vpop.permute.xlu0 %6952
      %6954 = vrot.lane.b32.xlu0 %v6771, 80
      %v6955 = vpop.permute.xlu0 %6954
      %6956 = vrot.lane.b32.xlu0 %v6773, 80
      %v6957 = vpop.permute.xlu0 %6956
      %6958 = vrot.lane.b32.xlu0 %v6776, 80
      %v6959 = vpop.permute.xlu0 %6958
      %6960 = vrot.lane.b32.xlu0 %v6778, 80
      %v6961 = vpop.permute.xlu0 %6960
      %6962 = vrot.lane.b32.xlu0 %v6781, 80
      %v6963 = vpop.permute.xlu0 %6962
      %6964 = vrot.lane.b32.xlu0 %v6783, 80
      %v6965 = vpop.permute.xlu0 %6964
      %6966 = vrot.lane.b32.xlu0 %v6786, 80
      %v6967 = vpop.permute.xlu0 %6966
      %6968 = vrot.lane.b32.xlu0 %v6788, 80
      %v6969 = vpop.permute.xlu0 %6968
      %6970 = vrot.lane.b32.xlu0 %v6791, 80
      %v6971 = vpop.permute.xlu0 %6970
      %6972 = vrot.lane.b32.xlu0 %v6793, 80
      %v6973 = vpop.permute.xlu0 %6972
      %6974 = vrot.lane.b32.xlu0 %v6796, 80
      %v6975 = vpop.permute.xlu0 %6974
      %6976 = vrot.lane.b32.xlu0 %v6798, 80
      %v6977 = vpop.permute.xlu0 %6976
      %6978 = vrot.lane.b32.xlu0 %v6801, 80
      %v6979 = vpop.permute.xlu0 %6978
      %6980 = vrot.lane.b32.xlu0 %v6803, 80
      %v6981 = vpop.permute.xlu0 %6980
      %6982 = vrot.lane.b32.xlu0 %v6806, 80
      %v6983 = vpop.permute.xlu0 %6982
      %6984 = vrot.lane.b32.xlu0 %v6808, 80
      %v6985 = vpop.permute.xlu0 %6984
      %6986 = vrot.lane.b32.xlu0 %v6811, 80
      %v6987 = vpop.permute.xlu0 %6986
      %6988 = vrot.lane.b32.xlu0 %v6813, 80
      %v6989 = vpop.permute.xlu0 %6988
      %6990 = vrot.lane.b32.xlu0 %v6816, 80
      %v6991 = vpop.permute.xlu0 %6990
      %6992 = vrot.lane.b32.xlu0 %v6818, 80
      %v6993 = vpop.permute.xlu0 %6992
      %6994 = vrot.lane.b32.xlu0 %v6821, 80
      %v6995 = vpop.permute.xlu0 %6994
      %6996 = vrot.lane.b32.xlu0 %v6823, 80
      %v6997 = vpop.permute.xlu0 %6996
      %6998 = vrot.lane.b32.xlu0 %v6826, 80
      %v6999 = vpop.permute.xlu0 %6998
      %7000 = vrot.lane.b32.xlu0 %v6828, 80
      %v7001 = vpop.permute.xlu0 %7000
      %7034 = vrot.lane.b32.xlu0 %v6573, 120
      %v7035 = vpop.permute.xlu0 %7034
      %7036 = vrot.lane.b32.xlu0 %v6574, 120
      %v7037 = vpop.permute.xlu0 %7036
      %7038 = vrot.lane.b32.xlu0 %v6576, 120
      %v7039 = vpop.permute.xlu0 %7038
      %7040 = vrot.lane.b32.xlu0 %v6577, 120
      %v7041 = vpop.permute.xlu0 %7040
      %7042 = vrot.lane.b32.xlu0 %v6579, 120
      %v7043 = vpop.permute.xlu0 %7042
      %7044 = vrot.lane.b32.xlu0 %v6580, 120
      %v7045 = vpop.permute.xlu0 %7044
      %7046 = vrot.lane.b32.xlu0 %v6582, 120
      %v7047 = vpop.permute.xlu0 %7046
      %7048 = vrot.lane.b32.xlu0 %v6583, 120
      %v7049 = vpop.permute.xlu0 %7048
      %7050 = vrot.lane.b32.xlu0 %v6585, 120
      %v7051 = vpop.permute.xlu0 %7050
      %7052 = vrot.lane.b32.xlu0 %v6586, 120
      %v7053 = vpop.permute.xlu0 %7052
      %7054 = vrot.lane.b32.xlu0 %v6588, 120
      %v7055 = vpop.permute.xlu0 %7054
      %7056 = vrot.lane.b32.xlu0 %v6589, 120
      %v7057 = vpop.permute.xlu0 %7056
      %7058 = vrot.lane.b32.xlu0 %v6591, 120
      %v7059 = vpop.permute.xlu0 %7058
      %7060 = vrot.lane.b32.xlu0 %v6592, 120
      %v7061 = vpop.permute.xlu0 %7060
      %7062 = vrot.lane.b32.xlu0 %v6594, 120
      %v7063 = vpop.permute.xlu0 %7062
      %7064 = vrot.lane.b32.xlu0 %v6595, 120
      %v7065 = vpop.permute.xlu0 %7064
      %7066 = vrot.lane.b32.xlu0 %v6597, 120
      %v7067 = vpop.permute.xlu0 %7066
      %7068 = vrot.lane.b32.xlu0 %v6598, 120
      %v7069 = vpop.permute.xlu0 %7068
      %7070 = vrot.lane.b32.xlu0 %v6600, 120
      %v7071 = vpop.permute.xlu0 %7070
      %7072 = vrot.lane.b32.xlu0 %v6601, 120
      %v7073 = vpop.permute.xlu0 %7072
      %7074 = vrot.lane.b32.xlu0 %v6603, 120
      %v7075 = vpop.permute.xlu0 %7074
      %7076 = vrot.lane.b32.xlu0 %v6604, 120
      %v7077 = vpop.permute.xlu0 %7076
      %7078 = vrot.lane.b32.xlu0 %v6606, 120
      %v7079 = vpop.permute.xlu0 %7078
      %7080 = vrot.lane.b32.xlu0 %v6607, 120
      %v7081 = vpop.permute.xlu0 %7080
      %7082 = vrot.lane.b32.xlu0 %v6609, 120
      %v7083 = vpop.permute.xlu0 %7082
      %7084 = vrot.lane.b32.xlu0 %v6610, 120
      %v7085 = vpop.permute.xlu0 %7084
      %7086 = vrot.lane.b32.xlu0 %v6612, 120
      %v7087 = vpop.permute.xlu0 %7086
      %7088 = vrot.lane.b32.xlu0 %v6613, 120
      %v7089 = vpop.permute.xlu0 %7088
      %7090 = vrot.lane.b32.xlu0 %v6615, 120
      %v7091 = vpop.permute.xlu0 %7090
      %7092 = vrot.lane.b32.xlu0 %v6616, 120
      %v7093 = vpop.permute.xlu0 %7092
      %7094 = vrot.lane.b32.xlu0 %v6618, 120
      %v7095 = vpop.permute.xlu0 %7094
      %7096 = vrot.lane.b32.xlu0 %v6619, 120
      %v7097 = vpop.permute.xlu0 %7096
      %7130 = vrot.lane.b32.xlu0 %v6676, 32
      %v7131 = vpop.permute.xlu0 %7130
      %7132 = vrot.lane.b32.xlu0 %v6678, 32
      %v7133 = vpop.permute.xlu0 %7132
      %7134 = vrot.lane.b32.xlu0 %v6681, 32
      %v7135 = vpop.permute.xlu0 %7134
      %7136 = vrot.lane.b32.xlu0 %v6683, 32
      %v7137 = vpop.permute.xlu0 %7136
      %7138 = vrot.lane.b32.xlu0 %v6686, 32
      %v7139 = vpop.permute.xlu0 %7138
      %7140 = vrot.lane.b32.xlu0 %v6688, 32
      %v7141 = vpop.permute.xlu0 %7140
      %7142 = vrot.lane.b32.xlu0 %v6691, 32
      %v7143 = vpop.permute.xlu0 %7142
      %7144 = vrot.lane.b32.xlu0 %v6693, 32
      %v7145 = vpop.permute.xlu0 %7144
      %7146 = vrot.lane.b32.xlu0 %v6696, 32
      %v7147 = vpop.permute.xlu0 %7146
      %7148 = vrot.lane.b32.xlu0 %v6698, 32
      %v7149 = vpop.permute.xlu0 %7148
      %7150 = vrot.lane.b32.xlu0 %v6701, 32
      %v7151 = vpop.permute.xlu0 %7150
      %7152 = vrot.lane.b32.xlu0 %v6703, 32
      %v7153 = vpop.permute.xlu0 %7152
      %7154 = vrot.lane.b32.xlu0 %v6706, 32
      %v7155 = vpop.permute.xlu0 %7154
      %7156 = vrot.lane.b32.xlu0 %v6708, 32
      %v7157 = vpop.permute.xlu0 %7156
      %7158 = vrot.lane.b32.xlu0 %v6711, 32
      %v7159 = vpop.permute.xlu0 %7158
      %7160 = vrot.lane.b32.xlu0 %v6713, 32
      %v7161 = vpop.permute.xlu0 %7160
      %7162 = vrot.lane.b32.xlu0 %v6716, 32
      %v7163 = vpop.permute.xlu0 %7162
      %7164 = vrot.lane.b32.xlu0 %v6718, 32
      %v7165 = vpop.permute.xlu0 %7164
      %7166 = vrot.lane.b32.xlu0 %v6721, 32
      %v7167 = vpop.permute.xlu0 %7166
      %7168 = vrot.lane.b32.xlu0 %v6723, 32
      %v7169 = vpop.permute.xlu0 %7168
      %7170 = vrot.lane.b32.xlu0 %v6726, 32
      %v7171 = vpop.permute.xlu0 %7170
      %7172 = vrot.lane.b32.xlu0 %v6728, 32
      %v7173 = vpop.permute.xlu0 %7172
      %7174 = vrot.lane.b32.xlu0 %v6731, 32
      %v7175 = vpop.permute.xlu0 %7174
      %7176 = vrot.lane.b32.xlu0 %v6733, 32
      %v7177 = vpop.permute.xlu0 %7176
      %7178 = vrot.lane.b32.xlu0 %v6736, 32
      %v7179 = vpop.permute.xlu0 %7178
      %7180 = vrot.lane.b32.xlu0 %v6738, 32
      %v7181 = vpop.permute.xlu0 %7180
      %7182 = vrot.lane.b32.xlu0 %v6741, 32
      %v7183 = vpop.permute.xlu0 %7182
      %7184 = vrot.lane.b32.xlu0 %v6743, 32
      %v7185 = vpop.permute.xlu0 %7184
      %7186 = vrot.lane.b32.xlu0 %v6746, 32
      %v7187 = vpop.permute.xlu0 %7186
      %7188 = vrot.lane.b32.xlu0 %v6748, 32
      %v7189 = vpop.permute.xlu0 %7188
      %7190 = vrot.lane.b32.xlu0 %v6834, 32
      %v7191 = vpop.permute.xlu0 %7190
      %7192 = vrot.lane.b32.xlu0 %v6836, 32
      %v7193 = vpop.permute.xlu0 %7192
      %7226 = vrot.lane.b32.xlu0 %v6756, 72
      %v7227 = vpop.permute.xlu0 %7226
      %7228 = vrot.lane.b32.xlu0 %v6758, 72
      %v7229 = vpop.permute.xlu0 %7228
      %7230 = vrot.lane.b32.xlu0 %v6761, 72
      %v7231 = vpop.permute.xlu0 %7230
      %7232 = vrot.lane.b32.xlu0 %v6763, 72
      %v7233 = vpop.permute.xlu0 %7232
      %7234 = vrot.lane.b32.xlu0 %v6766, 72
      %v7235 = vpop.permute.xlu0 %7234
      %7236 = vrot.lane.b32.xlu0 %v6768, 72
      %v7237 = vpop.permute.xlu0 %7236
      %7238 = vrot.lane.b32.xlu0 %v6771, 72
      %v7239 = vpop.permute.xlu0 %7238
      %7240 = vrot.lane.b32.xlu0 %v6773, 72
      %v7241 = vpop.permute.xlu0 %7240
      %7242 = vrot.lane.b32.xlu0 %v6776, 72
      %v7243 = vpop.permute.xlu0 %7242
      %7244 = vrot.lane.b32.xlu0 %v6778, 72
      %v7245 = vpop.permute.xlu0 %7244
      %7246 = vrot.lane.b32.xlu0 %v6781, 72
      %v7247 = vpop.permute.xlu0 %7246
      %7248 = vrot.lane.b32.xlu0 %v6783, 72
      %v7249 = vpop.permute.xlu0 %7248
      %7250 = vrot.lane.b32.xlu0 %v6786, 72
      %v7251 = vpop.permute.xlu0 %7250
      %7252 = vrot.lane.b32.xlu0 %v6788, 72
      %v7253 = vpop.permute.xlu0 %7252
      %7254 = vrot.lane.b32.xlu0 %v6791, 72
      %v7255 = vpop.permute.xlu0 %7254
      %7256 = vrot.lane.b32.xlu0 %v6793, 72
      %v7257 = vpop.permute.xlu0 %7256
      %7258 = vrot.lane.b32.xlu0 %v6796, 72
      %v7259 = vpop.permute.xlu0 %7258
      %7260 = vrot.lane.b32.xlu0 %v6798, 72
      %v7261 = vpop.permute.xlu0 %7260
      %7262 = vrot.lane.b32.xlu0 %v6801, 72
      %v7263 = vpop.permute.xlu0 %7262
      %7264 = vrot.lane.b32.xlu0 %v6803, 72
      %v7265 = vpop.permute.xlu0 %7264
      %7266 = vrot.lane.b32.xlu0 %v6806, 72
      %v7267 = vpop.permute.xlu0 %7266
      %7268 = vrot.lane.b32.xlu0 %v6808, 72
      %v7269 = vpop.permute.xlu0 %7268
      %7270 = vrot.lane.b32.xlu0 %v6811, 72
      %v7271 = vpop.permute.xlu0 %7270
      %7272 = vrot.lane.b32.xlu0 %v6813, 72
      %v7273 = vpop.permute.xlu0 %7272
      %7274 = vrot.lane.b32.xlu0 %v6816, 72
      %v7275 = vpop.permute.xlu0 %7274
      %7276 = vrot.lane.b32.xlu0 %v6818, 72
      %v7277 = vpop.permute.xlu0 %7276
      %7278 = vrot.lane.b32.xlu0 %v6821, 72
      %v7279 = vpop.permute.xlu0 %7278
      %7280 = vrot.lane.b32.xlu0 %v6823, 72
      %v7281 = vpop.permute.xlu0 %7280
      %7282 = vrot.lane.b32.xlu0 %v6826, 72
      %v7283 = vpop.permute.xlu0 %7282
      %7284 = vrot.lane.b32.xlu0 %v6828, 72
      %v7285 = vpop.permute.xlu0 %7284
      %7286 = vrot.lane.b32.xlu0 %v6839, 72
      %v7287 = vpop.permute.xlu0 %7286
      %7288 = vrot.lane.b32.xlu0 %v6841, 72
      %v7289 = vpop.permute.xlu0 %7288
      %7322 = vrot.lane.b32.xlu0 %v6576, 112
      %v7323 = vpop.permute.xlu0 %7322
      %7324 = vrot.lane.b32.xlu0 %v6577, 112
      %v7325 = vpop.permute.xlu0 %7324
      %7326 = vrot.lane.b32.xlu0 %v6579, 112
      %v7327 = vpop.permute.xlu0 %7326
      %7328 = vrot.lane.b32.xlu0 %v6580, 112
      %v7329 = vpop.permute.xlu0 %7328
      %7330 = vrot.lane.b32.xlu0 %v6582, 112
      %v7331 = vpop.permute.xlu0 %7330
      %7332 = vrot.lane.b32.xlu0 %v6583, 112
      %v7333 = vpop.permute.xlu0 %7332
      %7334 = vrot.lane.b32.xlu0 %v6585, 112
      %v7335 = vpop.permute.xlu0 %7334
      %7336 = vrot.lane.b32.xlu0 %v6586, 112
      %v7337 = vpop.permute.xlu0 %7336
      %7338 = vrot.lane.b32.xlu0 %v6588, 112
      %v7339 = vpop.permute.xlu0 %7338
      %7340 = vrot.lane.b32.xlu0 %v6589, 112
      %v7341 = vpop.permute.xlu0 %7340
      %7342 = vrot.lane.b32.xlu0 %v6591, 112
      %v7343 = vpop.permute.xlu0 %7342
      %7344 = vrot.lane.b32.xlu0 %v6592, 112
      %v7345 = vpop.permute.xlu0 %7344
      %7346 = vrot.lane.b32.xlu0 %v6594, 112
      %v7347 = vpop.permute.xlu0 %7346
      %7348 = vrot.lane.b32.xlu0 %v6595, 112
      %v7349 = vpop.permute.xlu0 %7348
      %7350 = vrot.lane.b32.xlu0 %v6597, 112
      %v7351 = vpop.permute.xlu0 %7350
      %7352 = vrot.lane.b32.xlu0 %v6598, 112
      %v7353 = vpop.permute.xlu0 %7352
      %7354 = vrot.lane.b32.xlu0 %v6600, 112
      %v7355 = vpop.permute.xlu0 %7354
      %7356 = vrot.lane.b32.xlu0 %v6601, 112
      %v7357 = vpop.permute.xlu0 %7356
      %7358 = vrot.lane.b32.xlu0 %v6603, 112
      %v7359 = vpop.permute.xlu0 %7358
      %7360 = vrot.lane.b32.xlu0 %v6604, 112
      %v7361 = vpop.permute.xlu0 %7360
      %7362 = vrot.lane.b32.xlu0 %v6606, 112
      %v7363 = vpop.permute.xlu0 %7362
      %7364 = vrot.lane.b32.xlu0 %v6607, 112
      %v7365 = vpop.permute.xlu0 %7364
      %7366 = vrot.lane.b32.xlu0 %v6609, 112
      %v7367 = vpop.permute.xlu0 %7366
      %7368 = vrot.lane.b32.xlu0 %v6610, 112
      %v7369 = vpop.permute.xlu0 %7368
      %7370 = vrot.lane.b32.xlu0 %v6612, 112
      %v7371 = vpop.permute.xlu0 %7370
      %7372 = vrot.lane.b32.xlu0 %v6613, 112
      %v7373 = vpop.permute.xlu0 %7372
      %7374 = vrot.lane.b32.xlu0 %v6615, 112
      %v7375 = vpop.permute.xlu0 %7374
      %7376 = vrot.lane.b32.xlu0 %v6616, 112
      %v7377 = vpop.permute.xlu0 %7376
      %7378 = vrot.lane.b32.xlu0 %v6618, 112
      %v7379 = vpop.permute.xlu0 %7378
      %7380 = vrot.lane.b32.xlu0 %v6619, 112
      %v7381 = vpop.permute.xlu0 %7380
      %7382 = vrot.lane.b32.xlu0 %v6570, 112
      %v7383 = vpop.permute.xlu0 %7382
      %7384 = vrot.lane.b32.xlu0 %v6571, 112
      %v7385 = vpop.permute.xlu0 %7384
      %7418 = vrot.lane.b32.xlu0 %v6681, 24
      %v7419 = vpop.permute.xlu0 %7418
      %7420 = vrot.lane.b32.xlu0 %v6683, 24
      %v7421 = vpop.permute.xlu0 %7420
      %7422 = vrot.lane.b32.xlu0 %v6686, 24
      %v7423 = vpop.permute.xlu0 %7422
      %7424 = vrot.lane.b32.xlu0 %v6688, 24
      %v7425 = vpop.permute.xlu0 %7424
      %7426 = vrot.lane.b32.xlu0 %v6691, 24
      %v7427 = vpop.permute.xlu0 %7426
      %7428 = vrot.lane.b32.xlu0 %v6693, 24
      %v7429 = vpop.permute.xlu0 %7428
      %7430 = vrot.lane.b32.xlu0 %v6696, 24
      %v7431 = vpop.permute.xlu0 %7430
      %7432 = vrot.lane.b32.xlu0 %v6698, 24
      %v7433 = vpop.permute.xlu0 %7432
      %7434 = vrot.lane.b32.xlu0 %v6701, 24
      %v7435 = vpop.permute.xlu0 %7434
      %7436 = vrot.lane.b32.xlu0 %v6703, 24
      %v7437 = vpop.permute.xlu0 %7436
      %7438 = vrot.lane.b32.xlu0 %v6706, 24
      %v7439 = vpop.permute.xlu0 %7438
      %7440 = vrot.lane.b32.xlu0 %v6708, 24
      %v7441 = vpop.permute.xlu0 %7440
      %7442 = vrot.lane.b32.xlu0 %v6711, 24
      %v7443 = vpop.permute.xlu0 %7442
      %7444 = vrot.lane.b32.xlu0 %v6713, 24
      %v7445 = vpop.permute.xlu0 %7444
      %7446 = vrot.lane.b32.xlu0 %v6716, 24
      %v7447 = vpop.permute.xlu0 %7446
      %7448 = vrot.lane.b32.xlu0 %v6718, 24
      %v7449 = vpop.permute.xlu0 %7448
      %7450 = vrot.lane.b32.xlu0 %v6721, 24
      %v7451 = vpop.permute.xlu0 %7450
      %7452 = vrot.lane.b32.xlu0 %v6723, 24
      %v7453 = vpop.permute.xlu0 %7452
      %7454 = vrot.lane.b32.xlu0 %v6726, 24
      %v7455 = vpop.permute.xlu0 %7454
      %7456 = vrot.lane.b32.xlu0 %v6728, 24
      %v7457 = vpop.permute.xlu0 %7456
      %7458 = vrot.lane.b32.xlu0 %v6731, 24
      %v7459 = vpop.permute.xlu0 %7458
      %7460 = vrot.lane.b32.xlu0 %v6733, 24
      %v7461 = vpop.permute.xlu0 %7460
      %7462 = vrot.lane.b32.xlu0 %v6736, 24
      %v7463 = vpop.permute.xlu0 %7462
      %7464 = vrot.lane.b32.xlu0 %v6738, 24
      %v7465 = vpop.permute.xlu0 %7464
      %7466 = vrot.lane.b32.xlu0 %v6741, 24
      %v7467 = vpop.permute.xlu0 %7466
      %7468 = vrot.lane.b32.xlu0 %v6743, 24
      %v7469 = vpop.permute.xlu0 %7468
      %7470 = vrot.lane.b32.xlu0 %v6746, 24
      %v7471 = vpop.permute.xlu0 %7470
      %7472 = vrot.lane.b32.xlu0 %v6748, 24
      %v7473 = vpop.permute.xlu0 %7472
      %7474 = vrot.lane.b32.xlu0 %v6834, 24
      %v7475 = vpop.permute.xlu0 %7474
      %7476 = vrot.lane.b32.xlu0 %v6836, 24
      %v7477 = vpop.permute.xlu0 %7476
      %7478 = vrot.lane.b32.xlu0 %v6671, 24
      %v7479 = vpop.permute.xlu0 %7478
      %7480 = vrot.lane.b32.xlu0 %v6673, 24
      %v7481 = vpop.permute.xlu0 %7480
      %7514 = vrot.lane.b32.xlu0 %v6761, 64
      %v7515 = vpop.permute.xlu0 %7514
      %7516 = vrot.lane.b32.xlu0 %v6763, 64
      %v7517 = vpop.permute.xlu0 %7516
      %7518 = vrot.lane.b32.xlu0 %v6766, 64
      %v7519 = vpop.permute.xlu0 %7518
      %7520 = vrot.lane.b32.xlu0 %v6768, 64
      %v7521 = vpop.permute.xlu0 %7520
      %7522 = vrot.lane.b32.xlu0 %v6771, 64
      %v7523 = vpop.permute.xlu0 %7522
      %7524 = vrot.lane.b32.xlu0 %v6773, 64
      %v7525 = vpop.permute.xlu0 %7524
      %7526 = vrot.lane.b32.xlu0 %v6776, 64
      %v7527 = vpop.permute.xlu0 %7526
      %7528 = vrot.lane.b32.xlu0 %v6778, 64
      %v7529 = vpop.permute.xlu0 %7528
      %7530 = vrot.lane.b32.xlu0 %v6781, 64
      %v7531 = vpop.permute.xlu0 %7530
      %7532 = vrot.lane.b32.xlu0 %v6783, 64
      %v7533 = vpop.permute.xlu0 %7532
      %7534 = vrot.lane.b32.xlu0 %v6786, 64
      %v7535 = vpop.permute.xlu0 %7534
      %7536 = vrot.lane.b32.xlu0 %v6788, 64
      %v7537 = vpop.permute.xlu0 %7536
      %7538 = vrot.lane.b32.xlu0 %v6791, 64
      %v7539 = vpop.permute.xlu0 %7538
      %7540 = vrot.lane.b32.xlu0 %v6793, 64
      %v7541 = vpop.permute.xlu0 %7540
      %7542 = vrot.lane.b32.xlu0 %v6796, 64
      %v7543 = vpop.permute.xlu0 %7542
      %7544 = vrot.lane.b32.xlu0 %v6798, 64
      %v7545 = vpop.permute.xlu0 %7544
      %7546 = vrot.lane.b32.xlu0 %v6801, 64
      %v7547 = vpop.permute.xlu0 %7546
      %7548 = vrot.lane.b32.xlu0 %v6803, 64
      %v7549 = vpop.permute.xlu0 %7548
      %7550 = vrot.lane.b32.xlu0 %v6806, 64
      %v7551 = vpop.permute.xlu0 %7550
      %7552 = vrot.lane.b32.xlu0 %v6808, 64
      %v7553 = vpop.permute.xlu0 %7552
      %7554 = vrot.lane.b32.xlu0 %v6811, 64
      %v7555 = vpop.permute.xlu0 %7554
      %7556 = vrot.lane.b32.xlu0 %v6813, 64
      %v7557 = vpop.permute.xlu0 %7556
      %7558 = vrot.lane.b32.xlu0 %v6816, 64
      %v7559 = vpop.permute.xlu0 %7558
      %7560 = vrot.lane.b32.xlu0 %v6818, 64
      %v7561 = vpop.permute.xlu0 %7560
      %7562 = vrot.lane.b32.xlu0 %v6821, 64
      %v7563 = vpop.permute.xlu0 %7562
      %7564 = vrot.lane.b32.xlu0 %v6823, 64
      %v7565 = vpop.permute.xlu0 %7564
      %7566 = vrot.lane.b32.xlu0 %v6826, 64
      %v7567 = vpop.permute.xlu0 %7566
      %7568 = vrot.lane.b32.xlu0 %v6828, 64
      %v7569 = vpop.permute.xlu0 %7568
      %7570 = vrot.lane.b32.xlu0 %v6839, 64
      %v7571 = vpop.permute.xlu0 %7570
      %7572 = vrot.lane.b32.xlu0 %v6841, 64
      %v7573 = vpop.permute.xlu0 %7572
      %7574 = vrot.lane.b32.xlu0 %v6751, 64
      %v7575 = vpop.permute.xlu0 %7574
      %7576 = vrot.lane.b32.xlu0 %v6753, 64
      %v7577 = vpop.permute.xlu0 %7576
      %v7610 = vsel %vm3670, %v6570, %v6843
      %v7611 = vsel %vm3670, %v6571, %v6845
      %v7612 = vsel %vm3670, %v6573, %v6847
      %v7613 = vsel %vm3670, %v6574, %v6849
      %v7614 = vsel %vm3670, %v6576, %v6851
      %v7615 = vsel %vm3670, %v6577, %v6853
      %v7616 = vsel %vm3670, %v6579, %v6855
      %v7617 = vsel %vm3670, %v6580, %v6857
      %v7618 = vsel %vm3670, %v6582, %v6859
      %v7619 = vsel %vm3670, %v6583, %v6861
      %v7620 = vsel %vm3670, %v6585, %v6863
      %v7621 = vsel %vm3670, %v6586, %v6865
      %v7622 = vsel %vm3670, %v6588, %v6867
      %v7623 = vsel %vm3670, %v6589, %v6869
      %v7624 = vsel %vm3670, %v6591, %v6871
      %v7625 = vsel %vm3670, %v6592, %v6873
      %v7626 = vsel %vm3670, %v6594, %v6875
      %v7627 = vsel %vm3670, %v6595, %v6877
      %v7628 = vsel %vm3670, %v6597, %v6879
      %v7629 = vsel %vm3670, %v6598, %v6881
      %v7630 = vsel %vm3670, %v6600, %v6883
      %v7631 = vsel %vm3670, %v6601, %v6885
      %v7632 = vsel %vm3670, %v6603, %v6887
      %v7633 = vsel %vm3670, %v6604, %v6889
      %v7634 = vsel %vm3670, %v6606, %v6891
      %v7635 = vsel %vm3670, %v6607, %v6893
      %v7636 = vsel %vm3670, %v6609, %v6895
      %v7637 = vsel %vm3670, %v6610, %v6897
      %v7638 = vsel %vm3670, %v6612, %v6899
      %v7639 = vsel %vm3670, %v6613, %v6901
      %v7640 = vsel %vm3670, %v6615, %v6903
      %v7641 = vsel %vm3670, %v6616, %v6905
      %v7642 = vsel %vm1597, %v7610, %v6939
      %v7643 = vsel %vm1597, %v7611, %v6941
      %v7644 = vsel %vm1597, %v7612, %v6943
      %v7645 = vsel %vm1597, %v7613, %v6945
      %v7646 = vsel %vm1597, %v7614, %v6947
      %v7647 = vsel %vm1597, %v7615, %v6949
      %v7648 = vsel %vm1597, %v7616, %v6951
      %v7649 = vsel %vm1597, %v7617, %v6953
      %v7650 = vsel %vm1597, %v7618, %v6955
      %v7651 = vsel %vm1597, %v7619, %v6957
      %v7652 = vsel %vm1597, %v7620, %v6959
      %v7653 = vsel %vm1597, %v7621, %v6961
      %v7654 = vsel %vm1597, %v7622, %v6963
      %v7655 = vsel %vm1597, %v7623, %v6965
      %v7656 = vsel %vm1597, %v7624, %v6967
      %v7657 = vsel %vm1597, %v7625, %v6969
      %v7658 = vsel %vm1597, %v7626, %v6971
      %v7659 = vsel %vm1597, %v7627, %v6973
      %v7660 = vsel %vm1597, %v7628, %v6975
      %v7661 = vsel %vm1597, %v7629, %v6977
      %v7662 = vsel %vm1597, %v7630, %v6979
      %v7663 = vsel %vm1597, %v7631, %v6981
      %v7664 = vsel %vm1597, %v7632, %v6983
      %v7665 = vsel %vm1597, %v7633, %v6985
      %v7666 = vsel %vm1597, %v7634, %v6987
      %v7667 = vsel %vm1597, %v7635, %v6989
      %v7668 = vsel %vm1597, %v7636, %v6991
      %v7669 = vsel %vm1597, %v7637, %v6993
      %v7670 = vsel %vm1597, %v7638, %v6995
      %v7671 = vsel %vm1597, %v7639, %v6997
      %v7672 = vsel %vm1597, %v7640, %v6999
      %v7673 = vsel %vm1597, %v7641, %v7001
      %v7674 = vsel %vm3605, %v7642, %v7035
      %v7675 = vsel %vm3605, %v7643, %v7037
      %v7676 = vsel %vm3605, %v7644, %v7039
      %v7677 = vsel %vm3605, %v7645, %v7041
      %v7678 = vsel %vm3605, %v7646, %v7043
      %v7679 = vsel %vm3605, %v7647, %v7045
      %v7680 = vsel %vm3605, %v7648, %v7047
      %v7681 = vsel %vm3605, %v7649, %v7049
      %v7682 = vsel %vm3605, %v7650, %v7051
      %v7683 = vsel %vm3605, %v7651, %v7053
      %v7684 = vsel %vm3605, %v7652, %v7055
      %v7685 = vsel %vm3605, %v7653, %v7057
      %v7686 = vsel %vm3605, %v7654, %v7059
      %v7687 = vsel %vm3605, %v7655, %v7061
      %v7688 = vsel %vm3605, %v7656, %v7063
      %v7689 = vsel %vm3605, %v7657, %v7065
      %v7690 = vsel %vm3605, %v7658, %v7067
      %v7691 = vsel %vm3605, %v7659, %v7069
      %v7692 = vsel %vm3605, %v7660, %v7071
      %v7693 = vsel %vm3605, %v7661, %v7073
      %v7694 = vsel %vm3605, %v7662, %v7075
      %v7695 = vsel %vm3605, %v7663, %v7077
      %v7696 = vsel %vm3605, %v7664, %v7079
      %v7697 = vsel %vm3605, %v7665, %v7081
      %v7698 = vsel %vm3605, %v7666, %v7083
      %v7699 = vsel %vm3605, %v7667, %v7085
      %v7700 = vsel %vm3605, %v7668, %v7087
      %v7701 = vsel %vm3605, %v7669, %v7089
      %v7702 = vsel %vm3605, %v7670, %v7091
      %v7703 = vsel %vm3605, %v7671, %v7093
      %v7704 = vsel %vm3605, %v7672, %v7095
      %v7705 = vsel %vm3605, %v7673, %v7097
      %v7706 = vsel %vm1498, %v7035, %v7131
      %v7707 = vsel %vm1498, %v7037, %v7133
      %v7708 = vsel %vm1498, %v7039, %v7135
      %v7709 = vsel %vm1498, %v7041, %v7137
      %v7710 = vsel %vm1498, %v7043, %v7139
      %v7711 = vsel %vm1498, %v7045, %v7141
      %v7712 = vsel %vm1498, %v7047, %v7143
      %v7713 = vsel %vm1498, %v7049, %v7145
      %v7714 = vsel %vm1498, %v7051, %v7147
      %v7715 = vsel %vm1498, %v7053, %v7149
      %v7716 = vsel %vm1498, %v7055, %v7151
      %v7717 = vsel %vm1498, %v7057, %v7153
      %v7718 = vsel %vm1498, %v7059, %v7155
      %v7719 = vsel %vm1498, %v7061, %v7157
      %v7720 = vsel %vm1498, %v7063, %v7159
      %v7721 = vsel %vm1498, %v7065, %v7161
      %v7722 = vsel %vm1498, %v7067, %v7163
      %v7723 = vsel %vm1498, %v7069, %v7165
      %v7724 = vsel %vm1498, %v7071, %v7167
      %v7725 = vsel %vm1498, %v7073, %v7169
      %v7726 = vsel %vm1498, %v7075, %v7171
      %v7727 = vsel %vm1498, %v7077, %v7173
      %v7728 = vsel %vm1498, %v7079, %v7175
      %v7729 = vsel %vm1498, %v7081, %v7177
      %v7730 = vsel %vm1498, %v7083, %v7179
      %v7731 = vsel %vm1498, %v7085, %v7181
      %v7732 = vsel %vm1498, %v7087, %v7183
      %v7733 = vsel %vm1498, %v7089, %v7185
      %v7734 = vsel %vm1498, %v7091, %v7187
      %v7735 = vsel %vm1498, %v7093, %v7189
      %v7736 = vsel %vm1498, %v7095, %v7191
      %v7737 = vsel %vm1498, %v7097, %v7193
      %v7738 = vsel %vm3540, %v7706, %v7227
      %v7739 = vsel %vm3540, %v7707, %v7229
      %v7740 = vsel %vm3540, %v7708, %v7231
      %v7741 = vsel %vm3540, %v7709, %v7233
      %v7742 = vsel %vm3540, %v7710, %v7235
      %v7743 = vsel %vm3540, %v7711, %v7237
      %v7744 = vsel %vm3540, %v7712, %v7239
      %v7745 = vsel %vm3540, %v7713, %v7241
      %v7746 = vsel %vm3540, %v7714, %v7243
      %v7747 = vsel %vm3540, %v7715, %v7245
      %v7748 = vsel %vm3540, %v7716, %v7247
      %v7749 = vsel %vm3540, %v7717, %v7249
      %v7750 = vsel %vm3540, %v7718, %v7251
      %v7751 = vsel %vm3540, %v7719, %v7253
      %v7752 = vsel %vm3540, %v7720, %v7255
      %v7753 = vsel %vm3540, %v7721, %v7257
      %v7754 = vsel %vm3540, %v7722, %v7259
      %v7755 = vsel %vm3540, %v7723, %v7261
      %v7756 = vsel %vm3540, %v7724, %v7263
      %v7757 = vsel %vm3540, %v7725, %v7265
      %v7758 = vsel %vm3540, %v7726, %v7267
      %v7759 = vsel %vm3540, %v7727, %v7269
      %v7760 = vsel %vm3540, %v7728, %v7271
      %v7761 = vsel %vm3540, %v7729, %v7273
      %v7762 = vsel %vm3540, %v7730, %v7275
      %v7763 = vsel %vm3540, %v7731, %v7277
      %v7764 = vsel %vm3540, %v7732, %v7279
      %v7765 = vsel %vm3540, %v7733, %v7281
      %v7766 = vsel %vm3540, %v7734, %v7283
      %v7767 = vsel %vm3540, %v7735, %v7285
      %v7768 = vsel %vm3540, %v7736, %v7287
      %v7769 = vsel %vm3540, %v7737, %v7289
      %v7770 = vsel %vm1663, %v7738, %v7323
      %v7771 = vsel %vm1663, %v7739, %v7325
      %v7772 = vsel %vm1663, %v7740, %v7327
      %v7773 = vsel %vm1663, %v7741, %v7329
      %v7774 = vsel %vm1663, %v7742, %v7331
      %v7775 = vsel %vm1663, %v7743, %v7333
      %v7776 = vsel %vm1663, %v7744, %v7335
      %v7777 = vsel %vm1663, %v7745, %v7337
      %v7778 = vsel %vm1663, %v7746, %v7339
      %v7779 = vsel %vm1663, %v7747, %v7341
      %v7780 = vsel %vm1663, %v7748, %v7343
      %v7781 = vsel %vm1663, %v7749, %v7345
      %v7782 = vsel %vm1663, %v7750, %v7347
      %v7783 = vsel %vm1663, %v7751, %v7349
      %v7784 = vsel %vm1663, %v7752, %v7351
      %v7785 = vsel %vm1663, %v7753, %v7353
      %v7786 = vsel %vm1663, %v7754, %v7355
      %v7787 = vsel %vm1663, %v7755, %v7357
      %v7788 = vsel %vm1663, %v7756, %v7359
      %v7789 = vsel %vm1663, %v7757, %v7361
      %v7790 = vsel %vm1663, %v7758, %v7363
      %v7791 = vsel %vm1663, %v7759, %v7365
      %v7792 = vsel %vm1663, %v7760, %v7367
      %v7793 = vsel %vm1663, %v7761, %v7369
      %v7794 = vsel %vm1663, %v7762, %v7371
      %v7795 = vsel %vm1663, %v7763, %v7373
      %v7796 = vsel %vm1663, %v7764, %v7375
      %v7797 = vsel %vm1663, %v7765, %v7377
      %v7798 = vsel %vm1663, %v7766, %v7379
      %v7799 = vsel %vm1663, %v7767, %v7381
      %v7800 = vsel %vm1663, %v7768, %v7383
      %v7801 = vsel %vm1663, %v7769, %v7385
      %v7802 = vsel %vm3475, %v7323, %v7419
      %v7803 = vsel %vm3475, %v7325, %v7421
      %v7804 = vsel %vm3475, %v7327, %v7423
      %v7805 = vsel %vm3475, %v7329, %v7425
      %v7806 = vsel %vm3475, %v7331, %v7427
      %v7807 = vsel %vm3475, %v7333, %v7429
      %v7808 = vsel %vm3475, %v7335, %v7431
      %v7809 = vsel %vm3475, %v7337, %v7433
      %v7810 = vsel %vm3475, %v7339, %v7435
      %v7811 = vsel %vm3475, %v7341, %v7437
      %v7812 = vsel %vm3475, %v7343, %v7439
      %v7813 = vsel %vm3475, %v7345, %v7441
      %v7814 = vsel %vm3475, %v7347, %v7443
      %v7815 = vsel %vm3475, %v7349, %v7445
      %v7816 = vsel %vm3475, %v7351, %v7447
      %v7817 = vsel %vm3475, %v7353, %v7449
      %v7818 = vsel %vm3475, %v7355, %v7451
      %v7819 = vsel %vm3475, %v7357, %v7453
      %v7820 = vsel %vm3475, %v7359, %v7455
      %v7821 = vsel %vm3475, %v7361, %v7457
      %v7822 = vsel %vm3475, %v7363, %v7459
      %v7823 = vsel %vm3475, %v7365, %v7461
      %v7824 = vsel %vm3475, %v7367, %v7463
      %v7825 = vsel %vm3475, %v7369, %v7465
      %v7826 = vsel %vm3475, %v7371, %v7467
      %v7827 = vsel %vm3475, %v7373, %v7469
      %v7828 = vsel %vm3475, %v7375, %v7471
      %v7829 = vsel %vm3475, %v7377, %v7473
      %v7830 = vsel %vm3475, %v7379, %v7475
      %v7831 = vsel %vm3475, %v7381, %v7477
      %v7832 = vsel %vm3475, %v7383, %v7479
      %v7833 = vsel %vm3475, %v7385, %v7481
      %v7834 = vsel %vm1564, %v7802, %v7515
      %v7835 = vsel %vm1564, %v7803, %v7517
      %v7836 = vsel %vm1564, %v7804, %v7519
      %v7837 = vsel %vm1564, %v7805, %v7521
      %v7838 = vsel %vm1564, %v7806, %v7523
      %v7839 = vsel %vm1564, %v7807, %v7525
      %v7840 = vsel %vm1564, %v7808, %v7527
      %v7841 = vsel %vm1564, %v7809, %v7529
      %v7842 = vsel %vm1564, %v7810, %v7531
      %v7843 = vsel %vm1564, %v7811, %v7533
      %v7844 = vsel %vm1564, %v7812, %v7535
      %v7845 = vsel %vm1564, %v7813, %v7537
      %v7846 = vsel %vm1564, %v7814, %v7539
      %v7847 = vsel %vm1564, %v7815, %v7541
      %v7848 = vsel %vm1564, %v7816, %v7543
      %v7849 = vsel %vm1564, %v7817, %v7545
      %v7850 = vsel %vm1564, %v7818, %v7547
      %v7851 = vsel %vm1564, %v7819, %v7549
      %v7852 = vsel %vm1564, %v7820, %v7551
      %v7853 = vsel %vm1564, %v7821, %v7553
      %v7854 = vsel %vm1564, %v7822, %v7555
      %v7855 = vsel %vm1564, %v7823, %v7557
      %v7856 = vsel %vm1564, %v7824, %v7559
      %v7857 = vsel %vm1564, %v7825, %v7561
      %v7858 = vsel %vm1564, %v7826, %v7563
      %v7859 = vsel %vm1564, %v7827, %v7565
      %v7860 = vsel %vm1564, %v7828, %v7567
      %v7861 = vsel %vm1564, %v7829, %v7569
      %v7862 = vsel %vm1564, %v7830, %v7571
      %v7863 = vsel %vm1564, %v7831, %v7573
      %v7864 = vsel %vm1564, %v7832, %v7575
      %v7865 = vsel %vm1564, %v7833, %v7577
      %v7866 = vld [vmem:[%s7] sm:$0xff]
      %v7867 = vld [vmem:[%s7 + $0x8] sm:$0xff]
      %v7868 = vld [vmem:[%s7 + $0x10] sm:$0xff]
      %v7869 = vld [vmem:[%s7 + $0x18] sm:$0xff]
      %v7870 = vld [vmem:[%s7 + $0x20] sm:$0xff]
      %v7871 = vld [vmem:[%s7 + $0x28] sm:$0xff]
      %v7872 = vld [vmem:[%s7 + $0x30] sm:$0xff]
      %v7873 = vld [vmem:[%s7 + $0x38] sm:$0xff]
      %v7874 = vld [vmem:[%s7 + $0x40] sm:$0xff]
      %v7875 = vld [vmem:[%s7 + $0x48] sm:$0xff]
      %v7876 = vld [vmem:[%s7 + $0x50] sm:$0xff]
      %v7877 = vld [vmem:[%s7 + $0x58] sm:$0xff]
      %v7878 = vld [vmem:[%s7 + $0x60] sm:$0xff]
      %v7879 = vld [vmem:[%s7 + $0x68] sm:$0xff]
      %v7880 = vld [vmem:[%s7 + $0x70] sm:$0xff]
      %v7881 = vld [vmem:[%s7 + $0x78] sm:$0xff]
      %v7882 = vld [vmem:[%s7 + $0x80] sm:$0xff]
      %v7883 = vld [vmem:[%s7 + $0x88] sm:$0xff]
      %v7884 = vld [vmem:[%s7 + $0x90] sm:$0xff]
      %v7885 = vld [vmem:[%s7 + $0x98] sm:$0xff]
      %v7886 = vld [vmem:[%s7 + $0xa0] sm:$0xff]
      %v7887 = vld [vmem:[%s7 + $0xa8] sm:$0xff]
      %v7888 = vld [vmem:[%s7 + $0xb0] sm:$0xff]
      %v7889 = vld [vmem:[%s7 + $0xb8] sm:$0xff]
      %v7890 = vld [vmem:[%s7 + $0xc0] sm:$0xff]
      %v7891 = vld [vmem:[%s7 + $0xc8] sm:$0xff]
      %v7892 = vld [vmem:[%s7 + $0xd0] sm:$0xff]
      %v7893 = vld [vmem:[%s7 + $0xd8] sm:$0xff]
      %v7894 = vld [vmem:[%s7 + $0xe0] sm:$0xff]
      %v7895 = vld [vmem:[%s7 + $0xe8] sm:$0xff]
      %v7896 = vld [vmem:[%s7 + $0xf0] sm:$0xff]
      %v7897 = vld [vmem:[%s7 + $0xf8] sm:$0xff]
      %v7898 = vld [vmem:[%s7 + $0x100] sm:$0xff]
      %v7899 = vld [vmem:[%s7 + $0x108] sm:$0xff]
      %v7900 = vld [vmem:[%s7 + $0x110] sm:$0xff]
      %v7901 = vld [vmem:[%s7 + $0x118] sm:$0xff]
      %v7902 = vld [vmem:[%s7 + $0x120] sm:$0xff]
      %v7903 = vld [vmem:[%s7 + $0x128] sm:$0xff]
      %v7904 = vld [vmem:[%s7 + $0x130] sm:$0xff]
      %v7905 = vld [vmem:[%s7 + $0x138] sm:$0xff]
      %v7906 = vld [vmem:[%s7 + $0x140] sm:$0xff]
      %v7907 = vld [vmem:[%s7 + $0x148] sm:$0xff]
      %v7908 = vld [vmem:[%s7 + $0x150] sm:$0xff]
      %v7909 = vld [vmem:[%s7 + $0x158] sm:$0xff]
      %v7910 = vld [vmem:[%s7 + $0x160] sm:$0xff]
      %v7911 = vld [vmem:[%s8] sm:$0x1]
      %v7913 = vlaneseq
      %v7914 = vshrl.u32 %v7913, 7
      %v7915 = vsub.s32 0, %v7914
      %v7916 = vrot.slane %v7911, %v7915
      %vm7918 = vcmask 850944
      %v7920 = vsel %vm7918, %v7834, 0
      %v7923 = vsel %vm7918, %v7835, 0
      %v7926 = vsel %vm7918, %v7836, 0
      %v7929 = vsel %vm7918, %v7837, 0
      %v7932 = vsel %vm7918, %v7838, 0
      %v7935 = vsel %vm7918, %v7839, 0
      %v7938 = vsel %vm7918, %v7840, 0
      %v7941 = vsel %vm7918, %v7841, 0
      %v7944 = vsel %vm7918, %v7842, 0
      %v7947 = vsel %vm7918, %v7843, 0
      %v7950 = vsel %vm7918, %v7844, 0
      %v7953 = vsel %vm7918, %v7845, 0
      %v7956 = vsel %vm7918, %v7846, 0
      %v7959 = vsel %vm7918, %v7847, 0
      %v7962 = vsel %vm7918, %v7848, 0
      %v7965 = vsel %vm7918, %v7849, 0
      %v7968 = vsel %vm7918, %v7850, 0
      %v7971 = vsel %vm7918, %v7851, 0
      %v7974 = vsel %vm7918, %v7852, 0
      %v7977 = vsel %vm7918, %v7853, 0
      %v7980 = vsel %vm7918, %v7854, 0
      %v7983 = vsel %vm7918, %v7855, 0
      %v7986 = vsel %vm7918, %v7856, 0
      %v7989 = vsel %vm7918, %v7857, 0
      %v7992 = vsel %vm7918, %v7858, 0
      %v7995 = vsel %vm7918, %v7859, 0
      %v7998 = vsel %vm7918, %v7860, 0
      %v8001 = vsel %vm7918, %v7861, 0
      %v8004 = vsel %vm7918, %v7862, 0
      %v8007 = vsel %vm7918, %v7863, 0
      %v8010 = vsel %vm7918, %v7864, 0
      %v8013 = vsel %vm7918, %v7865, 0
      %8015 = vmatprep.subr.mxu0 0.0
      %8016 = vmatpush1.msra.mxu0 %v7866
      %8017 = vmatprep.subr.mxu0 0.0
      %8018 = vmatpush1.msra.mxu0 %v7867
      %8019 = vmatprep.subr.mxu0 0.0
      %8020 = vmatpush1.msra.mxu0 %v7868
      %8021 = vmatprep.subr.mxu0 0.0
      %8022 = vmatpush1.msra.mxu0 %v7869
      %8023 = vmatprep.subr.mxu0 0.0
      %8024 = vmatpush1.msra.mxu0 %v7870
      %8025 = vmatprep.subr.mxu0 0.0
      %8026 = vmatpush1.msra.mxu0 %v7871
      %8027 = vmatprep.subr.mxu0 0.0
      %8028 = vmatpush1.msra.mxu0 %v7872
      %8029 = vmatprep.subr.mxu0 0.0
      %8030 = vmatpush1.msra.mxu0 %v7873
      %8031 = vmatprep.subr.mxu0 0.0
      %8032 = vmatpush1.msra.mxu0 %v7874
      %8033 = vmatprep.subr.mxu0 0.0
      %8034 = vmatpush1.msra.mxu0 %v7875
      %8035 = vmatprep.subr.mxu0 0.0
      %8036 = vmatpush1.msra.mxu0 %v7876
      %8037 = vmatprep.subr.mxu0 0.0
      %8038 = vmatpush1.msra.mxu0 %v7877
      %8039 = vmatprep.subr.mxu0 0.0
      %8040 = vmatpush1.msra.mxu0 %v7878
      %8041 = vmatprep.subr.mxu0 0.0
      %8042 = vmatpush1.msra.mxu0 %v7879
      %8043 = vmatprep.subr.mxu0 0.0
      %8044 = vmatpush1.msra.mxu0 %v7880
      %8045 = vmatprep.subr.mxu0 0.0
      %8046 = vmatpush1.msra.mxu0 %v7881
      %8047 = vmatprep.subr.mxu0 0.0
      %8048 = vmatpush1.msra.mxu0 %v7882
      %8049 = vmatprep.subr.mxu0 0.0
      %8050 = vmatpush1.msra.mxu0 %v7883
      %8051 = vmatprep.subr.mxu0 0.0
      %8052 = vmatpush1.msra.mxu0 %v7884
      %8053 = vmatprep.subr.mxu0 0.0
      %8054 = vmatpush1.msra.mxu0 %v7885
      %8055 = vmatprep.subr.mxu0 0.0
      %8056 = vmatpush1.msra.mxu0 %v7886
      %8057 = vmatprep.subr.mxu0 0.0
      %8058 = vmatpush1.msra.mxu0 %v7887
      %8059 = vmatprep.subr.mxu0 0.0
      %8060 = vmatpush1.msra.mxu0 %v7888
      %8061 = vmatprep.subr.mxu0 0.0
      %8062 = vmatpush1.msra.mxu0 %v7889
      %8063 = vmatprep.subr.mxu0 0.0
      %8064 = vmatpush1.msra.mxu0 %v7890
      %8065 = vmatprep.subr.mxu0 0.0
      %8066 = vmatpush1.msra.mxu0 %v7891
      %8067 = vmatprep.subr.mxu0 0.0
      %8068 = vmatpush1.msra.mxu0 %v7892
      %8069 = vmatprep.subr.mxu0 0.0
      %8070 = vmatpush1.msra.mxu0 %v7893
      %8071 = vmatprep.subr.mxu0 0.0
      %8072 = vmatpush1.msra.mxu0 %v7894
      %8073 = vmatprep.subr.mxu0 0.0
      %8074 = vmatpush1.msra.mxu0 %v7895
      %8075 = vmatprep.subr.mxu0 0.0
      %8076 = vmatpush1.msra.mxu0 %v7896
      %8077 = vmatprep.subr.mxu0 0.0
      %8078 = vmatpush1.msra.mxu0 %v7897
      %8079 = vmatprep.mubr.f32.mxu0 %v7770
      %8080 = vmatmul.mubr.f32.gmra.mrb[0].mxu0 %v7674
      %v8081 = vpop.f32.mrb[0].mxu0
      %v8082 = vadd.f32 %v7916, %v8081
      %v8083 = vpop.f32.mrb[0].mxu0
      %8084 = vmatprep.mubr.f32.mxu0 %v7771
      %8085 = vmatmul.mubr.f32.gmra.mrb[0].mxu0 %v7675
      %v8086 = vpop.f32.mrb[0].mxu0
      %v8087 = vadd.f32 %v7916, %v8086
      %v8088 = vpop.f32.mrb[0].mxu0
      %8089 = vmatprep.mubr.f32.mxu0 %v7772
      %8090 = vmatmul.mubr.f32.gmra.mrb[0].mxu0 %v7676
      %v8091 = vpop.f32.mrb[0].mxu0
      %v8092 = vadd.f32 %v7916, %v8091
      %v8093 = vpop.f32.mrb[0].mxu0
      %8094 = vmatprep.mubr.f32.mxu0 %v7773
      %8095 = vmatmul.mubr.f32.gmra.mrb[0].mxu0 %v7677
      %v8096 = vpop.f32.mrb[0].mxu0
      %v8097 = vadd.f32 %v7916, %v8096
      %v8098 = vpop.f32.mrb[0].mxu0
      %8099 = vmatprep.mubr.f32.mxu0 %v7774
      %8100 = vmatmul.mubr.f32.gmra.mrb[0].mxu0 %v7678
      %v8101 = vpop.f32.mrb[0].mxu0
      %v8102 = vadd.f32 %v7916, %v8101
      %v8103 = vpop.f32.mrb[0].mxu0
      %8104 = vmatprep.mubr.f32.mxu0 %v7775
      %8105 = vmatmul.mubr.f32.gmra.mrb[0].mxu0 %v7679
      %v8106 = vpop.f32.mrb[0].mxu0
      %v8107 = vadd.f32 %v7916, %v8106
      %v8108 = vpop.f32.mrb[0].mxu0
      %8109 = vmatprep.mubr.f32.mxu0 %v7776
      %8110 = vmatmul.mubr.f32.gmra.mrb[0].mxu0 %v7680
      %v8111 = vpop.f32.mrb[0].mxu0
      %v8112 = vadd.f32 %v7916, %v8111
      %v8113 = vpop.f32.mrb[0].mxu0
      %8114 = vmatprep.mubr.f32.mxu0 %v7777
      %8115 = vmatmul.mubr.f32.gmra.mrb[0].mxu0 %v7681
      %v8116 = vpop.f32.mrb[0].mxu0
      %v8117 = vadd.f32 %v7916, %v8116
      %v8118 = vpop.f32.mrb[0].mxu0
      %8119 = vmatprep.mubr.f32.mxu0 %v7778
      %8120 = vmatmul.mubr.f32.gmra.mrb[0].mxu0 %v7682
      %v8121 = vpop.f32.mrb[0].mxu0
      %v8122 = vadd.f32 %v7916, %v8121
      %v8123 = vpop.f32.mrb[0].mxu0
      %8124 = vmatprep.mubr.f32.mxu0 %v7779
      %8125 = vmatmul.mubr.f32.gmra.mrb[0].mxu0 %v7683
      %v8126 = vpop.f32.mrb[0].mxu0
      %v8127 = vadd.f32 %v7916, %v8126
      %v8128 = vpop.f32.mrb[0].mxu0
      %8129 = vmatprep.mubr.f32.mxu0 %v7780
      %8130 = vmatmul.mubr.f32.gmra.mrb[0].mxu0 %v7684
      %v8131 = vpop.f32.mrb[0].mxu0
      %v8132 = vadd.f32 %v7916, %v8131
      %v8133 = vpop.f32.mrb[0].mxu0
      %8134 = vmatprep.mubr.f32.mxu0 %v7781
      %8135 = vmatmul.mubr.f32.gmra.mrb[0].mxu0 %v7685
      %v8136 = vpop.f32.mrb[0].mxu0
      %v8137 = vadd.f32 %v7916, %v8136
      %v8138 = vpop.f32.mrb[0].mxu0
      %8139 = vmatprep.mubr.f32.mxu0 %v7782
      %8140 = vmatmul.mubr.f32.gmra.mrb[0].mxu0 %v7686
      %v8141 = vpop.f32.mrb[0].mxu0
      %v8142 = vadd.f32 %v7916, %v8141
      %v8143 = vpop.f32.mrb[0].mxu0
      %8144 = vmatprep.mubr.f32.mxu0 %v7783
      %8145 = vmatmul.mubr.f32.gmra.mrb[0].mxu0 %v7687
      %v8146 = vpop.f32.mrb[0].mxu0
      %v8147 = vadd.f32 %v7916, %v8146
      %v8148 = vpop.f32.mrb[0].mxu0
      %8149 = vmatprep.mubr.f32.mxu0 %v7784
      %8150 = vmatmul.mubr.f32.gmra.mrb[0].mxu0 %v7688
      %v8151 = vpop.f32.mrb[0].mxu0
      %v8152 = vadd.f32 %v7916, %v8151
      %v8153 = vpop.f32.mrb[0].mxu0
      %8154 = vmatprep.mubr.f32.mxu0 %v7785
      %8155 = vmatmul.mubr.f32.gmra.mrb[0].mxu0 %v7689
      %v8156 = vpop.f32.mrb[0].mxu0
      %v8157 = vadd.f32 %v7916, %v8156
      %v8158 = vpop.f32.mrb[0].mxu0
      %8159 = vmatprep.mubr.f32.mxu0 %v7786
      %8160 = vmatmul.mubr.f32.gmra.mrb[0].mxu0 %v7690
      %v8161 = vpop.f32.mrb[0].mxu0
      %v8162 = vadd.f32 %v7916, %v8161
      %v8163 = vpop.f32.mrb[0].mxu0
      %8164 = vmatprep.mubr.f32.mxu0 %v7787
      %8165 = vmatmul.mubr.f32.gmra.mrb[0].mxu0 %v7691
      %v8166 = vpop.f32.mrb[0].mxu0
      %v8167 = vadd.f32 %v7916, %v8166
      %v8168 = vpop.f32.mrb[0].mxu0
      %8169 = vmatprep.mubr.f32.mxu0 %v7788
      %8170 = vmatmul.mubr.f32.gmra.mrb[0].mxu0 %v7692
      %v8171 = vpop.f32.mrb[0].mxu0
      %v8172 = vadd.f32 %v7916, %v8171
      %v8173 = vpop.f32.mrb[0].mxu0
      %8174 = vmatprep.mubr.f32.mxu0 %v7789
      %8175 = vmatmul.mubr.f32.gmra.mrb[0].mxu0 %v7693
      %v8176 = vpop.f32.mrb[0].mxu0
      %v8177 = vadd.f32 %v7916, %v8176
      %v8178 = vpop.f32.mrb[0].mxu0
      %8179 = vmatprep.mubr.f32.mxu0 %v7790
      %8180 = vmatmul.mubr.f32.gmra.mrb[0].mxu0 %v7694
      %v8181 = vpop.f32.mrb[0].mxu0
      %v8182 = vadd.f32 %v7916, %v8181
      %v8183 = vpop.f32.mrb[0].mxu0
      %8184 = vmatprep.mubr.f32.mxu0 %v7791
      %8185 = vmatmul.mubr.f32.gmra.mrb[0].mxu0 %v7695
      %v8186 = vpop.f32.mrb[0].mxu0
      %v8187 = vadd.f32 %v7916, %v8186
      %v8188 = vpop.f32.mrb[0].mxu0
      %8189 = vmatprep.mubr.f32.mxu0 %v7792
      %8190 = vmatmul.mubr.f32.gmra.mrb[0].mxu0 %v7696
      %v8191 = vpop.f32.mrb[0].mxu0
      %v8192 = vadd.f32 %v7916, %v8191
      %v8193 = vpop.f32.mrb[0].mxu0
      %8194 = vmatprep.mubr.f32.mxu0 %v7793
      %8195 = vmatmul.mubr.f32.gmra.mrb[0].mxu0 %v7697
      %v8196 = vpop.f32.mrb[0].mxu0
      %v8197 = vadd.f32 %v7916, %v8196
      %v8198 = vpop.f32.mrb[0].mxu0
      %8199 = vmatprep.mubr.f32.mxu0 %v7794
      %8200 = vmatmul.mubr.f32.gmra.mrb[0].mxu0 %v7698
      %v8201 = vpop.f32.mrb[0].mxu0
      %v8202 = vadd.f32 %v7916, %v8201
      %v8203 = vpop.f32.mrb[0].mxu0
      %8204 = vmatprep.mubr.f32.mxu0 %v7795
      %8205 = vmatmul.mubr.f32.gmra.mrb[0].mxu0 %v7699
      %v8206 = vpop.f32.mrb[0].mxu0
      %v8207 = vadd.f32 %v7916, %v8206
      %v8208 = vpop.f32.mrb[0].mxu0
      %8209 = vmatprep.mubr.f32.mxu0 %v7796
      %8210 = vmatmul.mubr.f32.gmra.mrb[0].mxu0 %v7700
      %v8211 = vpop.f32.mrb[0].mxu0
      %v8212 = vadd.f32 %v7916, %v8211
      %v8213 = vpop.f32.mrb[0].mxu0
      %8214 = vmatprep.mubr.f32.mxu0 %v7797
      %8215 = vmatmul.mubr.f32.gmra.mrb[0].mxu0 %v7701
      %v8216 = vpop.f32.mrb[0].mxu0
      %v8217 = vadd.f32 %v7916, %v8216
      %v8218 = vpop.f32.mrb[0].mxu0
      %8219 = vmatprep.mubr.f32.mxu0 %v7798
      %8220 = vmatmul.mubr.f32.gmra.mrb[0].mxu0 %v7702
      %v8221 = vpop.f32.mrb[0].mxu0
      %v8222 = vadd.f32 %v7916, %v8221
      %v8223 = vpop.f32.mrb[0].mxu0
      %8224 = vmatprep.mubr.f32.mxu0 %v7799
      %8225 = vmatmul.mubr.f32.gmra.mrb[0].mxu0 %v7703
      %v8226 = vpop.f32.mrb[0].mxu0
      %v8227 = vadd.f32 %v7916, %v8226
      %v8228 = vpop.f32.mrb[0].mxu0
      %8229 = vmatprep.mubr.f32.mxu0 %v7800
      %8230 = vmatmul.mubr.f32.gmra.mrb[0].mxu0 %v7704
      %v8231 = vpop.f32.mrb[0].mxu0
      %v8232 = vadd.f32 %v7916, %v8231
      %v8233 = vpop.f32.mrb[0].mxu0
      %8234 = vmatprep.mubr.f32.mxu0 %v7801
      %8235 = vmatmul.mubr.f32.gmra.mrb[0].mxu0 %v7705
      %v8236 = vpop.f32.mrb[0].mxu0
      %v8237 = vadd.f32 %v7916, %v8236
      %v8238 = vpop.f32.mrb[0].mxu0
      %8239 = vdwg.mxu0
      %8240 = vmatprep.subr.mxu0 0.0
      %8241 = vmatpush1.msra.mxu0 %v7898
      %8242 = vmatprep.subr.mxu0 0.0
      %8243 = vmatpush1.msra.mxu0 %v7899
      %8244 = vmatprep.subr.mxu0 0.0
      %8245 = vmatpush1.msra.mxu0 %v7900
      %8246 = vmatprep.subr.mxu0 0.0
      %8247 = vmatpush1.msra.mxu0 %v7901
      %8248 = vmatprep.subr.mxu0 0.0
      %8249 = vmatpush1.msra.mxu0 %v7902
      %8250 = vmatprep.subr.mxu0 0.0
      %8251 = vmatpush1.msra.mxu0 %v7903
      %8252 = vmatprep.subr.mxu0 0.0
      %8253 = vmatpush1.msra.mxu0 %v7904
      %8254 = vmatprep.subr.mxu0 0.0
      %8255 = vmatpush1.msra.mxu0 %v7905
      %8256 = vmatprep.subr.mxu0 0.0
      %8257 = vmatpush1.msra.mxu0 %v7906
      %8258 = vmatprep.subr.mxu0 0.0
      %8259 = vmatpush1.msra.mxu0 %v7907
      %8260 = vmatprep.subr.mxu0 0.0
      %8261 = vmatpush1.msra.mxu0 %v7908
      %8262 = vmatprep.subr.mxu0 0.0
      %8263 = vmatpush1.msra.mxu0 %v7909
      %8264 = vmatprep.subr.mxu0 0.0
      %8265 = vmatpush1.msra.mxu0 %v7910
      %8266 = vmatprep.subr.mxu0 0.0
      %8267 = vmatpush1.msra.mxu0 0.0
      %8268 = vmatprep.subr.mxu0 0.0
      %8269 = vmatpush1.msra.mxu0 0.0
      %8270 = vmatprep.subr.mxu0 0.0
      %8271 = vmatpush1.msra.mxu0 0.0
      %8272 = vmatprep.subr.mxu0 0.0
      %8273 = vmatpush1.msra.mxu0 0.0
      %8274 = vmatprep.subr.mxu0 0.0
      %8275 = vmatpush1.msra.mxu0 0.0
      %8276 = vmatprep.subr.mxu0 0.0
      %8277 = vmatpush1.msra.mxu0 0.0
      %8278 = vmatprep.subr.mxu0 0.0
      %8279 = vmatpush1.msra.mxu0 0.0
      %8280 = vmatprep.subr.mxu0 0.0
      %8281 = vmatpush1.msra.mxu0 0.0
      %8282 = vmatprep.subr.mxu0 0.0
      %8283 = vmatpush1.msra.mxu0 0.0
      %8284 = vmatprep.subr.mxu0 0.0
      %8285 = vmatpush1.msra.mxu0 0.0
      %8286 = vmatprep.subr.mxu0 0.0
      %8287 = vmatpush1.msra.mxu0 0.0
      %8288 = vmatprep.subr.mxu0 0.0
      %8289 = vmatpush1.msra.mxu0 0.0
      %8290 = vmatprep.subr.mxu0 0.0
      %8291 = vmatpush1.msra.mxu0 0.0
      %8292 = vmatprep.subr.mxu0 0.0
      %8293 = vmatpush1.msra.mxu0 0.0
      %8294 = vmatprep.subr.mxu0 0.0
      %8295 = vmatpush1.msra.mxu0 0.0
      %8296 = vmatprep.subr.mxu0 0.0
      %8297 = vmatpush1.msra.mxu0 0.0
      %8298 = vmatprep.subr.mxu0 0.0
      %8299 = vmatpush1.msra.mxu0 0.0
      %8300 = vmatprep.subr.mxu0 0.0
      %8301 = vmatpush1.msra.mxu0 0.0
      %8302 = vmatprep.subr.mxu0 0.0
      %8303 = vmatpush1.msra.mxu0 0.0
      %8304 = vmatprep.mubr.f32.mxu0 0.0
      %8305 = vmatmul.mubr.f32.gmra.mrb[0].mxu0 %v7920
      %v8306 = vpop.f32.mrb[0].mxu0
      %v8307 = vadd.f32 %v8082, %v8306
      %v8308 = vpop.f32.mrb[0].mxu0
      %8309 = vmatprep.mubr.f32.mxu0 0.0
      %8310 = vmatmul.mubr.f32.gmra.mrb[0].mxu0 %v7923
      %v8311 = vpop.f32.mrb[0].mxu0
      %v8312 = vadd.f32 %v8087, %v8311
      %v8313 = vpop.f32.mrb[0].mxu0
      %8314 = vmatprep.mubr.f32.mxu0 0.0
      %8315 = vmatmul.mubr.f32.gmra.mrb[0].mxu0 %v7926
      %v8316 = vpop.f32.mrb[0].mxu0
      %v8317 = vadd.f32 %v8092, %v8316
      %v8318 = vpop.f32.mrb[0].mxu0
      %8319 = vmatprep.mubr.f32.mxu0 0.0
      %8320 = vmatmul.mubr.f32.gmra.mrb[0].mxu0 %v7929
      %v8321 = vpop.f32.mrb[0].mxu0
      %v8322 = vadd.f32 %v8097, %v8321
      %v8323 = vpop.f32.mrb[0].mxu0
      %8324 = vmatprep.mubr.f32.mxu0 0.0
      %8325 = vmatmul.mubr.f32.gmra.mrb[0].mxu0 %v7932
      %v8326 = vpop.f32.mrb[0].mxu0
      %v8327 = vadd.f32 %v8102, %v8326
      %v8328 = vpop.f32.mrb[0].mxu0
      %8329 = vmatprep.mubr.f32.mxu0 0.0
      %8330 = vmatmul.mubr.f32.gmra.mrb[0].mxu0 %v7935
      %v8331 = vpop.f32.mrb[0].mxu0
      %v8332 = vadd.f32 %v8107, %v8331
      %v8333 = vpop.f32.mrb[0].mxu0
      %8334 = vmatprep.mubr.f32.mxu0 0.0
      %8335 = vmatmul.mubr.f32.gmra.mrb[0].mxu0 %v7938
      %v8336 = vpop.f32.mrb[0].mxu0
      %v8337 = vadd.f32 %v8112, %v8336
      %v8338 = vpop.f32.mrb[0].mxu0
      %8339 = vmatprep.mubr.f32.mxu0 0.0
      %8340 = vmatmul.mubr.f32.gmra.mrb[0].mxu0 %v7941
      %v8341 = vpop.f32.mrb[0].mxu0
      %v8342 = vadd.f32 %v8117, %v8341
      %v8343 = vpop.f32.mrb[0].mxu0
      %8344 = vmatprep.mubr.f32.mxu0 0.0
      %8345 = vmatmul.mubr.f32.gmra.mrb[0].mxu0 %v7944
      %v8346 = vpop.f32.mrb[0].mxu0
      %v8347 = vadd.f32 %v8122, %v8346
      %v8348 = vpop.f32.mrb[0].mxu0
      %8349 = vmatprep.mubr.f32.mxu0 0.0
      %8350 = vmatmul.mubr.f32.gmra.mrb[0].mxu0 %v7947
      %v8351 = vpop.f32.mrb[0].mxu0
      %v8352 = vadd.f32 %v8127, %v8351
      %v8353 = vpop.f32.mrb[0].mxu0
      %8354 = vmatprep.mubr.f32.mxu0 0.0
      %8355 = vmatmul.mubr.f32.gmra.mrb[0].mxu0 %v7950
      %v8356 = vpop.f32.mrb[0].mxu0
      %v8357 = vadd.f32 %v8132, %v8356
      %v8358 = vpop.f32.mrb[0].mxu0
      %8359 = vmatprep.mubr.f32.mxu0 0.0
      %8360 = vmatmul.mubr.f32.gmra.mrb[0].mxu0 %v7953
      %v8361 = vpop.f32.mrb[0].mxu0
      %v8362 = vadd.f32 %v8137, %v8361
      %v8363 = vpop.f32.mrb[0].mxu0
      %8364 = vmatprep.mubr.f32.mxu0 0.0
      %8365 = vmatmul.mubr.f32.gmra.mrb[0].mxu0 %v7956
      %v8366 = vpop.f32.mrb[0].mxu0
      %v8367 = vadd.f32 %v8142, %v8366
      %v8368 = vpop.f32.mrb[0].mxu0
      %8369 = vmatprep.mubr.f32.mxu0 0.0
      %8370 = vmatmul.mubr.f32.gmra.mrb[0].mxu0 %v7959
      %v8371 = vpop.f32.mrb[0].mxu0
      %v8372 = vadd.f32 %v8147, %v8371
      %v8373 = vpop.f32.mrb[0].mxu0
      %8374 = vmatprep.mubr.f32.mxu0 0.0
      %8375 = vmatmul.mubr.f32.gmra.mrb[0].mxu0 %v7962
      %v8376 = vpop.f32.mrb[0].mxu0
      %v8377 = vadd.f32 %v8152, %v8376
      %v8378 = vpop.f32.mrb[0].mxu0
      %8379 = vmatprep.mubr.f32.mxu0 0.0
      %8380 = vmatmul.mubr.f32.gmra.mrb[0].mxu0 %v7965
      %v8381 = vpop.f32.mrb[0].mxu0
      %v8382 = vadd.f32 %v8157, %v8381
      %v8383 = vpop.f32.mrb[0].mxu0
      %8384 = vmatprep.mubr.f32.mxu0 0.0
      %8385 = vmatmul.mubr.f32.gmra.mrb[0].mxu0 %v7968
      %v8386 = vpop.f32.mrb[0].mxu0
      %v8387 = vadd.f32 %v8162, %v8386
      %v8388 = vpop.f32.mrb[0].mxu0
      %8389 = vmatprep.mubr.f32.mxu0 0.0
      %8390 = vmatmul.mubr.f32.gmra.mrb[0].mxu0 %v7971
      %v8391 = vpop.f32.mrb[0].mxu0
      %v8392 = vadd.f32 %v8167, %v8391
      %v8393 = vpop.f32.mrb[0].mxu0
      %8394 = vmatprep.mubr.f32.mxu0 0.0
      %8395 = vmatmul.mubr.f32.gmra.mrb[0].mxu0 %v7974
      %v8396 = vpop.f32.mrb[0].mxu0
      %v8397 = vadd.f32 %v8172, %v8396
      %v8398 = vpop.f32.mrb[0].mxu0
      %8399 = vmatprep.mubr.f32.mxu0 0.0
      %8400 = vmatmul.mubr.f32.gmra.mrb[0].mxu0 %v7977
      %v8401 = vpop.f32.mrb[0].mxu0
      %v8402 = vadd.f32 %v8177, %v8401
      %v8403 = vpop.f32.mrb[0].mxu0
      %8404 = vmatprep.mubr.f32.mxu0 0.0
      %8405 = vmatmul.mubr.f32.gmra.mrb[0].mxu0 %v7980
      %v8406 = vpop.f32.mrb[0].mxu0
      %v8407 = vadd.f32 %v8182, %v8406
      %v8408 = vpop.f32.mrb[0].mxu0
      %8409 = vmatprep.mubr.f32.mxu0 0.0
      %8410 = vmatmul.mubr.f32.gmra.mrb[0].mxu0 %v7983
      %v8411 = vpop.f32.mrb[0].mxu0
      %v8412 = vadd.f32 %v8187, %v8411
      %v8413 = vpop.f32.mrb[0].mxu0
      %8414 = vmatprep.mubr.f32.mxu0 0.0
      %8415 = vmatmul.mubr.f32.gmra.mrb[0].mxu0 %v7986
      %v8416 = vpop.f32.mrb[0].mxu0
      %v8417 = vadd.f32 %v8192, %v8416
      %v8418 = vpop.f32.mrb[0].mxu0
      %8419 = vmatprep.mubr.f32.mxu0 0.0
      %8420 = vmatmul.mubr.f32.gmra.mrb[0].mxu0 %v7989
      %v8421 = vpop.f32.mrb[0].mxu0
      %v8422 = vadd.f32 %v8197, %v8421
      %v8423 = vpop.f32.mrb[0].mxu0
      %8424 = vmatprep.mubr.f32.mxu0 0.0
      %8425 = vmatmul.mubr.f32.gmra.mrb[0].mxu0 %v7992
      %v8426 = vpop.f32.mrb[0].mxu0
      %v8427 = vadd.f32 %v8202, %v8426
      %v8428 = vpop.f32.mrb[0].mxu0
      %8429 = vmatprep.mubr.f32.mxu0 0.0
      %8430 = vmatmul.mubr.f32.gmra.mrb[0].mxu0 %v7995
      %v8431 = vpop.f32.mrb[0].mxu0
      %v8432 = vadd.f32 %v8207, %v8431
      %v8433 = vpop.f32.mrb[0].mxu0
      %8434 = vmatprep.mubr.f32.mxu0 0.0
      %8435 = vmatmul.mubr.f32.gmra.mrb[0].mxu0 %v7998
      %v8436 = vpop.f32.mrb[0].mxu0
      %v8437 = vadd.f32 %v8212, %v8436
      %v8438 = vpop.f32.mrb[0].mxu0
      %8439 = vmatprep.mubr.f32.mxu0 0.0
      %8440 = vmatmul.mubr.f32.gmra.mrb[0].mxu0 %v8001
      %v8441 = vpop.f32.mrb[0].mxu0
      %v8442 = vadd.f32 %v8217, %v8441
      %v8443 = vpop.f32.mrb[0].mxu0
      %8444 = vmatprep.mubr.f32.mxu0 0.0
      %8445 = vmatmul.mubr.f32.gmra.mrb[0].mxu0 %v8004
      %v8446 = vpop.f32.mrb[0].mxu0
      %v8447 = vadd.f32 %v8222, %v8446
      %v8448 = vpop.f32.mrb[0].mxu0
      %8449 = vmatprep.mubr.f32.mxu0 0.0
      %8450 = vmatmul.mubr.f32.gmra.mrb[0].mxu0 %v8007
      %v8451 = vpop.f32.mrb[0].mxu0
      %v8452 = vadd.f32 %v8227, %v8451
      %v8453 = vpop.f32.mrb[0].mxu0
      %8454 = vmatprep.mubr.f32.mxu0 0.0
      %8455 = vmatmul.mubr.f32.gmra.mrb[0].mxu0 %v8010
      %v8456 = vpop.f32.mrb[0].mxu0
      %v8457 = vadd.f32 %v8232, %v8456
      %v8458 = vpop.f32.mrb[0].mxu0
      %8459 = vmatprep.mubr.f32.mxu0 0.0
      %8460 = vmatmul.mubr.f32.gmra.mrb[0].mxu0 %v8013
      %v8461 = vpop.f32.mrb[0].mxu0
      %v8462 = vadd.f32 %v8237, %v8461
      %v8463 = vpop.f32.mrb[0].mxu0
      %8464 = vdwg.mxu0
      %vm8465 = vcmp.ge.f32.partialorder %v8307, 0.0
      %vm8466 = vcmp.ge.f32.partialorder %v8312, 0.0
      %vm8467 = vcmp.ge.f32.partialorder %v8317, 0.0
      %vm8468 = vcmp.ge.f32.partialorder %v8322, 0.0
      %vm8469 = vcmp.ge.f32.partialorder %v8327, 0.0
      %vm8470 = vcmp.ge.f32.partialorder %v8332, 0.0
      %vm8471 = vcmp.ge.f32.partialorder %v8337, 0.0
      %vm8472 = vcmp.ge.f32.partialorder %v8342, 0.0
      %vm8473 = vcmp.ge.f32.partialorder %v8347, 0.0
      %vm8474 = vcmp.ge.f32.partialorder %v8352, 0.0
      %vm8475 = vcmp.ge.f32.partialorder %v8357, 0.0
      %vm8476 = vcmp.ge.f32.partialorder %v8362, 0.0
      %vm8477 = vcmp.ge.f32.partialorder %v8367, 0.0
      %vm8478 = vcmp.ge.f32.partialorder %v8372, 0.0
      %vm8479 = vcmp.ge.f32.partialorder %v8377, 0.0
      %vm8480 = vcmp.ge.f32.partialorder %v8382, 0.0
      %vm8481 = vcmp.ge.f32.partialorder %v8387, 0.0
      %vm8482 = vcmp.ge.f32.partialorder %v8392, 0.0
      %vm8483 = vcmp.ge.f32.partialorder %v8397, 0.0
      %vm8484 = vcmp.ge.f32.partialorder %v8402, 0.0
      %vm8485 = vcmp.ge.f32.partialorder %v8407, 0.0
      %vm8486 = vcmp.ge.f32.partialorder %v8412, 0.0
      %vm8487 = vcmp.ge.f32.partialorder %v8417, 0.0
      %vm8488 = vcmp.ge.f32.partialorder %v8422, 0.0
      %vm8489 = vcmp.ge.f32.partialorder %v8427, 0.0
      %vm8490 = vcmp.ge.f32.partialorder %v8432, 0.0
      %vm8491 = vcmp.ge.f32.partialorder %v8437, 0.0
      %vm8492 = vcmp.ge.f32.partialorder %v8442, 0.0
      %vm8493 = vcmp.ge.f32.partialorder %v8447, 0.0
      %vm8494 = vcmp.ge.f32.partialorder %v8452, 0.0
      %vm8495 = vcmp.ge.f32.partialorder %v8457, 0.0
      %vm8496 = vcmp.ge.f32.partialorder %v8462, 0.0
      %v8497 = vmul.f32 %v8307, 0.2
      %v8498 = vmul.f32 %v8312, 0.2
      %v8499 = vmul.f32 %v8317, 0.2
      %v8500 = vmul.f32 %v8322, 0.2
      %v8501 = vmul.f32 %v8327, 0.2
      %v8502 = vmul.f32 %v8332, 0.2
      %v8503 = vmul.f32 %v8337, 0.2
      %v8504 = vmul.f32 %v8342, 0.2
      %v8505 = vmul.f32 %v8347, 0.2
      %v8506 = vmul.f32 %v8352, 0.2
      %v8507 = vmul.f32 %v8357, 0.2
      %v8508 = vmul.f32 %v8362, 0.2
      %v8509 = vmul.f32 %v8367, 0.2
      %v8510 = vmul.f32 %v8372, 0.2
      %v8511 = vmul.f32 %v8377, 0.2
      %v8512 = vmul.f32 %v8382, 0.2
      %v8513 = vmul.f32 %v8387, 0.2
      %v8514 = vmul.f32 %v8392, 0.2
      %v8515 = vmul.f32 %v8397, 0.2
      %v8516 = vmul.f32 %v8402, 0.2
      %v8517 = vmul.f32 %v8407, 0.2
      %v8518 = vmul.f32 %v8412, 0.2
      %v8519 = vmul.f32 %v8417, 0.2
      %v8520 = vmul.f32 %v8422, 0.2
      %v8521 = vmul.f32 %v8427, 0.2
      %v8522 = vmul.f32 %v8432, 0.2
      %v8523 = vmul.f32 %v8437, 0.2
      %v8524 = vmul.f32 %v8442, 0.2
      %v8525 = vmul.f32 %v8447, 0.2
      %v8526 = vmul.f32 %v8452, 0.2
      %v8527 = vmul.f32 %v8457, 0.2
      %v8528 = vmul.f32 %v8462, 0.2
      %v8529 = vsel %vm8465, %v8307, %v8497
      %v8530 = vsel %vm8466, %v8312, %v8498
      %v8531 = vsel %vm8467, %v8317, %v8499
      %v8532 = vsel %vm8468, %v8322, %v8500
      %v8533 = vsel %vm8469, %v8327, %v8501
      %v8534 = vsel %vm8470, %v8332, %v8502
      %v8535 = vsel %vm8471, %v8337, %v8503
      %v8536 = vsel %vm8472, %v8342, %v8504
      %v8537 = vsel %vm8473, %v8347, %v8505
      %v8538 = vsel %vm8474, %v8352, %v8506
      %v8539 = vsel %vm8475, %v8357, %v8507
      %v8540 = vsel %vm8476, %v8362, %v8508
      %v8541 = vsel %vm8477, %v8367, %v8509
      %v8542 = vsel %vm8478, %v8372, %v8510
      %v8543 = vsel %vm8479, %v8377, %v8511
      %v8544 = vsel %vm8480, %v8382, %v8512
      %v8545 = vsel %vm8481, %v8387, %v8513
      %v8546 = vsel %vm8482, %v8392, %v8514
      %v8547 = vsel %vm8483, %v8397, %v8515
      %v8548 = vsel %vm8484, %v8402, %v8516
      %v8549 = vsel %vm8485, %v8407, %v8517
      %v8550 = vsel %vm8486, %v8412, %v8518
      %v8551 = vsel %vm8487, %v8417, %v8519
      %v8552 = vsel %vm8488, %v8422, %v8520
      %v8553 = vsel %vm8489, %v8427, %v8521
      %v8554 = vsel %vm8490, %v8432, %v8522
      %v8555 = vsel %vm8491, %v8437, %v8523
      %v8556 = vsel %vm8492, %v8442, %v8524
      %v8557 = vsel %vm8493, %v8447, %v8525
      %v8558 = vsel %vm8494, %v8452, %v8526
      %v8559 = vsel %vm8495, %v8457, %v8527
      %v8560 = vsel %vm8496, %v8462, %v8528
      %v8593 = vrot.slane %v8529, 7
      %v8594 = vrot.slane %v8530, 7
      %v8595 = vsel %vm452, %v8593, %v8594
      %v8596 = vrot.slane %v8531, 7
      %v8597 = vrot.slane %v8532, 7
      %v8598 = vsel %vm452, %v8596, %v8597
      %v8599 = vrot.slane %v8533, 7
      %v8600 = vrot.slane %v8534, 7
      %v8601 = vsel %vm452, %v8599, %v8600
      %v8602 = vrot.slane %v8535, 7
      %v8603 = vrot.slane %v8536, 7
      %v8604 = vsel %vm452, %v8602, %v8603
      %v8605 = vrot.slane %v8537, 7
      %v8606 = vrot.slane %v8538, 7
      %v8607 = vsel %vm452, %v8605, %v8606
      %v8608 = vrot.slane %v8539, 7
      %v8609 = vrot.slane %v8540, 7
      %v8610 = vsel %vm452, %v8608, %v8609
      %v8611 = vrot.slane %v8541, 7
      %v8612 = vrot.slane %v8542, 7
      %v8613 = vsel %vm452, %v8611, %v8612
      %v8614 = vrot.slane %v8543, 7
      %v8615 = vrot.slane %v8544, 7
      %v8616 = vsel %vm452, %v8614, %v8615
      %v8617 = vrot.slane %v8545, 7
      %v8618 = vrot.slane %v8546, 7
      %v8619 = vsel %vm452, %v8617, %v8618
      %v8620 = vrot.slane %v8547, 7
      %v8621 = vrot.slane %v8548, 7
      %v8622 = vsel %vm452, %v8620, %v8621
      %v8623 = vrot.slane %v8549, 7
      %v8624 = vrot.slane %v8550, 7
      %v8625 = vsel %vm452, %v8623, %v8624
      %v8626 = vrot.slane %v8551, 7
      %v8627 = vrot.slane %v8552, 7
      %v8628 = vsel %vm452, %v8626, %v8627
      %v8629 = vrot.slane %v8553, 7
      %v8630 = vrot.slane %v8554, 7
      %v8631 = vsel %vm452, %v8629, %v8630
      %v8632 = vrot.slane %v8555, 7
      %v8633 = vrot.slane %v8556, 7
      %v8634 = vsel %vm452, %v8632, %v8633
      %v8635 = vrot.slane %v8557, 7
      %v8636 = vrot.slane %v8558, 7
      %v8637 = vsel %vm452, %v8635, %v8636
      %v8638 = vrot.slane %v8559, 7
      %v8639 = vrot.slane %v8560, 7
      %v8640 = vsel %vm452, %v8638, %v8639
      %v8673 = vsel %vm452, 0.0, %v8593
      %v8674 = vsel %vm452, 0.0, %v8596
      %v8675 = vsel %vm452, 0.0, %v8599
      %v8676 = vsel %vm452, 0.0, %v8602
      %v8677 = vsel %vm452, 0.0, %v8605
      %v8678 = vsel %vm452, 0.0, %v8608
      %v8679 = vsel %vm452, 0.0, %v8611
      %v8680 = vsel %vm452, 0.0, %v8614
      %v8681 = vsel %vm452, 0.0, %v8617
      %v8682 = vsel %vm452, 0.0, %v8620
      %v8683 = vsel %vm452, 0.0, %v8623
      %v8684 = vsel %vm452, 0.0, %v8626
      %v8685 = vsel %vm452, 0.0, %v8629
      %v8686 = vsel %vm452, 0.0, %v8632
      %v8687 = vsel %vm452, 0.0, %v8635
      %v8688 = vsel %vm452, 0.0, %v8638
      %v8689 = vsel %vm452, %v8594, 0.0
      %v8690 = vsel %vm452, %v8597, 0.0
      %v8691 = vsel %vm452, %v8600, 0.0
      %v8692 = vsel %vm452, %v8603, 0.0
      %v8693 = vsel %vm452, %v8606, 0.0
      %v8694 = vsel %vm452, %v8609, 0.0
      %v8695 = vsel %vm452, %v8612, 0.0
      %v8696 = vsel %vm452, %v8615, 0.0
      %v8697 = vsel %vm452, %v8618, 0.0
      %v8698 = vsel %vm452, %v8621, 0.0
      %v8699 = vsel %vm452, %v8624, 0.0
      %v8700 = vsel %vm452, %v8627, 0.0
      %v8701 = vsel %vm452, %v8630, 0.0
      %v8702 = vsel %vm452, %v8633, 0.0
      %v8703 = vsel %vm452, %v8636, 0.0
      %v8704 = vsel %vm452, %v8639, 0.0
      %8737 = vrot.lane.b32.xlu0 %v553, 40
      %v8738 = vpop.permute.xlu0 %8737
      %8739 = vrot.lane.b32.xlu0 %v454, 40
      %v8740 = vpop.permute.xlu0 %8739
      %8741 = vrot.lane.b32.xlu0 %v570, 40
      %v8742 = vpop.permute.xlu0 %8741
      %8743 = vrot.lane.b32.xlu0 %v8673, 40
      %v8744 = vpop.permute.xlu0 %8743
      %8745 = vrot.lane.b32.xlu0 %v8595, 40
      %v8746 = vpop.permute.xlu0 %8745
      %8747 = vrot.lane.b32.xlu0 %v8689, 40
      %v8748 = vpop.permute.xlu0 %8747
      %8749 = vrot.lane.b32.xlu0 %v8674, 40
      %v8750 = vpop.permute.xlu0 %8749
      %8751 = vrot.lane.b32.xlu0 %v8598, 40
      %v8752 = vpop.permute.xlu0 %8751
      %8753 = vrot.lane.b32.xlu0 %v8690, 40
      %v8754 = vpop.permute.xlu0 %8753
      %8755 = vrot.lane.b32.xlu0 %v8675, 40
      %v8756 = vpop.permute.xlu0 %8755
      %8757 = vrot.lane.b32.xlu0 %v8601, 40
      %v8758 = vpop.permute.xlu0 %8757
      %8759 = vrot.lane.b32.xlu0 %v8691, 40
      %v8760 = vpop.permute.xlu0 %8759
      %8761 = vrot.lane.b32.xlu0 %v8676, 40
      %v8762 = vpop.permute.xlu0 %8761
      %8763 = vrot.lane.b32.xlu0 %v8604, 40
      %v8764 = vpop.permute.xlu0 %8763
      %8765 = vrot.lane.b32.xlu0 %v8692, 40
      %v8766 = vpop.permute.xlu0 %8765
      %8767 = vrot.lane.b32.xlu0 %v8677, 40
      %v8768 = vpop.permute.xlu0 %8767
      %8769 = vrot.lane.b32.xlu0 %v8607, 40
      %v8770 = vpop.permute.xlu0 %8769
      %8771 = vrot.lane.b32.xlu0 %v8693, 40
      %v8772 = vpop.permute.xlu0 %8771
      %8773 = vrot.lane.b32.xlu0 %v8678, 40
      %v8774 = vpop.permute.xlu0 %8773
      %8775 = vrot.lane.b32.xlu0 %v8610, 40
      %v8776 = vpop.permute.xlu0 %8775
      %8777 = vrot.lane.b32.xlu0 %v8694, 40
      %v8778 = vpop.permute.xlu0 %8777
      %8779 = vrot.lane.b32.xlu0 %v8679, 40
      %v8780 = vpop.permute.xlu0 %8779
      %8781 = vrot.lane.b32.xlu0 %v8613, 40
      %v8782 = vpop.permute.xlu0 %8781
      %8783 = vrot.lane.b32.xlu0 %v8695, 40
      %v8784 = vpop.permute.xlu0 %8783
      %8785 = vrot.lane.b32.xlu0 %v8680, 40
      %v8786 = vpop.permute.xlu0 %8785
      %8787 = vrot.lane.b32.xlu0 %v8616, 40
      %v8788 = vpop.permute.xlu0 %8787
      %8789 = vrot.lane.b32.xlu0 %v8696, 40
      %v8790 = vpop.permute.xlu0 %8789
      %8791 = vrot.lane.b32.xlu0 %v8681, 40
      %v8792 = vpop.permute.xlu0 %8791
      %8793 = vrot.lane.b32.xlu0 %v8619, 40
      %v8794 = vpop.permute.xlu0 %8793
      %8795 = vrot.lane.b32.xlu0 %v8697, 40
      %v8796 = vpop.permute.xlu0 %8795
      %8797 = vrot.lane.b32.xlu0 %v8682, 40
      %v8798 = vpop.permute.xlu0 %8797
      %8799 = vrot.lane.b32.xlu0 %v8622, 40
      %v8800 = vpop.permute.xlu0 %8799
      %8801 = vrot.lane.b32.xlu0 %v8698, 40
      %v8802 = vpop.permute.xlu0 %8801
      %8803 = vrot.lane.b32.xlu0 %v8683, 40
      %v8804 = vpop.permute.xlu0 %8803
      %8805 = vrot.lane.b32.xlu0 %v8625, 40
      %v8806 = vpop.permute.xlu0 %8805
      %8807 = vrot.lane.b32.xlu0 %v8699, 40
      %v8808 = vpop.permute.xlu0 %8807
      %8809 = vrot.lane.b32.xlu0 %v8684, 40
      %v8810 = vpop.permute.xlu0 %8809
      %8811 = vrot.lane.b32.xlu0 %v8628, 40
      %v8812 = vpop.permute.xlu0 %8811
      %8813 = vrot.lane.b32.xlu0 %v8700, 40
      %v8814 = vpop.permute.xlu0 %8813
      %8815 = vrot.lane.b32.xlu0 %v8685, 40
      %v8816 = vpop.permute.xlu0 %8815
      %8817 = vrot.lane.b32.xlu0 %v8631, 40
      %v8818 = vpop.permute.xlu0 %8817
      %8819 = vrot.lane.b32.xlu0 %v8701, 40
      %v8820 = vpop.permute.xlu0 %8819
      %8821 = vrot.lane.b32.xlu0 %v8686, 40
      %v8822 = vpop.permute.xlu0 %8821
      %8823 = vrot.lane.b32.xlu0 %v8634, 40
      %v8824 = vpop.permute.xlu0 %8823
      %8825 = vrot.lane.b32.xlu0 %v8702, 40
      %v8826 = vpop.permute.xlu0 %8825
      %8827 = vrot.lane.b32.xlu0 %v8687, 40
      %v8828 = vpop.permute.xlu0 %8827
      %8829 = vrot.lane.b32.xlu0 %v8637, 40
      %v8830 = vpop.permute.xlu0 %8829
      %8831 = vrot.lane.b32.xlu0 %v8703, 40
      %v8832 = vpop.permute.xlu0 %8831
      %8833 = vrot.lane.b32.xlu0 %v8688, 40
      %v8834 = vpop.permute.xlu0 %8833
      %8835 = vrot.lane.b32.xlu0 %v8640, 40
      %v8836 = vpop.permute.xlu0 %8835
      %8837 = vrot.lane.b32.xlu0 %v8704, 40
      %v8838 = vpop.permute.xlu0 %8837
      %v8890 = vsel %vm3670, %v6570, %v8738
      %v8891 = vsel %vm3670, %v6571, %v8740
      %v8892 = vsel %vm3670, %v6572, %v8742
      %v8893 = vsel %vm3670, %v6573, %v8744
      %v8894 = vsel %vm3670, %v6574, %v8746
      %v8895 = vsel %vm3670, %v6575, %v8748
      %v8896 = vsel %vm3670, %v6576, %v8750
      %v8897 = vsel %vm3670, %v6577, %v8752
      %v8898 = vsel %vm3670, %v6578, %v8754
      %v8899 = vsel %vm3670, %v6579, %v8756
      %v8900 = vsel %vm3670, %v6580, %v8758
      %v8901 = vsel %vm3670, %v6581, %v8760
      %v8902 = vsel %vm3670, %v6582, %v8762
      %v8903 = vsel %vm3670, %v6583, %v8764
      %v8904 = vsel %vm3670, %v6584, %v8766
      %v8905 = vsel %vm3670, %v6585, %v8768
      %v8906 = vsel %vm3670, %v6586, %v8770
      %v8907 = vsel %vm3670, %v6587, %v8772
      %v8908 = vsel %vm3670, %v6588, %v8774
      %v8909 = vsel %vm3670, %v6589, %v8776
      %v8910 = vsel %vm3670, %v6590, %v8778
      %v8911 = vsel %vm3670, %v6591, %v8780
      %v8912 = vsel %vm3670, %v6592, %v8782
      %v8913 = vsel %vm3670, %v6593, %v8784
      %v8914 = vsel %vm3670, %v6594, %v8786
      %v8915 = vsel %vm3670, %v6595, %v8788
      %v8916 = vsel %vm3670, %v6596, %v8790
      %v8917 = vsel %vm3670, %v6597, %v8792
      %v8918 = vsel %vm3670, %v6598, %v8794
      %v8919 = vsel %vm3670, %v6599, %v8796
      %v8920 = vsel %vm3670, %v6600, %v8798
      %v8921 = vsel %vm3670, %v6601, %v8800
      %v8922 = vsel %vm3670, %v6602, %v8802
      %v8923 = vsel %vm3670, %v6603, %v8804
      %v8924 = vsel %vm3670, %v6604, %v8806
      %v8925 = vsel %vm3670, %v6605, %v8808
      %v8926 = vsel %vm3670, %v6606, %v8810
      %v8927 = vsel %vm3670, %v6607, %v8812
      %v8928 = vsel %vm3670, %v6608, %v8814
      %v8929 = vsel %vm3670, %v6609, %v8816
      %v8930 = vsel %vm3670, %v6610, %v8818
      %v8931 = vsel %vm3670, %v6611, %v8820
      %v8932 = vsel %vm3670, %v6612, %v8822
      %v8933 = vsel %vm3670, %v6613, %v8824
      %v8934 = vsel %vm3670, %v6614, %v8826
      %v8935 = vsel %vm3670, %v6615, %v8828
      %v8936 = vsel %vm3670, %v6616, %v8830
      %v8937 = vsel %vm3670, %v6617, %v8832
      %v8938 = vsel %vm3670, %v6618, %v8834
      %v8939 = vsel %vm3670, %v6619, %v8836
      %v8940 = vsel %vm3670, %v6620, %v8838
      %v8989 = vrot.slane %v8890, 1
      %v8990 = vrot.slane %v8891, 1
      %v8991 = vsel %vm619, %v8989, %v8990
      %v8992 = vrot.slane %v8892, 1
      %v8993 = vsel %vm619, %v8990, %v8992
      %v8994 = vrot.slane %v8893, 1
      %v8995 = vrot.slane %v8894, 1
      %v8996 = vsel %vm619, %v8994, %v8995
      %v8997 = vrot.slane %v8895, 1
      %v8998 = vsel %vm619, %v8995, %v8997
      %v8999 = vrot.slane %v8896, 1
      %v9000 = vrot.slane %v8897, 1
      %v9001 = vsel %vm619, %v8999, %v9000
      %v9002 = vrot.slane %v8898, 1
      %v9003 = vsel %vm619, %v9000, %v9002
      %v9004 = vrot.slane %v8899, 1
      %v9005 = vrot.slane %v8900, 1
      %v9006 = vsel %vm619, %v9004, %v9005
      %v9007 = vrot.slane %v8901, 1
      %v9008 = vsel %vm619, %v9005, %v9007
      %v9009 = vrot.slane %v8902, 1
      %v9010 = vrot.slane %v8903, 1
      %v9011 = vsel %vm619, %v9009, %v9010
      %v9012 = vrot.slane %v8904, 1
      %v9013 = vsel %vm619, %v9010, %v9012
      %v9014 = vrot.slane %v8905, 1
      %v9015 = vrot.slane %v8906, 1
      %v9016 = vsel %vm619, %v9014, %v9015
      %v9017 = vrot.slane %v8907, 1
      %v9018 = vsel %vm619, %v9015, %v9017
      %v9019 = vrot.slane %v8908, 1
      %v9020 = vrot.slane %v8909, 1
      %v9021 = vsel %vm619, %v9019, %v9020
      %v9022 = vrot.slane %v8910, 1
      %v9023 = vsel %vm619, %v9020, %v9022
      %v9024 = vrot.slane %v8911, 1
      %v9025 = vrot.slane %v8912, 1
      %v9026 = vsel %vm619, %v9024, %v9025
      %v9027 = vrot.slane %v8913, 1
      %v9028 = vsel %vm619, %v9025, %v9027
      %v9029 = vrot.slane %v8914, 1
      %v9030 = vrot.slane %v8915, 1
      %v9031 = vsel %vm619, %v9029, %v9030
      %v9032 = vrot.slane %v8916, 1
      %v9033 = vsel %vm619, %v9030, %v9032
      %v9034 = vrot.slane %v8917, 1
      %v9035 = vrot.slane %v8918, 1
      %v9036 = vsel %vm619, %v9034, %v9035
      %v9037 = vrot.slane %v8919, 1
      %v9038 = vsel %vm619, %v9035, %v9037
      %v9039 = vrot.slane %v8920, 1
      %v9040 = vrot.slane %v8921, 1
      %v9041 = vsel %vm619, %v9039, %v9040
      %v9042 = vrot.slane %v8922, 1
      %v9043 = vsel %vm619, %v9040, %v9042
      %v9044 = vrot.slane %v8923, 1
      %v9045 = vrot.slane %v8924, 1
      %v9046 = vsel %vm619, %v9044, %v9045
      %v9047 = vrot.slane %v8925, 1
      %v9048 = vsel %vm619, %v9045, %v9047
      %v9049 = vrot.slane %v8926, 1
      %v9050 = vrot.slane %v8927, 1
      %v9051 = vsel %vm619, %v9049, %v9050
      %v9052 = vrot.slane %v8928, 1
      %v9053 = vsel %vm619, %v9050, %v9052
      %v9054 = vrot.slane %v8929, 1
      %v9055 = vrot.slane %v8930, 1
      %v9056 = vsel %vm619, %v9054, %v9055
      %v9057 = vrot.slane %v8931, 1
      %v9058 = vsel %vm619, %v9055, %v9057
      %v9059 = vrot.slane %v8932, 1
      %v9060 = vrot.slane %v8933, 1
      %v9061 = vsel %vm619, %v9059, %v9060
      %v9062 = vrot.slane %v8934, 1
      %v9063 = vsel %vm619, %v9060, %v9062
      %v9064 = vrot.slane %v8935, 1
      %v9065 = vrot.slane %v8936, 1
      %v9066 = vsel %vm619, %v9064, %v9065
      %v9067 = vrot.slane %v8937, 1
      %v9068 = vsel %vm619, %v9065, %v9067
      %v9069 = vrot.slane %v8890, 2
      %v9070 = vrot.slane %v8891, 2
      %v9071 = vsel %vm700, %v9069, %v9070
      %v9072 = vrot.slane %v8892, 2
      %v9073 = vsel %vm700, %v9070, %v9072
      %v9074 = vrot.slane %v8893, 2
      %v9075 = vrot.slane %v8894, 2
      %v9076 = vsel %vm700, %v9074, %v9075
      %v9077 = vrot.slane %v8895, 2
      %v9078 = vsel %vm700, %v9075, %v9077
      %v9079 = vrot.slane %v8896, 2
      %v9080 = vrot.slane %v8897, 2
      %v9081 = vsel %vm700, %v9079, %v9080
      %v9082 = vrot.slane %v8898, 2
      %v9083 = vsel %vm700, %v9080, %v9082
      %v9084 = vrot.slane %v8899, 2
      %v9085 = vrot.slane %v8900, 2
      %v9086 = vsel %vm700, %v9084, %v9085
      %v9087 = vrot.slane %v8901, 2
      %v9088 = vsel %vm700, %v9085, %v9087
      %v9089 = vrot.slane %v8902, 2
      %v9090 = vrot.slane %v8903, 2
      %v9091 = vsel %vm700, %v9089, %v9090
      %v9092 = vrot.slane %v8904, 2
      %v9093 = vsel %vm700, %v9090, %v9092
      %v9094 = vrot.slane %v8905, 2
      %v9095 = vrot.slane %v8906, 2
      %v9096 = vsel %vm700, %v9094, %v9095
      %v9097 = vrot.slane %v8907, 2
      %v9098 = vsel %vm700, %v9095, %v9097
      %v9099 = vrot.slane %v8908, 2
      %v9100 = vrot.slane %v8909, 2
      %v9101 = vsel %vm700, %v9099, %v9100
      %v9102 = vrot.slane %v8910, 2
      %v9103 = vsel %vm700, %v9100, %v9102
      %v9104 = vrot.slane %v8911, 2
      %v9105 = vrot.slane %v8912, 2
      %v9106 = vsel %vm700, %v9104, %v9105
      %v9107 = vrot.slane %v8913, 2
      %v9108 = vsel %vm700, %v9105, %v9107
      %v9109 = vrot.slane %v8914, 2
      %v9110 = vrot.slane %v8915, 2
      %v9111 = vsel %vm700, %v9109, %v9110
      %v9112 = vrot.slane %v8916, 2
      %v9113 = vsel %vm700, %v9110, %v9112
      %v9114 = vrot.slane %v8917, 2
      %v9115 = vrot.slane %v8918, 2
      %v9116 = vsel %vm700, %v9114, %v9115
      %v9117 = vrot.slane %v8919, 2
      %v9118 = vsel %vm700, %v9115, %v9117
      %v9119 = vrot.slane %v8920, 2
      %v9120 = vrot.slane %v8921, 2
      %v9121 = vsel %vm700, %v9119, %v9120
      %v9122 = vrot.slane %v8922, 2
      %v9123 = vsel %vm700, %v9120, %v9122
      %v9124 = vrot.slane %v8923, 2
      %v9125 = vrot.slane %v8924, 2
      %v9126 = vsel %vm700, %v9124, %v9125
      %v9127 = vrot.slane %v8925, 2
      %v9128 = vsel %vm700, %v9125, %v9127
      %v9129 = vrot.slane %v8926, 2
      %v9130 = vrot.slane %v8927, 2
      %v9131 = vsel %vm700, %v9129, %v9130
      %v9132 = vrot.slane %v8928, 2
      %v9133 = vsel %vm700, %v9130, %v9132
      %v9134 = vrot.slane %v8929, 2
      %v9135 = vrot.slane %v8930, 2
      %v9136 = vsel %vm700, %v9134, %v9135
      %v9137 = vrot.slane %v8931, 2
      %v9138 = vsel %vm700, %v9135, %v9137
      %v9139 = vrot.slane %v8932, 2
      %v9140 = vrot.slane %v8933, 2
      %v9141 = vsel %vm700, %v9139, %v9140
      %v9142 = vrot.slane %v8934, 2
      %v9143 = vsel %vm700, %v9140, %v9142
      %v9144 = vrot.slane %v8935, 2
      %v9145 = vrot.slane %v8936, 2
      %v9146 = vsel %vm700, %v9144, %v9145
      %v9147 = vrot.slane %v8937, 2
      %v9148 = vsel %vm700, %v9145, %v9147
      %v9152 = vrot.slane %v8938, 1
      %v9153 = vrot.slane %v8939, 1
      %v9154 = vsel %vm619, %v9152, %v9153
      %v9155 = vrot.slane %v8940, 1
      %v9156 = vsel %vm619, %v9153, %v9155
      %v9157 = vrot.slane %v8938, 2
      %v9158 = vrot.slane %v8939, 2
      %v9159 = vsel %vm700, %v9157, %v9158
      %v9160 = vrot.slane %v8940, 2
      %v9161 = vsel %vm700, %v9158, %v9160
      %9162 = vrot.lane.b32.xlu0 %v8991, 48
      %v9163 = vpop.permute.xlu0 %9162
      %9164 = vrot.lane.b32.xlu0 %v8993, 48
      %v9165 = vpop.permute.xlu0 %9164
      %9166 = vrot.lane.b32.xlu0 %v8996, 48
      %v9167 = vpop.permute.xlu0 %9166
      %9168 = vrot.lane.b32.xlu0 %v8998, 48
      %v9169 = vpop.permute.xlu0 %9168
      %9170 = vrot.lane.b32.xlu0 %v9001, 48
      %v9171 = vpop.permute.xlu0 %9170
      %9172 = vrot.lane.b32.xlu0 %v9003, 48
      %v9173 = vpop.permute.xlu0 %9172
      %9174 = vrot.lane.b32.xlu0 %v9006, 48
      %v9175 = vpop.permute.xlu0 %9174
      %9176 = vrot.lane.b32.xlu0 %v9008, 48
      %v9177 = vpop.permute.xlu0 %9176
      %9178 = vrot.lane.b32.xlu0 %v9011, 48
      %v9179 = vpop.permute.xlu0 %9178
      %9180 = vrot.lane.b32.xlu0 %v9013, 48
      %v9181 = vpop.permute.xlu0 %9180
      %9182 = vrot.lane.b32.xlu0 %v9016, 48
      %v9183 = vpop.permute.xlu0 %9182
      %9184 = vrot.lane.b32.xlu0 %v9018, 48
      %v9185 = vpop.permute.xlu0 %9184
      %9186 = vrot.lane.b32.xlu0 %v9021, 48
      %v9187 = vpop.permute.xlu0 %9186
      %9188 = vrot.lane.b32.xlu0 %v9023, 48
      %v9189 = vpop.permute.xlu0 %9188
      %9190 = vrot.lane.b32.xlu0 %v9026, 48
      %v9191 = vpop.permute.xlu0 %9190
      %9192 = vrot.lane.b32.xlu0 %v9028, 48
      %v9193 = vpop.permute.xlu0 %9192
      %9194 = vrot.lane.b32.xlu0 %v9031, 48
      %v9195 = vpop.permute.xlu0 %9194
      %9196 = vrot.lane.b32.xlu0 %v9033, 48
      %v9197 = vpop.permute.xlu0 %9196
      %9198 = vrot.lane.b32.xlu0 %v9036, 48
      %v9199 = vpop.permute.xlu0 %9198
      %9200 = vrot.lane.b32.xlu0 %v9038, 48
      %v9201 = vpop.permute.xlu0 %9200
      %9202 = vrot.lane.b32.xlu0 %v9041, 48
      %v9203 = vpop.permute.xlu0 %9202
      %9204 = vrot.lane.b32.xlu0 %v9043, 48
      %v9205 = vpop.permute.xlu0 %9204
      %9206 = vrot.lane.b32.xlu0 %v9046, 48
      %v9207 = vpop.permute.xlu0 %9206
      %9208 = vrot.lane.b32.xlu0 %v9048, 48
      %v9209 = vpop.permute.xlu0 %9208
      %9210 = vrot.lane.b32.xlu0 %v9051, 48
      %v9211 = vpop.permute.xlu0 %9210
      %9212 = vrot.lane.b32.xlu0 %v9053, 48
      %v9213 = vpop.permute.xlu0 %9212
      %9214 = vrot.lane.b32.xlu0 %v9056, 48
      %v9215 = vpop.permute.xlu0 %9214
      %9216 = vrot.lane.b32.xlu0 %v9058, 48
      %v9217 = vpop.permute.xlu0 %9216
      %9218 = vrot.lane.b32.xlu0 %v9061, 48
      %v9219 = vpop.permute.xlu0 %9218
      %9220 = vrot.lane.b32.xlu0 %v9063, 48
      %v9221 = vpop.permute.xlu0 %9220
      %9222 = vrot.lane.b32.xlu0 %v9066, 48
      %v9223 = vpop.permute.xlu0 %9222
      %9224 = vrot.lane.b32.xlu0 %v9068, 48
      %v9225 = vpop.permute.xlu0 %9224
      %9258 = vrot.lane.b32.xlu0 %v9071, 96
      %v9259 = vpop.permute.xlu0 %9258
      %9260 = vrot.lane.b32.xlu0 %v9073, 96
      %v9261 = vpop.permute.xlu0 %9260
      %9262 = vrot.lane.b32.xlu0 %v9076, 96
      %v9263 = vpop.permute.xlu0 %9262
      %9264 = vrot.lane.b32.xlu0 %v9078, 96
      %v9265 = vpop.permute.xlu0 %9264
      %9266 = vrot.lane.b32.xlu0 %v9081, 96
      %v9267 = vpop.permute.xlu0 %9266
      %9268 = vrot.lane.b32.xlu0 %v9083, 96
      %v9269 = vpop.permute.xlu0 %9268
      %9270 = vrot.lane.b32.xlu0 %v9086, 96
      %v9271 = vpop.permute.xlu0 %9270
      %9272 = vrot.lane.b32.xlu0 %v9088, 96
      %v9273 = vpop.permute.xlu0 %9272
      %9274 = vrot.lane.b32.xlu0 %v9091, 96
      %v9275 = vpop.permute.xlu0 %9274
      %9276 = vrot.lane.b32.xlu0 %v9093, 96
      %v9277 = vpop.permute.xlu0 %9276
      %9278 = vrot.lane.b32.xlu0 %v9096, 96
      %v9279 = vpop.permute.xlu0 %9278
      %9280 = vrot.lane.b32.xlu0 %v9098, 96
      %v9281 = vpop.permute.xlu0 %9280
      %9282 = vrot.lane.b32.xlu0 %v9101, 96
      %v9283 = vpop.permute.xlu0 %9282
      %9284 = vrot.lane.b32.xlu0 %v9103, 96
      %v9285 = vpop.permute.xlu0 %9284
      %9286 = vrot.lane.b32.xlu0 %v9106, 96
      %v9287 = vpop.permute.xlu0 %9286
      %9288 = vrot.lane.b32.xlu0 %v9108, 96
      %v9289 = vpop.permute.xlu0 %9288
      %9290 = vrot.lane.b32.xlu0 %v9111, 96
      %v9291 = vpop.permute.xlu0 %9290
      %9292 = vrot.lane.b32.xlu0 %v9113, 96
      %v9293 = vpop.permute.xlu0 %9292
      %9294 = vrot.lane.b32.xlu0 %v9116, 96
      %v9295 = vpop.permute.xlu0 %9294
      %9296 = vrot.lane.b32.xlu0 %v9118, 96
      %v9297 = vpop.permute.xlu0 %9296
      %9298 = vrot.lane.b32.xlu0 %v9121, 96
      %v9299 = vpop.permute.xlu0 %9298
      %9300 = vrot.lane.b32.xlu0 %v9123, 96
      %v9301 = vpop.permute.xlu0 %9300
      %9302 = vrot.lane.b32.xlu0 %v9126, 96
      %v9303 = vpop.permute.xlu0 %9302
      %9304 = vrot.lane.b32.xlu0 %v9128, 96
      %v9305 = vpop.permute.xlu0 %9304
      %9306 = vrot.lane.b32.xlu0 %v9131, 96
      %v9307 = vpop.permute.xlu0 %9306
      %9308 = vrot.lane.b32.xlu0 %v9133, 96
      %v9309 = vpop.permute.xlu0 %9308
      %9310 = vrot.lane.b32.xlu0 %v9136, 96
      %v9311 = vpop.permute.xlu0 %9310
      %9312 = vrot.lane.b32.xlu0 %v9138, 96
      %v9313 = vpop.permute.xlu0 %9312
      %9314 = vrot.lane.b32.xlu0 %v9141, 96
      %v9315 = vpop.permute.xlu0 %9314
      %9316 = vrot.lane.b32.xlu0 %v9143, 96
      %v9317 = vpop.permute.xlu0 %9316
      %9318 = vrot.lane.b32.xlu0 %v9146, 96
      %v9319 = vpop.permute.xlu0 %9318
      %9320 = vrot.lane.b32.xlu0 %v9148, 96
      %v9321 = vpop.permute.xlu0 %9320
      %9354 = vrot.lane.b32.xlu0 %v8893, 16
      %v9355 = vpop.permute.xlu0 %9354
      %9356 = vrot.lane.b32.xlu0 %v8894, 16
      %v9357 = vpop.permute.xlu0 %9356
      %9358 = vrot.lane.b32.xlu0 %v8896, 16
      %v9359 = vpop.permute.xlu0 %9358
      %9360 = vrot.lane.b32.xlu0 %v8897, 16
      %v9361 = vpop.permute.xlu0 %9360
      %9362 = vrot.lane.b32.xlu0 %v8899, 16
      %v9363 = vpop.permute.xlu0 %9362
      %9364 = vrot.lane.b32.xlu0 %v8900, 16
      %v9365 = vpop.permute.xlu0 %9364
      %9366 = vrot.lane.b32.xlu0 %v8902, 16
      %v9367 = vpop.permute.xlu0 %9366
      %9368 = vrot.lane.b32.xlu0 %v8903, 16
      %v9369 = vpop.permute.xlu0 %9368
      %9370 = vrot.lane.b32.xlu0 %v8905, 16
      %v9371 = vpop.permute.xlu0 %9370
      %9372 = vrot.lane.b32.xlu0 %v8906, 16
      %v9373 = vpop.permute.xlu0 %9372
      %9374 = vrot.lane.b32.xlu0 %v8908, 16
      %v9375 = vpop.permute.xlu0 %9374
      %9376 = vrot.lane.b32.xlu0 %v8909, 16
      %v9377 = vpop.permute.xlu0 %9376
      %9378 = vrot.lane.b32.xlu0 %v8911, 16
      %v9379 = vpop.permute.xlu0 %9378
      %9380 = vrot.lane.b32.xlu0 %v8912, 16
      %v9381 = vpop.permute.xlu0 %9380
      %9382 = vrot.lane.b32.xlu0 %v8914, 16
      %v9383 = vpop.permute.xlu0 %9382
      %9384 = vrot.lane.b32.xlu0 %v8915, 16
      %v9385 = vpop.permute.xlu0 %9384
      %9386 = vrot.lane.b32.xlu0 %v8917, 16
      %v9387 = vpop.permute.xlu0 %9386
      %9388 = vrot.lane.b32.xlu0 %v8918, 16
      %v9389 = vpop.permute.xlu0 %9388
      %9390 = vrot.lane.b32.xlu0 %v8920, 16
      %v9391 = vpop.permute.xlu0 %9390
      %9392 = vrot.lane.b32.xlu0 %v8921, 16
      %v9393 = vpop.permute.xlu0 %9392
      %9394 = vrot.lane.b32.xlu0 %v8923, 16
      %v9395 = vpop.permute.xlu0 %9394
      %9396 = vrot.lane.b32.xlu0 %v8924, 16
      %v9397 = vpop.permute.xlu0 %9396
      %9398 = vrot.lane.b32.xlu0 %v8926, 16
      %v9399 = vpop.permute.xlu0 %9398
      %9400 = vrot.lane.b32.xlu0 %v8927, 16
      %v9401 = vpop.permute.xlu0 %9400
      %9402 = vrot.lane.b32.xlu0 %v8929, 16
      %v9403 = vpop.permute.xlu0 %9402
      %9404 = vrot.lane.b32.xlu0 %v8930, 16
      %v9405 = vpop.permute.xlu0 %9404
      %9406 = vrot.lane.b32.xlu0 %v8932, 16
      %v9407 = vpop.permute.xlu0 %9406
      %9408 = vrot.lane.b32.xlu0 %v8933, 16
      %v9409 = vpop.permute.xlu0 %9408
      %9410 = vrot.lane.b32.xlu0 %v8935, 16
      %v9411 = vpop.permute.xlu0 %9410
      %9412 = vrot.lane.b32.xlu0 %v8936, 16
      %v9413 = vpop.permute.xlu0 %9412
      %9414 = vrot.lane.b32.xlu0 %v8938, 16
      %v9415 = vpop.permute.xlu0 %9414
      %9416 = vrot.lane.b32.xlu0 %v8939, 16
      %v9417 = vpop.permute.xlu0 %9416
      %9450 = vrot.lane.b32.xlu0 %v8996, 64
      %v9451 = vpop.permute.xlu0 %9450
      %9452 = vrot.lane.b32.xlu0 %v8998, 64
      %v9453 = vpop.permute.xlu0 %9452
      %9454 = vrot.lane.b32.xlu0 %v9001, 64
      %v9455 = vpop.permute.xlu0 %9454
      %9456 = vrot.lane.b32.xlu0 %v9003, 64
      %v9457 = vpop.permute.xlu0 %9456
      %9458 = vrot.lane.b32.xlu0 %v9006, 64
      %v9459 = vpop.permute.xlu0 %9458
      %9460 = vrot.lane.b32.xlu0 %v9008, 64
      %v9461 = vpop.permute.xlu0 %9460
      %9462 = vrot.lane.b32.xlu0 %v9011, 64
      %v9463 = vpop.permute.xlu0 %9462
      %9464 = vrot.lane.b32.xlu0 %v9013, 64
      %v9465 = vpop.permute.xlu0 %9464
      %9466 = vrot.lane.b32.xlu0 %v9016, 64
      %v9467 = vpop.permute.xlu0 %9466
      %9468 = vrot.lane.b32.xlu0 %v9018, 64
      %v9469 = vpop.permute.xlu0 %9468
      %9470 = vrot.lane.b32.xlu0 %v9021, 64
      %v9471 = vpop.permute.xlu0 %9470
      %9472 = vrot.lane.b32.xlu0 %v9023, 64
      %v9473 = vpop.permute.xlu0 %9472
      %9474 = vrot.lane.b32.xlu0 %v9026, 64
      %v9475 = vpop.permute.xlu0 %9474
      %9476 = vrot.lane.b32.xlu0 %v9028, 64
      %v9477 = vpop.permute.xlu0 %9476
      %9478 = vrot.lane.b32.xlu0 %v9031, 64
      %v9479 = vpop.permute.xlu0 %9478
      %9480 = vrot.lane.b32.xlu0 %v9033, 64
      %v9481 = vpop.permute.xlu0 %9480
      %9482 = vrot.lane.b32.xlu0 %v9036, 64
      %v9483 = vpop.permute.xlu0 %9482
      %9484 = vrot.lane.b32.xlu0 %v9038, 64
      %v9485 = vpop.permute.xlu0 %9484
      %9486 = vrot.lane.b32.xlu0 %v9041, 64
      %v9487 = vpop.permute.xlu0 %9486
      %9488 = vrot.lane.b32.xlu0 %v9043, 64
      %v9489 = vpop.permute.xlu0 %9488
      %9490 = vrot.lane.b32.xlu0 %v9046, 64
      %v9491 = vpop.permute.xlu0 %9490
      %9492 = vrot.lane.b32.xlu0 %v9048, 64
      %v9493 = vpop.permute.xlu0 %9492
      %9494 = vrot.lane.b32.xlu0 %v9051, 64
      %v9495 = vpop.permute.xlu0 %9494
      %9496 = vrot.lane.b32.xlu0 %v9053, 64
      %v9497 = vpop.permute.xlu0 %9496
      %9498 = vrot.lane.b32.xlu0 %v9056, 64
      %v9499 = vpop.permute.xlu0 %9498
      %9500 = vrot.lane.b32.xlu0 %v9058, 64
      %v9501 = vpop.permute.xlu0 %9500
      %9502 = vrot.lane.b32.xlu0 %v9061, 64
      %v9503 = vpop.permute.xlu0 %9502
      %9504 = vrot.lane.b32.xlu0 %v9063, 64
      %v9505 = vpop.permute.xlu0 %9504
      %9506 = vrot.lane.b32.xlu0 %v9066, 64
      %v9507 = vpop.permute.xlu0 %9506
      %9508 = vrot.lane.b32.xlu0 %v9068, 64
      %v9509 = vpop.permute.xlu0 %9508
      %9510 = vrot.lane.b32.xlu0 %v9154, 64
      %v9511 = vpop.permute.xlu0 %9510
      %9512 = vrot.lane.b32.xlu0 %v9156, 64
      %v9513 = vpop.permute.xlu0 %9512
      %9546 = vrot.lane.b32.xlu0 %v9076, 112
      %v9547 = vpop.permute.xlu0 %9546
      %9548 = vrot.lane.b32.xlu0 %v9078, 112
      %v9549 = vpop.permute.xlu0 %9548
      %9550 = vrot.lane.b32.xlu0 %v9081, 112
      %v9551 = vpop.permute.xlu0 %9550
      %9552 = vrot.lane.b32.xlu0 %v9083, 112
      %v9553 = vpop.permute.xlu0 %9552
      %9554 = vrot.lane.b32.xlu0 %v9086, 112
      %v9555 = vpop.permute.xlu0 %9554
      %9556 = vrot.lane.b32.xlu0 %v9088, 112
      %v9557 = vpop.permute.xlu0 %9556
      %9558 = vrot.lane.b32.xlu0 %v9091, 112
      %v9559 = vpop.permute.xlu0 %9558
      %9560 = vrot.lane.b32.xlu0 %v9093, 112
      %v9561 = vpop.permute.xlu0 %9560
      %9562 = vrot.lane.b32.xlu0 %v9096, 112
      %v9563 = vpop.permute.xlu0 %9562
      %9564 = vrot.lane.b32.xlu0 %v9098, 112
      %v9565 = vpop.permute.xlu0 %9564
      %9566 = vrot.lane.b32.xlu0 %v9101, 112
      %v9567 = vpop.permute.xlu0 %9566
      %9568 = vrot.lane.b32.xlu0 %v9103, 112
      %v9569 = vpop.permute.xlu0 %9568
      %9570 = vrot.lane.b32.xlu0 %v9106, 112
      %v9571 = vpop.permute.xlu0 %9570
      %9572 = vrot.lane.b32.xlu0 %v9108, 112
      %v9573 = vpop.permute.xlu0 %9572
      %9574 = vrot.lane.b32.xlu0 %v9111, 112
      %v9575 = vpop.permute.xlu0 %9574
      %9576 = vrot.lane.b32.xlu0 %v9113, 112
      %v9577 = vpop.permute.xlu0 %9576
      %9578 = vrot.lane.b32.xlu0 %v9116, 112
      %v9579 = vpop.permute.xlu0 %9578
      %9580 = vrot.lane.b32.xlu0 %v9118, 112
      %v9581 = vpop.permute.xlu0 %9580
      %9582 = vrot.lane.b32.xlu0 %v9121, 112
      %v9583 = vpop.permute.xlu0 %9582
      %9584 = vrot.lane.b32.xlu0 %v9123, 112
      %v9585 = vpop.permute.xlu0 %9584
      %9586 = vrot.lane.b32.xlu0 %v9126, 112
      %v9587 = vpop.permute.xlu0 %9586
      %9588 = vrot.lane.b32.xlu0 %v9128, 112
      %v9589 = vpop.permute.xlu0 %9588
      %9590 = vrot.lane.b32.xlu0 %v9131, 112
      %v9591 = vpop.permute.xlu0 %9590
      %9592 = vrot.lane.b32.xlu0 %v9133, 112
      %v9593 = vpop.permute.xlu0 %9592
      %9594 = vrot.lane.b32.xlu0 %v9136, 112
      %v9595 = vpop.permute.xlu0 %9594
      %9596 = vrot.lane.b32.xlu0 %v9138, 112
      %v9597 = vpop.permute.xlu0 %9596
      %9598 = vrot.lane.b32.xlu0 %v9141, 112
      %v9599 = vpop.permute.xlu0 %9598
      %9600 = vrot.lane.b32.xlu0 %v9143, 112
      %v9601 = vpop.permute.xlu0 %9600
      %9602 = vrot.lane.b32.xlu0 %v9146, 112
      %v9603 = vpop.permute.xlu0 %9602
      %9604 = vrot.lane.b32.xlu0 %v9148, 112
      %v9605 = vpop.permute.xlu0 %9604
      %9606 = vrot.lane.b32.xlu0 %v9159, 112
      %v9607 = vpop.permute.xlu0 %9606
      %9608 = vrot.lane.b32.xlu0 %v9161, 112
      %v9609 = vpop.permute.xlu0 %9608
      %9642 = vrot.lane.b32.xlu0 %v8896, 32
      %v9643 = vpop.permute.xlu0 %9642
      %9644 = vrot.lane.b32.xlu0 %v8897, 32
      %v9645 = vpop.permute.xlu0 %9644
      %9646 = vrot.lane.b32.xlu0 %v8899, 32
      %v9647 = vpop.permute.xlu0 %9646
      %9648 = vrot.lane.b32.xlu0 %v8900, 32
      %v9649 = vpop.permute.xlu0 %9648
      %9650 = vrot.lane.b32.xlu0 %v8902, 32
      %v9651 = vpop.permute.xlu0 %9650
      %9652 = vrot.lane.b32.xlu0 %v8903, 32
      %v9653 = vpop.permute.xlu0 %9652
      %9654 = vrot.lane.b32.xlu0 %v8905, 32
      %v9655 = vpop.permute.xlu0 %9654
      %9656 = vrot.lane.b32.xlu0 %v8906, 32
      %v9657 = vpop.permute.xlu0 %9656
      %9658 = vrot.lane.b32.xlu0 %v8908, 32
      %v9659 = vpop.permute.xlu0 %9658
      %9660 = vrot.lane.b32.xlu0 %v8909, 32
      %v9661 = vpop.permute.xlu0 %9660
      %9662 = vrot.lane.b32.xlu0 %v8911, 32
      %v9663 = vpop.permute.xlu0 %9662
      %9664 = vrot.lane.b32.xlu0 %v8912, 32
      %v9665 = vpop.permute.xlu0 %9664
      %9666 = vrot.lane.b32.xlu0 %v8914, 32
      %v9667 = vpop.permute.xlu0 %9666
      %9668 = vrot.lane.b32.xlu0 %v8915, 32
      %v9669 = vpop.permute.xlu0 %9668
      %9670 = vrot.lane.b32.xlu0 %v8917, 32
      %v9671 = vpop.permute.xlu0 %9670
      %9672 = vrot.lane.b32.xlu0 %v8918, 32
      %v9673 = vpop.permute.xlu0 %9672
      %9674 = vrot.lane.b32.xlu0 %v8920, 32
      %v9675 = vpop.permute.xlu0 %9674
      %9676 = vrot.lane.b32.xlu0 %v8921, 32
      %v9677 = vpop.permute.xlu0 %9676
      %9678 = vrot.lane.b32.xlu0 %v8923, 32
      %v9679 = vpop.permute.xlu0 %9678
      %9680 = vrot.lane.b32.xlu0 %v8924, 32
      %v9681 = vpop.permute.xlu0 %9680
      %9682 = vrot.lane.b32.xlu0 %v8926, 32
      %v9683 = vpop.permute.xlu0 %9682
      %9684 = vrot.lane.b32.xlu0 %v8927, 32
      %v9685 = vpop.permute.xlu0 %9684
      %9686 = vrot.lane.b32.xlu0 %v8929, 32
      %v9687 = vpop.permute.xlu0 %9686
      %9688 = vrot.lane.b32.xlu0 %v8930, 32
      %v9689 = vpop.permute.xlu0 %9688
      %9690 = vrot.lane.b32.xlu0 %v8932, 32
      %v9691 = vpop.permute.xlu0 %9690
      %9692 = vrot.lane.b32.xlu0 %v8933, 32
      %v9693 = vpop.permute.xlu0 %9692
      %9694 = vrot.lane.b32.xlu0 %v8935, 32
      %v9695 = vpop.permute.xlu0 %9694
      %9696 = vrot.lane.b32.xlu0 %v8936, 32
      %v9697 = vpop.permute.xlu0 %9696
      %9698 = vrot.lane.b32.xlu0 %v8938, 32
      %v9699 = vpop.permute.xlu0 %9698
      %9700 = vrot.lane.b32.xlu0 %v8939, 32
      %v9701 = vpop.permute.xlu0 %9700
      %9702 = vrot.lane.b32.xlu0 %v8890, 32
      %v9703 = vpop.permute.xlu0 %9702
      %9704 = vrot.lane.b32.xlu0 %v8891, 32
      %v9705 = vpop.permute.xlu0 %9704
      %9738 = vrot.lane.b32.xlu0 %v9001, 80
      %v9739 = vpop.permute.xlu0 %9738
      %9740 = vrot.lane.b32.xlu0 %v9003, 80
      %v9741 = vpop.permute.xlu0 %9740
      %9742 = vrot.lane.b32.xlu0 %v9006, 80
      %v9743 = vpop.permute.xlu0 %9742
      %9744 = vrot.lane.b32.xlu0 %v9008, 80
      %v9745 = vpop.permute.xlu0 %9744
      %9746 = vrot.lane.b32.xlu0 %v9011, 80
      %v9747 = vpop.permute.xlu0 %9746
      %9748 = vrot.lane.b32.xlu0 %v9013, 80
      %v9749 = vpop.permute.xlu0 %9748
      %9750 = vrot.lane.b32.xlu0 %v9016, 80
      %v9751 = vpop.permute.xlu0 %9750
      %9752 = vrot.lane.b32.xlu0 %v9018, 80
      %v9753 = vpop.permute.xlu0 %9752
      %9754 = vrot.lane.b32.xlu0 %v9021, 80
      %v9755 = vpop.permute.xlu0 %9754
      %9756 = vrot.lane.b32.xlu0 %v9023, 80
      %v9757 = vpop.permute.xlu0 %9756
      %9758 = vrot.lane.b32.xlu0 %v9026, 80
      %v9759 = vpop.permute.xlu0 %9758
      %9760 = vrot.lane.b32.xlu0 %v9028, 80
      %v9761 = vpop.permute.xlu0 %9760
      %9762 = vrot.lane.b32.xlu0 %v9031, 80
      %v9763 = vpop.permute.xlu0 %9762
      %9764 = vrot.lane.b32.xlu0 %v9033, 80
      %v9765 = vpop.permute.xlu0 %9764
      %9766 = vrot.lane.b32.xlu0 %v9036, 80
      %v9767 = vpop.permute.xlu0 %9766
      %9768 = vrot.lane.b32.xlu0 %v9038, 80
      %v9769 = vpop.permute.xlu0 %9768
      %9770 = vrot.lane.b32.xlu0 %v9041, 80
      %v9771 = vpop.permute.xlu0 %9770
      %9772 = vrot.lane.b32.xlu0 %v9043, 80
      %v9773 = vpop.permute.xlu0 %9772
      %9774 = vrot.lane.b32.xlu0 %v9046, 80
      %v9775 = vpop.permute.xlu0 %9774
      %9776 = vrot.lane.b32.xlu0 %v9048, 80
      %v9777 = vpop.permute.xlu0 %9776
      %9778 = vrot.lane.b32.xlu0 %v9051, 80
      %v9779 = vpop.permute.xlu0 %9778
      %9780 = vrot.lane.b32.xlu0 %v9053, 80
      %v9781 = vpop.permute.xlu0 %9780
      %9782 = vrot.lane.b32.xlu0 %v9056, 80
      %v9783 = vpop.permute.xlu0 %9782
      %9784 = vrot.lane.b32.xlu0 %v9058, 80
      %v9785 = vpop.permute.xlu0 %9784
      %9786 = vrot.lane.b32.xlu0 %v9061, 80
      %v9787 = vpop.permute.xlu0 %9786
      %9788 = vrot.lane.b32.xlu0 %v9063, 80
      %v9789 = vpop.permute.xlu0 %9788
      %9790 = vrot.lane.b32.xlu0 %v9066, 80
      %v9791 = vpop.permute.xlu0 %9790
      %9792 = vrot.lane.b32.xlu0 %v9068, 80
      %v9793 = vpop.permute.xlu0 %9792
      %9794 = vrot.lane.b32.xlu0 %v9154, 80
      %v9795 = vpop.permute.xlu0 %9794
      %9796 = vrot.lane.b32.xlu0 %v9156, 80
      %v9797 = vpop.permute.xlu0 %9796
      %9798 = vrot.lane.b32.xlu0 %v8991, 80
      %v9799 = vpop.permute.xlu0 %9798
      %9800 = vrot.lane.b32.xlu0 %v8993, 80
      %v9801 = vpop.permute.xlu0 %9800
      %v9834 = vsel %vm1531, %v8890, %v9163
      %v9835 = vsel %vm1531, %v8891, %v9165
      %v9836 = vsel %vm1531, %v8893, %v9167
      %v9837 = vsel %vm1531, %v8894, %v9169
      %v9838 = vsel %vm1531, %v8896, %v9171
      %v9839 = vsel %vm1531, %v8897, %v9173
      %v9840 = vsel %vm1531, %v8899, %v9175
      %v9841 = vsel %vm1531, %v8900, %v9177
      %v9842 = vsel %vm1531, %v8902, %v9179
      %v9843 = vsel %vm1531, %v8903, %v9181
      %v9844 = vsel %vm1531, %v8905, %v9183
      %v9845 = vsel %vm1531, %v8906, %v9185
      %v9846 = vsel %vm1531, %v8908, %v9187
      %v9847 = vsel %vm1531, %v8909, %v9189
      %v9848 = vsel %vm1531, %v8911, %v9191
      %v9849 = vsel %vm1531, %v8912, %v9193
      %v9850 = vsel %vm1531, %v8914, %v9195
      %v9851 = vsel %vm1531, %v8915, %v9197
      %v9852 = vsel %vm1531, %v8917, %v9199
      %v9853 = vsel %vm1531, %v8918, %v9201
      %v9854 = vsel %vm1531, %v8920, %v9203
      %v9855 = vsel %vm1531, %v8921, %v9205
      %v9856 = vsel %vm1531, %v8923, %v9207
      %v9857 = vsel %vm1531, %v8924, %v9209
      %v9858 = vsel %vm1531, %v8926, %v9211
      %v9859 = vsel %vm1531, %v8927, %v9213
      %v9860 = vsel %vm1531, %v8929, %v9215
      %v9861 = vsel %vm1531, %v8930, %v9217
      %v9862 = vsel %vm1531, %v8932, %v9219
      %v9863 = vsel %vm1531, %v8933, %v9221
      %v9864 = vsel %vm1531, %v8935, %v9223
      %v9865 = vsel %vm1531, %v8936, %v9225
      %v9866 = vsel %vm1630, %v9834, %v9259
      %v9867 = vsel %vm1630, %v9835, %v9261
      %v9868 = vsel %vm1630, %v9836, %v9263
      %v9869 = vsel %vm1630, %v9837, %v9265
      %v9870 = vsel %vm1630, %v9838, %v9267
      %v9871 = vsel %vm1630, %v9839, %v9269
      %v9872 = vsel %vm1630, %v9840, %v9271
      %v9873 = vsel %vm1630, %v9841, %v9273
      %v9874 = vsel %vm1630, %v9842, %v9275
      %v9875 = vsel %vm1630, %v9843, %v9277
      %v9876 = vsel %vm1630, %v9844, %v9279
      %v9877 = vsel %vm1630, %v9845, %v9281
      %v9878 = vsel %vm1630, %v9846, %v9283
      %v9879 = vsel %vm1630, %v9847, %v9285
      %v9880 = vsel %vm1630, %v9848, %v9287
      %v9881 = vsel %vm1630, %v9849, %v9289
      %v9882 = vsel %vm1630, %v9850, %v9291
      %v9883 = vsel %vm1630, %v9851, %v9293
      %v9884 = vsel %vm1630, %v9852, %v9295
      %v9885 = vsel %vm1630, %v9853, %v9297
      %v9886 = vsel %vm1630, %v9854, %v9299
      %v9887 = vsel %vm1630, %v9855, %v9301
      %v9888 = vsel %vm1630, %v9856, %v9303
      %v9889 = vsel %vm1630, %v9857, %v9305
      %v9890 = vsel %vm1630, %v9858, %v9307
      %v9891 = vsel %vm1630, %v9859, %v9309
      %v9892 = vsel %vm1630, %v9860, %v9311
      %v9893 = vsel %vm1630, %v9861, %v9313
      %v9894 = vsel %vm1630, %v9862, %v9315
      %v9895 = vsel %vm1630, %v9863, %v9317
      %v9896 = vsel %vm1630, %v9864, %v9319
      %v9897 = vsel %vm1630, %v9865, %v9321
      %v9898 = vsel %vm1465, %v9259, %v9355
      %v9899 = vsel %vm1465, %v9261, %v9357
      %v9900 = vsel %vm1465, %v9263, %v9359
      %v9901 = vsel %vm1465, %v9265, %v9361
      %v9902 = vsel %vm1465, %v9267, %v9363
      %v9903 = vsel %vm1465, %v9269, %v9365
      %v9904 = vsel %vm1465, %v9271, %v9367
      %v9905 = vsel %vm1465, %v9273, %v9369
      %v9906 = vsel %vm1465, %v9275, %v9371
      %v9907 = vsel %vm1465, %v9277, %v9373
      %v9908 = vsel %vm1465, %v9279, %v9375
      %v9909 = vsel %vm1465, %v9281, %v9377
      %v9910 = vsel %vm1465, %v9283, %v9379
      %v9911 = vsel %vm1465, %v9285, %v9381
      %v9912 = vsel %vm1465, %v9287, %v9383
      %v9913 = vsel %vm1465, %v9289, %v9385
      %v9914 = vsel %vm1465, %v9291, %v9387
      %v9915 = vsel %vm1465, %v9293, %v9389
      %v9916 = vsel %vm1465, %v9295, %v9391
      %v9917 = vsel %vm1465, %v9297, %v9393
      %v9918 = vsel %vm1465, %v9299, %v9395
      %v9919 = vsel %vm1465, %v9301, %v9397
      %v9920 = vsel %vm1465, %v9303, %v9399
      %v9921 = vsel %vm1465, %v9305, %v9401
      %v9922 = vsel %vm1465, %v9307, %v9403
      %v9923 = vsel %vm1465, %v9309, %v9405
      %v9924 = vsel %vm1465, %v9311, %v9407
      %v9925 = vsel %vm1465, %v9313, %v9409
      %v9926 = vsel %vm1465, %v9315, %v9411
      %v9927 = vsel %vm1465, %v9317, %v9413
      %v9928 = vsel %vm1465, %v9319, %v9415
      %v9929 = vsel %vm1465, %v9321, %v9417
      %v9930 = vsel %vm1564, %v9898, %v9451
      %v9931 = vsel %vm1564, %v9899, %v9453
      %v9932 = vsel %vm1564, %v9900, %v9455
      %v9933 = vsel %vm1564, %v9901, %v9457
      %v9934 = vsel %vm1564, %v9902, %v9459
      %v9935 = vsel %vm1564, %v9903, %v9461
      %v9936 = vsel %vm1564, %v9904, %v9463
      %v9937 = vsel %vm1564, %v9905, %v9465
      %v9938 = vsel %vm1564, %v9906, %v9467
      %v9939 = vsel %vm1564, %v9907, %v9469
      %v9940 = vsel %vm1564, %v9908, %v9471
      %v9941 = vsel %vm1564, %v9909, %v9473
      %v9942 = vsel %vm1564, %v9910, %v9475
      %v9943 = vsel %vm1564, %v9911, %v9477
      %v9944 = vsel %vm1564, %v9912, %v9479
      %v9945 = vsel %vm1564, %v9913, %v9481
      %v9946 = vsel %vm1564, %v9914, %v9483
      %v9947 = vsel %vm1564, %v9915, %v9485
      %v9948 = vsel %vm1564, %v9916, %v9487
      %v9949 = vsel %vm1564, %v9917, %v9489
      %v9950 = vsel %vm1564, %v9918, %v9491
      %v9951 = vsel %vm1564, %v9919, %v9493
      %v9952 = vsel %vm1564, %v9920, %v9495
      %v9953 = vsel %vm1564, %v9921, %v9497
      %v9954 = vsel %vm1564, %v9922, %v9499
      %v9955 = vsel %vm1564, %v9923, %v9501
      %v9956 = vsel %vm1564, %v9924, %v9503
      %v9957 = vsel %vm1564, %v9925, %v9505
      %v9958 = vsel %vm1564, %v9926, %v9507
      %v9959 = vsel %vm1564, %v9927, %v9509
      %v9960 = vsel %vm1564, %v9928, %v9511
      %v9961 = vsel %vm1564, %v9929, %v9513
      %v9962 = vsel %vm1663, %v9930, %v9547
      %v9963 = vsel %vm1663, %v9931, %v9549
      %v9964 = vsel %vm1663, %v9932, %v9551
      %v9965 = vsel %vm1663, %v9933, %v9553
      %v9966 = vsel %vm1663, %v9934, %v9555
      %v9967 = vsel %vm1663, %v9935, %v9557
      %v9968 = vsel %vm1663, %v9936, %v9559
      %v9969 = vsel %vm1663, %v9937, %v9561
      %v9970 = vsel %vm1663, %v9938, %v9563
      %v9971 = vsel %vm1663, %v9939, %v9565
      %v9972 = vsel %vm1663, %v9940, %v9567
      %v9973 = vsel %vm1663, %v9941, %v9569
      %v9974 = vsel %vm1663, %v9942, %v9571
      %v9975 = vsel %vm1663, %v9943, %v9573
      %v9976 = vsel %vm1663, %v9944, %v9575
      %v9977 = vsel %vm1663, %v9945, %v9577
      %v9978 = vsel %vm1663, %v9946, %v9579
      %v9979 = vsel %vm1663, %v9947, %v9581
      %v9980 = vsel %vm1663, %v9948, %v9583
      %v9981 = vsel %vm1663, %v9949, %v9585
      %v9982 = vsel %vm1663, %v9950, %v9587
      %v9983 = vsel %vm1663, %v9951, %v9589
      %v9984 = vsel %vm1663, %v9952, %v9591
      %v9985 = vsel %vm1663, %v9953, %v9593
      %v9986 = vsel %vm1663, %v9954, %v9595
      %v9987 = vsel %vm1663, %v9955, %v9597
      %v9988 = vsel %vm1663, %v9956, %v9599
      %v9989 = vsel %vm1663, %v9957, %v9601
      %v9990 = vsel %vm1663, %v9958, %v9603
      %v9991 = vsel %vm1663, %v9959, %v9605
      %v9992 = vsel %vm1663, %v9960, %v9607
      %v9993 = vsel %vm1663, %v9961, %v9609
      %v9994 = vsel %vm1498, %v9547, %v9643
      %v9995 = vsel %vm1498, %v9549, %v9645
      %v9996 = vsel %vm1498, %v9551, %v9647
      %v9997 = vsel %vm1498, %v9553, %v9649
      %v9998 = vsel %vm1498, %v9555, %v9651
      %v9999 = vsel %vm1498, %v9557, %v9653
      %v10000 = vsel %vm1498, %v9559, %v9655
      %v10001 = vsel %vm1498, %v9561, %v9657
      %v10002 = vsel %vm1498, %v9563, %v9659
      %v10003 = vsel %vm1498, %v9565, %v9661
      %v10004 = vsel %vm1498, %v9567, %v9663
      %v10005 = vsel %vm1498, %v9569, %v9665
      %v10006 = vsel %vm1498, %v9571, %v9667
      %v10007 = vsel %vm1498, %v9573, %v9669
      %v10008 = vsel %vm1498, %v9575, %v9671
      %v10009 = vsel %vm1498, %v9577, %v9673
      %v10010 = vsel %vm1498, %v9579, %v9675
      %v10011 = vsel %vm1498, %v9581, %v9677
      %v10012 = vsel %vm1498, %v9583, %v9679
      %v10013 = vsel %vm1498, %v9585, %v9681
      %v10014 = vsel %vm1498, %v9587, %v9683
      %v10015 = vsel %vm1498, %v9589, %v9685
      %v10016 = vsel %vm1498, %v9591, %v9687
      %v10017 = vsel %vm1498, %v9593, %v9689
      %v10018 = vsel %vm1498, %v9595, %v9691
      %v10019 = vsel %vm1498, %v9597, %v9693
      %v10020 = vsel %vm1498, %v9599, %v9695
      %v10021 = vsel %vm1498, %v9601, %v9697
      %v10022 = vsel %vm1498, %v9603, %v9699
      %v10023 = vsel %vm1498, %v9605, %v9701
      %v10024 = vsel %vm1498, %v9607, %v9703
      %v10025 = vsel %vm1498, %v9609, %v9705
      %v10026 = vsel %vm1597, %v9994, %v9739
      %v10027 = vsel %vm1597, %v9995, %v9741
      %v10028 = vsel %vm1597, %v9996, %v9743
      %v10029 = vsel %vm1597, %v9997, %v9745
      %v10030 = vsel %vm1597, %v9998, %v9747
      %v10031 = vsel %vm1597, %v9999, %v9749
      %v10032 = vsel %vm1597, %v10000, %v9751
      %v10033 = vsel %vm1597, %v10001, %v9753
      %v10034 = vsel %vm1597, %v10002, %v9755
      %v10035 = vsel %vm1597, %v10003, %v9757
      %v10036 = vsel %vm1597, %v10004, %v9759
      %v10037 = vsel %vm1597, %v10005, %v9761
      %v10038 = vsel %vm1597, %v10006, %v9763
      %v10039 = vsel %vm1597, %v10007, %v9765
      %v10040 = vsel %vm1597, %v10008, %v9767
      %v10041 = vsel %vm1597, %v10009, %v9769
      %v10042 = vsel %vm1597, %v10010, %v9771
      %v10043 = vsel %vm1597, %v10011, %v9773
      %v10044 = vsel %vm1597, %v10012, %v9775
      %v10045 = vsel %vm1597, %v10013, %v9777
      %v10046 = vsel %vm1597, %v10014, %v9779
      %v10047 = vsel %vm1597, %v10015, %v9781
      %v10048 = vsel %vm1597, %v10016, %v9783
      %v10049 = vsel %vm1597, %v10017, %v9785
      %v10050 = vsel %vm1597, %v10018, %v9787
      %v10051 = vsel %vm1597, %v10019, %v9789
      %v10052 = vsel %vm1597, %v10020, %v9791
      %v10053 = vsel %vm1597, %v10021, %v9793
      %v10054 = vsel %vm1597, %v10022, %v9795
      %v10055 = vsel %vm1597, %v10023, %v9797
      %v10056 = vsel %vm1597, %v10024, %v9799
      %v10057 = vsel %vm1597, %v10025, %v9801
      %v10058 = vld [vmem:[%s9] sm:$0xff]
      %v10059 = vld [vmem:[%s9 + $0x8] sm:$0xff]
      %v10060 = vld [vmem:[%s9 + $0x10] sm:$0xff]
      %v10061 = vld [vmem:[%s9 + $0x18] sm:$0xff]
      %v10062 = vld [vmem:[%s9 + $0x20] sm:$0xff]
      %v10063 = vld [vmem:[%s9 + $0x28] sm:$0xff]
      %v10064 = vld [vmem:[%s9 + $0x30] sm:$0xff]
      %v10065 = vld [vmem:[%s9 + $0x38] sm:$0xff]
      %v10066 = vld [vmem:[%s9 + $0x40] sm:$0xff]
      %v10067 = vld [vmem:[%s9 + $0x48] sm:$0xff]
      %v10068 = vld [vmem:[%s9 + $0x50] sm:$0xff]
      %v10069 = vld [vmem:[%s9 + $0x58] sm:$0xff]
      %v10070 = vld [vmem:[%s9 + $0x60] sm:$0xff]
      %v10071 = vld [vmem:[%s9 + $0x68] sm:$0xff]
      %v10072 = vld [vmem:[%s9 + $0x70] sm:$0xff]
      %v10073 = vld [vmem:[%s9 + $0x78] sm:$0xff]
      %v10074 = vld [vmem:[%s9 + $0x80] sm:$0xff]
      %v10075 = vld [vmem:[%s9 + $0x88] sm:$0xff]
      %v10076 = vld [vmem:[%s9 + $0x90] sm:$0xff]
      %v10077 = vld [vmem:[%s9 + $0x98] sm:$0xff]
      %v10078 = vld [vmem:[%s9 + $0xa0] sm:$0xff]
      %v10079 = vld [vmem:[%s9 + $0xa8] sm:$0xff]
      %v10080 = vld [vmem:[%s9 + $0xb0] sm:$0xff]
      %v10081 = vld [vmem:[%s9 + $0xb8] sm:$0xff]
      %v10082 = vld [vmem:[%s9 + $0xc0] sm:$0xff]
      %v10083 = vld [vmem:[%s9 + $0xc8] sm:$0xff]
      %v10084 = vld [vmem:[%s9 + $0xd0] sm:$0xff]
      %v10085 = vld [vmem:[%s9 + $0xd8] sm:$0xff]
      %v10086 = vld [vmem:[%s9 + $0xe0] sm:$0xff]
      %v10087 = vld [vmem:[%s9 + $0xe8] sm:$0xff]
      %v10088 = vld [vmem:[%s9 + $0xf0] sm:$0xff]
      %v10089 = vld [vmem:[%s9 + $0xf8] sm:$0xff]
      %v10090 = vld [vmem:[%s9 + $0x100] sm:$0xff]
      %v10091 = vld [vmem:[%s9 + $0x108] sm:$0xff]
      %v10092 = vld [vmem:[%s9 + $0x110] sm:$0xff]
      %v10093 = vld [vmem:[%s9 + $0x118] sm:$0xff]
      %v10094 = vld [vmem:[%s9 + $0x120] sm:$0xff]
      %v10095 = vld [vmem:[%s9 + $0x128] sm:$0xff]
      %v10096 = vld [vmem:[%s9 + $0x130] sm:$0xff]
      %v10097 = vld [vmem:[%s9 + $0x138] sm:$0xff]
      %v10098 = vld [vmem:[%s9 + $0x140] sm:$0xff]
      %v10099 = vld [vmem:[%s9 + $0x148] sm:$0xff]
      %v10100 = vld [vmem:[%s9 + $0x150] sm:$0xff]
      %v10101 = vld [vmem:[%s9 + $0x158] sm:$0xff]
      %v10102 = vld [vmem:[%s9 + $0x160] sm:$0xff]
      %v10103 = vld [vmem:[%s9 + $0x168] sm:$0xff]
      %v10104 = vld [vmem:[%s9 + $0x170] sm:$0xff]
      %v10105 = vld [vmem:[%s9 + $0x178] sm:$0xff]
      %v10106 = vld [vmem:[%s9 + $0x180] sm:$0xff]
      %v10107 = vld [vmem:[%s9 + $0x188] sm:$0xff]
      %v10108 = vld [vmem:[%s9 + $0x190] sm:$0xff]
      %v10109 = vld [vmem:[%s9 + $0x198] sm:$0xff]
      %v10110 = vld [vmem:[%s9 + $0x1a0] sm:$0xff]
      %v10111 = vld [vmem:[%s9 + $0x1a8] sm:$0xff]
      %v10112 = vld [vmem:[%s10] sm:$0x1]
      %v10114 = vlaneseq
      %v10115 = vshrl.u32 %v10114, 7
      %v10116 = vsub.s32 0, %v10115
      %v10117 = vrot.slane %v10112, %v10116
      %v10119 = vsel %vm1531, %v9081, 0
      %v10121 = vsel %vm1531, %v9083, 0
      %v10123 = vsel %vm1531, %v9086, 0
      %v10125 = vsel %vm1531, %v9088, 0
      %v10127 = vsel %vm1531, %v9091, 0
      %v10129 = vsel %vm1531, %v9093, 0
      %v10131 = vsel %vm1531, %v9096, 0
      %v10133 = vsel %vm1531, %v9098, 0
      %v10135 = vsel %vm1531, %v9101, 0
      %v10137 = vsel %vm1531, %v9103, 0
      %v10139 = vsel %vm1531, %v9106, 0
      %v10141 = vsel %vm1531, %v9108, 0
      %v10143 = vsel %vm1531, %v9111, 0
      %v10145 = vsel %vm1531, %v9113, 0
      %v10147 = vsel %vm1531, %v9116, 0
      %v10149 = vsel %vm1531, %v9118, 0
      %v10151 = vsel %vm1531, %v9121, 0
      %v10153 = vsel %vm1531, %v9123, 0
      %v10155 = vsel %vm1531, %v9126, 0
      %v10157 = vsel %vm1531, %v9128, 0
      %v10159 = vsel %vm1531, %v9131, 0
      %v10161 = vsel %vm1531, %v9133, 0
      %v10163 = vsel %vm1531, %v9136, 0
      %v10165 = vsel %vm1531, %v9138, 0
      %v10167 = vsel %vm1531, %v9141, 0
      %v10169 = vsel %vm1531, %v9143, 0
      %v10171 = vsel %vm1531, %v9146, 0
      %v10173 = vsel %vm1531, %v9148, 0
      %v10175 = vsel %vm1531, %v9159, 0
      %v10177 = vsel %vm1531, %v9161, 0
      %v10179 = vsel %vm1531, %v9071, 0
      %v10181 = vsel %vm1531, %v9073, 0
      %10183 = vmatprep.subr.mxu0 0.0
      %10184 = vmatpush1.msra.mxu0 %v10058
      %10185 = vmatprep.subr.mxu0 0.0
      %10186 = vmatpush1.msra.mxu0 %v10059
      %10187 = vmatprep.subr.mxu0 0.0
      %10188 = vmatpush1.msra.mxu0 %v10060
      %10189 = vmatprep.subr.mxu0 0.0
      %10190 = vmatpush1.msra.mxu0 %v10061
      %10191 = vmatprep.subr.mxu0 0.0
      %10192 = vmatpush1.msra.mxu0 %v10062
      %10193 = vmatprep.subr.mxu0 0.0
      %10194 = vmatpush1.msra.mxu0 %v10063
      %10195 = vmatprep.subr.mxu0 0.0
      %10196 = vmatpush1.msra.mxu0 %v10064
      %10197 = vmatprep.subr.mxu0 0.0
      %10198 = vmatpush1.msra.mxu0 %v10065
      %10199 = vmatprep.subr.mxu0 0.0
      %10200 = vmatpush1.msra.mxu0 %v10066
      %10201 = vmatprep.subr.mxu0 0.0
      %10202 = vmatpush1.msra.mxu0 %v10067
      %10203 = vmatprep.subr.mxu0 0.0
      %10204 = vmatpush1.msra.mxu0 %v10068
      %10205 = vmatprep.subr.mxu0 0.0
      %10206 = vmatpush1.msra.mxu0 %v10069
      %10207 = vmatprep.subr.mxu0 0.0
      %10208 = vmatpush1.msra.mxu0 %v10070
      %10209 = vmatprep.subr.mxu0 0.0
      %10210 = vmatpush1.msra.mxu0 %v10071
      %10211 = vmatprep.subr.mxu0 0.0
      %10212 = vmatpush1.msra.mxu0 %v10072
      %10213 = vmatprep.subr.mxu0 0.0
      %10214 = vmatpush1.msra.mxu0 %v10073
      %10215 = vmatprep.subr.mxu0 0.0
      %10216 = vmatpush1.msra.mxu0 %v10074
      %10217 = vmatprep.subr.mxu0 0.0
      %10218 = vmatpush1.msra.mxu0 %v10075
      %10219 = vmatprep.subr.mxu0 0.0
      %10220 = vmatpush1.msra.mxu0 %v10076
      %10221 = vmatprep.subr.mxu0 0.0
      %10222 = vmatpush1.msra.mxu0 %v10077
      %10223 = vmatprep.subr.mxu0 0.0
      %10224 = vmatpush1.msra.mxu0 %v10078
      %10225 = vmatprep.subr.mxu0 0.0
      %10226 = vmatpush1.msra.mxu0 %v10079
      %10227 = vmatprep.subr.mxu0 0.0
      %10228 = vmatpush1.msra.mxu0 %v10080
      %10229 = vmatprep.subr.mxu0 0.0
      %10230 = vmatpush1.msra.mxu0 %v10081
      %10231 = vmatprep.subr.mxu0 0.0
      %10232 = vmatpush1.msra.mxu0 %v10082
      %10233 = vmatprep.subr.mxu0 0.0
      %10234 = vmatpush1.msra.mxu0 %v10083
      %10235 = vmatprep.subr.mxu0 0.0
      %10236 = vmatpush1.msra.mxu0 %v10084
      %10237 = vmatprep.subr.mxu0 0.0
      %10238 = vmatpush1.msra.mxu0 %v10085
      %10239 = vmatprep.subr.mxu0 0.0
      %10240 = vmatpush1.msra.mxu0 %v10086
      %10241 = vmatprep.subr.mxu0 0.0
      %10242 = vmatpush1.msra.mxu0 %v10087
      %10243 = vmatprep.subr.mxu0 0.0
      %10244 = vmatpush1.msra.mxu0 %v10088
      %10245 = vmatprep.subr.mxu0 0.0
      %10246 = vmatpush1.msra.mxu0 %v10089
      %10247 = vmatprep.mubr.f32.mxu0 %v9962
      %10248 = vmatmul.mubr.f32.gmra.mrb[0].mxu0 %v9866
      %v10249 = vpop.f32.mrb[0].mxu0
      %v10250 = vadd.f32 %v10117, %v10249
      %v10251 = vpop.f32.mrb[0].mxu0
      %10252 = vmatprep.mubr.f32.mxu0 %v9963
      %10253 = vmatmul.mubr.f32.gmra.mrb[0].mxu0 %v9867
      %v10254 = vpop.f32.mrb[0].mxu0
      %v10255 = vadd.f32 %v10117, %v10254
      %v10256 = vpop.f32.mrb[0].mxu0
      %10257 = vmatprep.mubr.f32.mxu0 %v9964
      %10258 = vmatmul.mubr.f32.gmra.mrb[0].mxu0 %v9868
      %v10259 = vpop.f32.mrb[0].mxu0
      %v10260 = vadd.f32 %v10117, %v10259
      %v10261 = vpop.f32.mrb[0].mxu0
      %10262 = vmatprep.mubr.f32.mxu0 %v9965
      %10263 = vmatmul.mubr.f32.gmra.mrb[0].mxu0 %v9869
      %v10264 = vpop.f32.mrb[0].mxu0
      %v10265 = vadd.f32 %v10117, %v10264
      %v10266 = vpop.f32.mrb[0].mxu0
      %10267 = vmatprep.mubr.f32.mxu0 %v9966
      %10268 = vmatmul.mubr.f32.gmra.mrb[0].mxu0 %v9870
      %v10269 = vpop.f32.mrb[0].mxu0
      %v10270 = vadd.f32 %v10117, %v10269
      %v10271 = vpop.f32.mrb[0].mxu0
      %10272 = vmatprep.mubr.f32.mxu0 %v9967
      %10273 = vmatmul.mubr.f32.gmra.mrb[0].mxu0 %v9871
      %v10274 = vpop.f32.mrb[0].mxu0
      %v10275 = vadd.f32 %v10117, %v10274
      %v10276 = vpop.f32.mrb[0].mxu0
      %10277 = vmatprep.mubr.f32.mxu0 %v9968
      %10278 = vmatmul.mubr.f32.gmra.mrb[0].mxu0 %v9872
      %v10279 = vpop.f32.mrb[0].mxu0
      %v10280 = vadd.f32 %v10117, %v10279
      %v10281 = vpop.f32.mrb[0].mxu0
      %10282 = vmatprep.mubr.f32.mxu0 %v9969
      %10283 = vmatmul.mubr.f32.gmra.mrb[0].mxu0 %v9873
      %v10284 = vpop.f32.mrb[0].mxu0
      %v10285 = vadd.f32 %v10117, %v10284
      %v10286 = vpop.f32.mrb[0].mxu0
      %10287 = vmatprep.mubr.f32.mxu0 %v9970
      %10288 = vmatmul.mubr.f32.gmra.mrb[0].mxu0 %v9874
      %v10289 = vpop.f32.mrb[0].mxu0
      %v10290 = vadd.f32 %v10117, %v10289
      %v10291 = vpop.f32.mrb[0].mxu0
      %10292 = vmatprep.mubr.f32.mxu0 %v9971
      %10293 = vmatmul.mubr.f32.gmra.mrb[0].mxu0 %v9875
      %v10294 = vpop.f32.mrb[0].mxu0
      %v10295 = vadd.f32 %v10117, %v10294
      %v10296 = vpop.f32.mrb[0].mxu0
      %10297 = vmatprep.mubr.f32.mxu0 %v9972
      %10298 = vmatmul.mubr.f32.gmra.mrb[0].mxu0 %v9876
      %v10299 = vpop.f32.mrb[0].mxu0
      %v10300 = vadd.f32 %v10117, %v10299
      %v10301 = vpop.f32.mrb[0].mxu0
      %10302 = vmatprep.mubr.f32.mxu0 %v9973
      %10303 = vmatmul.mubr.f32.gmra.mrb[0].mxu0 %v9877
      %v10304 = vpop.f32.mrb[0].mxu0
      %v10305 = vadd.f32 %v10117, %v10304
      %v10306 = vpop.f32.mrb[0].mxu0
      %10307 = vmatprep.mubr.f32.mxu0 %v9974
      %10308 = vmatmul.mubr.f32.gmra.mrb[0].mxu0 %v9878
      %v10309 = vpop.f32.mrb[0].mxu0
      %v10310 = vadd.f32 %v10117, %v10309
      %v10311 = vpop.f32.mrb[0].mxu0
      %10312 = vmatprep.mubr.f32.mxu0 %v9975
      %10313 = vmatmul.mubr.f32.gmra.mrb[0].mxu0 %v9879
      %v10314 = vpop.f32.mrb[0].mxu0
      %v10315 = vadd.f32 %v10117, %v10314
      %v10316 = vpop.f32.mrb[0].mxu0
      %10317 = vmatprep.mubr.f32.mxu0 %v9976
      %10318 = vmatmul.mubr.f32.gmra.mrb[0].mxu0 %v9880
      %v10319 = vpop.f32.mrb[0].mxu0
      %v10320 = vadd.f32 %v10117, %v10319
      %v10321 = vpop.f32.mrb[0].mxu0
      %10322 = vmatprep.mubr.f32.mxu0 %v9977
      %10323 = vmatmul.mubr.f32.gmra.mrb[0].mxu0 %v9881
      %v10324 = vpop.f32.mrb[0].mxu0
      %v10325 = vadd.f32 %v10117, %v10324
      %v10326 = vpop.f32.mrb[0].mxu0
      %10327 = vmatprep.mubr.f32.mxu0 %v9978
      %10328 = vmatmul.mubr.f32.gmra.mrb[0].mxu0 %v9882
      %v10329 = vpop.f32.mrb[0].mxu0
      %v10330 = vadd.f32 %v10117, %v10329
      %v10331 = vpop.f32.mrb[0].mxu0
      %10332 = vmatprep.mubr.f32.mxu0 %v9979
      %10333 = vmatmul.mubr.f32.gmra.mrb[0].mxu0 %v9883
      %v10334 = vpop.f32.mrb[0].mxu0
      %v10335 = vadd.f32 %v10117, %v10334
      %v10336 = vpop.f32.mrb[0].mxu0
      %10337 = vmatprep.mubr.f32.mxu0 %v9980
      %10338 = vmatmul.mubr.f32.gmra.mrb[0].mxu0 %v9884
      %v10339 = vpop.f32.mrb[0].mxu0
      %v10340 = vadd.f32 %v10117, %v10339
      %v10341 = vpop.f32.mrb[0].mxu0
      %10342 = vmatprep.mubr.f32.mxu0 %v9981
      %10343 = vmatmul.mubr.f32.gmra.mrb[0].mxu0 %v9885
      %v10344 = vpop.f32.mrb[0].mxu0
      %v10345 = vadd.f32 %v10117, %v10344
      %v10346 = vpop.f32.mrb[0].mxu0
      %10347 = vmatprep.mubr.f32.mxu0 %v9982
      %10348 = vmatmul.mubr.f32.gmra.mrb[0].mxu0 %v9886
      %v10349 = vpop.f32.mrb[0].mxu0
      %v10350 = vadd.f32 %v10117, %v10349
      %v10351 = vpop.f32.mrb[0].mxu0
      %10352 = vmatprep.mubr.f32.mxu0 %v9983
      %10353 = vmatmul.mubr.f32.gmra.mrb[0].mxu0 %v9887
      %v10354 = vpop.f32.mrb[0].mxu0
      %v10355 = vadd.f32 %v10117, %v10354
      %v10356 = vpop.f32.mrb[0].mxu0
      %10357 = vmatprep.mubr.f32.mxu0 %v9984
      %10358 = vmatmul.mubr.f32.gmra.mrb[0].mxu0 %v9888
      %v10359 = vpop.f32.mrb[0].mxu0
      %v10360 = vadd.f32 %v10117, %v10359
      %v10361 = vpop.f32.mrb[0].mxu0
      %10362 = vmatprep.mubr.f32.mxu0 %v9985
      %10363 = vmatmul.mubr.f32.gmra.mrb[0].mxu0 %v9889
      %v10364 = vpop.f32.mrb[0].mxu0
      %v10365 = vadd.f32 %v10117, %v10364
      %v10366 = vpop.f32.mrb[0].mxu0
      %10367 = vmatprep.mubr.f32.mxu0 %v9986
      %10368 = vmatmul.mubr.f32.gmra.mrb[0].mxu0 %v9890
      %v10369 = vpop.f32.mrb[0].mxu0
      %v10370 = vadd.f32 %v10117, %v10369
      %v10371 = vpop.f32.mrb[0].mxu0
      %10372 = vmatprep.mubr.f32.mxu0 %v9987
      %10373 = vmatmul.mubr.f32.gmra.mrb[0].mxu0 %v9891
      %v10374 = vpop.f32.mrb[0].mxu0
      %v10375 = vadd.f32 %v10117, %v10374
      %v10376 = vpop.f32.mrb[0].mxu0
      %10377 = vmatprep.mubr.f32.mxu0 %v9988
      %10378 = vmatmul.mubr.f32.gmra.mrb[0].mxu0 %v9892
      %v10379 = vpop.f32.mrb[0].mxu0
      %v10380 = vadd.f32 %v10117, %v10379
      %v10381 = vpop.f32.mrb[0].mxu0
      %10382 = vmatprep.mubr.f32.mxu0 %v9989
      %10383 = vmatmul.mubr.f32.gmra.mrb[0].mxu0 %v9893
      %v10384 = vpop.f32.mrb[0].mxu0
      %v10385 = vadd.f32 %v10117, %v10384
      %v10386 = vpop.f32.mrb[0].mxu0
      %10387 = vmatprep.mubr.f32.mxu0 %v9990
      %10388 = vmatmul.mubr.f32.gmra.mrb[0].mxu0 %v9894
      %v10389 = vpop.f32.mrb[0].mxu0
      %v10390 = vadd.f32 %v10117, %v10389
      %v10391 = vpop.f32.mrb[0].mxu0
      %10392 = vmatprep.mubr.f32.mxu0 %v9991
      %10393 = vmatmul.mubr.f32.gmra.mrb[0].mxu0 %v9895
      %v10394 = vpop.f32.mrb[0].mxu0
      %v10395 = vadd.f32 %v10117, %v10394
      %v10396 = vpop.f32.mrb[0].mxu0
      %10397 = vmatprep.mubr.f32.mxu0 %v9992
      %10398 = vmatmul.mubr.f32.gmra.mrb[0].mxu0 %v9896
      %v10399 = vpop.f32.mrb[0].mxu0
      %v10400 = vadd.f32 %v10117, %v10399
      %v10401 = vpop.f32.mrb[0].mxu0
      %10402 = vmatprep.mubr.f32.mxu0 %v9993
      %10403 = vmatmul.mubr.f32.gmra.mrb[0].mxu0 %v9897
      %v10404 = vpop.f32.mrb[0].mxu0
      %v10405 = vadd.f32 %v10117, %v10404
      %v10406 = vpop.f32.mrb[0].mxu0
      %10407 = vdwg.mxu0
      %10408 = vmatprep.subr.mxu0 0.0
      %10409 = vmatpush1.msra.mxu0 %v10090
      %10410 = vmatprep.subr.mxu0 0.0
      %10411 = vmatpush1.msra.mxu0 %v10091
      %10412 = vmatprep.subr.mxu0 0.0
      %10413 = vmatpush1.msra.mxu0 %v10092
      %10414 = vmatprep.subr.mxu0 0.0
      %10415 = vmatpush1.msra.mxu0 %v10093
      %10416 = vmatprep.subr.mxu0 0.0
      %10417 = vmatpush1.msra.mxu0 %v10094
      %10418 = vmatprep.subr.mxu0 0.0
      %10419 = vmatpush1.msra.mxu0 %v10095
      %10420 = vmatprep.subr.mxu0 0.0
      %10421 = vmatpush1.msra.mxu0 %v10096
      %10422 = vmatprep.subr.mxu0 0.0
      %10423 = vmatpush1.msra.mxu0 %v10097
      %10424 = vmatprep.subr.mxu0 0.0
      %10425 = vmatpush1.msra.mxu0 %v10098
      %10426 = vmatprep.subr.mxu0 0.0
      %10427 = vmatpush1.msra.mxu0 %v10099
      %10428 = vmatprep.subr.mxu0 0.0
      %10429 = vmatpush1.msra.mxu0 %v10100
      %10430 = vmatprep.subr.mxu0 0.0
      %10431 = vmatpush1.msra.mxu0 %v10101
      %10432 = vmatprep.subr.mxu0 0.0
      %10433 = vmatpush1.msra.mxu0 %v10102
      %10434 = vmatprep.subr.mxu0 0.0
      %10435 = vmatpush1.msra.mxu0 %v10103
      %10436 = vmatprep.subr.mxu0 0.0
      %10437 = vmatpush1.msra.mxu0 %v10104
      %10438 = vmatprep.subr.mxu0 0.0
      %10439 = vmatpush1.msra.mxu0 %v10105
      %10440 = vmatprep.subr.mxu0 0.0
      %10441 = vmatpush1.msra.mxu0 %v10106
      %10442 = vmatprep.subr.mxu0 0.0
      %10443 = vmatpush1.msra.mxu0 %v10107
      %10444 = vmatprep.subr.mxu0 0.0
      %10445 = vmatpush1.msra.mxu0 %v10108
      %10446 = vmatprep.subr.mxu0 0.0
      %10447 = vmatpush1.msra.mxu0 %v10109
      %10448 = vmatprep.subr.mxu0 0.0
      %10449 = vmatpush1.msra.mxu0 %v10110
      %10450 = vmatprep.subr.mxu0 0.0
      %10451 = vmatpush1.msra.mxu0 %v10111
      %10452 = vmatprep.subr.mxu0 0.0
      %10453 = vmatpush1.msra.mxu0 0.0
      %10454 = vmatprep.subr.mxu0 0.0
      %10455 = vmatpush1.msra.mxu0 0.0
      %10456 = vmatprep.subr.mxu0 0.0
      %10457 = vmatpush1.msra.mxu0 0.0
      %10458 = vmatprep.subr.mxu0 0.0
      %10459 = vmatpush1.msra.mxu0 0.0
      %10460 = vmatprep.subr.mxu0 0.0
      %10461 = vmatpush1.msra.mxu0 0.0
      %10462 = vmatprep.subr.mxu0 0.0
      %10463 = vmatpush1.msra.mxu0 0.0
      %10464 = vmatprep.subr.mxu0 0.0
      %10465 = vmatpush1.msra.mxu0 0.0
      %10466 = vmatprep.subr.mxu0 0.0
      %10467 = vmatpush1.msra.mxu0 0.0
      %10468 = vmatprep.subr.mxu0 0.0
      %10469 = vmatpush1.msra.mxu0 0.0
      %10470 = vmatprep.subr.mxu0 0.0
      %10471 = vmatpush1.msra.mxu0 0.0
      %10472 = vmatprep.mubr.f32.mxu0 %v10119
      %10473 = vmatmul.mubr.f32.gmra.mrb[0].mxu0 %v10026
      %v10474 = vpop.f32.mrb[0].mxu0
      %v10475 = vadd.f32 %v10250, %v10474
      %v10476 = vpop.f32.mrb[0].mxu0
      %10477 = vmatprep.mubr.f32.mxu0 %v10121
      %10478 = vmatmul.mubr.f32.gmra.mrb[0].mxu0 %v10027
      %v10479 = vpop.f32.mrb[0].mxu0
      %v10480 = vadd.f32 %v10255, %v10479
      %v10481 = vpop.f32.mrb[0].mxu0
      %10482 = vmatprep.mubr.f32.mxu0 %v10123
      %10483 = vmatmul.mubr.f32.gmra.mrb[0].mxu0 %v10028
      %v10484 = vpop.f32.mrb[0].mxu0
      %v10485 = vadd.f32 %v10260, %v10484
      %v10486 = vpop.f32.mrb[0].mxu0
      %10487 = vmatprep.mubr.f32.mxu0 %v10125
      %10488 = vmatmul.mubr.f32.gmra.mrb[0].mxu0 %v10029
      %v10489 = vpop.f32.mrb[0].mxu0
      %v10490 = vadd.f32 %v10265, %v10489
      %v10491 = vpop.f32.mrb[0].mxu0
      %10492 = vmatprep.mubr.f32.mxu0 %v10127
      %10493 = vmatmul.mubr.f32.gmra.mrb[0].mxu0 %v10030
      %v10494 = vpop.f32.mrb[0].mxu0
      %v10495 = vadd.f32 %v10270, %v10494
      %v10496 = vpop.f32.mrb[0].mxu0
      %10497 = vmatprep.mubr.f32.mxu0 %v10129
      %10498 = vmatmul.mubr.f32.gmra.mrb[0].mxu0 %v10031
      %v10499 = vpop.f32.mrb[0].mxu0
      %v10500 = vadd.f32 %v10275, %v10499
      %v10501 = vpop.f32.mrb[0].mxu0
      %10502 = vmatprep.mubr.f32.mxu0 %v10131
      %10503 = vmatmul.mubr.f32.gmra.mrb[0].mxu0 %v10032
      %v10504 = vpop.f32.mrb[0].mxu0
      %v10505 = vadd.f32 %v10280, %v10504
      %v10506 = vpop.f32.mrb[0].mxu0
      %10507 = vmatprep.mubr.f32.mxu0 %v10133
      %10508 = vmatmul.mubr.f32.gmra.mrb[0].mxu0 %v10033
      %v10509 = vpop.f32.mrb[0].mxu0
      %v10510 = vadd.f32 %v10285, %v10509
      %v10511 = vpop.f32.mrb[0].mxu0
      %10512 = vmatprep.mubr.f32.mxu0 %v10135
      %10513 = vmatmul.mubr.f32.gmra.mrb[0].mxu0 %v10034
      %v10514 = vpop.f32.mrb[0].mxu0
      %v10515 = vadd.f32 %v10290, %v10514
      %v10516 = vpop.f32.mrb[0].mxu0
      %10517 = vmatprep.mubr.f32.mxu0 %v10137
      %10518 = vmatmul.mubr.f32.gmra.mrb[0].mxu0 %v10035
      %v10519 = vpop.f32.mrb[0].mxu0
      %v10520 = vadd.f32 %v10295, %v10519
      %v10521 = vpop.f32.mrb[0].mxu0
      %10522 = vmatprep.mubr.f32.mxu0 %v10139
      %10523 = vmatmul.mubr.f32.gmra.mrb[0].mxu0 %v10036
      %v10524 = vpop.f32.mrb[0].mxu0
      %v10525 = vadd.f32 %v10300, %v10524
      %v10526 = vpop.f32.mrb[0].mxu0
      %10527 = vmatprep.mubr.f32.mxu0 %v10141
      %10528 = vmatmul.mubr.f32.gmra.mrb[0].mxu0 %v10037
      %v10529 = vpop.f32.mrb[0].mxu0
      %v10530 = vadd.f32 %v10305, %v10529
      %v10531 = vpop.f32.mrb[0].mxu0
      %10532 = vmatprep.mubr.f32.mxu0 %v10143
      %10533 = vmatmul.mubr.f32.gmra.mrb[0].mxu0 %v10038
      %v10534 = vpop.f32.mrb[0].mxu0
      %v10535 = vadd.f32 %v10310, %v10534
      %v10536 = vpop.f32.mrb[0].mxu0
      %10537 = vmatprep.mubr.f32.mxu0 %v10145
      %10538 = vmatmul.mubr.f32.gmra.mrb[0].mxu0 %v10039
      %v10539 = vpop.f32.mrb[0].mxu0
      %v10540 = vadd.f32 %v10315, %v10539
      %v10541 = vpop.f32.mrb[0].mxu0
      %10542 = vmatprep.mubr.f32.mxu0 %v10147
      %10543 = vmatmul.mubr.f32.gmra.mrb[0].mxu0 %v10040
      %v10544 = vpop.f32.mrb[0].mxu0
      %v10545 = vadd.f32 %v10320, %v10544
      %v10546 = vpop.f32.mrb[0].mxu0
      %10547 = vmatprep.mubr.f32.mxu0 %v10149
      %10548 = vmatmul.mubr.f32.gmra.mrb[0].mxu0 %v10041
      %v10549 = vpop.f32.mrb[0].mxu0
      %v10550 = vadd.f32 %v10325, %v10549
      %v10551 = vpop.f32.mrb[0].mxu0
      %10552 = vmatprep.mubr.f32.mxu0 %v10151
      %10553 = vmatmul.mubr.f32.gmra.mrb[0].mxu0 %v10042
      %v10554 = vpop.f32.mrb[0].mxu0
      %v10555 = vadd.f32 %v10330, %v10554
      %v10556 = vpop.f32.mrb[0].mxu0
      %10557 = vmatprep.mubr.f32.mxu0 %v10153
      %10558 = vmatmul.mubr.f32.gmra.mrb[0].mxu0 %v10043
      %v10559 = vpop.f32.mrb[0].mxu0
      %v10560 = vadd.f32 %v10335, %v10559
      %v10561 = vpop.f32.mrb[0].mxu0
      %10562 = vmatprep.mubr.f32.mxu0 %v10155
      %10563 = vmatmul.mubr.f32.gmra.mrb[0].mxu0 %v10044
      %v10564 = vpop.f32.mrb[0].mxu0
      %v10565 = vadd.f32 %v10340, %v10564
      %v10566 = vpop.f32.mrb[0].mxu0
      %10567 = vmatprep.mubr.f32.mxu0 %v10157
      %10568 = vmatmul.mubr.f32.gmra.mrb[0].mxu0 %v10045
      %v10569 = vpop.f32.mrb[0].mxu0
      %v10570 = vadd.f32 %v10345, %v10569
      %v10571 = vpop.f32.mrb[0].mxu0
      %10572 = vmatprep.mubr.f32.mxu0 %v10159
      %10573 = vmatmul.mubr.f32.gmra.mrb[0].mxu0 %v10046
      %v10574 = vpop.f32.mrb[0].mxu0
      %v10575 = vadd.f32 %v10350, %v10574
      %v10576 = vpop.f32.mrb[0].mxu0
      %10577 = vmatprep.mubr.f32.mxu0 %v10161
      %10578 = vmatmul.mubr.f32.gmra.mrb[0].mxu0 %v10047
      %v10579 = vpop.f32.mrb[0].mxu0
      %v10580 = vadd.f32 %v10355, %v10579
      %v10581 = vpop.f32.mrb[0].mxu0
      %10582 = vmatprep.mubr.f32.mxu0 %v10163
      %10583 = vmatmul.mubr.f32.gmra.mrb[0].mxu0 %v10048
      %v10584 = vpop.f32.mrb[0].mxu0
      %v10585 = vadd.f32 %v10360, %v10584
      %v10586 = vpop.f32.mrb[0].mxu0
      %10587 = vmatprep.mubr.f32.mxu0 %v10165
      %10588 = vmatmul.mubr.f32.gmra.mrb[0].mxu0 %v10049
      %v10589 = vpop.f32.mrb[0].mxu0
      %v10590 = vadd.f32 %v10365, %v10589
      %v10591 = vpop.f32.mrb[0].mxu0
      %10592 = vmatprep.mubr.f32.mxu0 %v10167
      %10593 = vmatmul.mubr.f32.gmra.mrb[0].mxu0 %v10050
      %v10594 = vpop.f32.mrb[0].mxu0
      %v10595 = vadd.f32 %v10370, %v10594
      %v10596 = vpop.f32.mrb[0].mxu0
      %10597 = vmatprep.mubr.f32.mxu0 %v10169
      %10598 = vmatmul.mubr.f32.gmra.mrb[0].mxu0 %v10051
      %v10599 = vpop.f32.mrb[0].mxu0
      %v10600 = vadd.f32 %v10375, %v10599
      %v10601 = vpop.f32.mrb[0].mxu0
      %10602 = vmatprep.mubr.f32.mxu0 %v10171
      %10603 = vmatmul.mubr.f32.gmra.mrb[0].mxu0 %v10052
      %v10604 = vpop.f32.mrb[0].mxu0
      %v10605 = vadd.f32 %v10380, %v10604
      %v10606 = vpop.f32.mrb[0].mxu0
      %10607 = vmatprep.mubr.f32.mxu0 %v10173
      %10608 = vmatmul.mubr.f32.gmra.mrb[0].mxu0 %v10053
      %v10609 = vpop.f32.mrb[0].mxu0
      %v10610 = vadd.f32 %v10385, %v10609
      %v10611 = vpop.f32.mrb[0].mxu0
      %10612 = vmatprep.mubr.f32.mxu0 %v10175
      %10613 = vmatmul.mubr.f32.gmra.mrb[0].mxu0 %v10054
      %v10614 = vpop.f32.mrb[0].mxu0
      %v10615 = vadd.f32 %v10390, %v10614
      %v10616 = vpop.f32.mrb[0].mxu0
      %10617 = vmatprep.mubr.f32.mxu0 %v10177
      %10618 = vmatmul.mubr.f32.gmra.mrb[0].mxu0 %v10055
      %v10619 = vpop.f32.mrb[0].mxu0
      %v10620 = vadd.f32 %v10395, %v10619
      %v10621 = vpop.f32.mrb[0].mxu0
      %10622 = vmatprep.mubr.f32.mxu0 %v10179
      %10623 = vmatmul.mubr.f32.gmra.mrb[0].mxu0 %v10056
      %v10624 = vpop.f32.mrb[0].mxu0
      %v10625 = vadd.f32 %v10400, %v10624
      %v10626 = vpop.f32.mrb[0].mxu0
      %10627 = vmatprep.mubr.f32.mxu0 %v10181
      %10628 = vmatmul.mubr.f32.gmra.mrb[0].mxu0 %v10057
      %v10629 = vpop.f32.mrb[0].mxu0
      %v10630 = vadd.f32 %v10405, %v10629
      %v10631 = vpop.f32.mrb[0].mxu0
      %10632 = vdwg.mxu0
      %v10633 = vmul.f32 %v10475, 0.2
      %v10634 = vmul.f32 %v10480, 0.2
      %v10635 = vmul.f32 %v10485, 0.2
      %v10636 = vmul.f32 %v10490, 0.2
      %v10637 = vmul.f32 %v10495, 0.2
      %v10638 = vmul.f32 %v10500, 0.2
      %v10639 = vmul.f32 %v10505, 0.2
      %v10640 = vmul.f32 %v10510, 0.2
      %v10641 = vmul.f32 %v10515, 0.2
      %v10642 = vmul.f32 %v10520, 0.2
      %v10643 = vmul.f32 %v10525, 0.2
      %v10644 = vmul.f32 %v10530, 0.2
      %v10645 = vmul.f32 %v10535, 0.2
      %v10646 = vmul.f32 %v10540, 0.2
      %v10647 = vmul.f32 %v10545, 0.2
      %v10648 = vmul.f32 %v10550, 0.2
      %v10649 = vmul.f32 %v10555, 0.2
      %v10650 = vmul.f32 %v10560, 0.2
      %v10651 = vmul.f32 %v10565, 0.2
      %v10652 = vmul.f32 %v10570, 0.2
      %v10653 = vmul.f32 %v10575, 0.2
      %v10654 = vmul.f32 %v10580, 0.2
      %v10655 = vmul.f32 %v10585, 0.2
      %v10656 = vmul.f32 %v10590, 0.2
      %v10657 = vmul.f32 %v10595, 0.2
      %v10658 = vmul.f32 %v10600, 0.2
      %v10659 = vmul.f32 %v10605, 0.2
      %v10660 = vmul.f32 %v10610, 0.2
      %v10661 = vmul.f32 %v10615, 0.2
      %v10662 = vmul.f32 %v10620, 0.2
      %v10663 = vmul.f32 %v10625, 0.2
      %v10664 = vmul.f32 %v10630, 0.2
      %v10665 = vadd.f32 %v10633, %v387
      %v10666 = vadd.f32 %v10634, %v388
      %v10667 = vadd.f32 %v10635, %v389
      %v10668 = vadd.f32 %v10636, %v390
      %v10669 = vadd.f32 %v10637, %v391
      %v10670 = vadd.f32 %v10638, %v392
      %v10671 = vadd.f32 %v10639, %v393
      %v10672 = vadd.f32 %v10640, %v394
      %v10673 = vadd.f32 %v10641, %v395
      %v10674 = vadd.f32 %v10642, %v396
      %v10675 = vadd.f32 %v10643, %v397
      %v10676 = vadd.f32 %v10644, %v398
      %v10677 = vadd.f32 %v10645, %v399
      %v10678 = vadd.f32 %v10646, %v400
      %v10679 = vadd.f32 %v10647, %v401
      %v10680 = vadd.f32 %v10648, %v402
      %v10681 = vadd.f32 %v10649, %v403
      %v10682 = vadd.f32 %v10650, %v404
      %v10683 = vadd.f32 %v10651, %v405
      %v10684 = vadd.f32 %v10652, %v406
      %v10685 = vadd.f32 %v10653, %v407
      %v10686 = vadd.f32 %v10654, %v408
      %v10687 = vadd.f32 %v10655, %v409
      %v10688 = vadd.f32 %v10656, %v410
      %v10689 = vadd.f32 %v10657, %v411
      %v10690 = vadd.f32 %v10658, %v412
      %v10691 = vadd.f32 %v10659, %v413
      %v10692 = vadd.f32 %v10660, %v414
      %v10693 = vadd.f32 %v10661, %v415
      %v10694 = vadd.f32 %v10662, %v416
      %v10695 = vadd.f32 %v10663, %v417
      %v10696 = vadd.f32 %v10664, %v418
      %10697 = vst.msk [vmem:[%s386] sm:$0xff] %vm1465, %v10665
      %10698 = vst.msk [vmem:[%s386 + $0x8] sm:$0xff] %vm1465, %v10666
      %10699 = vst.msk [vmem:[%s386 + $0x10] sm:$0xff] %vm1465, %v10667
      %10700 = vst.msk [vmem:[%s386 + $0x18] sm:$0xff] %vm1465, %v10668
      %10701 = vst.msk [vmem:[%s386 + $0x20] sm:$0xff] %vm1465, %v10669
      %10702 = vst.msk [vmem:[%s386 + $0x28] sm:$0xff] %vm1465, %v10670
      %10703 = vst.msk [vmem:[%s386 + $0x30] sm:$0xff] %vm1465, %v10671
      %10704 = vst.msk [vmem:[%s386 + $0x38] sm:$0xff] %vm1465, %v10672
      %10705 = vst.msk [vmem:[%s386 + $0x40] sm:$0xff] %vm1465, %v10673
      %10706 = vst.msk [vmem:[%s386 + $0x48] sm:$0xff] %vm1465, %v10674
      %10707 = vst.msk [vmem:[%s386 + $0x50] sm:$0xff] %vm1465, %v10675
      %10708 = vst.msk [vmem:[%s386 + $0x58] sm:$0xff] %vm1465, %v10676
      %10709 = vst.msk [vmem:[%s386 + $0x60] sm:$0xff] %vm1465, %v10677
      %10710 = vst.msk [vmem:[%s386 + $0x68] sm:$0xff] %vm1465, %v10678
      %10711 = vst.msk [vmem:[%s386 + $0x70] sm:$0xff] %vm1465, %v10679
      %10712 = vst.msk [vmem:[%s386 + $0x78] sm:$0xff] %vm1465, %v10680
      %10713 = vst.msk [vmem:[%s386 + $0x80] sm:$0xff] %vm1465, %v10681
      %10714 = vst.msk [vmem:[%s386 + $0x88] sm:$0xff] %vm1465, %v10682
      %10715 = vst.msk [vmem:[%s386 + $0x90] sm:$0xff] %vm1465, %v10683
      %10716 = vst.msk [vmem:[%s386 + $0x98] sm:$0xff] %vm1465, %v10684
      %10717 = vst.msk [vmem:[%s386 + $0xa0] sm:$0xff] %vm1465, %v10685
      %10718 = vst.msk [vmem:[%s386 + $0xa8] sm:$0xff] %vm1465, %v10686
      %10719 = vst.msk [vmem:[%s386 + $0xb0] sm:$0xff] %vm1465, %v10687
      %10720 = vst.msk [vmem:[%s386 + $0xb8] sm:$0xff] %vm1465, %v10688
      %10721 = vst.msk [vmem:[%s386 + $0xc0] sm:$0xff] %vm1465, %v10689
      %10722 = vst.msk [vmem:[%s386 + $0xc8] sm:$0xff] %vm1465, %v10690
      %10723 = vst.msk [vmem:[%s386 + $0xd0] sm:$0xff] %vm1465, %v10691
      %10724 = vst.msk [vmem:[%s386 + $0xd8] sm:$0xff] %vm1465, %v10692
      %10725 = vst.msk [vmem:[%s386 + $0xe0] sm:$0xff] %vm1465, %v10693
      %10726 = vst.msk [vmem:[%s386 + $0xe8] sm:$0xff] %vm1465, %v10694
      %10727 = vst.msk [vmem:[%s386 + $0xf0] sm:$0xff] %vm1465, %v10695
      %10728 = vst.msk [vmem:[%s386 + $0xf8] sm:$0xff] %vm1465, %v10696
      %p10729 = scmp.lt.s32.totalorder %s22, 1
      %s10730 = scalar_select %p10729, %s22, 1
      %s10731 = smul.addr %s10730, 32
      %s10732 = smul.addr %s10731, 8
      %s10733 = scalar_lea.vmem %s11, %s10732
      // Predicated region
      $region65: #{residual_dense_block_5c.1} parent=63 // pred_check
        %p10734 = pneg %p276
      $region66: #{residual_dense_block_5c.1} parent=63 // pred_check_branch
        %10736 = sbr.rel (%p10734) target = $region68
      $region67: #{residual_dense_block_5c.1} parent=63 // pred_region
        _
      $region68: #{residual_dense_block_5c.1} parent=63 // pred_fallthru
        _
    $region64: #{residual_dense_block_5c.1} parent=5 // pred_fallthru
      _
    %p10737 = scmp.le.s32.totalorder 2, %s17
    // Predicated region
    $region69: #{residual_dense_block_5c.1} parent=5 // pred_check
      %p10738 = pneg %p10737
    $region70: #{residual_dense_block_5c.1} parent=5 // pred_check_branch
      %10740 = sbr.rel (%p10738) target = $region72
    $region71: #{residual_dense_block_5c.1} parent=5 // pred_region
      %s10741 = ssub.s32 %s17, 2
      // Predicated region
      $region73: #{residual_dense_block_5c.1} parent=71 // pred_check
        %p10742 = pneg %p282
      $region74: #{residual_dense_block_5c.1} parent=71 // pred_check_branch
        %10744 = sbr.rel (%p10742) target = $region76
      $region75: #{residual_dense_block_5c.1} parent=71 // pred_region
        %p10745 = scmp.lt.s32.totalorder %s23, 1
        %s10746 = scalar_select %p10745, %s23, 1
        %s10747 = smul.addr %s10746, 32
        %s10748 = smul.addr %s10747, 8
        %s10749 = scalar_lea.vmem %s11, %s10748
      $region76: #{residual_dense_block_5c.1} parent=71 // pred_fallthru
        _
    $region72: #{residual_dense_block_5c.1} parent=5 // pred_fallthru
      _
  $region6: #{residual_dense_block_5c.1} parent=0 // loop_footer
    %s21 = sadd.s32 1, %s17
  $region7: #{residual_dense_block_5c.1} parent=0 // loop_footer_branch
    %16 = sbr.rel target = $region3
  $region8: #{residual_dense_block_5c.1} parent=0 // loop_exit
    _

</llo_original>
